<compile_context>
chip_gen: v6e
topology: v6e:2x2x1
jax: 0.10.0
libtpu: 0.0.40
codegen_flags: <defaults>
</compile_context>

<pallas_src>
import functools
import math

import numpy as np
import jax
import jax.numpy as jnp
from jax.experimental import pallas as pl
from jax.experimental.pallas import tpu as pltpu


def _round_up(x, m):
    return ((x + m - 1) // m) * m


# ----------------------------------------------------------------------------
# Bicubic interpolation matrices (PyTorch upsample_bicubic2d, align_corners=True)
# ----------------------------------------------------------------------------
def _cubic(d, A=-0.75):
    d = abs(float(d))
    if d <= 1.0:
        return (A + 2.0) * d ** 3 - (A + 3.0) * d ** 2 + 1.0
    elif d < 2.0:
        return A * d ** 3 - 5.0 * A * d ** 2 + 8.0 * A * d - 4.0 * A
    return 0.0


@functools.lru_cache(maxsize=None)
def _bicubic_matrix_np(out_size, in_size):
    """Dense (out_size, in_size) interpolation matrix, align_corners=True."""
    if out_size > 1 and in_size > 1:
        scale = (in_size - 1) / (out_size - 1)
    else:
        scale = 0.0
    M = np.zeros((out_size, in_size), dtype=np.float64)
    for o in range(out_size):
        x = o * scale
        x0 = int(np.floor(x))
        t = x - x0
        weights = [_cubic(t + 1.0), _cubic(t), _cubic(1.0 - t), _cubic(2.0 - t)]
        indices = [x0 - 1, x0, x0 + 1, x0 + 2]
        for w, idx in zip(weights, indices):
            idx = min(max(idx, 0), in_size - 1)  # PyTorch clamps at borders
            M[o, idx] += w
    return M.astype(np.float32)


def _bicubic_matrix(out_size, in_size):
    return jnp.asarray(_bicubic_matrix_np(out_size, in_size))


def bicubic_upsample(x, scale):
    """(N, C, H, W) -> (N, C, sH, sW), PyTorch bicubic, align_corners=True."""
    Wh = _bicubic_matrix(scale * x.shape[2], x.shape[2])
    Ww = _bicubic_matrix(scale * x.shape[3], x.shape[3])
    t = jnp.einsum('oh,nchw->ncow', Wh, x)     # rows
    return jnp.einsum('pw,ncow->ncop', Ww, t)  # cols


# ----------------------------------------------------------------------------
# Interior mask (1.0 on real pixels, 0.0 on pad ring / lane tail), host-built
# ----------------------------------------------------------------------------
@functools.lru_cache(maxsize=None)
def _center_mask_np(H, W, pmax, HWL):
    Hp, Wp = H + 2 * pmax, W + 2 * pmax
    core = np.zeros((Hp, Wp), dtype=np.float32)
    core[pmax:pmax + H, pmax:pmax + W] = 1.0
    m = np.zeros((1, HWL), dtype=np.float32)
    m[0, :Hp * Wp] = core.reshape(-1)
    return m


# ----------------------------------------------------------------------------
# Fused Pallas kernel: whole conv stack + ReLUs + residual, one image per step
# ----------------------------------------------------------------------------
def _make_fused_kernel(layer_meta, Wpad, HWL):
    """layer_meta: tuple of (kernel_size, apply_relu, cin_p, cout_p) per layer."""
    n_layers = len(layer_meta)

    def kernel(x_ref, cmask_ref, *refs):
        out_ref = refs[-2]
        s_ref = refs[-1]          # (R_max, HWL) VMEM scratch: in-VMEM im2col
        wrefs = refs[:-2]

        x = x_ref[0]              # (Cp, HWL) channel-major, lane-dense, zero pad ring
        cmask = cmask_ref[...]    # (1, HWL)  1.0 on interior pixels, 0.0 elsewhere
        a = x
        for li, (K, relu, cin_p, cout_p) in enumerate(layer_meta):
            p = K // 2
            # Scatter the K*K shifted channel-major views into scratch so the
            # whole conv collapses into ONE MXU matmul (contraction K*K*Cin_p).
            for ky in range(K):
                for kx in range(K):
                    off = (ky - p) * Wpad + (kx - p)
                    if off == 0:
                        shifted = a
                    else:
                        # shifted[:, f] = a[:, f + off]; interior outputs never
                        # wrap, and zero padding comes free from the pad ring.
                        shifted = pltpu.roll(a, (-off) % HWL, 1)
                    row = (ky * K + kx) * cin_p
                    s_ref[pl.ds(row, cin_p), :] = shifted
            R = K * K * cin_p
            w2 = wrefs[2 * li][...]                       # (Cout_p, R)
            b = wrefs[2 * li + 1][...]                    # (Cout_p, 1)
            acc = jnp.dot(w2, s_ref[pl.ds(0, R), :],
                          preferred_element_type=jnp.float32) + b
            if relu:
                acc = jnp.maximum(acc, 0.0)
            if li < n_layers - 1:
                a = acc * cmask   # re-zero the pad ring for the next conv's halo
            else:
                a = acc           # last layer: pad ring is cropped by the wrapper

        out_ref[0] = a + x                                # fused residual add

    return kernel


def fused_conv_stack(x_flat, cmask, layers, Wpad, HWL):
    """x_flat: (N, Cp, HWL) f32, channel-padded, spatially-padded, flattened."""
    N, Cp, _ = x_flat.shape
    layer_meta = tuple((l['k'], l['relu'], l['cin_p'], l['cout_p']) for l in layers)
    kernel = _make_fused_kernel(layer_meta, Wpad, HWL)

    r_max = max(l['k'] * l['k'] * l['cin_p'] for l in layers)

    in_specs = [
        pl.BlockSpec((1, Cp, HWL), lambda n: (n, 0, 0)),   # one image per grid step
        pl.BlockSpec((1, HWL), lambda n: (0, 0)),          # interior mask
    ]
    args = [x_flat, cmask]
    for l in layers:
        cop, R = l['w2'].shape
        in_specs.append(pl.BlockSpec((cop, R), lambda n: (0, 0)))
        in_specs.append(pl.BlockSpec((cop, 1), lambda n: (0, 0)))
        args.append(l['w2'])
        args.append(l['b_pad'])

    cout_last = layers[-1]['cout_p']
    return pl.pallas_call(
        kernel,
        out_shape=jax.ShapeDtypeStruct((N, cout_last, HWL), jnp.float32),
        grid=(N,),
        in_specs=in_specs,
        out_specs=pl.BlockSpec((1, cout_last, HWL), lambda n: (n, 0, 0)),
        scratch_shapes=[pltpu.VMEM((r_max, HWL), jnp.float32)],
        compiler_params=pltpu.CompilerParams(
            dimension_semantics=("parallel",)),
    )(*args)


# ----------------------------------------------------------------------------
# Deterministic parameter init (kaiming_normal_, a=0, mode='fan_in'; bias = 0)
# ----------------------------------------------------------------------------
def kaiming_conv_params(key, cout, cin, k, scale=1.0):
    fan_in = cin * k * k
    std = math.sqrt(2.0 / fan_in)
    w = std * scale * jax.random.normal(key, (cout, cin, k, k), jnp.float32)
    b = jnp.zeros((cout,), jnp.float32)
    return w, b


class VanillaPallas:
    """JAX/Pallas port of `Vanilla` with block = Conv2d -> ReLU."""

    def __init__(self, in_channels, num_features, num_blocks, scale, key,
                 init_scale=1.0):
        self.in_channels = in_channels
        self.scale_factor = scale
        self.cin_pad = _round_up(in_channels, 8)

        specs = [(in_channels, num_features, 5, True)]
        for _ in range(1, num_blocks):
            specs.append((num_features, num_features, 3, True))
        specs.append((num_features, in_channels, 5, False))    # features_to_image

        self.pmax = max(k for _, _, k, _ in specs) // 2        # shared pad ring

        keys = jax.random.split(key, len(specs))
        self.layers = []
        for kk, (cin, cout, ksz, relu) in zip(keys, specs):
            w, b = kaiming_conv_params(kk, cout, cin, ksz, init_scale)
            cin_p, cout_p = _round_up(cin, 8), _round_up(cout, 8)
            # (Cout,Cin,K,K) -> (Cout_p, K*K*Cin_p); column = (ky*K+kx)*Cin_p + ci
            wt = jnp.transpose(w, (2, 3, 0, 1))                 # (K, K, Cout, Cin)
            wt = jnp.pad(wt, ((0, 0), (0, 0),
                              (0, cout_p - cout), (0, cin_p - cin)))
            w2 = jnp.transpose(wt, (2, 0, 1, 3)).reshape(cout_p, ksz * ksz * cin_p)
            b_pad = jnp.pad(b, (0, cout_p - cout)).reshape(cout_p, 1)
            self.layers.append(dict(w=w, b=b, w2=w2, b_pad=b_pad, k=ksz,
                                    relu=relu, cin_p=cin_p, cout_p=cout_p))
        assert self.layers[-1]['cout_p'] == self.cin_pad

    def __call__(self, x):
        N, C, H, W = x.shape
        Ho, Wo = self.scale_factor * H, self.scale_factor * W
        p = self.pmax
        Hp, Wp = Ho + 2 * p, Wo + 2 * p
        HWL = _round_up(Hp * Wp, 128)     # lane-pad -> unmasked full-vreg stores
        Cp = self.cin_pad

        x_up = bicubic_upsample(x, self.scale_factor)            # (N, C, Ho, Wo)
        x_pad = jnp.pad(x_up, ((0, 0), (0, Cp - C), (p, p), (p, p)))
        x_flat = x_pad.reshape(N, Cp, Hp * Wp)                   # pure reshape
        x_flat = jnp.pad(x_flat, ((0, 0), (0, 0), (0, HWL - Hp * Wp)))

        cmask = jnp.asarray(_center_mask_np(Ho, Wo, p, HWL))     # (1, HWL)

        out_flat = fused_conv_stack(x_flat, cmask, self.layers, Wp, HWL)
        out = out_flat[:, :C, :Hp * Wp].reshape(N, C, Hp, Wp)
        return out[:, :, p:p + Ho, p:p + Wo]

    # Pure-JAX reference (lax.conv) for correctness checking.
    def reference(self, x):
        x_up = bicubic_upsample(x, self.scale_factor)
        h = x_up
        for l in self.layers:
            h = jax.lax.conv_general_dilated(
                h, l['w'], window_strides=(1, 1), padding='SAME',
                dimension_numbers=('NCHW', 'OIHW', 'NCHW'),
                precision=jax.lax.Precision.HIGHEST)
            h = h + l['b'][None, :, None, None]
            if l['relu']:
                h = jnp.maximum(h, 0.0)
        return h + x_up


if __name__ == "__main__":
    key = jax.random.PRNGKey(0)
    k_model, k_data = jax.random.split(key)

    in_channels, num_features, num_blocks, scale = 3, 8, 3, 2
    model = VanillaPallas(in_channels, num_features, num_blocks, scale, k_model)

    x = jax.random.normal(k_data, (2, in_channels, 16, 16), jnp.float32)

    fwd = jax.jit(model.__call__)
    out = jax.block_until_ready(fwd(x))

    assert out.shape == (2, in_channels, 16 * scale, 16 * scale), out.shape
    assert bool(jnp.all(jnp.isfinite(out)))

    # Structural-correctness check against a plain-JAX lax.conv reference.
    # (Loose tolerance: robust to MXU precision-mode differences, still catches
    #  any shift/layout/weight-indexing bug, which would give O(1) errors.)
    ref = model.reference(x)
    err = float(jnp.max(jnp.abs(out - ref)))
    assert err < 1e-1, f"max abs error vs reference: {err}"

    print("KERNEL_OK")
</pallas_src>

<mosaic_0001>
module attributes {stable_mosaic.version = 11 : i64} {
  func.func @kernel(%arg0: i32, %arg1: memref<1x8x1408xf32, #tpu.memory_space<vmem>>, %arg2: memref<1x1408xf32, #tpu.memory_space<vmem>>, %arg3: memref<8x200xf32, #tpu.memory_space<vmem>>, %arg4: memref<8x1xf32, #tpu.memory_space<vmem>>, %arg5: memref<8x72xf32, #tpu.memory_space<vmem>>, %arg6: memref<8x1xf32, #tpu.memory_space<vmem>>, %arg7: memref<8x72xf32, #tpu.memory_space<vmem>>, %arg8: memref<8x1xf32, #tpu.memory_space<vmem>>, %arg9: memref<8x200xf32, #tpu.memory_space<vmem>>, %arg10: memref<8x1xf32, #tpu.memory_space<vmem>>, %arg11: memref<1x8x1408xf32, #tpu.memory_space<vmem>>, %arg12: memref<200x1408xf32, #tpu.memory_space<vmem>>) attributes {dimension_semantics = [#tpu.dimension_semantics<parallel>], iteration_bounds = array<i64: 2>, scalar_prefetch = 0 : i64, scratch_operands = 1 : i64, tpu.core_type = #tpu.core_type<tc>, window_params = [{transform_indices = @transform_0, window_bounds = array<i64: 1, 8, 1408>}, {pipeline_mode = #tpu.pipeline_mode<synchronous>, transform_indices = @transform_1, window_bounds = array<i64: 1, 1408>}, {pipeline_mode = #tpu.pipeline_mode<synchronous>, transform_indices = @transform_2, window_bounds = array<i64: 8, 200>}, {pipeline_mode = #tpu.pipeline_mode<synchronous>, transform_indices = @transform_3, window_bounds = array<i64: 8, 1>}, {pipeline_mode = #tpu.pipeline_mode<synchronous>, transform_indices = @transform_4, window_bounds = array<i64: 8, 72>}, {pipeline_mode = #tpu.pipeline_mode<synchronous>, transform_indices = @transform_5, window_bounds = array<i64: 8, 1>}, {pipeline_mode = #tpu.pipeline_mode<synchronous>, transform_indices = @transform_6, window_bounds = array<i64: 8, 72>}, {pipeline_mode = #tpu.pipeline_mode<synchronous>, transform_indices = @transform_7, window_bounds = array<i64: 8, 1>}, {pipeline_mode = #tpu.pipeline_mode<synchronous>, transform_indices = @transform_8, window_bounds = array<i64: 8, 200>}, {pipeline_mode = #tpu.pipeline_mode<synchronous>, transform_indices = @transform_9, window_bounds = array<i64: 8, 1>}, {transform_indices = @transform_10, window_bounds = array<i64: 1, 8, 1408>}]} {
    %c0 = arith.constant 0 : index
    %c0_0 = arith.constant 0 : index
    %c0_1 = arith.constant 0 : index
    %0 = vector.load %arg1[%c0, %c0_0, %c0_1] : memref<1x8x1408xf32, #tpu.memory_space<vmem>>, vector<1x8x1408xf32>
    %1 = vector.shape_cast %0 : vector<1x8x1408xf32> to vector<8x1408xf32>
    %c0_2 = arith.constant 0 : index
    %c0_3 = arith.constant 0 : index
    %2 = vector.load %arg2[%c0_2, %c0_3] : memref<1x1408xf32, #tpu.memory_space<vmem>>, vector<1x1408xf32>
    %c74_i32 = arith.constant 74 : i32
    %3 = tpu.dynamic_rotate %1 by %c74_i32 dim 1 : vector<8x1408xf32>, i32 -> vector<8x1408xf32>
    %c0_4 = arith.constant 0 : index
    %c0_5 = arith.constant 0 : index
    %4 = vector.load %arg12[%c0_4, %c0_5] : memref<200x1408xf32, #tpu.memory_space<vmem>>, vector<8x1408xf32>
    tpu.vector_store %arg12[%c0_4, %c0_5], %3 {strides = array<i32>} : memref<200x1408xf32, #tpu.memory_space<vmem>>, vector<8x1408xf32>,
    %c73_i32 = arith.constant 73 : i32
    %5 = tpu.dynamic_rotate %1 by %c73_i32 dim 1 : vector<8x1408xf32>, i32 -> vector<8x1408xf32>
    %c8 = arith.constant 8 : index
    %c0_6 = arith.constant 0 : index
    %6 = vector.load %arg12[%c8, %c0_6] : memref<200x1408xf32, #tpu.memory_space<vmem>>, vector<8x1408xf32>
    tpu.vector_store %arg12[%c8, %c0_6], %5 {strides = array<i32>} : memref<200x1408xf32, #tpu.memory_space<vmem>>, vector<8x1408xf32>,
    %c72_i32 = arith.constant 72 : i32
    %7 = tpu.dynamic_rotate %1 by %c72_i32 dim 1 : vector<8x1408xf32>, i32 -> vector<8x1408xf32>
    %c16 = arith.constant 16 : index
    %c0_7 = arith.constant 0 : index
    %8 = vector.load %arg12[%c16, %c0_7] : memref<200x1408xf32, #tpu.memory_space<vmem>>, vector<8x1408xf32>
    tpu.vector_store %arg12[%c16, %c0_7], %7 {strides = array<i32>} : memref<200x1408xf32, #tpu.memory_space<vmem>>, vector<8x1408xf32>,
    %c71_i32 = arith.constant 71 : i32
    %9 = tpu.dynamic_rotate %1 by %c71_i32 dim 1 : vector<8x1408xf32>, i32 -> vector<8x1408xf32>
    %c24 = arith.constant 24 : index
    %c0_8 = arith.constant 0 : index
    %10 = vector.load %arg12[%c24, %c0_8] : memref<200x1408xf32, #tpu.memory_space<vmem>>, vector<8x1408xf32>
    tpu.vector_store %arg12[%c24, %c0_8], %9 {strides = array<i32>} : memref<200x1408xf32, #tpu.memory_space<vmem>>, vector<8x1408xf32>,
    %c70_i32 = arith.constant 70 : i32
    %11 = tpu.dynamic_rotate %1 by %c70_i32 dim 1 : vector<8x1408xf32>, i32 -> vector<8x1408xf32>
    %c32 = arith.constant 32 : index
    %c0_9 = arith.constant 0 : index
    %12 = vector.load %arg12[%c32, %c0_9] : memref<200x1408xf32, #tpu.memory_space<vmem>>, vector<8x1408xf32>
    tpu.vector_store %arg12[%c32, %c0_9], %11 {strides = array<i32>} : memref<200x1408xf32, #tpu.memory_space<vmem>>, vector<8x1408xf32>,
    %c38_i32 = arith.constant 38 : i32
    %13 = tpu.dynamic_rotate %1 by %c38_i32 dim 1 : vector<8x1408xf32>, i32 -> vector<8x1408xf32>
    %c40 = arith.constant 40 : index
    %c0_10 = arith.constant 0 : index
    %14 = vector.load %arg12[%c40, %c0_10] : memref<200x1408xf32, #tpu.memory_space<vmem>>, vector<8x1408xf32>
    tpu.vector_store %arg12[%c40, %c0_10], %13 {strides = array<i32>} : memref<200x1408xf32, #tpu.memory_space<vmem>>, vector<8x1408xf32>,
    %c37_i32 = arith.constant 37 : i32
    %15 = tpu.dynamic_rotate %1 by %c37_i32 dim 1 : vector<8x1408xf32>, i32 -> vector<8x1408xf32>
    %c48 = arith.constant 48 : index
    %c0_11 = arith.constant 0 : index
    %16 = vector.load %arg12[%c48, %c0_11] : memref<200x1408xf32, #tpu.memory_space<vmem>>, vector<8x1408xf32>
    tpu.vector_store %arg12[%c48, %c0_11], %15 {strides = array<i32>} : memref<200x1408xf32, #tpu.memory_space<vmem>>, vector<8x1408xf32>,
    %c36_i32 = arith.constant 36 : i32
    %17 = tpu.dynamic_rotate %1 by %c36_i32 dim 1 : vector<8x1408xf32>, i32 -> vector<8x1408xf32>
    %c56 = arith.constant 56 : index
    %c0_12 = arith.constant 0 : index
    %18 = vector.load %arg12[%c56, %c0_12] : memref<200x1408xf32, #tpu.memory_space<vmem>>, vector<8x1408xf32>
    tpu.vector_store %arg12[%c56, %c0_12], %17 {strides = array<i32>} : memref<200x1408xf32, #tpu.memory_space<vmem>>, vector<8x1408xf32>,
    %c35_i32 = arith.constant 35 : i32
    %19 = tpu.dynamic_rotate %1 by %c35_i32 dim 1 : vector<8x1408xf32>, i32 -> vector<8x1408xf32>
    %c64 = arith.constant 64 : index
    %c0_13 = arith.constant 0 : index
    %20 = vector.load %arg12[%c64, %c0_13] : memref<200x1408xf32, #tpu.memory_space<vmem>>, vector<8x1408xf32>
    tpu.vector_store %arg12[%c64, %c0_13], %19 {strides = array<i32>} : memref<200x1408xf32, #tpu.memory_space<vmem>>, vector<8x1408xf32>,
    %c34_i32 = arith.constant 34 : i32
    %21 = tpu.dynamic_rotate %1 by %c34_i32 dim 1 : vector<8x1408xf32>, i32 -> vector<8x1408xf32>
    %c72 = arith.constant 72 : index
    %c0_14 = arith.constant 0 : index
    %22 = vector.load %arg12[%c72, %c0_14] : memref<200x1408xf32, #tpu.memory_space<vmem>>, vector<8x1408xf32>
    tpu.vector_store %arg12[%c72, %c0_14], %21 {strides = array<i32>} : memref<200x1408xf32, #tpu.memory_space<vmem>>, vector<8x1408xf32>,
    %c2_i32 = arith.constant 2 : i32
    %23 = tpu.dynamic_rotate %1 by %c2_i32 dim 1 : vector<8x1408xf32>, i32 -> vector<8x1408xf32>
    %c80 = arith.constant 80 : index
    %c0_15 = arith.constant 0 : index
    %24 = vector.load %arg12[%c80, %c0_15] : memref<200x1408xf32, #tpu.memory_space<vmem>>, vector<8x1408xf32>
    tpu.vector_store %arg12[%c80, %c0_15], %23 {strides = array<i32>} : memref<200x1408xf32, #tpu.memory_space<vmem>>, vector<8x1408xf32>,
    %c1_i32 = arith.constant 1 : i32
    %25 = tpu.dynamic_rotate %1 by %c1_i32 dim 1 : vector<8x1408xf32>, i32 -> vector<8x1408xf32>
    %c88 = arith.constant 88 : index
    %c0_16 = arith.constant 0 : index
    %26 = vector.load %arg12[%c88, %c0_16] : memref<200x1408xf32, #tpu.memory_space<vmem>>, vector<8x1408xf32>
    tpu.vector_store %arg12[%c88, %c0_16], %25 {strides = array<i32>} : memref<200x1408xf32, #tpu.memory_space<vmem>>, vector<8x1408xf32>,
    %c96 = arith.constant 96 : index
    %c0_17 = arith.constant 0 : index
    %27 = vector.load %arg12[%c96, %c0_17] : memref<200x1408xf32, #tpu.memory_space<vmem>>, vector<8x1408xf32>
    tpu.vector_store %arg12[%c96, %c0_17], %1 {strides = array<i32>} : memref<200x1408xf32, #tpu.memory_space<vmem>>, vector<8x1408xf32>,
    %c1407_i32 = arith.constant 1407 : i32
    %28 = tpu.dynamic_rotate %1 by %c1407_i32 dim 1 : vector<8x1408xf32>, i32 -> vector<8x1408xf32>
    %c104 = arith.constant 104 : index
    %c0_18 = arith.constant 0 : index
    %29 = vector.load %arg12[%c104, %c0_18] : memref<200x1408xf32, #tpu.memory_space<vmem>>, vector<8x1408xf32>
    tpu.vector_store %arg12[%c104, %c0_18], %28 {strides = array<i32>} : memref<200x1408xf32, #tpu.memory_space<vmem>>, vector<8x1408xf32>,
    %c1406_i32 = arith.constant 1406 : i32
    %30 = tpu.dynamic_rotate %1 by %c1406_i32 dim 1 : vector<8x1408xf32>, i32 -> vector<8x1408xf32>
    %c112 = arith.constant 112 : index
    %c0_19 = arith.constant 0 : index
    %31 = vector.load %arg12[%c112, %c0_19] : memref<200x1408xf32, #tpu.memory_space<vmem>>, vector<8x1408xf32>
    tpu.vector_store %arg12[%c112, %c0_19], %30 {strides = array<i32>} : memref<200x1408xf32, #tpu.memory_space<vmem>>, vector<8x1408xf32>,
    %c1374_i32 = arith.constant 1374 : i32
    %32 = tpu.dynamic_rotate %1 by %c1374_i32 dim 1 : vector<8x1408xf32>, i32 -> vector<8x1408xf32>
    %c120 = arith.constant 120 : index
    %c0_20 = arith.constant 0 : index
    %33 = vector.load %arg12[%c120, %c0_20] : memref<200x1408xf32, #tpu.memory_space<vmem>>, vector<8x1408xf32>
    tpu.vector_store %arg12[%c120, %c0_20], %32 {strides = array<i32>} : memref<200x1408xf32, #tpu.memory_space<vmem>>, vector<8x1408xf32>,
    %c1373_i32 = arith.constant 1373 : i32
    %34 = tpu.dynamic_rotate %1 by %c1373_i32 dim 1 : vector<8x1408xf32>, i32 -> vector<8x1408xf32>
    %c128 = arith.constant 128 : index
    %c0_21 = arith.constant 0 : index
    %35 = vector.load %arg12[%c128, %c0_21] : memref<200x1408xf32, #tpu.memory_space<vmem>>, vector<8x1408xf32>
    tpu.vector_store %arg12[%c128, %c0_21], %34 {strides = array<i32>} : memref<200x1408xf32, #tpu.memory_space<vmem>>, vector<8x1408xf32>,
    %c1372_i32 = arith.constant 1372 : i32
    %36 = tpu.dynamic_rotate %1 by %c1372_i32 dim 1 : vector<8x1408xf32>, i32 -> vector<8x1408xf32>
    %c136 = arith.constant 136 : index
    %c0_22 = arith.constant 0 : index
    %37 = vector.load %arg12[%c136, %c0_22] : memref<200x1408xf32, #tpu.memory_space<vmem>>, vector<8x1408xf32>
    tpu.vector_store %arg12[%c136, %c0_22], %36 {strides = array<i32>} : memref<200x1408xf32, #tpu.memory_space<vmem>>, vector<8x1408xf32>,
    %c1371_i32 = arith.constant 1371 : i32
    %38 = tpu.dynamic_rotate %1 by %c1371_i32 dim 1 : vector<8x1408xf32>, i32 -> vector<8x1408xf32>
    %c144 = arith.constant 144 : index
    %c0_23 = arith.constant 0 : index
    %39 = vector.load %arg12[%c144, %c0_23] : memref<200x1408xf32, #tpu.memory_space<vmem>>, vector<8x1408xf32>
    tpu.vector_store %arg12[%c144, %c0_23], %38 {strides = array<i32>} : memref<200x1408xf32, #tpu.memory_space<vmem>>, vector<8x1408xf32>,
    %c1370_i32 = arith.constant 1370 : i32
    %40 = tpu.dynamic_rotate %1 by %c1370_i32 dim 1 : vector<8x1408xf32>, i32 -> vector<8x1408xf32>
    %c152 = arith.constant 152 : index
    %c0_24 = arith.constant 0 : index
    %41 = vector.load %arg12[%c152, %c0_24] : memref<200x1408xf32, #tpu.memory_space<vmem>>, vector<8x1408xf32>
    tpu.vector_store %arg12[%c152, %c0_24], %40 {strides = array<i32>} : memref<200x1408xf32, #tpu.memory_space<vmem>>, vector<8x1408xf32>,
    %c1338_i32 = arith.constant 1338 : i32
    %42 = tpu.dynamic_rotate %1 by %c1338_i32 dim 1 : vector<8x1408xf32>, i32 -> vector<8x1408xf32>
    %c160 = arith.constant 160 : index
    %c0_25 = arith.constant 0 : index
    %43 = vector.load %arg12[%c160, %c0_25] : memref<200x1408xf32, #tpu.memory_space<vmem>>, vector<8x1408xf32>
    tpu.vector_store %arg12[%c160, %c0_25], %42 {strides = array<i32>} : memref<200x1408xf32, #tpu.memory_space<vmem>>, vector<8x1408xf32>,
    %c1337_i32 = arith.constant 1337 : i32
    %44 = tpu.dynamic_rotate %1 by %c1337_i32 dim 1 : vector<8x1408xf32>, i32 -> vector<8x1408xf32>
    %c168 = arith.constant 168 : index
    %c0_26 = arith.constant 0 : index
    %45 = vector.load %arg12[%c168, %c0_26] : memref<200x1408xf32, #tpu.memory_space<vmem>>, vector<8x1408xf32>
    tpu.vector_store %arg12[%c168, %c0_26], %44 {strides = array<i32>} : memref<200x1408xf32, #tpu.memory_space<vmem>>, vector<8x1408xf32>,
    %c1336_i32 = arith.constant 1336 : i32
    %46 = tpu.dynamic_rotate %1 by %c1336_i32 dim 1 : vector<8x1408xf32>, i32 -> vector<8x1408xf32>
    %c176 = arith.constant 176 : index
    %c0_27 = arith.constant 0 : index
    %47 = vector.load %arg12[%c176, %c0_27] : memref<200x1408xf32, #tpu.memory_space<vmem>>, vector<8x1408xf32>
    tpu.vector_store %arg12[%c176, %c0_27], %46 {strides = array<i32>} : memref<200x1408xf32, #tpu.memory_space<vmem>>, vector<8x1408xf32>,
    %c1335_i32 = arith.constant 1335 : i32
    %48 = tpu.dynamic_rotate %1 by %c1335_i32 dim 1 : vector<8x1408xf32>, i32 -> vector<8x1408xf32>
    %c184 = arith.constant 184 : index
    %c0_28 = arith.constant 0 : index
    %49 = vector.load %arg12[%c184, %c0_28] : memref<200x1408xf32, #tpu.memory_space<vmem>>, vector<8x1408xf32>
    tpu.vector_store %arg12[%c184, %c0_28], %48 {strides = array<i32>} : memref<200x1408xf32, #tpu.memory_space<vmem>>, vector<8x1408xf32>,
    %c1334_i32 = arith.constant 1334 : i32
    %50 = tpu.dynamic_rotate %1 by %c1334_i32 dim 1 : vector<8x1408xf32>, i32 -> vector<8x1408xf32>
    %c192 = arith.constant 192 : index
    %c0_29 = arith.constant 0 : index
    %51 = vector.load %arg12[%c192, %c0_29] : memref<200x1408xf32, #tpu.memory_space<vmem>>, vector<8x1408xf32>
    tpu.vector_store %arg12[%c192, %c0_29], %50 {strides = array<i32>} : memref<200x1408xf32, #tpu.memory_space<vmem>>, vector<8x1408xf32>,
    %c0_30 = arith.constant 0 : index
    %c0_31 = arith.constant 0 : index
    %52 = vector.load %arg3[%c0_30, %c0_31] : memref<8x200xf32, #tpu.memory_space<vmem>>, vector<8x200xf32>
    %c0_32 = arith.constant 0 : index
    %c0_33 = arith.constant 0 : index
    %53 = vector.load %arg4[%c0_32, %c0_33] : memref<8x1xf32, #tpu.memory_space<vmem>>, vector<8x1xf32>
    %c0_34 = arith.constant 0 : index
    %c0_35 = arith.constant 0 : index
    %54 = vector.load %arg12[%c0_34, %c0_35] : memref<200x1408xf32, #tpu.memory_space<vmem>>, vector<200x1408xf32>
    %cst = arith.constant dense<0.000000e+00> : vector<8x1408xf32>
    %55 = tpu.matmul %52, %54, %cst {dimension_numbers = #tpu.dot_dimension_numbers<[1], [0], [0], [1], [0, 0, 1, 1], [], []>} : vector<8x200xf32>, vector<200x1408xf32>, vector<8x1408xf32> -> vector<8x1408xf32>
    %56 = vector.broadcast %53 : vector<8x1xf32> to vector<8x1408xf32>
    %57 = arith.addf %55, %56 : vector<8x1408xf32>
    %cst_36 = arith.constant 0.000000e+00 : f32
    %58 = vector.broadcast %cst_36 : f32 to vector<8x1408xf32>
    %59 = arith.maximumf %57, %58 : vector<8x1408xf32>
    %60 = vector.broadcast %2 : vector<1x1408xf32> to vector<8x1408xf32>
    %61 = arith.mulf %59, %60 : vector<8x1408xf32>
    %c37_i32_37 = arith.constant 37 : i32
    %62 = tpu.dynamic_rotate %61 by %c37_i32_37 dim 1 : vector<8x1408xf32>, i32 -> vector<8x1408xf32>
    %c0_38 = arith.constant 0 : index
    %c0_39 = arith.constant 0 : index
    %63 = vector.load %arg12[%c0_38, %c0_39] : memref<200x1408xf32, #tpu.memory_space<vmem>>, vector<8x1408xf32>
    tpu.vector_store %arg12[%c0_38, %c0_39], %62 {strides = array<i32>} : memref<200x1408xf32, #tpu.memory_space<vmem>>, vector<8x1408xf32>,
    %c36_i32_40 = arith.constant 36 : i32
    %64 = tpu.dynamic_rotate %61 by %c36_i32_40 dim 1 : vector<8x1408xf32>, i32 -> vector<8x1408xf32>
    %c8_41 = arith.constant 8 : index
    %c0_42 = arith.constant 0 : index
    %65 = vector.load %arg12[%c8_41, %c0_42] : memref<200x1408xf32, #tpu.memory_space<vmem>>, vector<8x1408xf32>
    tpu.vector_store %arg12[%c8_41, %c0_42], %64 {strides = array<i32>} : memref<200x1408xf32, #tpu.memory_space<vmem>>, vector<8x1408xf32>,
    %c35_i32_43 = arith.constant 35 : i32
    %66 = tpu.dynamic_rotate %61 by %c35_i32_43 dim 1 : vector<8x1408xf32>, i32 -> vector<8x1408xf32>
    %c16_44 = arith.constant 16 : index
    %c0_45 = arith.constant 0 : index
    %67 = vector.load %arg12[%c16_44, %c0_45] : memref<200x1408xf32, #tpu.memory_space<vmem>>, vector<8x1408xf32>
    tpu.vector_store %arg12[%c16_44, %c0_45], %66 {strides = array<i32>} : memref<200x1408xf32, #tpu.memory_space<vmem>>, vector<8x1408xf32>,
    %c1_i32_46 = arith.constant 1 : i32
    %68 = tpu.dynamic_rotate %61 by %c1_i32_46 dim 1 : vector<8x1408xf32>, i32 -> vector<8x1408xf32>
    %c24_47 = arith.constant 24 : index
    %c0_48 = arith.constant 0 : index
    %69 = vector.load %arg12[%c24_47, %c0_48] : memref<200x1408xf32, #tpu.memory_space<vmem>>, vector<8x1408xf32>
    tpu.vector_store %arg12[%c24_47, %c0_48], %68 {strides = array<i32>} : memref<200x1408xf32, #tpu.memory_space<vmem>>, vector<8x1408xf32>,
    %c32_49 = arith.constant 32 : index
    %c0_50 = arith.constant 0 : index
    %70 = vector.load %arg12[%c32_49, %c0_50] : memref<200x1408xf32, #tpu.memory_space<vmem>>, vector<8x1408xf32>
    tpu.vector_store %arg12[%c32_49, %c0_50], %61 {strides = array<i32>} : memref<200x1408xf32, #tpu.memory_space<vmem>>, vector<8x1408xf32>,
    %c1407_i32_51 = arith.constant 1407 : i32
    %71 = tpu.dynamic_rotate %61 by %c1407_i32_51 dim 1 : vector<8x1408xf32>, i32 -> vector<8x1408xf32>
    %c40_52 = arith.constant 40 : index
    %c0_53 = arith.constant 0 : index
    %72 = vector.load %arg12[%c40_52, %c0_53] : memref<200x1408xf32, #tpu.memory_space<vmem>>, vector<8x1408xf32>
    tpu.vector_store %arg12[%c40_52, %c0_53], %71 {strides = array<i32>} : memref<200x1408xf32, #tpu.memory_space<vmem>>, vector<8x1408xf32>,
    %c1373_i32_54 = arith.constant 1373 : i32
    %73 = tpu.dynamic_rotate %61 by %c1373_i32_54 dim 1 : vector<8x1408xf32>, i32 -> vector<8x1408xf32>
    %c48_55 = arith.constant 48 : index
    %c0_56 = arith.constant 0 : index
    %74 = vector.load %arg12[%c48_55, %c0_56] : memref<200x1408xf32, #tpu.memory_space<vmem>>, vector<8x1408xf32>
    tpu.vector_store %arg12[%c48_55, %c0_56], %73 {strides = array<i32>} : memref<200x1408xf32, #tpu.memory_space<vmem>>, vector<8x1408xf32>,
    %c1372_i32_57 = arith.constant 1372 : i32
    %75 = tpu.dynamic_rotate %61 by %c1372_i32_57 dim 1 : vector<8x1408xf32>, i32 -> vector<8x1408xf32>
    %c56_58 = arith.constant 56 : index
    %c0_59 = arith.constant 0 : index
    %76 = vector.load %arg12[%c56_58, %c0_59] : memref<200x1408xf32, #tpu.memory_space<vmem>>, vector<8x1408xf32>
    tpu.vector_store %arg12[%c56_58, %c0_59], %75 {strides = array<i32>} : memref<200x1408xf32, #tpu.memory_space<vmem>>, vector<8x1408xf32>,
    %c1371_i32_60 = arith.constant 1371 : i32
    %77 = tpu.dynamic_rotate %61 by %c1371_i32_60 dim 1 : vector<8x1408xf32>, i32 -> vector<8x1408xf32>
    %c64_61 = arith.constant 64 : index
    %c0_62 = arith.constant 0 : index
    %78 = vector.load %arg12[%c64_61, %c0_62] : memref<200x1408xf32, #tpu.memory_space<vmem>>, vector<8x1408xf32>
    tpu.vector_store %arg12[%c64_61, %c0_62], %77 {strides = array<i32>} : memref<200x1408xf32, #tpu.memory_space<vmem>>, vector<8x1408xf32>,
    %c0_63 = arith.constant 0 : index
    %c0_64 = arith.constant 0 : index
    %79 = vector.load %arg5[%c0_63, %c0_64] : memref<8x72xf32, #tpu.memory_space<vmem>>, vector<8x72xf32>
    %c0_65 = arith.constant 0 : index
    %c0_66 = arith.constant 0 : index
    %80 = vector.load %arg6[%c0_65, %c0_66] : memref<8x1xf32, #tpu.memory_space<vmem>>, vector<8x1xf32>
    %c0_67 = arith.constant 0 : index
    %c0_68 = arith.constant 0 : index
    %81 = vector.load %arg12[%c0_67, %c0_68] : memref<200x1408xf32, #tpu.memory_space<vmem>>, vector<72x1408xf32>
    %cst_69 = arith.constant dense<0.000000e+00> : vector<8x1408xf32>
    %82 = tpu.matmul %79, %81, %cst_69 {dimension_numbers = #tpu.dot_dimension_numbers<[1], [0], [0], [1], [0, 0, 1, 1], [], []>} : vector<8x72xf32>, vector<72x1408xf32>, vector<8x1408xf32> -> vector<8x1408xf32>
    %83 = vector.broadcast %80 : vector<8x1xf32> to vector<8x1408xf32>
    %84 = arith.addf %82, %83 : vector<8x1408xf32>
    %cst_70 = arith.constant 0.000000e+00 : f32
    %85 = vector.broadcast %cst_70 : f32 to vector<8x1408xf32>
    %86 = arith.maximumf %84, %85 : vector<8x1408xf32>
    %87 = vector.broadcast %2 : vector<1x1408xf32> to vector<8x1408xf32>
    %88 = arith.mulf %86, %87 : vector<8x1408xf32>
    %c37_i32_71 = arith.constant 37 : i32
    %89 = tpu.dynamic_rotate %88 by %c37_i32_71 dim 1 : vector<8x1408xf32>, i32 -> vector<8x1408xf32>
    %c0_72 = arith.constant 0 : index
    %c0_73 = arith.constant 0 : index
    %90 = vector.load %arg12[%c0_72, %c0_73] : memref<200x1408xf32, #tpu.memory_space<vmem>>, vector<8x1408xf32>
    tpu.vector_store %arg12[%c0_72, %c0_73], %89 {strides = array<i32>} : memref<200x1408xf32, #tpu.memory_space<vmem>>, vector<8x1408xf32>,
    %c36_i32_74 = arith.constant 36 : i32
    %91 = tpu.dynamic_rotate %88 by %c36_i32_74 dim 1 : vector<8x1408xf32>, i32 -> vector<8x1408xf32>
    %c8_75 = arith.constant 8 : index
    %c0_76 = arith.constant 0 : index
    %92 = vector.load %arg12[%c8_75, %c0_76] : memref<200x1408xf32, #tpu.memory_space<vmem>>, vector<8x1408xf32>
    tpu.vector_store %arg12[%c8_75, %c0_76], %91 {strides = array<i32>} : memref<200x1408xf32, #tpu.memory_space<vmem>>, vector<8x1408xf32>,
    %c35_i32_77 = arith.constant 35 : i32
    %93 = tpu.dynamic_rotate %88 by %c35_i32_77 dim 1 : vector<8x1408xf32>, i32 -> vector<8x1408xf32>
    %c16_78 = arith.constant 16 : index
    %c0_79 = arith.constant 0 : index
    %94 = vector.load %arg12[%c16_78, %c0_79] : memref<200x1408xf32, #tpu.memory_space<vmem>>, vector<8x1408xf32>
    tpu.vector_store %arg12[%c16_78, %c0_79], %93 {strides = array<i32>} : memref<200x1408xf32, #tpu.memory_space<vmem>>, vector<8x1408xf32>,
    %c1_i32_80 = arith.constant 1 : i32
    %95 = tpu.dynamic_rotate %88 by %c1_i32_80 dim 1 : vector<8x1408xf32>, i32 -> vector<8x1408xf32>
    %c24_81 = arith.constant 24 : index
    %c0_82 = arith.constant 0 : index
    %96 = vector.load %arg12[%c24_81, %c0_82] : memref<200x1408xf32, #tpu.memory_space<vmem>>, vector<8x1408xf32>
    tpu.vector_store %arg12[%c24_81, %c0_82], %95 {strides = array<i32>} : memref<200x1408xf32, #tpu.memory_space<vmem>>, vector<8x1408xf32>,
    %c32_83 = arith.constant 32 : index
    %c0_84 = arith.constant 0 : index
    %97 = vector.load %arg12[%c32_83, %c0_84] : memref<200x1408xf32, #tpu.memory_space<vmem>>, vector<8x1408xf32>
    tpu.vector_store %arg12[%c32_83, %c0_84], %88 {strides = array<i32>} : memref<200x1408xf32, #tpu.memory_space<vmem>>, vector<8x1408xf32>,
    %c1407_i32_85 = arith.constant 1407 : i32
    %98 = tpu.dynamic_rotate %88 by %c1407_i32_85 dim 1 : vector<8x1408xf32>, i32 -> vector<8x1408xf32>
    %c40_86 = arith.constant 40 : index
    %c0_87 = arith.constant 0 : index
    %99 = vector.load %arg12[%c40_86, %c0_87] : memref<200x1408xf32, #tpu.memory_space<vmem>>, vector<8x1408xf32>
    tpu.vector_store %arg12[%c40_86, %c0_87], %98 {strides = array<i32>} : memref<200x1408xf32, #tpu.memory_space<vmem>>, vector<8x1408xf32>,
    %c1373_i32_88 = arith.constant 1373 : i32
    %100 = tpu.dynamic_rotate %88 by %c1373_i32_88 dim 1 : vector<8x1408xf32>, i32 -> vector<8x1408xf32>
    %c48_89 = arith.constant 48 : index
    %c0_90 = arith.constant 0 : index
    %101 = vector.load %arg12[%c48_89, %c0_90] : memref<200x1408xf32, #tpu.memory_space<vmem>>, vector<8x1408xf32>
    tpu.vector_store %arg12[%c48_89, %c0_90], %100 {strides = array<i32>} : memref<200x1408xf32, #tpu.memory_space<vmem>>, vector<8x1408xf32>,
    %c1372_i32_91 = arith.constant 1372 : i32
    %102 = tpu.dynamic_rotate %88 by %c1372_i32_91 dim 1 : vector<8x1408xf32>, i32 -> vector<8x1408xf32>
    %c56_92 = arith.constant 56 : index
    %c0_93 = arith.constant 0 : index
    %103 = vector.load %arg12[%c56_92, %c0_93] : memref<200x1408xf32, #tpu.memory_space<vmem>>, vector<8x1408xf32>
    tpu.vector_store %arg12[%c56_92, %c0_93], %102 {strides = array<i32>} : memref<200x1408xf32, #tpu.memory_space<vmem>>, vector<8x1408xf32>,
    %c1371_i32_94 = arith.constant 1371 : i32
    %104 = tpu.dynamic_rotate %88 by %c1371_i32_94 dim 1 : vector<8x1408xf32>, i32 -> vector<8x1408xf32>
    %c64_95 = arith.constant 64 : index
    %c0_96 = arith.constant 0 : index
    %105 = vector.load %arg12[%c64_95, %c0_96] : memref<200x1408xf32, #tpu.memory_space<vmem>>, vector<8x1408xf32>
    tpu.vector_store %arg12[%c64_95, %c0_96], %104 {strides = array<i32>} : memref<200x1408xf32, #tpu.memory_space<vmem>>, vector<8x1408xf32>,
    %c0_97 = arith.constant 0 : index
    %c0_98 = arith.constant 0 : index
    %106 = vector.load %arg7[%c0_97, %c0_98] : memref<8x72xf32, #tpu.memory_space<vmem>>, vector<8x72xf32>
    %c0_99 = arith.constant 0 : index
    %c0_100 = arith.constant 0 : index
    %107 = vector.load %arg8[%c0_99, %c0_100] : memref<8x1xf32, #tpu.memory_space<vmem>>, vector<8x1xf32>
    %c0_101 = arith.constant 0 : index
    %c0_102 = arith.constant 0 : index
    %108 = vector.load %arg12[%c0_101, %c0_102] : memref<200x1408xf32, #tpu.memory_space<vmem>>, vector<72x1408xf32>
    %cst_103 = arith.constant dense<0.000000e+00> : vector<8x1408xf32>
    %109 = tpu.matmul %106, %108, %cst_103 {dimension_numbers = #tpu.dot_dimension_numbers<[1], [0], [0], [1], [0, 0, 1, 1], [], []>} : vector<8x72xf32>, vector<72x1408xf32>, vector<8x1408xf32> -> vector<8x1408xf32>
    %110 = vector.broadcast %107 : vector<8x1xf32> to vector<8x1408xf32>
    %111 = arith.addf %109, %110 : vector<8x1408xf32>
    %cst_104 = arith.constant 0.000000e+00 : f32
    %112 = vector.broadcast %cst_104 : f32 to vector<8x1408xf32>
    %113 = arith.maximumf %111, %112 : vector<8x1408xf32>
    %114 = vector.broadcast %2 : vector<1x1408xf32> to vector<8x1408xf32>
    %115 = arith.mulf %113, %114 : vector<8x1408xf32>
    %c74_i32_105 = arith.constant 74 : i32
    %116 = tpu.dynamic_rotate %115 by %c74_i32_105 dim 1 : vector<8x1408xf32>, i32 -> vector<8x1408xf32>
    %c0_106 = arith.constant 0 : index
    %c0_107 = arith.constant 0 : index
    %117 = vector.load %arg12[%c0_106, %c0_107] : memref<200x1408xf32, #tpu.memory_space<vmem>>, vector<8x1408xf32>
    tpu.vector_store %arg12[%c0_106, %c0_107], %116 {strides = array<i32>} : memref<200x1408xf32, #tpu.memory_space<vmem>>, vector<8x1408xf32>,
    %c73_i32_108 = arith.constant 73 : i32
    %118 = tpu.dynamic_rotate %115 by %c73_i32_108 dim 1 : vector<8x1408xf32>, i32 -> vector<8x1408xf32>
    %c8_109 = arith.constant 8 : index
    %c0_110 = arith.constant 0 : index
    %119 = vector.load %arg12[%c8_109, %c0_110] : memref<200x1408xf32, #tpu.memory_space<vmem>>, vector<8x1408xf32>
    tpu.vector_store %arg12[%c8_109, %c0_110], %118 {strides = array<i32>} : memref<200x1408xf32, #tpu.memory_space<vmem>>, vector<8x1408xf32>,
    %c72_i32_111 = arith.constant 72 : i32
    %120 = tpu.dynamic_rotate %115 by %c72_i32_111 dim 1 : vector<8x1408xf32>, i32 -> vector<8x1408xf32>
    %c16_112 = arith.constant 16 : index
    %c0_113 = arith.constant 0 : index
    %121 = vector.load %arg12[%c16_112, %c0_113] : memref<200x1408xf32, #tpu.memory_space<vmem>>, vector<8x1408xf32>
    tpu.vector_store %arg12[%c16_112, %c0_113], %120 {strides = array<i32>} : memref<200x1408xf32, #tpu.memory_space<vmem>>, vector<8x1408xf32>,
    %c71_i32_114 = arith.constant 71 : i32
    %122 = tpu.dynamic_rotate %115 by %c71_i32_114 dim 1 : vector<8x1408xf32>, i32 -> vector<8x1408xf32>
    %c24_115 = arith.constant 24 : index
    %c0_116 = arith.constant 0 : index
    %123 = vector.load %arg12[%c24_115, %c0_116] : memref<200x1408xf32, #tpu.memory_space<vmem>>, vector<8x1408xf32>
    tpu.vector_store %arg12[%c24_115, %c0_116], %122 {strides = array<i32>} : memref<200x1408xf32, #tpu.memory_space<vmem>>, vector<8x1408xf32>,
    %c70_i32_117 = arith.constant 70 : i32
    %124 = tpu.dynamic_rotate %115 by %c70_i32_117 dim 1 : vector<8x1408xf32>, i32 -> vector<8x1408xf32>
    %c32_118 = arith.constant 32 : index
    %c0_119 = arith.constant 0 : index
    %125 = vector.load %arg12[%c32_118, %c0_119] : memref<200x1408xf32, #tpu.memory_space<vmem>>, vector<8x1408xf32>
    tpu.vector_store %arg12[%c32_118, %c0_119], %124 {strides = array<i32>} : memref<200x1408xf32, #tpu.memory_space<vmem>>, vector<8x1408xf32>,
    %c38_i32_120 = arith.constant 38 : i32
    %126 = tpu.dynamic_rotate %115 by %c38_i32_120 dim 1 : vector<8x1408xf32>, i32 -> vector<8x1408xf32>
    %c40_121 = arith.constant 40 : index
    %c0_122 = arith.constant 0 : index
    %127 = vector.load %arg12[%c40_121, %c0_122] : memref<200x1408xf32, #tpu.memory_space<vmem>>, vector<8x1408xf32>
    tpu.vector_store %arg12[%c40_121, %c0_122], %126 {strides = array<i32>} : memref<200x1408xf32, #tpu.memory_space<vmem>>, vector<8x1408xf32>,
    %c37_i32_123 = arith.constant 37 : i32
    %128 = tpu.dynamic_rotate %115 by %c37_i32_123 dim 1 : vector<8x1408xf32>, i32 -> vector<8x1408xf32>
    %c48_124 = arith.constant 48 : index
    %c0_125 = arith.constant 0 : index
    %129 = vector.load %arg12[%c48_124, %c0_125] : memref<200x1408xf32, #tpu.memory_space<vmem>>, vector<8x1408xf32>
    tpu.vector_store %arg12[%c48_124, %c0_125], %128 {strides = array<i32>} : memref<200x1408xf32, #tpu.memory_space<vmem>>, vector<8x1408xf32>,
    %c36_i32_126 = arith.constant 36 : i32
    %130 = tpu.dynamic_rotate %115 by %c36_i32_126 dim 1 : vector<8x1408xf32>, i32 -> vector<8x1408xf32>
    %c56_127 = arith.constant 56 : index
    %c0_128 = arith.constant 0 : index
    %131 = vector.load %arg12[%c56_127, %c0_128] : memref<200x1408xf32, #tpu.memory_space<vmem>>, vector<8x1408xf32>
    tpu.vector_store %arg12[%c56_127, %c0_128], %130 {strides = array<i32>} : memref<200x1408xf32, #tpu.memory_space<vmem>>, vector<8x1408xf32>,
    %c35_i32_129 = arith.constant 35 : i32
    %132 = tpu.dynamic_rotate %115 by %c35_i32_129 dim 1 : vector<8x1408xf32>, i32 -> vector<8x1408xf32>
    %c64_130 = arith.constant 64 : index
    %c0_131 = arith.constant 0 : index
    %133 = vector.load %arg12[%c64_130, %c0_131] : memref<200x1408xf32, #tpu.memory_space<vmem>>, vector<8x1408xf32>
    tpu.vector_store %arg12[%c64_130, %c0_131], %132 {strides = array<i32>} : memref<200x1408xf32, #tpu.memory_space<vmem>>, vector<8x1408xf32>,
    %c34_i32_132 = arith.constant 34 : i32
    %134 = tpu.dynamic_rotate %115 by %c34_i32_132 dim 1 : vector<8x1408xf32>, i32 -> vector<8x1408xf32>
    %c72_133 = arith.constant 72 : index
    %c0_134 = arith.constant 0 : index
    %135 = vector.load %arg12[%c72_133, %c0_134] : memref<200x1408xf32, #tpu.memory_space<vmem>>, vector<8x1408xf32>
    tpu.vector_store %arg12[%c72_133, %c0_134], %134 {strides = array<i32>} : memref<200x1408xf32, #tpu.memory_space<vmem>>, vector<8x1408xf32>,
    %c2_i32_135 = arith.constant 2 : i32
    %136 = tpu.dynamic_rotate %115 by %c2_i32_135 dim 1 : vector<8x1408xf32>, i32 -> vector<8x1408xf32>
    %c80_136 = arith.constant 80 : index
    %c0_137 = arith.constant 0 : index
    %137 = vector.load %arg12[%c80_136, %c0_137] : memref<200x1408xf32, #tpu.memory_space<vmem>>, vector<8x1408xf32>
    tpu.vector_store %arg12[%c80_136, %c0_137], %136 {strides = array<i32>} : memref<200x1408xf32, #tpu.memory_space<vmem>>, vector<8x1408xf32>,
    %c1_i32_138 = arith.constant 1 : i32
    %138 = tpu.dynamic_rotate %115 by %c1_i32_138 dim 1 : vector<8x1408xf32>, i32 -> vector<8x1408xf32>
    %c88_139 = arith.constant 88 : index
    %c0_140 = arith.constant 0 : index
    %139 = vector.load %arg12[%c88_139, %c0_140] : memref<200x1408xf32, #tpu.memory_space<vmem>>, vector<8x1408xf32>
    tpu.vector_store %arg12[%c88_139, %c0_140], %138 {strides = array<i32>} : memref<200x1408xf32, #tpu.memory_space<vmem>>, vector<8x1408xf32>,
    %c96_141 = arith.constant 96 : index
    %c0_142 = arith.constant 0 : index
    %140 = vector.load %arg12[%c96_141, %c0_142] : memref<200x1408xf32, #tpu.memory_space<vmem>>, vector<8x1408xf32>
    tpu.vector_store %arg12[%c96_141, %c0_142], %115 {strides = array<i32>} : memref<200x1408xf32, #tpu.memory_space<vmem>>, vector<8x1408xf32>,
    %c1407_i32_143 = arith.constant 1407 : i32
    %141 = tpu.dynamic_rotate %115 by %c1407_i32_143 dim 1 : vector<8x1408xf32>, i32 -> vector<8x1408xf32>
    %c104_144 = arith.constant 104 : index
    %c0_145 = arith.constant 0 : index
    %142 = vector.load %arg12[%c104_144, %c0_145] : memref<200x1408xf32, #tpu.memory_space<vmem>>, vector<8x1408xf32>
    tpu.vector_store %arg12[%c104_144, %c0_145], %141 {strides = array<i32>} : memref<200x1408xf32, #tpu.memory_space<vmem>>, vector<8x1408xf32>,
    %c1406_i32_146 = arith.constant 1406 : i32
    %143 = tpu.dynamic_rotate %115 by %c1406_i32_146 dim 1 : vector<8x1408xf32>, i32 -> vector<8x1408xf32>
    %c112_147 = arith.constant 112 : index
    %c0_148 = arith.constant 0 : index
    %144 = vector.load %arg12[%c112_147, %c0_148] : memref<200x1408xf32, #tpu.memory_space<vmem>>, vector<8x1408xf32>
    tpu.vector_store %arg12[%c112_147, %c0_148], %143 {strides = array<i32>} : memref<200x1408xf32, #tpu.memory_space<vmem>>, vector<8x1408xf32>,
    %c1374_i32_149 = arith.constant 1374 : i32
    %145 = tpu.dynamic_rotate %115 by %c1374_i32_149 dim 1 : vector<8x1408xf32>, i32 -> vector<8x1408xf32>
    %c120_150 = arith.constant 120 : index
    %c0_151 = arith.constant 0 : index
    %146 = vector.load %arg12[%c120_150, %c0_151] : memref<200x1408xf32, #tpu.memory_space<vmem>>, vector<8x1408xf32>
    tpu.vector_store %arg12[%c120_150, %c0_151], %145 {strides = array<i32>} : memref<200x1408xf32, #tpu.memory_space<vmem>>, vector<8x1408xf32>,
    %c1373_i32_152 = arith.constant 1373 : i32
    %147 = tpu.dynamic_rotate %115 by %c1373_i32_152 dim 1 : vector<8x1408xf32>, i32 -> vector<8x1408xf32>
    %c128_153 = arith.constant 128 : index
    %c0_154 = arith.constant 0 : index
    %148 = vector.load %arg12[%c128_153, %c0_154] : memref<200x1408xf32, #tpu.memory_space<vmem>>, vector<8x1408xf32>
    tpu.vector_store %arg12[%c128_153, %c0_154], %147 {strides = array<i32>} : memref<200x1408xf32, #tpu.memory_space<vmem>>, vector<8x1408xf32>,
    %c1372_i32_155 = arith.constant 1372 : i32
    %149 = tpu.dynamic_rotate %115 by %c1372_i32_155 dim 1 : vector<8x1408xf32>, i32 -> vector<8x1408xf32>
    %c136_156 = arith.constant 136 : index
    %c0_157 = arith.constant 0 : index
    %150 = vector.load %arg12[%c136_156, %c0_157] : memref<200x1408xf32, #tpu.memory_space<vmem>>, vector<8x1408xf32>
    tpu.vector_store %arg12[%c136_156, %c0_157], %149 {strides = array<i32>} : memref<200x1408xf32, #tpu.memory_space<vmem>>, vector<8x1408xf32>,
    %c1371_i32_158 = arith.constant 1371 : i32
    %151 = tpu.dynamic_rotate %115 by %c1371_i32_158 dim 1 : vector<8x1408xf32>, i32 -> vector<8x1408xf32>
    %c144_159 = arith.constant 144 : index
    %c0_160 = arith.constant 0 : index
    %152 = vector.load %arg12[%c144_159, %c0_160] : memref<200x1408xf32, #tpu.memory_space<vmem>>, vector<8x1408xf32>
    tpu.vector_store %arg12[%c144_159, %c0_160], %151 {strides = array<i32>} : memref<200x1408xf32, #tpu.memory_space<vmem>>, vector<8x1408xf32>,
    %c1370_i32_161 = arith.constant 1370 : i32
    %153 = tpu.dynamic_rotate %115 by %c1370_i32_161 dim 1 : vector<8x1408xf32>, i32 -> vector<8x1408xf32>
    %c152_162 = arith.constant 152 : index
    %c0_163 = arith.constant 0 : index
    %154 = vector.load %arg12[%c152_162, %c0_163] : memref<200x1408xf32, #tpu.memory_space<vmem>>, vector<8x1408xf32>
    tpu.vector_store %arg12[%c152_162, %c0_163], %153 {strides = array<i32>} : memref<200x1408xf32, #tpu.memory_space<vmem>>, vector<8x1408xf32>,
    %c1338_i32_164 = arith.constant 1338 : i32
    %155 = tpu.dynamic_rotate %115 by %c1338_i32_164 dim 1 : vector<8x1408xf32>, i32 -> vector<8x1408xf32>
    %c160_165 = arith.constant 160 : index
    %c0_166 = arith.constant 0 : index
    %156 = vector.load %arg12[%c160_165, %c0_166] : memref<200x1408xf32, #tpu.memory_space<vmem>>, vector<8x1408xf32>
    tpu.vector_store %arg12[%c160_165, %c0_166], %155 {strides = array<i32>} : memref<200x1408xf32, #tpu.memory_space<vmem>>, vector<8x1408xf32>,
    %c1337_i32_167 = arith.constant 1337 : i32
    %157 = tpu.dynamic_rotate %115 by %c1337_i32_167 dim 1 : vector<8x1408xf32>, i32 -> vector<8x1408xf32>
    %c168_168 = arith.constant 168 : index
    %c0_169 = arith.constant 0 : index
    %158 = vector.load %arg12[%c168_168, %c0_169] : memref<200x1408xf32, #tpu.memory_space<vmem>>, vector<8x1408xf32>
    tpu.vector_store %arg12[%c168_168, %c0_169], %157 {strides = array<i32>} : memref<200x1408xf32, #tpu.memory_space<vmem>>, vector<8x1408xf32>,
    %c1336_i32_170 = arith.constant 1336 : i32
    %159 = tpu.dynamic_rotate %115 by %c1336_i32_170 dim 1 : vector<8x1408xf32>, i32 -> vector<8x1408xf32>
    %c176_171 = arith.constant 176 : index
    %c0_172 = arith.constant 0 : index
    %160 = vector.load %arg12[%c176_171, %c0_172] : memref<200x1408xf32, #tpu.memory_space<vmem>>, vector<8x1408xf32>
    tpu.vector_store %arg12[%c176_171, %c0_172], %159 {strides = array<i32>} : memref<200x1408xf32, #tpu.memory_space<vmem>>, vector<8x1408xf32>,
    %c1335_i32_173 = arith.constant 1335 : i32
    %161 = tpu.dynamic_rotate %115 by %c1335_i32_173 dim 1 : vector<8x1408xf32>, i32 -> vector<8x1408xf32>
    %c184_174 = arith.constant 184 : index
    %c0_175 = arith.constant 0 : index
    %162 = vector.load %arg12[%c184_174, %c0_175] : memref<200x1408xf32, #tpu.memory_space<vmem>>, vector<8x1408xf32>
    tpu.vector_store %arg12[%c184_174, %c0_175], %161 {strides = array<i32>} : memref<200x1408xf32, #tpu.memory_space<vmem>>, vector<8x1408xf32>,
    %c1334_i32_176 = arith.constant 1334 : i32
    %163 = tpu.dynamic_rotate %115 by %c1334_i32_176 dim 1 : vector<8x1408xf32>, i32 -> vector<8x1408xf32>
    %c192_177 = arith.constant 192 : index
    %c0_178 = arith.constant 0 : index
    %164 = vector.load %arg12[%c192_177, %c0_178] : memref<200x1408xf32, #tpu.memory_space<vmem>>, vector<8x1408xf32>
    tpu.vector_store %arg12[%c192_177, %c0_178], %163 {strides = array<i32>} : memref<200x1408xf32, #tpu.memory_space<vmem>>, vector<8x1408xf32>,
    %c0_179 = arith.constant 0 : index
    %c0_180 = arith.constant 0 : index
    %165 = vector.load %arg9[%c0_179, %c0_180] : memref<8x200xf32, #tpu.memory_space<vmem>>, vector<8x200xf32>
    %c0_181 = arith.constant 0 : index
    %c0_182 = arith.constant 0 : index
    %166 = vector.load %arg10[%c0_181, %c0_182] : memref<8x1xf32, #tpu.memory_space<vmem>>, vector<8x1xf32>
    %c0_183 = arith.constant 0 : index
    %c0_184 = arith.constant 0 : index
    %167 = vector.load %arg12[%c0_183, %c0_184] : memref<200x1408xf32, #tpu.memory_space<vmem>>, vector<200x1408xf32>
    %cst_185 = arith.constant dense<0.000000e+00> : vector<8x1408xf32>
    %168 = tpu.matmul %165, %167, %cst_185 {dimension_numbers = #tpu.dot_dimension_numbers<[1], [0], [0], [1], [0, 0, 1, 1], [], []>} : vector<8x200xf32>, vector<200x1408xf32>, vector<8x1408xf32> -> vector<8x1408xf32>
    %169 = vector.broadcast %166 : vector<8x1xf32> to vector<8x1408xf32>
    %170 = arith.addf %168, %169 : vector<8x1408xf32>
    %171 = arith.addf %170, %1 : vector<8x1408xf32>
    %c0_186 = arith.constant 0 : index
    %c0_187 = arith.constant 0 : index
    %c0_188 = arith.constant 0 : index
    %172 = vector.load %arg11[%c0_186, %c0_187, %c0_188] : memref<1x8x1408xf32, #tpu.memory_space<vmem>>, vector<1x8x1408xf32>
    %173 = vector.shape_cast %172 : vector<1x8x1408xf32> to vector<8x1408xf32>
    %174 = vector.shape_cast %171 : vector<8x1408xf32> to vector<1x8x1408xf32>
    tpu.vector_store %arg11[%c0_186, %c0_187, %c0_188], %174 {strides = array<i32>} : memref<1x8x1408xf32, #tpu.memory_space<vmem>>, vector<1x8x1408xf32>,
    return
  }
  func.func @transform_0(%arg0: i32) -> (i32, i32, i32) {
    %c0_i32 = arith.constant 0 : i32
    %c0_i32_0 = arith.constant 0 : i32
    %c0_i32_1 = arith.constant 0 : i32
    return %arg0, %c0_i32, %c0_i32_0 : i32, i32, i32
  }
  func.func @transform_1(%arg0: i32) -> (i32, i32) {
    %c0_i32 = arith.constant 0 : i32
    %c0_i32_0 = arith.constant 0 : i32
    %c0_i32_1 = arith.constant 0 : i32
    return %c0_i32, %c0_i32_0 : i32, i32
  }
  func.func @transform_2(%arg0: i32) -> (i32, i32) {
    %c0_i32 = arith.constant 0 : i32
    %c0_i32_0 = arith.constant 0 : i32
    %c0_i32_1 = arith.constant 0 : i32
    return %c0_i32, %c0_i32_0 : i32, i32
  }
  func.func @transform_3(%arg0: i32) -> (i32, i32) {
    %c0_i32 = arith.constant 0 : i32
    %c0_i32_0 = arith.constant 0 : i32
    %c0_i32_1 = arith.constant 0 : i32
    return %c0_i32, %c0_i32_0 : i32, i32
  }
  func.func @transform_4(%arg0: i32) -> (i32, i32) {
    %c0_i32 = arith.constant 0 : i32
    %c0_i32_0 = arith.constant 0 : i32
    %c0_i32_1 = arith.constant 0 : i32
    return %c0_i32, %c0_i32_0 : i32, i32
  }
  func.func @transform_5(%arg0: i32) -> (i32, i32) {
    %c0_i32 = arith.constant 0 : i32
    %c0_i32_0 = arith.constant 0 : i32
    %c0_i32_1 = arith.constant 0 : i32
    return %c0_i32, %c0_i32_0 : i32, i32
  }
  func.func @transform_6(%arg0: i32) -> (i32, i32) {
    %c0_i32 = arith.constant 0 : i32
    %c0_i32_0 = arith.constant 0 : i32
    %c0_i32_1 = arith.constant 0 : i32
    return %c0_i32, %c0_i32_0 : i32, i32
  }
  func.func @transform_7(%arg0: i32) -> (i32, i32) {
    %c0_i32 = arith.constant 0 : i32
    %c0_i32_0 = arith.constant 0 : i32
    %c0_i32_1 = arith.constant 0 : i32
    return %c0_i32, %c0_i32_0 : i32, i32
  }
  func.func @transform_8(%arg0: i32) -> (i32, i32) {
    %c0_i32 = arith.constant 0 : i32
    %c0_i32_0 = arith.constant 0 : i32
    %c0_i32_1 = arith.constant 0 : i32
    return %c0_i32, %c0_i32_0 : i32, i32
  }
  func.func @transform_9(%arg0: i32) -> (i32, i32) {
    %c0_i32 = arith.constant 0 : i32
    %c0_i32_0 = arith.constant 0 : i32
    %c0_i32_1 = arith.constant 0 : i32
    return %c0_i32, %c0_i32_0 : i32, i32
  }
  func.func @transform_10(%arg0: i32) -> (i32, i32, i32) {
    %c0_i32 = arith.constant 0 : i32
    %c0_i32_0 = arith.constant 0 : i32
    %c0_i32_1 = arith.constant 0 : i32
    return %arg0, %c0_i32, %c0_i32_0 : i32, i32, i32
  }
}

</mosaic_0001>

<llo_original>
// kernel: a_call__.1
$region0: #{a_call__.1}
  #allocation0 [shape = 'u32[]', space=smem, size = 0x4, offset = 0x4, fixed_abs, tag = 'smem constant byte address 0x4 - core index']
  #allocation1 [shape = 'u32[144,128]{1,0:T(1,128)}', space=vmem, size = 0x12000, scoped, tag = 'internal scratch']
  #allocation2 [shape = 'f32[200,1408]{1,0:T(8,128)}', space=vmem, size = 0x113000, scoped, tag = 'scratch operand']
  %s0 = inlined_call_operand.vmem [shape: f32[2,8,1408], index: 0, kind: input, shape index: {}]
  %s1 = inlined_call_operand.vmem [shape: f32[1,1408], index: 1, kind: input, shape index: {}]
  %s2 = inlined_call_operand.vmem [shape: f32[8,200], index: 2, kind: input, shape index: {}]
  %s3 = inlined_call_operand.vmem [shape: f32[8,1], index: 3, kind: input, shape index: {}, may-alias: {3,5,7,9}]
  %s4 = inlined_call_operand.vmem [shape: f32[8,72], index: 4, kind: input, shape index: {}]
  %s5 = inlined_call_operand.vmem [shape: f32[8,1], index: 5, kind: input, shape index: {}, may-alias: {3,5,7,9}]
  %s6 = inlined_call_operand.vmem [shape: f32[8,72], index: 6, kind: input, shape index: {}]
  %s7 = inlined_call_operand.vmem [shape: f32[8,1], index: 7, kind: input, shape index: {}, may-alias: {3,5,7,9}]
  %s8 = inlined_call_operand.vmem [shape: f32[8,200], index: 8, kind: input, shape index: {}]
  %s9 = inlined_call_operand.vmem [shape: f32[8,1], index: 9, kind: input, shape index: {}, may-alias: {3,5,7,9}]
  %s10 = inlined_call_operand.vmem [shape: f32[2,8,1408], index: 10, kind: output, shape index: {}]
  %s11 = sld [smem:[#allocation0]]
  $region73: #{a_call__.1} parent=0
    _
  %s13 = ssub.s32 1, %s11
  %s14 = scalar_select 0, %s13, %s11
  loop: start=0, step=1, limit=4
  $region2: #{a_call__.1} parent=0 // loop_pre_header
    _
  $region3: #{a_call__.1} parent=0 // loop_header
    %s16 = sphi 0, %s20
    %p17 = scmp.ge.s32.totalorder %s16, 4
    %s26 = sphi 0, %s28
    %s29 = sphi 0, %s26
    %s30 = sphi 0, %s29
    %s46 = sphi 0, %s30
    %s50 = sphi 0, %s50
    %s52 = sphi 0, %s50
    %s53 = sphi 0, %s52
    %s67 = sphi 0, %s53
    %s71 = sphi 0, %s71
    %s73 = sphi 0, %s71
    %s74 = sphi 0, %s73
    %s88 = sphi 0, %s74
    %s92 = sphi 0, %s92
    %s94 = sphi 0, %s92
    %s95 = sphi 0, %s94
    %s109 = sphi 0, %s95
    %s113 = sphi 0, %s113
    %s115 = sphi 0, %s113
    %s116 = sphi 0, %s115
    %s130 = sphi 0, %s116
    %s134 = sphi 0, %s134
    %s136 = sphi 0, %s134
    %s137 = sphi 0, %s136
    %s151 = sphi 0, %s137
    %s155 = sphi 0, %s155
    %s157 = sphi 0, %s155
    %s158 = sphi 0, %s157
    %s172 = sphi 0, %s158
    %s176 = sphi 0, %s176
    %s178 = sphi 0, %s176
    %s179 = sphi 0, %s178
    %s193 = sphi 0, %s179
    %s197 = sphi 0, %s197
    %s199 = sphi 0, %s197
    %s200 = sphi 0, %s199
    %s214 = sphi 0, %s200
    %s218 = sphi 0, %s218
    %s220 = sphi 0, %s218
    %s221 = sphi 0, %s220
    %s235 = sphi 0, %s221
    %s241 = sphi 0, %s243
    %s244 = sphi 0, %s241
    %s245 = sphi 0, %s244
    %s261 = sphi 0, %s245
  $region4: #{a_call__.1} parent=0 // loop_header_branch
    %19 = sbr.rel (%p17) target = $region8
  $region5: #{a_call__.1} parent=0 // loop_body
    %s21 = ssub.s32 %s16, 1
    %s22 = ssub.s32 %s16, 2
    %s23 = sadd.s32 %s16, 1
    %s24 = ssub.s32 %s16, %s23
    %p25 = scmp.eq.s32.totalorder %s24, 0
    %s27 = sadd.s32 %s26, 1
    %s28 = scalar_select %p25, %s26, %s27
    %p31 = pneg %p25
    %p32 = scmp.eq.s32.totalorder %s16, 1
    %p33 = por %p31, %p32
    %p34 = scmp.ne.s32.totalorder %s26, %s29
    %p35 = scmp.eq.s32.totalorder %s16, 0
    %p36 = por %p34, %p35
    %p37 = scmp.ne.s32.totalorder %s26, %s29
    %p38 = scmp.eq.s32.totalorder %s21, 1
    %p39 = por %p37, %p38
    %p40 = scmp.ne.s32.totalorder %s29, %s30
    %p41 = scmp.eq.s32.totalorder %s21, 0
    %p42 = por %p40, %p41
    %p43 = scmp.ne.s32.totalorder %s29, %s30
    %p44 = scmp.eq.s32.totalorder %s22, 1
    %p45 = por %p43, %p44
    %p47 = scmp.ne.s32.totalorder %s30, %s46
    %p48 = scmp.eq.s32.totalorder %s22, 0
    %p49 = por %p47, %p48
    %s51 = sadd.s32 %s50, 1
    %p54 = scmp.eq.s32.totalorder %s16, 1
    %p55 = scmp.ne.s32.totalorder %s50, %s52
    %p56 = scmp.eq.s32.totalorder %s16, 0
    %p57 = por %p55, %p56
    %p58 = scmp.ne.s32.totalorder %s50, %s52
    %p59 = scmp.eq.s32.totalorder %s21, 1
    %p60 = por %p58, %p59
    %p61 = scmp.ne.s32.totalorder %s52, %s53
    %p62 = scmp.eq.s32.totalorder %s21, 0
    %p63 = por %p61, %p62
    %p64 = scmp.ne.s32.totalorder %s52, %s53
    %p65 = scmp.eq.s32.totalorder %s22, 1
    %p66 = por %p64, %p65
    %p68 = scmp.ne.s32.totalorder %s53, %s67
    %p69 = scmp.eq.s32.totalorder %s22, 0
    %p70 = por %p68, %p69
    %s72 = sadd.s32 %s71, 1
    %p75 = scmp.eq.s32.totalorder %s16, 1
    %p76 = scmp.ne.s32.totalorder %s71, %s73
    %p77 = scmp.eq.s32.totalorder %s16, 0
    %p78 = por %p76, %p77
    %p79 = scmp.ne.s32.totalorder %s71, %s73
    %p80 = scmp.eq.s32.totalorder %s21, 1
    %p81 = por %p79, %p80
    %p82 = scmp.ne.s32.totalorder %s73, %s74
    %p83 = scmp.eq.s32.totalorder %s21, 0
    %p84 = por %p82, %p83
    %p85 = scmp.ne.s32.totalorder %s73, %s74
    %p86 = scmp.eq.s32.totalorder %s22, 1
    %p87 = por %p85, %p86
    %p89 = scmp.ne.s32.totalorder %s74, %s88
    %p90 = scmp.eq.s32.totalorder %s22, 0
    %p91 = por %p89, %p90
    %s93 = sadd.s32 %s92, 1
    %p96 = scmp.eq.s32.totalorder %s16, 1
    %p97 = scmp.ne.s32.totalorder %s92, %s94
    %p98 = scmp.eq.s32.totalorder %s16, 0
    %p99 = por %p97, %p98
    %p100 = scmp.ne.s32.totalorder %s92, %s94
    %p101 = scmp.eq.s32.totalorder %s21, 1
    %p102 = por %p100, %p101
    %p103 = scmp.ne.s32.totalorder %s94, %s95
    %p104 = scmp.eq.s32.totalorder %s21, 0
    %p105 = por %p103, %p104
    %p106 = scmp.ne.s32.totalorder %s94, %s95
    %p107 = scmp.eq.s32.totalorder %s22, 1
    %p108 = por %p106, %p107
    %p110 = scmp.ne.s32.totalorder %s95, %s109
    %p111 = scmp.eq.s32.totalorder %s22, 0
    %p112 = por %p110, %p111
    %s114 = sadd.s32 %s113, 1
    %p117 = scmp.eq.s32.totalorder %s16, 1
    %p118 = scmp.ne.s32.totalorder %s113, %s115
    %p119 = scmp.eq.s32.totalorder %s16, 0
    %p120 = por %p118, %p119
    %p121 = scmp.ne.s32.totalorder %s113, %s115
    %p122 = scmp.eq.s32.totalorder %s21, 1
    %p123 = por %p121, %p122
    %p124 = scmp.ne.s32.totalorder %s115, %s116
    %p125 = scmp.eq.s32.totalorder %s21, 0
    %p126 = por %p124, %p125
    %p127 = scmp.ne.s32.totalorder %s115, %s116
    %p128 = scmp.eq.s32.totalorder %s22, 1
    %p129 = por %p127, %p128
    %p131 = scmp.ne.s32.totalorder %s116, %s130
    %p132 = scmp.eq.s32.totalorder %s22, 0
    %p133 = por %p131, %p132
    %s135 = sadd.s32 %s134, 1
    %p138 = scmp.eq.s32.totalorder %s16, 1
    %p139 = scmp.ne.s32.totalorder %s134, %s136
    %p140 = scmp.eq.s32.totalorder %s16, 0
    %p141 = por %p139, %p140
    %p142 = scmp.ne.s32.totalorder %s134, %s136
    %p143 = scmp.eq.s32.totalorder %s21, 1
    %p144 = por %p142, %p143
    %p145 = scmp.ne.s32.totalorder %s136, %s137
    %p146 = scmp.eq.s32.totalorder %s21, 0
    %p147 = por %p145, %p146
    %p148 = scmp.ne.s32.totalorder %s136, %s137
    %p149 = scmp.eq.s32.totalorder %s22, 1
    %p150 = por %p148, %p149
    %p152 = scmp.ne.s32.totalorder %s137, %s151
    %p153 = scmp.eq.s32.totalorder %s22, 0
    %p154 = por %p152, %p153
    %s156 = sadd.s32 %s155, 1
    %p159 = scmp.eq.s32.totalorder %s16, 1
    %p160 = scmp.ne.s32.totalorder %s155, %s157
    %p161 = scmp.eq.s32.totalorder %s16, 0
    %p162 = por %p160, %p161
    %p163 = scmp.ne.s32.totalorder %s155, %s157
    %p164 = scmp.eq.s32.totalorder %s21, 1
    %p165 = por %p163, %p164
    %p166 = scmp.ne.s32.totalorder %s157, %s158
    %p167 = scmp.eq.s32.totalorder %s21, 0
    %p168 = por %p166, %p167
    %p169 = scmp.ne.s32.totalorder %s157, %s158
    %p170 = scmp.eq.s32.totalorder %s22, 1
    %p171 = por %p169, %p170
    %p173 = scmp.ne.s32.totalorder %s158, %s172
    %p174 = scmp.eq.s32.totalorder %s22, 0
    %p175 = por %p173, %p174
    %s177 = sadd.s32 %s176, 1
    %p180 = scmp.eq.s32.totalorder %s16, 1
    %p181 = scmp.ne.s32.totalorder %s176, %s178
    %p182 = scmp.eq.s32.totalorder %s16, 0
    %p183 = por %p181, %p182
    %p184 = scmp.ne.s32.totalorder %s176, %s178
    %p185 = scmp.eq.s32.totalorder %s21, 1
    %p186 = por %p184, %p185
    %p187 = scmp.ne.s32.totalorder %s178, %s179
    %p188 = scmp.eq.s32.totalorder %s21, 0
    %p189 = por %p187, %p188
    %p190 = scmp.ne.s32.totalorder %s178, %s179
    %p191 = scmp.eq.s32.totalorder %s22, 1
    %p192 = por %p190, %p191
    %p194 = scmp.ne.s32.totalorder %s179, %s193
    %p195 = scmp.eq.s32.totalorder %s22, 0
    %p196 = por %p194, %p195
    %s198 = sadd.s32 %s197, 1
    %p201 = scmp.eq.s32.totalorder %s16, 1
    %p202 = scmp.ne.s32.totalorder %s197, %s199
    %p203 = scmp.eq.s32.totalorder %s16, 0
    %p204 = por %p202, %p203
    %p205 = scmp.ne.s32.totalorder %s197, %s199
    %p206 = scmp.eq.s32.totalorder %s21, 1
    %p207 = por %p205, %p206
    %p208 = scmp.ne.s32.totalorder %s199, %s200
    %p209 = scmp.eq.s32.totalorder %s21, 0
    %p210 = por %p208, %p209
    %p211 = scmp.ne.s32.totalorder %s199, %s200
    %p212 = scmp.eq.s32.totalorder %s22, 1
    %p213 = por %p211, %p212
    %p215 = scmp.ne.s32.totalorder %s200, %s214
    %p216 = scmp.eq.s32.totalorder %s22, 0
    %p217 = por %p215, %p216
    %s219 = sadd.s32 %s218, 1
    %p222 = scmp.eq.s32.totalorder %s16, 1
    %p223 = scmp.ne.s32.totalorder %s218, %s220
    %p224 = scmp.eq.s32.totalorder %s16, 0
    %p225 = por %p223, %p224
    %p226 = scmp.ne.s32.totalorder %s218, %s220
    %p227 = scmp.eq.s32.totalorder %s21, 1
    %p228 = por %p226, %p227
    %p229 = scmp.ne.s32.totalorder %s220, %s221
    %p230 = scmp.eq.s32.totalorder %s21, 0
    %p231 = por %p229, %p230
    %p232 = scmp.ne.s32.totalorder %s220, %s221
    %p233 = scmp.eq.s32.totalorder %s22, 1
    %p234 = por %p232, %p233
    %p236 = scmp.ne.s32.totalorder %s221, %s235
    %p237 = scmp.eq.s32.totalorder %s22, 0
    %p238 = por %p236, %p237
    %s239 = ssub.s32 %s16, %s23
    %p240 = scmp.eq.s32.totalorder %s239, 0
    %s242 = sadd.s32 %s241, 1
    %s243 = scalar_select %p240, %s241, %s242
    %p246 = pneg %p240
    %p247 = scmp.eq.s32.totalorder %s16, 1
    %p248 = por %p246, %p247
    %p249 = scmp.ne.s32.totalorder %s241, %s244
    %p250 = scmp.eq.s32.totalorder %s16, 0
    %p251 = por %p249, %p250
    %p252 = scmp.ne.s32.totalorder %s241, %s244
    %p253 = scmp.eq.s32.totalorder %s21, 1
    %p254 = por %p252, %p253
    %p255 = scmp.ne.s32.totalorder %s244, %s245
    %p256 = scmp.eq.s32.totalorder %s21, 0
    %p257 = por %p255, %p256
    %p258 = scmp.ne.s32.totalorder %s244, %s245
    %p259 = scmp.eq.s32.totalorder %s22, 1
    %p260 = por %p258, %p259
    %p262 = scmp.ne.s32.totalorder %s245, %s261
    %p263 = scmp.eq.s32.totalorder %s22, 0
    %p264 = por %p262, %p263
    %p265 = scmp.le.s32.totalorder 1, %s16
    %p266 = scmp.lt.s32.totalorder %s16, 3
    %p267 = pnand %p265, %p266
    %p268 = pneg %p267
    // Predicated region
    $region9: #{a_call__.1} parent=5 // pred_check
      _
    $region10: #{a_call__.1} parent=5 // pred_check_branch
      %270 = sbr.rel (%p267) target = $region12
    $region11: #{a_call__.1} parent=5 // pred_region
      %s271 = ssub.s32 %s16, 1
      // Predicated region
      $region13: #{a_call__.1} parent=11 // pred_check
        %p272 = pneg %p63
      $region14: #{a_call__.1} parent=11 // pred_check_branch
        %274 = sbr.rel (%p272) target = $region16
      $region15: #{a_call__.1} parent=11 // pred_region
        _
      $region16: #{a_call__.1} parent=11 // pred_fallthru
        _
      // Predicated region
      $region17: #{a_call__.1} parent=11 // pred_check
        %p275 = pneg %p84
      $region18: #{a_call__.1} parent=11 // pred_check_branch
        %277 = sbr.rel (%p275) target = $region20
      $region19: #{a_call__.1} parent=11 // pred_region
        _
      $region20: #{a_call__.1} parent=11 // pred_fallthru
        _
      // Predicated region
      $region21: #{a_call__.1} parent=11 // pred_check
        %p278 = pneg %p105
      $region22: #{a_call__.1} parent=11 // pred_check_branch
        %280 = sbr.rel (%p278) target = $region24
      $region23: #{a_call__.1} parent=11 // pred_region
        _
      $region24: #{a_call__.1} parent=11 // pred_fallthru
        _
      // Predicated region
      $region25: #{a_call__.1} parent=11 // pred_check
        %p281 = pneg %p126
      $region26: #{a_call__.1} parent=11 // pred_check_branch
        %283 = sbr.rel (%p281) target = $region28
      $region27: #{a_call__.1} parent=11 // pred_region
        _
      $region28: #{a_call__.1} parent=11 // pred_fallthru
        _
      // Predicated region
      $region29: #{a_call__.1} parent=11 // pred_check
        %p284 = pneg %p147
      $region30: #{a_call__.1} parent=11 // pred_check_branch
        %286 = sbr.rel (%p284) target = $region32
      $region31: #{a_call__.1} parent=11 // pred_region
        _
      $region32: #{a_call__.1} parent=11 // pred_fallthru
        _
      // Predicated region
      $region33: #{a_call__.1} parent=11 // pred_check
        %p287 = pneg %p168
      $region34: #{a_call__.1} parent=11 // pred_check_branch
        %289 = sbr.rel (%p287) target = $region36
      $region35: #{a_call__.1} parent=11 // pred_region
        _
      $region36: #{a_call__.1} parent=11 // pred_fallthru
        _
      // Predicated region
      $region37: #{a_call__.1} parent=11 // pred_check
        %p290 = pneg %p189
      $region38: #{a_call__.1} parent=11 // pred_check_branch
        %292 = sbr.rel (%p290) target = $region40
      $region39: #{a_call__.1} parent=11 // pred_region
        _
      $region40: #{a_call__.1} parent=11 // pred_fallthru
        _
      // Predicated region
      $region41: #{a_call__.1} parent=11 // pred_check
        %p293 = pneg %p210
      $region42: #{a_call__.1} parent=11 // pred_check_branch
        %295 = sbr.rel (%p293) target = $region44
      $region43: #{a_call__.1} parent=11 // pred_region
        _
      $region44: #{a_call__.1} parent=11 // pred_fallthru
        _
      // Predicated region
      $region45: #{a_call__.1} parent=11 // pred_check
        %p296 = pneg %p231
      $region46: #{a_call__.1} parent=11 // pred_check_branch
        %298 = sbr.rel (%p296) target = $region48
      $region47: #{a_call__.1} parent=11 // pred_region
        _
      $region48: #{a_call__.1} parent=11 // pred_fallthru
        _
    $region12: #{a_call__.1} parent=5 // pred_fallthru
      _
    %p299 = scmp.lt.s32.totalorder %s16, 2
    // Predicated region
    $region49: #{a_call__.1} parent=5 // pred_check
      %p300 = pneg %p299
    $region50: #{a_call__.1} parent=5 // pred_check_branch
      %302 = sbr.rel (%p300) target = $region52
    $region51: #{a_call__.1} parent=5 // pred_region
      // Predicated region
      $region53: #{a_call__.1} parent=51 // pred_check
        %p303 = pneg %p36
      $region54: #{a_call__.1} parent=51 // pred_check_branch
        %305 = sbr.rel (%p303) target = $region56
      $region55: #{a_call__.1} parent=51 // pred_region
        %p306 = scmp.lt.s32.totalorder %s16, 1
        %s307 = scalar_select %p306, %s16, 1
        %s308 = smul.addr %s307, 11
        %s309 = smul.addr %s308, 8
        %s310 = scalar_lea.vmem %s0, %s309
      $region56: #{a_call__.1} parent=51 // pred_fallthru
        _
    $region52: #{a_call__.1} parent=5 // pred_fallthru
      _
    %p311 = scmp.le.s32.totalorder 1, %s16
    %p312 = scmp.lt.s32.totalorder %s16, 3
    %p313 = pnand %p311, %p312
    %p314 = pneg %p313
    // Predicated region
    $region57: #{a_call__.1} parent=5 // pred_check
      _
    $region58: #{a_call__.1} parent=5 // pred_check_branch
      %316 = sbr.rel (%p313) target = $region60
    $region59: #{a_call__.1} parent=5 // pred_region
      %s317 = ssub.s32 %s16, 1
      %p318 = scmp.lt.s32.totalorder %s21, 1
      %s319 = scalar_select %p318, %s21, 1
      %s320 = smul.addr %s319, 11
      %s321 = smul.addr %s320, 8
      %s322 = scalar_lea.vmem %s0, %s321
      %p323 = pneg %p42
      %p324 = pneg %p39
      %p325 = pneg %p63
      %p326 = pneg %p60
      %p327 = pneg %p84
      %p328 = pneg %p81
      %p329 = pneg %p105
      %p330 = pneg %p102
      %p331 = pneg %p126
      %p332 = pneg %p123
      %p333 = pneg %p147
      %p334 = pneg %p144
      %p335 = pneg %p168
      %p336 = pneg %p165
      %p337 = pneg %p189
      %p338 = pneg %p186
      %p339 = pneg %p210
      %p340 = pneg %p207
      %p341 = pneg %p231
      %p342 = pneg %p228
      %p343 = pneg %p257
      %p344 = pneg %p254
      %p345 = scmp.lt.s32.totalorder %s21, 1
      %s346 = scalar_select %p345, %s21, 1
      %s347 = smul.addr %s346, 11
      %s348 = smul.addr %s347, 8
      %s349 = scalar_lea.vmem %s10, %s348
      %p350 = scmp.lt.s32.totalorder %s21, 1
      %s351 = scalar_select %p350, %s21, 1
      %s352 = smul.addr %s351, 11
      %s353 = smul.addr %s352, 8
      %s354 = scalar_lea.vmem %s0, %s353
      %p355 = scmp.lt.s32.totalorder %s21, 1
      %s356 = scalar_select %p355, %s21, 1
      %s357 = smul.addr %s356, 11
      %s358 = smul.addr %s357, 8
      %s359 = scalar_lea.vmem %s10, %s358
      %v360 = vld [vmem:[%s354] sm:$0xff]
      %v361 = vld [vmem:[%s354 + $0x8] sm:$0xff]
      %v362 = vld [vmem:[%s354 + $0x10] sm:$0xff]
      %v363 = vld [vmem:[%s354 + $0x18] sm:$0xff]
      %v364 = vld [vmem:[%s354 + $0x20] sm:$0xff]
      %v365 = vld [vmem:[%s354 + $0x28] sm:$0xff]
      %v366 = vld [vmem:[%s354 + $0x30] sm:$0xff]
      %v367 = vld [vmem:[%s354 + $0x38] sm:$0xff]
      %v368 = vld [vmem:[%s354 + $0x40] sm:$0xff]
      %v369 = vld [vmem:[%s354 + $0x48] sm:$0xff]
      %v370 = vld [vmem:[%s354 + $0x50] sm:$0xff]
      %v371 = vld [vmem:[%s1] sm:$0xff]
      %v372 = vld [vmem:[%s1 + $0x8] sm:$0x7]
      %373 = vrot.lane.b32.xlu0 %v360, 74
      %v374 = vpop.permute.xlu0 %373
      %375 = vrot.lane.b32.xlu0 %v361, 74
      %v376 = vpop.permute.xlu0 %375
      %377 = vrot.lane.b32.xlu0 %v362, 74
      %v378 = vpop.permute.xlu0 %377
      %379 = vrot.lane.b32.xlu0 %v363, 74
      %v380 = vpop.permute.xlu0 %379
      %381 = vrot.lane.b32.xlu0 %v364, 74
      %v382 = vpop.permute.xlu0 %381
      %383 = vrot.lane.b32.xlu0 %v365, 74
      %v384 = vpop.permute.xlu0 %383
      %385 = vrot.lane.b32.xlu0 %v366, 74
      %v386 = vpop.permute.xlu0 %385
      %387 = vrot.lane.b32.xlu0 %v367, 74
      %v388 = vpop.permute.xlu0 %387
      %389 = vrot.lane.b32.xlu0 %v368, 74
      %v390 = vpop.permute.xlu0 %389
      %391 = vrot.lane.b32.xlu0 %v369, 74
      %v392 = vpop.permute.xlu0 %391
      %393 = vrot.lane.b32.xlu0 %v370, 74
      %v394 = vpop.permute.xlu0 %393
      %v395 = vlaneseq
      %v396 = vand.u32 %v395, 127
      %vm397 = vcmp.lt.s32.totalorder %v396, 74
      %v398 = vsel %vm397, %v392, %v394
      %v399 = vsel %vm397, %v390, %v392
      %v400 = vsel %vm397, %v388, %v390
      %v401 = vsel %vm397, %v386, %v388
      %v402 = vsel %vm397, %v384, %v386
      %v403 = vsel %vm397, %v382, %v384
      %v404 = vsel %vm397, %v380, %v382
      %v405 = vsel %vm397, %v378, %v380
      %v406 = vsel %vm397, %v376, %v378
      %v407 = vsel %vm397, %v374, %v376
      %v408 = vsel %vm397, %v394, %v374
      %409 = vst [vmem:[#allocation2] sm:$0xff] %v408
      %410 = vst [vmem:[#allocation2 + $0x8] sm:$0xff] %v407
      %411 = vst [vmem:[#allocation2 + $0x10] sm:$0xff] %v406
      %412 = vst [vmem:[#allocation2 + $0x18] sm:$0xff] %v405
      %413 = vst [vmem:[#allocation2 + $0x20] sm:$0xff] %v404
      %414 = vst [vmem:[#allocation2 + $0x28] sm:$0xff] %v403
      %415 = vst [vmem:[#allocation2 + $0x30] sm:$0xff] %v402
      %416 = vst [vmem:[#allocation2 + $0x38] sm:$0xff] %v401
      %417 = vst [vmem:[#allocation2 + $0x40] sm:$0xff] %v400
      %418 = vst [vmem:[#allocation2 + $0x48] sm:$0xff] %v399
      %419 = vst [vmem:[#allocation2 + $0x50] sm:$0xff] %v398
      %420 = vrot.lane.b32.xlu0 %v360, 73
      %v421 = vpop.permute.xlu0 %420
      %422 = vrot.lane.b32.xlu0 %v361, 73
      %v423 = vpop.permute.xlu0 %422
      %424 = vrot.lane.b32.xlu0 %v362, 73
      %v425 = vpop.permute.xlu0 %424
      %426 = vrot.lane.b32.xlu0 %v363, 73
      %v427 = vpop.permute.xlu0 %426
      %428 = vrot.lane.b32.xlu0 %v364, 73
      %v429 = vpop.permute.xlu0 %428
      %430 = vrot.lane.b32.xlu0 %v365, 73
      %v431 = vpop.permute.xlu0 %430
      %432 = vrot.lane.b32.xlu0 %v366, 73
      %v433 = vpop.permute.xlu0 %432
      %434 = vrot.lane.b32.xlu0 %v367, 73
      %v435 = vpop.permute.xlu0 %434
      %436 = vrot.lane.b32.xlu0 %v368, 73
      %v437 = vpop.permute.xlu0 %436
      %438 = vrot.lane.b32.xlu0 %v369, 73
      %v439 = vpop.permute.xlu0 %438
      %440 = vrot.lane.b32.xlu0 %v370, 73
      %v441 = vpop.permute.xlu0 %440
      %vm442 = vcmp.lt.s32.totalorder %v396, 73
      %v443 = vsel %vm442, %v439, %v441
      %v444 = vsel %vm442, %v437, %v439
      %v445 = vsel %vm442, %v435, %v437
      %v446 = vsel %vm442, %v433, %v435
      %v447 = vsel %vm442, %v431, %v433
      %v448 = vsel %vm442, %v429, %v431
      %v449 = vsel %vm442, %v427, %v429
      %v450 = vsel %vm442, %v425, %v427
      %v451 = vsel %vm442, %v423, %v425
      %v452 = vsel %vm442, %v421, %v423
      %v453 = vsel %vm442, %v441, %v421
      %454 = vst [vmem:[#allocation2 + $0x58] sm:$0xff] %v453
      %455 = vst [vmem:[#allocation2 + $0x60] sm:$0xff] %v452
      %456 = vst [vmem:[#allocation2 + $0x68] sm:$0xff] %v451
      %457 = vst [vmem:[#allocation2 + $0x70] sm:$0xff] %v450
      %458 = vst [vmem:[#allocation2 + $0x78] sm:$0xff] %v449
      %459 = vst [vmem:[#allocation2 + $0x80] sm:$0xff] %v448
      %460 = vst [vmem:[#allocation2 + $0x88] sm:$0xff] %v447
      %461 = vst [vmem:[#allocation2 + $0x90] sm:$0xff] %v446
      %462 = vst [vmem:[#allocation2 + $0x98] sm:$0xff] %v445
      %463 = vst [vmem:[#allocation2 + $0xa0] sm:$0xff] %v444
      %464 = vst [vmem:[#allocation2 + $0xa8] sm:$0xff] %v443
      %465 = vrot.lane.b32.xlu0 %v360, 72
      %v466 = vpop.permute.xlu0 %465
      %467 = vrot.lane.b32.xlu0 %v361, 72
      %v468 = vpop.permute.xlu0 %467
      %469 = vrot.lane.b32.xlu0 %v362, 72
      %v470 = vpop.permute.xlu0 %469
      %471 = vrot.lane.b32.xlu0 %v363, 72
      %v472 = vpop.permute.xlu0 %471
      %473 = vrot.lane.b32.xlu0 %v364, 72
      %v474 = vpop.permute.xlu0 %473
      %475 = vrot.lane.b32.xlu0 %v365, 72
      %v476 = vpop.permute.xlu0 %475
      %477 = vrot.lane.b32.xlu0 %v366, 72
      %v478 = vpop.permute.xlu0 %477
      %479 = vrot.lane.b32.xlu0 %v367, 72
      %v480 = vpop.permute.xlu0 %479
      %481 = vrot.lane.b32.xlu0 %v368, 72
      %v482 = vpop.permute.xlu0 %481
      %483 = vrot.lane.b32.xlu0 %v369, 72
      %v484 = vpop.permute.xlu0 %483
      %485 = vrot.lane.b32.xlu0 %v370, 72
      %v486 = vpop.permute.xlu0 %485
      %vm487 = vcmp.lt.s32.totalorder %v396, 72
      %v488 = vsel %vm487, %v484, %v486
      %v489 = vsel %vm487, %v482, %v484
      %v490 = vsel %vm487, %v480, %v482
      %v491 = vsel %vm487, %v478, %v480
      %v492 = vsel %vm487, %v476, %v478
      %v493 = vsel %vm487, %v474, %v476
      %v494 = vsel %vm487, %v472, %v474
      %v495 = vsel %vm487, %v470, %v472
      %v496 = vsel %vm487, %v468, %v470
      %v497 = vsel %vm487, %v466, %v468
      %v498 = vsel %vm487, %v486, %v466
      %499 = vst [vmem:[#allocation2 + $0xb0] sm:$0xff] %v498
      %500 = vst [vmem:[#allocation2 + $0xb8] sm:$0xff] %v497
      %501 = vst [vmem:[#allocation2 + $0xc0] sm:$0xff] %v496
      %502 = vst [vmem:[#allocation2 + $0xc8] sm:$0xff] %v495
      %503 = vst [vmem:[#allocation2 + $0xd0] sm:$0xff] %v494
      %504 = vst [vmem:[#allocation2 + $0xd8] sm:$0xff] %v493
      %505 = vst [vmem:[#allocation2 + $0xe0] sm:$0xff] %v492
      %506 = vst [vmem:[#allocation2 + $0xe8] sm:$0xff] %v491
      %507 = vst [vmem:[#allocation2 + $0xf0] sm:$0xff] %v490
      %508 = vst [vmem:[#allocation2 + $0xf8] sm:$0xff] %v489
      %509 = vst [vmem:[#allocation2 + $0x100] sm:$0xff] %v488
      %510 = vrot.lane.b32.xlu0 %v360, 71
      %v511 = vpop.permute.xlu0 %510
      %512 = vrot.lane.b32.xlu0 %v361, 71
      %v513 = vpop.permute.xlu0 %512
      %514 = vrot.lane.b32.xlu0 %v362, 71
      %v515 = vpop.permute.xlu0 %514
      %516 = vrot.lane.b32.xlu0 %v363, 71
      %v517 = vpop.permute.xlu0 %516
      %518 = vrot.lane.b32.xlu0 %v364, 71
      %v519 = vpop.permute.xlu0 %518
      %520 = vrot.lane.b32.xlu0 %v365, 71
      %v521 = vpop.permute.xlu0 %520
      %522 = vrot.lane.b32.xlu0 %v366, 71
      %v523 = vpop.permute.xlu0 %522
      %524 = vrot.lane.b32.xlu0 %v367, 71
      %v525 = vpop.permute.xlu0 %524
      %526 = vrot.lane.b32.xlu0 %v368, 71
      %v527 = vpop.permute.xlu0 %526
      %528 = vrot.lane.b32.xlu0 %v369, 71
      %v529 = vpop.permute.xlu0 %528
      %530 = vrot.lane.b32.xlu0 %v370, 71
      %v531 = vpop.permute.xlu0 %530
      %vm532 = vcmp.lt.s32.totalorder %v396, 71
      %v533 = vsel %vm532, %v529, %v531
      %v534 = vsel %vm532, %v527, %v529
      %v535 = vsel %vm532, %v525, %v527
      %v536 = vsel %vm532, %v523, %v525
      %v537 = vsel %vm532, %v521, %v523
      %v538 = vsel %vm532, %v519, %v521
      %v539 = vsel %vm532, %v517, %v519
      %v540 = vsel %vm532, %v515, %v517
      %v541 = vsel %vm532, %v513, %v515
      %v542 = vsel %vm532, %v511, %v513
      %v543 = vsel %vm532, %v531, %v511
      %544 = vst [vmem:[#allocation2 + $0x108] sm:$0xff] %v543
      %545 = vst [vmem:[#allocation2 + $0x110] sm:$0xff] %v542
      %546 = vst [vmem:[#allocation2 + $0x118] sm:$0xff] %v541
      %547 = vst [vmem:[#allocation2 + $0x120] sm:$0xff] %v540
      %548 = vst [vmem:[#allocation2 + $0x128] sm:$0xff] %v539
      %549 = vst [vmem:[#allocation2 + $0x130] sm:$0xff] %v538
      %550 = vst [vmem:[#allocation2 + $0x138] sm:$0xff] %v537
      %551 = vst [vmem:[#allocation2 + $0x140] sm:$0xff] %v536
      %552 = vst [vmem:[#allocation2 + $0x148] sm:$0xff] %v535
      %553 = vst [vmem:[#allocation2 + $0x150] sm:$0xff] %v534
      %554 = vst [vmem:[#allocation2 + $0x158] sm:$0xff] %v533
      %555 = vrot.lane.b32.xlu0 %v360, 70
      %v556 = vpop.permute.xlu0 %555
      %557 = vrot.lane.b32.xlu0 %v361, 70
      %v558 = vpop.permute.xlu0 %557
      %559 = vrot.lane.b32.xlu0 %v362, 70
      %v560 = vpop.permute.xlu0 %559
      %561 = vrot.lane.b32.xlu0 %v363, 70
      %v562 = vpop.permute.xlu0 %561
      %563 = vrot.lane.b32.xlu0 %v364, 70
      %v564 = vpop.permute.xlu0 %563
      %565 = vrot.lane.b32.xlu0 %v365, 70
      %v566 = vpop.permute.xlu0 %565
      %567 = vrot.lane.b32.xlu0 %v366, 70
      %v568 = vpop.permute.xlu0 %567
      %569 = vrot.lane.b32.xlu0 %v367, 70
      %v570 = vpop.permute.xlu0 %569
      %571 = vrot.lane.b32.xlu0 %v368, 70
      %v572 = vpop.permute.xlu0 %571
      %573 = vrot.lane.b32.xlu0 %v369, 70
      %v574 = vpop.permute.xlu0 %573
      %575 = vrot.lane.b32.xlu0 %v370, 70
      %v576 = vpop.permute.xlu0 %575
      %vm577 = vcmp.lt.s32.totalorder %v396, 70
      %v578 = vsel %vm577, %v574, %v576
      %v579 = vsel %vm577, %v572, %v574
      %v580 = vsel %vm577, %v570, %v572
      %v581 = vsel %vm577, %v568, %v570
      %v582 = vsel %vm577, %v566, %v568
      %v583 = vsel %vm577, %v564, %v566
      %v584 = vsel %vm577, %v562, %v564
      %v585 = vsel %vm577, %v560, %v562
      %v586 = vsel %vm577, %v558, %v560
      %v587 = vsel %vm577, %v556, %v558
      %v588 = vsel %vm577, %v576, %v556
      %589 = vst [vmem:[#allocation2 + $0x160] sm:$0xff] %v588
      %590 = vst [vmem:[#allocation2 + $0x168] sm:$0xff] %v587
      %591 = vst [vmem:[#allocation2 + $0x170] sm:$0xff] %v586
      %592 = vst [vmem:[#allocation2 + $0x178] sm:$0xff] %v585
      %593 = vst [vmem:[#allocation2 + $0x180] sm:$0xff] %v584
      %594 = vst [vmem:[#allocation2 + $0x188] sm:$0xff] %v583
      %595 = vst [vmem:[#allocation2 + $0x190] sm:$0xff] %v582
      %596 = vst [vmem:[#allocation2 + $0x198] sm:$0xff] %v581
      %597 = vst [vmem:[#allocation2 + $0x1a0] sm:$0xff] %v580
      %598 = vst [vmem:[#allocation2 + $0x1a8] sm:$0xff] %v579
      %599 = vst [vmem:[#allocation2 + $0x1b0] sm:$0xff] %v578
      %600 = vrot.lane.b32.xlu0 %v360, 38
      %v601 = vpop.permute.xlu0 %600
      %602 = vrot.lane.b32.xlu0 %v361, 38
      %v603 = vpop.permute.xlu0 %602
      %604 = vrot.lane.b32.xlu0 %v362, 38
      %v605 = vpop.permute.xlu0 %604
      %606 = vrot.lane.b32.xlu0 %v363, 38
      %v607 = vpop.permute.xlu0 %606
      %608 = vrot.lane.b32.xlu0 %v364, 38
      %v609 = vpop.permute.xlu0 %608
      %610 = vrot.lane.b32.xlu0 %v365, 38
      %v611 = vpop.permute.xlu0 %610
      %612 = vrot.lane.b32.xlu0 %v366, 38
      %v613 = vpop.permute.xlu0 %612
      %614 = vrot.lane.b32.xlu0 %v367, 38
      %v615 = vpop.permute.xlu0 %614
      %616 = vrot.lane.b32.xlu0 %v368, 38
      %v617 = vpop.permute.xlu0 %616
      %618 = vrot.lane.b32.xlu0 %v369, 38
      %v619 = vpop.permute.xlu0 %618
      %620 = vrot.lane.b32.xlu0 %v370, 38
      %v621 = vpop.permute.xlu0 %620
      %vm622 = vcmp.lt.s32.totalorder %v396, 38
      %v623 = vsel %vm622, %v619, %v621
      %v624 = vsel %vm622, %v617, %v619
      %v625 = vsel %vm622, %v615, %v617
      %v626 = vsel %vm622, %v613, %v615
      %v627 = vsel %vm622, %v611, %v613
      %v628 = vsel %vm622, %v609, %v611
      %v629 = vsel %vm622, %v607, %v609
      %v630 = vsel %vm622, %v605, %v607
      %v631 = vsel %vm622, %v603, %v605
      %v632 = vsel %vm622, %v601, %v603
      %v633 = vsel %vm622, %v621, %v601
      %634 = vst [vmem:[#allocation2 + $0x1b8] sm:$0xff] %v633
      %635 = vst [vmem:[#allocation2 + $0x1c0] sm:$0xff] %v632
      %636 = vst [vmem:[#allocation2 + $0x1c8] sm:$0xff] %v631
      %637 = vst [vmem:[#allocation2 + $0x1d0] sm:$0xff] %v630
      %638 = vst [vmem:[#allocation2 + $0x1d8] sm:$0xff] %v629
      %639 = vst [vmem:[#allocation2 + $0x1e0] sm:$0xff] %v628
      %640 = vst [vmem:[#allocation2 + $0x1e8] sm:$0xff] %v627
      %641 = vst [vmem:[#allocation2 + $0x1f0] sm:$0xff] %v626
      %642 = vst [vmem:[#allocation2 + $0x1f8] sm:$0xff] %v625
      %643 = vst [vmem:[#allocation2 + $0x200] sm:$0xff] %v624
      %644 = vst [vmem:[#allocation2 + $0x208] sm:$0xff] %v623
      %645 = vrot.lane.b32.xlu0 %v360, 37
      %v646 = vpop.permute.xlu0 %645
      %647 = vrot.lane.b32.xlu0 %v361, 37
      %v648 = vpop.permute.xlu0 %647
      %649 = vrot.lane.b32.xlu0 %v362, 37
      %v650 = vpop.permute.xlu0 %649
      %651 = vrot.lane.b32.xlu0 %v363, 37
      %v652 = vpop.permute.xlu0 %651
      %653 = vrot.lane.b32.xlu0 %v364, 37
      %v654 = vpop.permute.xlu0 %653
      %655 = vrot.lane.b32.xlu0 %v365, 37
      %v656 = vpop.permute.xlu0 %655
      %657 = vrot.lane.b32.xlu0 %v366, 37
      %v658 = vpop.permute.xlu0 %657
      %659 = vrot.lane.b32.xlu0 %v367, 37
      %v660 = vpop.permute.xlu0 %659
      %661 = vrot.lane.b32.xlu0 %v368, 37
      %v662 = vpop.permute.xlu0 %661
      %663 = vrot.lane.b32.xlu0 %v369, 37
      %v664 = vpop.permute.xlu0 %663
      %665 = vrot.lane.b32.xlu0 %v370, 37
      %v666 = vpop.permute.xlu0 %665
      %vm667 = vcmp.lt.s32.totalorder %v396, 37
      %v668 = vsel %vm667, %v664, %v666
      %v669 = vsel %vm667, %v662, %v664
      %v670 = vsel %vm667, %v660, %v662
      %v671 = vsel %vm667, %v658, %v660
      %v672 = vsel %vm667, %v656, %v658
      %v673 = vsel %vm667, %v654, %v656
      %v674 = vsel %vm667, %v652, %v654
      %v675 = vsel %vm667, %v650, %v652
      %v676 = vsel %vm667, %v648, %v650
      %v677 = vsel %vm667, %v646, %v648
      %v678 = vsel %vm667, %v666, %v646
      %679 = vst [vmem:[#allocation2 + $0x210] sm:$0xff] %v678
      %680 = vst [vmem:[#allocation2 + $0x218] sm:$0xff] %v677
      %681 = vst [vmem:[#allocation2 + $0x220] sm:$0xff] %v676
      %682 = vst [vmem:[#allocation2 + $0x228] sm:$0xff] %v675
      %683 = vst [vmem:[#allocation2 + $0x230] sm:$0xff] %v674
      %684 = vst [vmem:[#allocation2 + $0x238] sm:$0xff] %v673
      %685 = vst [vmem:[#allocation2 + $0x240] sm:$0xff] %v672
      %686 = vst [vmem:[#allocation2 + $0x248] sm:$0xff] %v671
      %687 = vst [vmem:[#allocation2 + $0x250] sm:$0xff] %v670
      %688 = vst [vmem:[#allocation2 + $0x258] sm:$0xff] %v669
      %689 = vst [vmem:[#allocation2 + $0x260] sm:$0xff] %v668
      %690 = vrot.lane.b32.xlu0 %v360, 36
      %v691 = vpop.permute.xlu0 %690
      %692 = vrot.lane.b32.xlu0 %v361, 36
      %v693 = vpop.permute.xlu0 %692
      %694 = vrot.lane.b32.xlu0 %v362, 36
      %v695 = vpop.permute.xlu0 %694
      %696 = vrot.lane.b32.xlu0 %v363, 36
      %v697 = vpop.permute.xlu0 %696
      %698 = vrot.lane.b32.xlu0 %v364, 36
      %v699 = vpop.permute.xlu0 %698
      %700 = vrot.lane.b32.xlu0 %v365, 36
      %v701 = vpop.permute.xlu0 %700
      %702 = vrot.lane.b32.xlu0 %v366, 36
      %v703 = vpop.permute.xlu0 %702
      %704 = vrot.lane.b32.xlu0 %v367, 36
      %v705 = vpop.permute.xlu0 %704
      %706 = vrot.lane.b32.xlu0 %v368, 36
      %v707 = vpop.permute.xlu0 %706
      %708 = vrot.lane.b32.xlu0 %v369, 36
      %v709 = vpop.permute.xlu0 %708
      %710 = vrot.lane.b32.xlu0 %v370, 36
      %v711 = vpop.permute.xlu0 %710
      %vm712 = vcmp.lt.s32.totalorder %v396, 36
      %v713 = vsel %vm712, %v709, %v711
      %v714 = vsel %vm712, %v707, %v709
      %v715 = vsel %vm712, %v705, %v707
      %v716 = vsel %vm712, %v703, %v705
      %v717 = vsel %vm712, %v701, %v703
      %v718 = vsel %vm712, %v699, %v701
      %v719 = vsel %vm712, %v697, %v699
      %v720 = vsel %vm712, %v695, %v697
      %v721 = vsel %vm712, %v693, %v695
      %v722 = vsel %vm712, %v691, %v693
      %v723 = vsel %vm712, %v711, %v691
      %724 = vst [vmem:[#allocation2 + $0x268] sm:$0xff] %v723
      %725 = vst [vmem:[#allocation2 + $0x270] sm:$0xff] %v722
      %726 = vst [vmem:[#allocation2 + $0x278] sm:$0xff] %v721
      %727 = vst [vmem:[#allocation2 + $0x280] sm:$0xff] %v720
      %728 = vst [vmem:[#allocation2 + $0x288] sm:$0xff] %v719
      %729 = vst [vmem:[#allocation2 + $0x290] sm:$0xff] %v718
      %730 = vst [vmem:[#allocation2 + $0x298] sm:$0xff] %v717
      %731 = vst [vmem:[#allocation2 + $0x2a0] sm:$0xff] %v716
      %732 = vst [vmem:[#allocation2 + $0x2a8] sm:$0xff] %v715
      %733 = vst [vmem:[#allocation2 + $0x2b0] sm:$0xff] %v714
      %734 = vst [vmem:[#allocation2 + $0x2b8] sm:$0xff] %v713
      %735 = vrot.lane.b32.xlu0 %v360, 35
      %v736 = vpop.permute.xlu0 %735
      %737 = vrot.lane.b32.xlu0 %v361, 35
      %v738 = vpop.permute.xlu0 %737
      %739 = vrot.lane.b32.xlu0 %v362, 35
      %v740 = vpop.permute.xlu0 %739
      %741 = vrot.lane.b32.xlu0 %v363, 35
      %v742 = vpop.permute.xlu0 %741
      %743 = vrot.lane.b32.xlu0 %v364, 35
      %v744 = vpop.permute.xlu0 %743
      %745 = vrot.lane.b32.xlu0 %v365, 35
      %v746 = vpop.permute.xlu0 %745
      %747 = vrot.lane.b32.xlu0 %v366, 35
      %v748 = vpop.permute.xlu0 %747
      %749 = vrot.lane.b32.xlu0 %v367, 35
      %v750 = vpop.permute.xlu0 %749
      %751 = vrot.lane.b32.xlu0 %v368, 35
      %v752 = vpop.permute.xlu0 %751
      %753 = vrot.lane.b32.xlu0 %v369, 35
      %v754 = vpop.permute.xlu0 %753
      %755 = vrot.lane.b32.xlu0 %v370, 35
      %v756 = vpop.permute.xlu0 %755
      %vm757 = vcmp.lt.s32.totalorder %v396, 35
      %v758 = vsel %vm757, %v754, %v756
      %v759 = vsel %vm757, %v752, %v754
      %v760 = vsel %vm757, %v750, %v752
      %v761 = vsel %vm757, %v748, %v750
      %v762 = vsel %vm757, %v746, %v748
      %v763 = vsel %vm757, %v744, %v746
      %v764 = vsel %vm757, %v742, %v744
      %v765 = vsel %vm757, %v740, %v742
      %v766 = vsel %vm757, %v738, %v740
      %v767 = vsel %vm757, %v736, %v738
      %v768 = vsel %vm757, %v756, %v736
      %769 = vst [vmem:[#allocation2 + $0x2c0] sm:$0xff] %v768
      %770 = vst [vmem:[#allocation2 + $0x2c8] sm:$0xff] %v767
      %771 = vst [vmem:[#allocation2 + $0x2d0] sm:$0xff] %v766
      %772 = vst [vmem:[#allocation2 + $0x2d8] sm:$0xff] %v765
      %773 = vst [vmem:[#allocation2 + $0x2e0] sm:$0xff] %v764
      %774 = vst [vmem:[#allocation2 + $0x2e8] sm:$0xff] %v763
      %775 = vst [vmem:[#allocation2 + $0x2f0] sm:$0xff] %v762
      %776 = vst [vmem:[#allocation2 + $0x2f8] sm:$0xff] %v761
      %777 = vst [vmem:[#allocation2 + $0x300] sm:$0xff] %v760
      %778 = vst [vmem:[#allocation2 + $0x308] sm:$0xff] %v759
      %779 = vst [vmem:[#allocation2 + $0x310] sm:$0xff] %v758
      %780 = vrot.lane.b32.xlu0 %v360, 34
      %v781 = vpop.permute.xlu0 %780
      %782 = vrot.lane.b32.xlu0 %v361, 34
      %v783 = vpop.permute.xlu0 %782
      %784 = vrot.lane.b32.xlu0 %v362, 34
      %v785 = vpop.permute.xlu0 %784
      %786 = vrot.lane.b32.xlu0 %v363, 34
      %v787 = vpop.permute.xlu0 %786
      %788 = vrot.lane.b32.xlu0 %v364, 34
      %v789 = vpop.permute.xlu0 %788
      %790 = vrot.lane.b32.xlu0 %v365, 34
      %v791 = vpop.permute.xlu0 %790
      %792 = vrot.lane.b32.xlu0 %v366, 34
      %v793 = vpop.permute.xlu0 %792
      %794 = vrot.lane.b32.xlu0 %v367, 34
      %v795 = vpop.permute.xlu0 %794
      %796 = vrot.lane.b32.xlu0 %v368, 34
      %v797 = vpop.permute.xlu0 %796
      %798 = vrot.lane.b32.xlu0 %v369, 34
      %v799 = vpop.permute.xlu0 %798
      %800 = vrot.lane.b32.xlu0 %v370, 34
      %v801 = vpop.permute.xlu0 %800
      %vm802 = vcmp.lt.s32.totalorder %v396, 34
      %v803 = vsel %vm802, %v799, %v801
      %v804 = vsel %vm802, %v797, %v799
      %v805 = vsel %vm802, %v795, %v797
      %v806 = vsel %vm802, %v793, %v795
      %v807 = vsel %vm802, %v791, %v793
      %v808 = vsel %vm802, %v789, %v791
      %v809 = vsel %vm802, %v787, %v789
      %v810 = vsel %vm802, %v785, %v787
      %v811 = vsel %vm802, %v783, %v785
      %v812 = vsel %vm802, %v781, %v783
      %v813 = vsel %vm802, %v801, %v781
      %814 = vst [vmem:[#allocation2 + $0x318] sm:$0xff] %v813
      %815 = vst [vmem:[#allocation2 + $0x320] sm:$0xff] %v812
      %816 = vst [vmem:[#allocation2 + $0x328] sm:$0xff] %v811
      %817 = vst [vmem:[#allocation2 + $0x330] sm:$0xff] %v810
      %818 = vst [vmem:[#allocation2 + $0x338] sm:$0xff] %v809
      %819 = vst [vmem:[#allocation2 + $0x340] sm:$0xff] %v808
      %820 = vst [vmem:[#allocation2 + $0x348] sm:$0xff] %v807
      %821 = vst [vmem:[#allocation2 + $0x350] sm:$0xff] %v806
      %822 = vst [vmem:[#allocation2 + $0x358] sm:$0xff] %v805
      %823 = vst [vmem:[#allocation2 + $0x360] sm:$0xff] %v804
      %824 = vst [vmem:[#allocation2 + $0x368] sm:$0xff] %v803
      %825 = vrot.lane.b32.xlu0 %v360, 2
      %v826 = vpop.permute.xlu0 %825
      %827 = vrot.lane.b32.xlu0 %v361, 2
      %v828 = vpop.permute.xlu0 %827
      %829 = vrot.lane.b32.xlu0 %v362, 2
      %v830 = vpop.permute.xlu0 %829
      %831 = vrot.lane.b32.xlu0 %v363, 2
      %v832 = vpop.permute.xlu0 %831
      %833 = vrot.lane.b32.xlu0 %v364, 2
      %v834 = vpop.permute.xlu0 %833
      %835 = vrot.lane.b32.xlu0 %v365, 2
      %v836 = vpop.permute.xlu0 %835
      %837 = vrot.lane.b32.xlu0 %v366, 2
      %v838 = vpop.permute.xlu0 %837
      %839 = vrot.lane.b32.xlu0 %v367, 2
      %v840 = vpop.permute.xlu0 %839
      %841 = vrot.lane.b32.xlu0 %v368, 2
      %v842 = vpop.permute.xlu0 %841
      %843 = vrot.lane.b32.xlu0 %v369, 2
      %v844 = vpop.permute.xlu0 %843
      %845 = vrot.lane.b32.xlu0 %v370, 2
      %v846 = vpop.permute.xlu0 %845
      %vm847 = vcmp.lt.s32.totalorder %v396, 2
      %v848 = vsel %vm847, %v844, %v846
      %v849 = vsel %vm847, %v842, %v844
      %v850 = vsel %vm847, %v840, %v842
      %v851 = vsel %vm847, %v838, %v840
      %v852 = vsel %vm847, %v836, %v838
      %v853 = vsel %vm847, %v834, %v836
      %v854 = vsel %vm847, %v832, %v834
      %v855 = vsel %vm847, %v830, %v832
      %v856 = vsel %vm847, %v828, %v830
      %v857 = vsel %vm847, %v826, %v828
      %v858 = vsel %vm847, %v846, %v826
      %859 = vst [vmem:[#allocation2 + $0x370] sm:$0xff] %v858
      %860 = vst [vmem:[#allocation2 + $0x378] sm:$0xff] %v857
      %861 = vst [vmem:[#allocation2 + $0x380] sm:$0xff] %v856
      %862 = vst [vmem:[#allocation2 + $0x388] sm:$0xff] %v855
      %863 = vst [vmem:[#allocation2 + $0x390] sm:$0xff] %v854
      %864 = vst [vmem:[#allocation2 + $0x398] sm:$0xff] %v853
      %865 = vst [vmem:[#allocation2 + $0x3a0] sm:$0xff] %v852
      %866 = vst [vmem:[#allocation2 + $0x3a8] sm:$0xff] %v851
      %867 = vst [vmem:[#allocation2 + $0x3b0] sm:$0xff] %v850
      %868 = vst [vmem:[#allocation2 + $0x3b8] sm:$0xff] %v849
      %869 = vst [vmem:[#allocation2 + $0x3c0] sm:$0xff] %v848
      %870 = vrot.lane.b32.xlu0 %v360, 1
      %v871 = vpop.permute.xlu0 %870
      %872 = vrot.lane.b32.xlu0 %v361, 1
      %v873 = vpop.permute.xlu0 %872
      %874 = vrot.lane.b32.xlu0 %v362, 1
      %v875 = vpop.permute.xlu0 %874
      %876 = vrot.lane.b32.xlu0 %v363, 1
      %v877 = vpop.permute.xlu0 %876
      %878 = vrot.lane.b32.xlu0 %v364, 1
      %v879 = vpop.permute.xlu0 %878
      %880 = vrot.lane.b32.xlu0 %v365, 1
      %v881 = vpop.permute.xlu0 %880
      %882 = vrot.lane.b32.xlu0 %v366, 1
      %v883 = vpop.permute.xlu0 %882
      %884 = vrot.lane.b32.xlu0 %v367, 1
      %v885 = vpop.permute.xlu0 %884
      %886 = vrot.lane.b32.xlu0 %v368, 1
      %v887 = vpop.permute.xlu0 %886
      %888 = vrot.lane.b32.xlu0 %v369, 1
      %v889 = vpop.permute.xlu0 %888
      %890 = vrot.lane.b32.xlu0 %v370, 1
      %v891 = vpop.permute.xlu0 %890
      %vm892 = vcmp.lt.s32.totalorder %v396, 1
      %v893 = vsel %vm892, %v889, %v891
      %v894 = vsel %vm892, %v887, %v889
      %v895 = vsel %vm892, %v885, %v887
      %v896 = vsel %vm892, %v883, %v885
      %v897 = vsel %vm892, %v881, %v883
      %v898 = vsel %vm892, %v879, %v881
      %v899 = vsel %vm892, %v877, %v879
      %v900 = vsel %vm892, %v875, %v877
      %v901 = vsel %vm892, %v873, %v875
      %v902 = vsel %vm892, %v871, %v873
      %v903 = vsel %vm892, %v891, %v871
      %904 = vst [vmem:[#allocation2 + $0x3c8] sm:$0xff] %v903
      %905 = vst [vmem:[#allocation2 + $0x3d0] sm:$0xff] %v902
      %906 = vst [vmem:[#allocation2 + $0x3d8] sm:$0xff] %v901
      %907 = vst [vmem:[#allocation2 + $0x3e0] sm:$0xff] %v900
      %908 = vst [vmem:[#allocation2 + $0x3e8] sm:$0xff] %v899
      %909 = vst [vmem:[#allocation2 + $0x3f0] sm:$0xff] %v898
      %910 = vst [vmem:[#allocation2 + $0x3f8] sm:$0xff] %v897
      %911 = vst [vmem:[#allocation2 + $0x400] sm:$0xff] %v896
      %912 = vst [vmem:[#allocation2 + $0x408] sm:$0xff] %v895
      %913 = vst [vmem:[#allocation2 + $0x410] sm:$0xff] %v894
      %914 = vst [vmem:[#allocation2 + $0x418] sm:$0xff] %v893
      %915 = vst [vmem:[#allocation2 + $0x420] sm:$0xff] %v360
      %916 = vst [vmem:[#allocation2 + $0x428] sm:$0xff] %v361
      %917 = vst [vmem:[#allocation2 + $0x430] sm:$0xff] %v362
      %918 = vst [vmem:[#allocation2 + $0x438] sm:$0xff] %v363
      %919 = vst [vmem:[#allocation2 + $0x440] sm:$0xff] %v364
      %920 = vst [vmem:[#allocation2 + $0x448] sm:$0xff] %v365
      %921 = vst [vmem:[#allocation2 + $0x450] sm:$0xff] %v366
      %922 = vst [vmem:[#allocation2 + $0x458] sm:$0xff] %v367
      %923 = vst [vmem:[#allocation2 + $0x460] sm:$0xff] %v368
      %924 = vst [vmem:[#allocation2 + $0x468] sm:$0xff] %v369
      %925 = vst [vmem:[#allocation2 + $0x470] sm:$0xff] %v370
      %926 = vrot.lane.b32.xlu0 %v360, 127
      %v927 = vpop.permute.xlu0 %926
      %928 = vrot.lane.b32.xlu0 %v361, 127
      %v929 = vpop.permute.xlu0 %928
      %930 = vrot.lane.b32.xlu0 %v362, 127
      %v931 = vpop.permute.xlu0 %930
      %932 = vrot.lane.b32.xlu0 %v363, 127
      %v933 = vpop.permute.xlu0 %932
      %934 = vrot.lane.b32.xlu0 %v364, 127
      %v935 = vpop.permute.xlu0 %934
      %936 = vrot.lane.b32.xlu0 %v365, 127
      %v937 = vpop.permute.xlu0 %936
      %938 = vrot.lane.b32.xlu0 %v366, 127
      %v939 = vpop.permute.xlu0 %938
      %940 = vrot.lane.b32.xlu0 %v367, 127
      %v941 = vpop.permute.xlu0 %940
      %942 = vrot.lane.b32.xlu0 %v368, 127
      %v943 = vpop.permute.xlu0 %942
      %944 = vrot.lane.b32.xlu0 %v369, 127
      %v945 = vpop.permute.xlu0 %944
      %946 = vrot.lane.b32.xlu0 %v370, 127
      %v947 = vpop.permute.xlu0 %946
      %vm948 = vcmp.lt.s32.totalorder %v396, 127
      %v949 = vsel %vm948, %v945, %v947
      %v950 = vsel %vm948, %v943, %v945
      %v951 = vsel %vm948, %v941, %v943
      %v952 = vsel %vm948, %v939, %v941
      %v953 = vsel %vm948, %v937, %v939
      %v954 = vsel %vm948, %v935, %v937
      %v955 = vsel %vm948, %v933, %v935
      %v956 = vsel %vm948, %v931, %v933
      %v957 = vsel %vm948, %v929, %v931
      %v958 = vsel %vm948, %v927, %v929
      %v959 = vsel %vm948, %v947, %v927
      %960 = vst [vmem:[#allocation2 + $0x478] sm:$0xff] %v958
      %961 = vst [vmem:[#allocation2 + $0x480] sm:$0xff] %v957
      %962 = vst [vmem:[#allocation2 + $0x488] sm:$0xff] %v956
      %963 = vst [vmem:[#allocation2 + $0x490] sm:$0xff] %v955
      %964 = vst [vmem:[#allocation2 + $0x498] sm:$0xff] %v954
      %965 = vst [vmem:[#allocation2 + $0x4a0] sm:$0xff] %v953
      %966 = vst [vmem:[#allocation2 + $0x4a8] sm:$0xff] %v952
      %967 = vst [vmem:[#allocation2 + $0x4b0] sm:$0xff] %v951
      %968 = vst [vmem:[#allocation2 + $0x4b8] sm:$0xff] %v950
      %969 = vst [vmem:[#allocation2 + $0x4c0] sm:$0xff] %v949
      %970 = vst [vmem:[#allocation2 + $0x4c8] sm:$0xff] %v959
      %971 = vrot.lane.b32.xlu0 %v360, 126
      %v972 = vpop.permute.xlu0 %971
      %973 = vrot.lane.b32.xlu0 %v361, 126
      %v974 = vpop.permute.xlu0 %973
      %975 = vrot.lane.b32.xlu0 %v362, 126
      %v976 = vpop.permute.xlu0 %975
      %977 = vrot.lane.b32.xlu0 %v363, 126
      %v978 = vpop.permute.xlu0 %977
      %979 = vrot.lane.b32.xlu0 %v364, 126
      %v980 = vpop.permute.xlu0 %979
      %981 = vrot.lane.b32.xlu0 %v365, 126
      %v982 = vpop.permute.xlu0 %981
      %983 = vrot.lane.b32.xlu0 %v366, 126
      %v984 = vpop.permute.xlu0 %983
      %985 = vrot.lane.b32.xlu0 %v367, 126
      %v986 = vpop.permute.xlu0 %985
      %987 = vrot.lane.b32.xlu0 %v368, 126
      %v988 = vpop.permute.xlu0 %987
      %989 = vrot.lane.b32.xlu0 %v369, 126
      %v990 = vpop.permute.xlu0 %989
      %991 = vrot.lane.b32.xlu0 %v370, 126
      %v992 = vpop.permute.xlu0 %991
      %vm993 = vcmp.lt.s32.totalorder %v396, 126
      %v994 = vsel %vm993, %v990, %v992
      %v995 = vsel %vm993, %v988, %v990
      %v996 = vsel %vm993, %v986, %v988
      %v997 = vsel %vm993, %v984, %v986
      %v998 = vsel %vm993, %v982, %v984
      %v999 = vsel %vm993, %v980, %v982
      %v1000 = vsel %vm993, %v978, %v980
      %v1001 = vsel %vm993, %v976, %v978
      %v1002 = vsel %vm993, %v974, %v976
      %v1003 = vsel %vm993, %v972, %v974
      %v1004 = vsel %vm993, %v992, %v972
      %1005 = vst [vmem:[#allocation2 + $0x4d0] sm:$0xff] %v1003
      %1006 = vst [vmem:[#allocation2 + $0x4d8] sm:$0xff] %v1002
      %1007 = vst [vmem:[#allocation2 + $0x4e0] sm:$0xff] %v1001
      %1008 = vst [vmem:[#allocation2 + $0x4e8] sm:$0xff] %v1000
      %1009 = vst [vmem:[#allocation2 + $0x4f0] sm:$0xff] %v999
      %1010 = vst [vmem:[#allocation2 + $0x4f8] sm:$0xff] %v998
      %1011 = vst [vmem:[#allocation2 + $0x500] sm:$0xff] %v997
      %1012 = vst [vmem:[#allocation2 + $0x508] sm:$0xff] %v996
      %1013 = vst [vmem:[#allocation2 + $0x510] sm:$0xff] %v995
      %1014 = vst [vmem:[#allocation2 + $0x518] sm:$0xff] %v994
      %1015 = vst [vmem:[#allocation2 + $0x520] sm:$0xff] %v1004
      %1016 = vrot.lane.b32.xlu0 %v360, 94
      %v1017 = vpop.permute.xlu0 %1016
      %1018 = vrot.lane.b32.xlu0 %v361, 94
      %v1019 = vpop.permute.xlu0 %1018
      %1020 = vrot.lane.b32.xlu0 %v362, 94
      %v1021 = vpop.permute.xlu0 %1020
      %1022 = vrot.lane.b32.xlu0 %v363, 94
      %v1023 = vpop.permute.xlu0 %1022
      %1024 = vrot.lane.b32.xlu0 %v364, 94
      %v1025 = vpop.permute.xlu0 %1024
      %1026 = vrot.lane.b32.xlu0 %v365, 94
      %v1027 = vpop.permute.xlu0 %1026
      %1028 = vrot.lane.b32.xlu0 %v366, 94
      %v1029 = vpop.permute.xlu0 %1028
      %1030 = vrot.lane.b32.xlu0 %v367, 94
      %v1031 = vpop.permute.xlu0 %1030
      %1032 = vrot.lane.b32.xlu0 %v368, 94
      %v1033 = vpop.permute.xlu0 %1032
      %1034 = vrot.lane.b32.xlu0 %v369, 94
      %v1035 = vpop.permute.xlu0 %1034
      %1036 = vrot.lane.b32.xlu0 %v370, 94
      %v1037 = vpop.permute.xlu0 %1036
      %vm1038 = vcmp.lt.s32.totalorder %v396, 94
      %v1039 = vsel %vm1038, %v1035, %v1037
      %v1040 = vsel %vm1038, %v1033, %v1035
      %v1041 = vsel %vm1038, %v1031, %v1033
      %v1042 = vsel %vm1038, %v1029, %v1031
      %v1043 = vsel %vm1038, %v1027, %v1029
      %v1044 = vsel %vm1038, %v1025, %v1027
      %v1045 = vsel %vm1038, %v1023, %v1025
      %v1046 = vsel %vm1038, %v1021, %v1023
      %v1047 = vsel %vm1038, %v1019, %v1021
      %v1048 = vsel %vm1038, %v1017, %v1019
      %v1049 = vsel %vm1038, %v1037, %v1017
      %1050 = vst [vmem:[#allocation2 + $0x528] sm:$0xff] %v1048
      %1051 = vst [vmem:[#allocation2 + $0x530] sm:$0xff] %v1047
      %1052 = vst [vmem:[#allocation2 + $0x538] sm:$0xff] %v1046
      %1053 = vst [vmem:[#allocation2 + $0x540] sm:$0xff] %v1045
      %1054 = vst [vmem:[#allocation2 + $0x548] sm:$0xff] %v1044
      %1055 = vst [vmem:[#allocation2 + $0x550] sm:$0xff] %v1043
      %1056 = vst [vmem:[#allocation2 + $0x558] sm:$0xff] %v1042
      %1057 = vst [vmem:[#allocation2 + $0x560] sm:$0xff] %v1041
      %1058 = vst [vmem:[#allocation2 + $0x568] sm:$0xff] %v1040
      %1059 = vst [vmem:[#allocation2 + $0x570] sm:$0xff] %v1039
      %1060 = vst [vmem:[#allocation2 + $0x578] sm:$0xff] %v1049
      %1061 = vrot.lane.b32.xlu0 %v360, 93
      %v1062 = vpop.permute.xlu0 %1061
      %1063 = vrot.lane.b32.xlu0 %v361, 93
      %v1064 = vpop.permute.xlu0 %1063
      %1065 = vrot.lane.b32.xlu0 %v362, 93
      %v1066 = vpop.permute.xlu0 %1065
      %1067 = vrot.lane.b32.xlu0 %v363, 93
      %v1068 = vpop.permute.xlu0 %1067
      %1069 = vrot.lane.b32.xlu0 %v364, 93
      %v1070 = vpop.permute.xlu0 %1069
      %1071 = vrot.lane.b32.xlu0 %v365, 93
      %v1072 = vpop.permute.xlu0 %1071
      %1073 = vrot.lane.b32.xlu0 %v366, 93
      %v1074 = vpop.permute.xlu0 %1073
      %1075 = vrot.lane.b32.xlu0 %v367, 93
      %v1076 = vpop.permute.xlu0 %1075
      %1077 = vrot.lane.b32.xlu0 %v368, 93
      %v1078 = vpop.permute.xlu0 %1077
      %1079 = vrot.lane.b32.xlu0 %v369, 93
      %v1080 = vpop.permute.xlu0 %1079
      %1081 = vrot.lane.b32.xlu0 %v370, 93
      %v1082 = vpop.permute.xlu0 %1081
      %vm1083 = vcmp.lt.s32.totalorder %v396, 93
      %v1084 = vsel %vm1083, %v1080, %v1082
      %v1085 = vsel %vm1083, %v1078, %v1080
      %v1086 = vsel %vm1083, %v1076, %v1078
      %v1087 = vsel %vm1083, %v1074, %v1076
      %v1088 = vsel %vm1083, %v1072, %v1074
      %v1089 = vsel %vm1083, %v1070, %v1072
      %v1090 = vsel %vm1083, %v1068, %v1070
      %v1091 = vsel %vm1083, %v1066, %v1068
      %v1092 = vsel %vm1083, %v1064, %v1066
      %v1093 = vsel %vm1083, %v1062, %v1064
      %v1094 = vsel %vm1083, %v1082, %v1062
      %1095 = vst [vmem:[#allocation2 + $0x580] sm:$0xff] %v1093
      %1096 = vst [vmem:[#allocation2 + $0x588] sm:$0xff] %v1092
      %1097 = vst [vmem:[#allocation2 + $0x590] sm:$0xff] %v1091
      %1098 = vst [vmem:[#allocation2 + $0x598] sm:$0xff] %v1090
      %1099 = vst [vmem:[#allocation2 + $0x5a0] sm:$0xff] %v1089
      %1100 = vst [vmem:[#allocation2 + $0x5a8] sm:$0xff] %v1088
      %1101 = vst [vmem:[#allocation2 + $0x5b0] sm:$0xff] %v1087
      %1102 = vst [vmem:[#allocation2 + $0x5b8] sm:$0xff] %v1086
      %1103 = vst [vmem:[#allocation2 + $0x5c0] sm:$0xff] %v1085
      %1104 = vst [vmem:[#allocation2 + $0x5c8] sm:$0xff] %v1084
      %1105 = vst [vmem:[#allocation2 + $0x5d0] sm:$0xff] %v1094
      %1106 = vrot.lane.b32.xlu0 %v360, 92
      %v1107 = vpop.permute.xlu0 %1106
      %1108 = vrot.lane.b32.xlu0 %v361, 92
      %v1109 = vpop.permute.xlu0 %1108
      %1110 = vrot.lane.b32.xlu0 %v362, 92
      %v1111 = vpop.permute.xlu0 %1110
      %1112 = vrot.lane.b32.xlu0 %v363, 92
      %v1113 = vpop.permute.xlu0 %1112
      %1114 = vrot.lane.b32.xlu0 %v364, 92
      %v1115 = vpop.permute.xlu0 %1114
      %1116 = vrot.lane.b32.xlu0 %v365, 92
      %v1117 = vpop.permute.xlu0 %1116
      %1118 = vrot.lane.b32.xlu0 %v366, 92
      %v1119 = vpop.permute.xlu0 %1118
      %1120 = vrot.lane.b32.xlu0 %v367, 92
      %v1121 = vpop.permute.xlu0 %1120
      %1122 = vrot.lane.b32.xlu0 %v368, 92
      %v1123 = vpop.permute.xlu0 %1122
      %1124 = vrot.lane.b32.xlu0 %v369, 92
      %v1125 = vpop.permute.xlu0 %1124
      %1126 = vrot.lane.b32.xlu0 %v370, 92
      %v1127 = vpop.permute.xlu0 %1126
      %vm1128 = vcmp.lt.s32.totalorder %v396, 92
      %v1129 = vsel %vm1128, %v1125, %v1127
      %v1130 = vsel %vm1128, %v1123, %v1125
      %v1131 = vsel %vm1128, %v1121, %v1123
      %v1132 = vsel %vm1128, %v1119, %v1121
      %v1133 = vsel %vm1128, %v1117, %v1119
      %v1134 = vsel %vm1128, %v1115, %v1117
      %v1135 = vsel %vm1128, %v1113, %v1115
      %v1136 = vsel %vm1128, %v1111, %v1113
      %v1137 = vsel %vm1128, %v1109, %v1111
      %v1138 = vsel %vm1128, %v1107, %v1109
      %v1139 = vsel %vm1128, %v1127, %v1107
      %1140 = vst [vmem:[#allocation2 + $0x5d8] sm:$0xff] %v1138
      %1141 = vst [vmem:[#allocation2 + $0x5e0] sm:$0xff] %v1137
      %1142 = vst [vmem:[#allocation2 + $0x5e8] sm:$0xff] %v1136
      %1143 = vst [vmem:[#allocation2 + $0x5f0] sm:$0xff] %v1135
      %1144 = vst [vmem:[#allocation2 + $0x5f8] sm:$0xff] %v1134
      %1145 = vst [vmem:[#allocation2 + $0x600] sm:$0xff] %v1133
      %1146 = vst [vmem:[#allocation2 + $0x608] sm:$0xff] %v1132
      %1147 = vst [vmem:[#allocation2 + $0x610] sm:$0xff] %v1131
      %1148 = vst [vmem:[#allocation2 + $0x618] sm:$0xff] %v1130
      %1149 = vst [vmem:[#allocation2 + $0x620] sm:$0xff] %v1129
      %1150 = vst [vmem:[#allocation2 + $0x628] sm:$0xff] %v1139
      %1151 = vrot.lane.b32.xlu0 %v360, 91
      %v1152 = vpop.permute.xlu0 %1151
      %1153 = vrot.lane.b32.xlu0 %v361, 91
      %v1154 = vpop.permute.xlu0 %1153
      %1155 = vrot.lane.b32.xlu0 %v362, 91
      %v1156 = vpop.permute.xlu0 %1155
      %1157 = vrot.lane.b32.xlu0 %v363, 91
      %v1158 = vpop.permute.xlu0 %1157
      %1159 = vrot.lane.b32.xlu0 %v364, 91
      %v1160 = vpop.permute.xlu0 %1159
      %1161 = vrot.lane.b32.xlu0 %v365, 91
      %v1162 = vpop.permute.xlu0 %1161
      %1163 = vrot.lane.b32.xlu0 %v366, 91
      %v1164 = vpop.permute.xlu0 %1163
      %1165 = vrot.lane.b32.xlu0 %v367, 91
      %v1166 = vpop.permute.xlu0 %1165
      %1167 = vrot.lane.b32.xlu0 %v368, 91
      %v1168 = vpop.permute.xlu0 %1167
      %1169 = vrot.lane.b32.xlu0 %v369, 91
      %v1170 = vpop.permute.xlu0 %1169
      %1171 = vrot.lane.b32.xlu0 %v370, 91
      %v1172 = vpop.permute.xlu0 %1171
      %vm1173 = vcmp.lt.s32.totalorder %v396, 91
      %v1174 = vsel %vm1173, %v1170, %v1172
      %v1175 = vsel %vm1173, %v1168, %v1170
      %v1176 = vsel %vm1173, %v1166, %v1168
      %v1177 = vsel %vm1173, %v1164, %v1166
      %v1178 = vsel %vm1173, %v1162, %v1164
      %v1179 = vsel %vm1173, %v1160, %v1162
      %v1180 = vsel %vm1173, %v1158, %v1160
      %v1181 = vsel %vm1173, %v1156, %v1158
      %v1182 = vsel %vm1173, %v1154, %v1156
      %v1183 = vsel %vm1173, %v1152, %v1154
      %v1184 = vsel %vm1173, %v1172, %v1152
      %1185 = vst [vmem:[#allocation2 + $0x630] sm:$0xff] %v1183
      %1186 = vst [vmem:[#allocation2 + $0x638] sm:$0xff] %v1182
      %1187 = vst [vmem:[#allocation2 + $0x640] sm:$0xff] %v1181
      %1188 = vst [vmem:[#allocation2 + $0x648] sm:$0xff] %v1180
      %1189 = vst [vmem:[#allocation2 + $0x650] sm:$0xff] %v1179
      %1190 = vst [vmem:[#allocation2 + $0x658] sm:$0xff] %v1178
      %1191 = vst [vmem:[#allocation2 + $0x660] sm:$0xff] %v1177
      %1192 = vst [vmem:[#allocation2 + $0x668] sm:$0xff] %v1176
      %1193 = vst [vmem:[#allocation2 + $0x670] sm:$0xff] %v1175
      %1194 = vst [vmem:[#allocation2 + $0x678] sm:$0xff] %v1174
      %1195 = vst [vmem:[#allocation2 + $0x680] sm:$0xff] %v1184
      %1196 = vrot.lane.b32.xlu0 %v360, 90
      %v1197 = vpop.permute.xlu0 %1196
      %1198 = vrot.lane.b32.xlu0 %v361, 90
      %v1199 = vpop.permute.xlu0 %1198
      %1200 = vrot.lane.b32.xlu0 %v362, 90
      %v1201 = vpop.permute.xlu0 %1200
      %1202 = vrot.lane.b32.xlu0 %v363, 90
      %v1203 = vpop.permute.xlu0 %1202
      %1204 = vrot.lane.b32.xlu0 %v364, 90
      %v1205 = vpop.permute.xlu0 %1204
      %1206 = vrot.lane.b32.xlu0 %v365, 90
      %v1207 = vpop.permute.xlu0 %1206
      %1208 = vrot.lane.b32.xlu0 %v366, 90
      %v1209 = vpop.permute.xlu0 %1208
      %1210 = vrot.lane.b32.xlu0 %v367, 90
      %v1211 = vpop.permute.xlu0 %1210
      %1212 = vrot.lane.b32.xlu0 %v368, 90
      %v1213 = vpop.permute.xlu0 %1212
      %1214 = vrot.lane.b32.xlu0 %v369, 90
      %v1215 = vpop.permute.xlu0 %1214
      %1216 = vrot.lane.b32.xlu0 %v370, 90
      %v1217 = vpop.permute.xlu0 %1216
      %vm1218 = vcmp.lt.s32.totalorder %v396, 90
      %v1219 = vsel %vm1218, %v1215, %v1217
      %v1220 = vsel %vm1218, %v1213, %v1215
      %v1221 = vsel %vm1218, %v1211, %v1213
      %v1222 = vsel %vm1218, %v1209, %v1211
      %v1223 = vsel %vm1218, %v1207, %v1209
      %v1224 = vsel %vm1218, %v1205, %v1207
      %v1225 = vsel %vm1218, %v1203, %v1205
      %v1226 = vsel %vm1218, %v1201, %v1203
      %v1227 = vsel %vm1218, %v1199, %v1201
      %v1228 = vsel %vm1218, %v1197, %v1199
      %v1229 = vsel %vm1218, %v1217, %v1197
      %1230 = vst [vmem:[#allocation2 + $0x688] sm:$0xff] %v1228
      %1231 = vst [vmem:[#allocation2 + $0x690] sm:$0xff] %v1227
      %1232 = vst [vmem:[#allocation2 + $0x698] sm:$0xff] %v1226
      %1233 = vst [vmem:[#allocation2 + $0x6a0] sm:$0xff] %v1225
      %1234 = vst [vmem:[#allocation2 + $0x6a8] sm:$0xff] %v1224
      %1235 = vst [vmem:[#allocation2 + $0x6b0] sm:$0xff] %v1223
      %1236 = vst [vmem:[#allocation2 + $0x6b8] sm:$0xff] %v1222
      %1237 = vst [vmem:[#allocation2 + $0x6c0] sm:$0xff] %v1221
      %1238 = vst [vmem:[#allocation2 + $0x6c8] sm:$0xff] %v1220
      %1239 = vst [vmem:[#allocation2 + $0x6d0] sm:$0xff] %v1219
      %1240 = vst [vmem:[#allocation2 + $0x6d8] sm:$0xff] %v1229
      %1241 = vrot.lane.b32.xlu0 %v360, 58
      %v1242 = vpop.permute.xlu0 %1241
      %1243 = vrot.lane.b32.xlu0 %v361, 58
      %v1244 = vpop.permute.xlu0 %1243
      %1245 = vrot.lane.b32.xlu0 %v362, 58
      %v1246 = vpop.permute.xlu0 %1245
      %1247 = vrot.lane.b32.xlu0 %v363, 58
      %v1248 = vpop.permute.xlu0 %1247
      %1249 = vrot.lane.b32.xlu0 %v364, 58
      %v1250 = vpop.permute.xlu0 %1249
      %1251 = vrot.lane.b32.xlu0 %v365, 58
      %v1252 = vpop.permute.xlu0 %1251
      %1253 = vrot.lane.b32.xlu0 %v366, 58
      %v1254 = vpop.permute.xlu0 %1253
      %1255 = vrot.lane.b32.xlu0 %v367, 58
      %v1256 = vpop.permute.xlu0 %1255
      %1257 = vrot.lane.b32.xlu0 %v368, 58
      %v1258 = vpop.permute.xlu0 %1257
      %1259 = vrot.lane.b32.xlu0 %v369, 58
      %v1260 = vpop.permute.xlu0 %1259
      %1261 = vrot.lane.b32.xlu0 %v370, 58
      %v1262 = vpop.permute.xlu0 %1261
      %vm1263 = vcmp.lt.s32.totalorder %v396, 58
      %v1264 = vsel %vm1263, %v1260, %v1262
      %v1265 = vsel %vm1263, %v1258, %v1260
      %v1266 = vsel %vm1263, %v1256, %v1258
      %v1267 = vsel %vm1263, %v1254, %v1256
      %v1268 = vsel %vm1263, %v1252, %v1254
      %v1269 = vsel %vm1263, %v1250, %v1252
      %v1270 = vsel %vm1263, %v1248, %v1250
      %v1271 = vsel %vm1263, %v1246, %v1248
      %v1272 = vsel %vm1263, %v1244, %v1246
      %v1273 = vsel %vm1263, %v1242, %v1244
      %v1274 = vsel %vm1263, %v1262, %v1242
      %1275 = vst [vmem:[#allocation2 + $0x6e0] sm:$0xff] %v1273
      %1276 = vst [vmem:[#allocation2 + $0x6e8] sm:$0xff] %v1272
      %1277 = vst [vmem:[#allocation2 + $0x6f0] sm:$0xff] %v1271
      %1278 = vst [vmem:[#allocation2 + $0x6f8] sm:$0xff] %v1270
      %1279 = vst [vmem:[#allocation2 + $0x700] sm:$0xff] %v1269
      %1280 = vst [vmem:[#allocation2 + $0x708] sm:$0xff] %v1268
      %1281 = vst [vmem:[#allocation2 + $0x710] sm:$0xff] %v1267
      %1282 = vst [vmem:[#allocation2 + $0x718] sm:$0xff] %v1266
      %1283 = vst [vmem:[#allocation2 + $0x720] sm:$0xff] %v1265
      %1284 = vst [vmem:[#allocation2 + $0x728] sm:$0xff] %v1264
      %1285 = vst [vmem:[#allocation2 + $0x730] sm:$0xff] %v1274
      %1286 = vrot.lane.b32.xlu0 %v360, 57
      %v1287 = vpop.permute.xlu0 %1286
      %1288 = vrot.lane.b32.xlu0 %v361, 57
      %v1289 = vpop.permute.xlu0 %1288
      %1290 = vrot.lane.b32.xlu0 %v362, 57
      %v1291 = vpop.permute.xlu0 %1290
      %1292 = vrot.lane.b32.xlu0 %v363, 57
      %v1293 = vpop.permute.xlu0 %1292
      %1294 = vrot.lane.b32.xlu0 %v364, 57
      %v1295 = vpop.permute.xlu0 %1294
      %1296 = vrot.lane.b32.xlu0 %v365, 57
      %v1297 = vpop.permute.xlu0 %1296
      %1298 = vrot.lane.b32.xlu0 %v366, 57
      %v1299 = vpop.permute.xlu0 %1298
      %1300 = vrot.lane.b32.xlu0 %v367, 57
      %v1301 = vpop.permute.xlu0 %1300
      %1302 = vrot.lane.b32.xlu0 %v368, 57
      %v1303 = vpop.permute.xlu0 %1302
      %1304 = vrot.lane.b32.xlu0 %v369, 57
      %v1305 = vpop.permute.xlu0 %1304
      %1306 = vrot.lane.b32.xlu0 %v370, 57
      %v1307 = vpop.permute.xlu0 %1306
      %vm1308 = vcmp.lt.s32.totalorder %v396, 57
      %v1309 = vsel %vm1308, %v1305, %v1307
      %v1310 = vsel %vm1308, %v1303, %v1305
      %v1311 = vsel %vm1308, %v1301, %v1303
      %v1312 = vsel %vm1308, %v1299, %v1301
      %v1313 = vsel %vm1308, %v1297, %v1299
      %v1314 = vsel %vm1308, %v1295, %v1297
      %v1315 = vsel %vm1308, %v1293, %v1295
      %v1316 = vsel %vm1308, %v1291, %v1293
      %v1317 = vsel %vm1308, %v1289, %v1291
      %v1318 = vsel %vm1308, %v1287, %v1289
      %v1319 = vsel %vm1308, %v1307, %v1287
      %1320 = vst [vmem:[#allocation2 + $0x738] sm:$0xff] %v1318
      %1321 = vst [vmem:[#allocation2 + $0x740] sm:$0xff] %v1317
      %1322 = vst [vmem:[#allocation2 + $0x748] sm:$0xff] %v1316
      %1323 = vst [vmem:[#allocation2 + $0x750] sm:$0xff] %v1315
      %1324 = vst [vmem:[#allocation2 + $0x758] sm:$0xff] %v1314
      %1325 = vst [vmem:[#allocation2 + $0x760] sm:$0xff] %v1313
      %1326 = vst [vmem:[#allocation2 + $0x768] sm:$0xff] %v1312
      %1327 = vst [vmem:[#allocation2 + $0x770] sm:$0xff] %v1311
      %1328 = vst [vmem:[#allocation2 + $0x778] sm:$0xff] %v1310
      %1329 = vst [vmem:[#allocation2 + $0x780] sm:$0xff] %v1309
      %1330 = vst [vmem:[#allocation2 + $0x788] sm:$0xff] %v1319
      %1331 = vrot.lane.b32.xlu0 %v360, 56
      %v1332 = vpop.permute.xlu0 %1331
      %1333 = vrot.lane.b32.xlu0 %v361, 56
      %v1334 = vpop.permute.xlu0 %1333
      %1335 = vrot.lane.b32.xlu0 %v362, 56
      %v1336 = vpop.permute.xlu0 %1335
      %1337 = vrot.lane.b32.xlu0 %v363, 56
      %v1338 = vpop.permute.xlu0 %1337
      %1339 = vrot.lane.b32.xlu0 %v364, 56
      %v1340 = vpop.permute.xlu0 %1339
      %1341 = vrot.lane.b32.xlu0 %v365, 56
      %v1342 = vpop.permute.xlu0 %1341
      %1343 = vrot.lane.b32.xlu0 %v366, 56
      %v1344 = vpop.permute.xlu0 %1343
      %1345 = vrot.lane.b32.xlu0 %v367, 56
      %v1346 = vpop.permute.xlu0 %1345
      %1347 = vrot.lane.b32.xlu0 %v368, 56
      %v1348 = vpop.permute.xlu0 %1347
      %1349 = vrot.lane.b32.xlu0 %v369, 56
      %v1350 = vpop.permute.xlu0 %1349
      %1351 = vrot.lane.b32.xlu0 %v370, 56
      %v1352 = vpop.permute.xlu0 %1351
      %vm1353 = vcmp.lt.s32.totalorder %v396, 56
      %v1354 = vsel %vm1353, %v1350, %v1352
      %v1355 = vsel %vm1353, %v1348, %v1350
      %v1356 = vsel %vm1353, %v1346, %v1348
      %v1357 = vsel %vm1353, %v1344, %v1346
      %v1358 = vsel %vm1353, %v1342, %v1344
      %v1359 = vsel %vm1353, %v1340, %v1342
      %v1360 = vsel %vm1353, %v1338, %v1340
      %v1361 = vsel %vm1353, %v1336, %v1338
      %v1362 = vsel %vm1353, %v1334, %v1336
      %v1363 = vsel %vm1353, %v1332, %v1334
      %v1364 = vsel %vm1353, %v1352, %v1332
      %1365 = vst [vmem:[#allocation2 + $0x790] sm:$0xff] %v1363
      %1366 = vst [vmem:[#allocation2 + $0x798] sm:$0xff] %v1362
      %1367 = vst [vmem:[#allocation2 + $0x7a0] sm:$0xff] %v1361
      %1368 = vst [vmem:[#allocation2 + $0x7a8] sm:$0xff] %v1360
      %1369 = vst [vmem:[#allocation2 + $0x7b0] sm:$0xff] %v1359
      %1370 = vst [vmem:[#allocation2 + $0x7b8] sm:$0xff] %v1358
      %1371 = vst [vmem:[#allocation2 + $0x7c0] sm:$0xff] %v1357
      %1372 = vst [vmem:[#allocation2 + $0x7c8] sm:$0xff] %v1356
      %1373 = vst [vmem:[#allocation2 + $0x7d0] sm:$0xff] %v1355
      %1374 = vst [vmem:[#allocation2 + $0x7d8] sm:$0xff] %v1354
      %1375 = vst [vmem:[#allocation2 + $0x7e0] sm:$0xff] %v1364
      %1376 = vrot.lane.b32.xlu0 %v360, 55
      %v1377 = vpop.permute.xlu0 %1376
      %1378 = vrot.lane.b32.xlu0 %v361, 55
      %v1379 = vpop.permute.xlu0 %1378
      %1380 = vrot.lane.b32.xlu0 %v362, 55
      %v1381 = vpop.permute.xlu0 %1380
      %1382 = vrot.lane.b32.xlu0 %v363, 55
      %v1383 = vpop.permute.xlu0 %1382
      %1384 = vrot.lane.b32.xlu0 %v364, 55
      %v1385 = vpop.permute.xlu0 %1384
      %1386 = vrot.lane.b32.xlu0 %v365, 55
      %v1387 = vpop.permute.xlu0 %1386
      %1388 = vrot.lane.b32.xlu0 %v366, 55
      %v1389 = vpop.permute.xlu0 %1388
      %1390 = vrot.lane.b32.xlu0 %v367, 55
      %v1391 = vpop.permute.xlu0 %1390
      %1392 = vrot.lane.b32.xlu0 %v368, 55
      %v1393 = vpop.permute.xlu0 %1392
      %1394 = vrot.lane.b32.xlu0 %v369, 55
      %v1395 = vpop.permute.xlu0 %1394
      %1396 = vrot.lane.b32.xlu0 %v370, 55
      %v1397 = vpop.permute.xlu0 %1396
      %vm1398 = vcmp.lt.s32.totalorder %v396, 55
      %v1399 = vsel %vm1398, %v1395, %v1397
      %v1400 = vsel %vm1398, %v1393, %v1395
      %v1401 = vsel %vm1398, %v1391, %v1393
      %v1402 = vsel %vm1398, %v1389, %v1391
      %v1403 = vsel %vm1398, %v1387, %v1389
      %v1404 = vsel %vm1398, %v1385, %v1387
      %v1405 = vsel %vm1398, %v1383, %v1385
      %v1406 = vsel %vm1398, %v1381, %v1383
      %v1407 = vsel %vm1398, %v1379, %v1381
      %v1408 = vsel %vm1398, %v1377, %v1379
      %v1409 = vsel %vm1398, %v1397, %v1377
      %1410 = vst [vmem:[#allocation2 + $0x7e8] sm:$0xff] %v1408
      %1411 = vst [vmem:[#allocation2 + $0x7f0] sm:$0xff] %v1407
      %1412 = vst [vmem:[#allocation2 + $0x7f8] sm:$0xff] %v1406
      %1413 = vst [vmem:[#allocation2 + $0x800] sm:$0xff] %v1405
      %1414 = vst [vmem:[#allocation2 + $0x808] sm:$0xff] %v1404
      %1415 = vst [vmem:[#allocation2 + $0x810] sm:$0xff] %v1403
      %1416 = vst [vmem:[#allocation2 + $0x818] sm:$0xff] %v1402
      %1417 = vst [vmem:[#allocation2 + $0x820] sm:$0xff] %v1401
      %1418 = vst [vmem:[#allocation2 + $0x828] sm:$0xff] %v1400
      %1419 = vst [vmem:[#allocation2 + $0x830] sm:$0xff] %v1399
      %1420 = vst [vmem:[#allocation2 + $0x838] sm:$0xff] %v1409
      %1421 = vrot.lane.b32.xlu0 %v360, 54
      %v1422 = vpop.permute.xlu0 %1421
      %1423 = vrot.lane.b32.xlu0 %v361, 54
      %v1424 = vpop.permute.xlu0 %1423
      %1425 = vrot.lane.b32.xlu0 %v362, 54
      %v1426 = vpop.permute.xlu0 %1425
      %1427 = vrot.lane.b32.xlu0 %v363, 54
      %v1428 = vpop.permute.xlu0 %1427
      %1429 = vrot.lane.b32.xlu0 %v364, 54
      %v1430 = vpop.permute.xlu0 %1429
      %1431 = vrot.lane.b32.xlu0 %v365, 54
      %v1432 = vpop.permute.xlu0 %1431
      %1433 = vrot.lane.b32.xlu0 %v366, 54
      %v1434 = vpop.permute.xlu0 %1433
      %1435 = vrot.lane.b32.xlu0 %v367, 54
      %v1436 = vpop.permute.xlu0 %1435
      %1437 = vrot.lane.b32.xlu0 %v368, 54
      %v1438 = vpop.permute.xlu0 %1437
      %1439 = vrot.lane.b32.xlu0 %v369, 54
      %v1440 = vpop.permute.xlu0 %1439
      %1441 = vrot.lane.b32.xlu0 %v370, 54
      %v1442 = vpop.permute.xlu0 %1441
      %vm1443 = vcmp.lt.s32.totalorder %v396, 54
      %v1444 = vsel %vm1443, %v1440, %v1442
      %v1445 = vsel %vm1443, %v1438, %v1440
      %v1446 = vsel %vm1443, %v1436, %v1438
      %v1447 = vsel %vm1443, %v1434, %v1436
      %v1448 = vsel %vm1443, %v1432, %v1434
      %v1449 = vsel %vm1443, %v1430, %v1432
      %v1450 = vsel %vm1443, %v1428, %v1430
      %v1451 = vsel %vm1443, %v1426, %v1428
      %v1452 = vsel %vm1443, %v1424, %v1426
      %v1453 = vsel %vm1443, %v1422, %v1424
      %v1454 = vsel %vm1443, %v1442, %v1422
      %1455 = vst [vmem:[#allocation2 + $0x840] sm:$0xff] %v1453
      %1456 = vst [vmem:[#allocation2 + $0x848] sm:$0xff] %v1452
      %1457 = vst [vmem:[#allocation2 + $0x850] sm:$0xff] %v1451
      %1458 = vst [vmem:[#allocation2 + $0x858] sm:$0xff] %v1450
      %1459 = vst [vmem:[#allocation2 + $0x860] sm:$0xff] %v1449
      %1460 = vst [vmem:[#allocation2 + $0x868] sm:$0xff] %v1448
      %1461 = vst [vmem:[#allocation2 + $0x870] sm:$0xff] %v1447
      %1462 = vst [vmem:[#allocation2 + $0x878] sm:$0xff] %v1446
      %1463 = vst [vmem:[#allocation2 + $0x880] sm:$0xff] %v1445
      %1464 = vst [vmem:[#allocation2 + $0x888] sm:$0xff] %v1444
      %1465 = vst [vmem:[#allocation2 + $0x890] sm:$0xff] %v1454
      %v1466 = vld [vmem:[%s2] sm:$0xff]
      %v1467 = vld [vmem:[%s2 + $0x8] sm:$0xff]
      %v1468 = vld [vmem:[%s3] sm:$0xff]
      %v1469 = vld [vmem:[#allocation2] sm:$0xff]
      %v1470 = vld [vmem:[#allocation2 + $0x8] sm:$0xff]
      %v1471 = vld [vmem:[#allocation2 + $0x10] sm:$0xff]
      %v1472 = vld [vmem:[#allocation2 + $0x18] sm:$0xff]
      %v1473 = vld [vmem:[#allocation2 + $0x20] sm:$0xff]
      %v1474 = vld [vmem:[#allocation2 + $0x28] sm:$0xff]
      %v1475 = vld [vmem:[#allocation2 + $0x30] sm:$0xff]
      %v1476 = vld [vmem:[#allocation2 + $0x38] sm:$0xff]
      %v1477 = vld [vmem:[#allocation2 + $0x40] sm:$0xff]
      %v1478 = vld [vmem:[#allocation2 + $0x48] sm:$0xff]
      %v1479 = vld [vmem:[#allocation2 + $0x50] sm:$0xff]
      %v1480 = vld [vmem:[#allocation2 + $0x58] sm:$0xff]
      %v1481 = vld [vmem:[#allocation2 + $0x60] sm:$0xff]
      %v1482 = vld [vmem:[#allocation2 + $0x68] sm:$0xff]
      %v1483 = vld [vmem:[#allocation2 + $0x70] sm:$0xff]
      %v1484 = vld [vmem:[#allocation2 + $0x78] sm:$0xff]
      %v1485 = vld [vmem:[#allocation2 + $0x80] sm:$0xff]
      %v1486 = vld [vmem:[#allocation2 + $0x88] sm:$0xff]
      %v1487 = vld [vmem:[#allocation2 + $0x90] sm:$0xff]
      %v1488 = vld [vmem:[#allocation2 + $0x98] sm:$0xff]
      %v1489 = vld [vmem:[#allocation2 + $0xa0] sm:$0xff]
      %v1490 = vld [vmem:[#allocation2 + $0xa8] sm:$0xff]
      %v1491 = vld [vmem:[#allocation2 + $0xb0] sm:$0xff]
      %v1492 = vld [vmem:[#allocation2 + $0xb8] sm:$0xff]
      %v1493 = vld [vmem:[#allocation2 + $0xc0] sm:$0xff]
      %v1494 = vld [vmem:[#allocation2 + $0xc8] sm:$0xff]
      %v1495 = vld [vmem:[#allocation2 + $0xd0] sm:$0xff]
      %v1496 = vld [vmem:[#allocation2 + $0xd8] sm:$0xff]
      %v1497 = vld [vmem:[#allocation2 + $0xe0] sm:$0xff]
      %v1498 = vld [vmem:[#allocation2 + $0xe8] sm:$0xff]
      %v1499 = vld [vmem:[#allocation2 + $0xf0] sm:$0xff]
      %v1500 = vld [vmem:[#allocation2 + $0xf8] sm:$0xff]
      %v1501 = vld [vmem:[#allocation2 + $0x100] sm:$0xff]
      %v1502 = vld [vmem:[#allocation2 + $0x108] sm:$0xff]
      %v1503 = vld [vmem:[#allocation2 + $0x110] sm:$0xff]
      %v1504 = vld [vmem:[#allocation2 + $0x118] sm:$0xff]
      %v1505 = vld [vmem:[#allocation2 + $0x120] sm:$0xff]
      %v1506 = vld [vmem:[#allocation2 + $0x128] sm:$0xff]
      %v1507 = vld [vmem:[#allocation2 + $0x130] sm:$0xff]
      %v1508 = vld [vmem:[#allocation2 + $0x138] sm:$0xff]
      %v1509 = vld [vmem:[#allocation2 + $0x140] sm:$0xff]
      %v1510 = vld [vmem:[#allocation2 + $0x148] sm:$0xff]
      %v1511 = vld [vmem:[#allocation2 + $0x150] sm:$0xff]
      %v1512 = vld [vmem:[#allocation2 + $0x158] sm:$0xff]
      %v1513 = vld [vmem:[#allocation2 + $0x160] sm:$0xff]
      %v1514 = vld [vmem:[#allocation2 + $0x168] sm:$0xff]
      %v1515 = vld [vmem:[#allocation2 + $0x170] sm:$0xff]
      %v1516 = vld [vmem:[#allocation2 + $0x178] sm:$0xff]
      %v1517 = vld [vmem:[#allocation2 + $0x180] sm:$0xff]
      %v1518 = vld [vmem:[#allocation2 + $0x188] sm:$0xff]
      %v1519 = vld [vmem:[#allocation2 + $0x190] sm:$0xff]
      %v1520 = vld [vmem:[#allocation2 + $0x198] sm:$0xff]
      %v1521 = vld [vmem:[#allocation2 + $0x1a0] sm:$0xff]
      %v1522 = vld [vmem:[#allocation2 + $0x1a8] sm:$0xff]
      %v1523 = vld [vmem:[#allocation2 + $0x1b0] sm:$0xff]
      %v1524 = vld [vmem:[#allocation2 + $0x1b8] sm:$0xff]
      %v1525 = vld [vmem:[#allocation2 + $0x1c0] sm:$0xff]
      %v1526 = vld [vmem:[#allocation2 + $0x1c8] sm:$0xff]
      %v1527 = vld [vmem:[#allocation2 + $0x1d0] sm:$0xff]
      %v1528 = vld [vmem:[#allocation2 + $0x1d8] sm:$0xff]
      %v1529 = vld [vmem:[#allocation2 + $0x1e0] sm:$0xff]
      %v1530 = vld [vmem:[#allocation2 + $0x1e8] sm:$0xff]
      %v1531 = vld [vmem:[#allocation2 + $0x1f0] sm:$0xff]
      %v1532 = vld [vmem:[#allocation2 + $0x1f8] sm:$0xff]
      %v1533 = vld [vmem:[#allocation2 + $0x200] sm:$0xff]
      %v1534 = vld [vmem:[#allocation2 + $0x208] sm:$0xff]
      %v1535 = vld [vmem:[#allocation2 + $0x210] sm:$0xff]
      %v1536 = vld [vmem:[#allocation2 + $0x218] sm:$0xff]
      %v1537 = vld [vmem:[#allocation2 + $0x220] sm:$0xff]
      %v1538 = vld [vmem:[#allocation2 + $0x228] sm:$0xff]
      %v1539 = vld [vmem:[#allocation2 + $0x230] sm:$0xff]
      %v1540 = vld [vmem:[#allocation2 + $0x238] sm:$0xff]
      %v1541 = vld [vmem:[#allocation2 + $0x240] sm:$0xff]
      %v1542 = vld [vmem:[#allocation2 + $0x248] sm:$0xff]
      %v1543 = vld [vmem:[#allocation2 + $0x250] sm:$0xff]
      %v1544 = vld [vmem:[#allocation2 + $0x258] sm:$0xff]
      %v1545 = vld [vmem:[#allocation2 + $0x260] sm:$0xff]
      %v1546 = vld [vmem:[#allocation2 + $0x268] sm:$0xff]
      %v1547 = vld [vmem:[#allocation2 + $0x270] sm:$0xff]
      %v1548 = vld [vmem:[#allocation2 + $0x278] sm:$0xff]
      %v1549 = vld [vmem:[#allocation2 + $0x280] sm:$0xff]
      %v1550 = vld [vmem:[#allocation2 + $0x288] sm:$0xff]
      %v1551 = vld [vmem:[#allocation2 + $0x290] sm:$0xff]
      %v1552 = vld [vmem:[#allocation2 + $0x298] sm:$0xff]
      %v1553 = vld [vmem:[#allocation2 + $0x2a0] sm:$0xff]
      %v1554 = vld [vmem:[#allocation2 + $0x2a8] sm:$0xff]
      %v1555 = vld [vmem:[#allocation2 + $0x2b0] sm:$0xff]
      %v1556 = vld [vmem:[#allocation2 + $0x2b8] sm:$0xff]
      %v1557 = vld [vmem:[#allocation2 + $0x2c0] sm:$0xff]
      %v1558 = vld [vmem:[#allocation2 + $0x2c8] sm:$0xff]
      %v1559 = vld [vmem:[#allocation2 + $0x2d0] sm:$0xff]
      %v1560 = vld [vmem:[#allocation2 + $0x2d8] sm:$0xff]
      %v1561 = vld [vmem:[#allocation2 + $0x2e0] sm:$0xff]
      %v1562 = vld [vmem:[#allocation2 + $0x2e8] sm:$0xff]
      %v1563 = vld [vmem:[#allocation2 + $0x2f0] sm:$0xff]
      %v1564 = vld [vmem:[#allocation2 + $0x2f8] sm:$0xff]
      %v1565 = vld [vmem:[#allocation2 + $0x300] sm:$0xff]
      %v1566 = vld [vmem:[#allocation2 + $0x308] sm:$0xff]
      %v1567 = vld [vmem:[#allocation2 + $0x310] sm:$0xff]
      %v1568 = vld [vmem:[#allocation2 + $0x318] sm:$0xff]
      %v1569 = vld [vmem:[#allocation2 + $0x320] sm:$0xff]
      %v1570 = vld [vmem:[#allocation2 + $0x328] sm:$0xff]
      %v1571 = vld [vmem:[#allocation2 + $0x330] sm:$0xff]
      %v1572 = vld [vmem:[#allocation2 + $0x338] sm:$0xff]
      %v1573 = vld [vmem:[#allocation2 + $0x340] sm:$0xff]
      %v1574 = vld [vmem:[#allocation2 + $0x348] sm:$0xff]
      %v1575 = vld [vmem:[#allocation2 + $0x350] sm:$0xff]
      %v1576 = vld [vmem:[#allocation2 + $0x358] sm:$0xff]
      %v1577 = vld [vmem:[#allocation2 + $0x360] sm:$0xff]
      %v1578 = vld [vmem:[#allocation2 + $0x368] sm:$0xff]
      %v1579 = vld [vmem:[#allocation2 + $0x370] sm:$0xff]
      %v1580 = vld [vmem:[#allocation2 + $0x378] sm:$0xff]
      %v1581 = vld [vmem:[#allocation2 + $0x380] sm:$0xff]
      %v1582 = vld [vmem:[#allocation2 + $0x388] sm:$0xff]
      %v1583 = vld [vmem:[#allocation2 + $0x390] sm:$0xff]
      %v1584 = vld [vmem:[#allocation2 + $0x398] sm:$0xff]
      %v1585 = vld [vmem:[#allocation2 + $0x3a0] sm:$0xff]
      %v1586 = vld [vmem:[#allocation2 + $0x3a8] sm:$0xff]
      %v1587 = vld [vmem:[#allocation2 + $0x3b0] sm:$0xff]
      %v1588 = vld [vmem:[#allocation2 + $0x3b8] sm:$0xff]
      %v1589 = vld [vmem:[#allocation2 + $0x3c0] sm:$0xff]
      %v1590 = vld [vmem:[#allocation2 + $0x3c8] sm:$0xff]
      %v1591 = vld [vmem:[#allocation2 + $0x3d0] sm:$0xff]
      %v1592 = vld [vmem:[#allocation2 + $0x3d8] sm:$0xff]
      %v1593 = vld [vmem:[#allocation2 + $0x3e0] sm:$0xff]
      %v1594 = vld [vmem:[#allocation2 + $0x3e8] sm:$0xff]
      %v1595 = vld [vmem:[#allocation2 + $0x3f0] sm:$0xff]
      %v1596 = vld [vmem:[#allocation2 + $0x3f8] sm:$0xff]
      %v1597 = vld [vmem:[#allocation2 + $0x400] sm:$0xff]
      %v1598 = vld [vmem:[#allocation2 + $0x408] sm:$0xff]
      %v1599 = vld [vmem:[#allocation2 + $0x410] sm:$0xff]
      %v1600 = vld [vmem:[#allocation2 + $0x418] sm:$0xff]
      %v1601 = vld [vmem:[#allocation2 + $0x420] sm:$0xff]
      %v1602 = vld [vmem:[#allocation2 + $0x428] sm:$0xff]
      %v1603 = vld [vmem:[#allocation2 + $0x430] sm:$0xff]
      %v1604 = vld [vmem:[#allocation2 + $0x438] sm:$0xff]
      %v1605 = vld [vmem:[#allocation2 + $0x440] sm:$0xff]
      %v1606 = vld [vmem:[#allocation2 + $0x448] sm:$0xff]
      %v1607 = vld [vmem:[#allocation2 + $0x450] sm:$0xff]
      %v1608 = vld [vmem:[#allocation2 + $0x458] sm:$0xff]
      %v1609 = vld [vmem:[#allocation2 + $0x460] sm:$0xff]
      %v1610 = vld [vmem:[#allocation2 + $0x468] sm:$0xff]
      %v1611 = vld [vmem:[#allocation2 + $0x470] sm:$0xff]
      %v1612 = vld [vmem:[#allocation2 + $0x478] sm:$0xff]
      %v1613 = vld [vmem:[#allocation2 + $0x480] sm:$0xff]
      %v1614 = vld [vmem:[#allocation2 + $0x488] sm:$0xff]
      %v1615 = vld [vmem:[#allocation2 + $0x490] sm:$0xff]
      %v1616 = vld [vmem:[#allocation2 + $0x498] sm:$0xff]
      %v1617 = vld [vmem:[#allocation2 + $0x4a0] sm:$0xff]
      %v1618 = vld [vmem:[#allocation2 + $0x4a8] sm:$0xff]
      %v1619 = vld [vmem:[#allocation2 + $0x4b0] sm:$0xff]
      %v1620 = vld [vmem:[#allocation2 + $0x4b8] sm:$0xff]
      %v1621 = vld [vmem:[#allocation2 + $0x4c0] sm:$0xff]
      %v1622 = vld [vmem:[#allocation2 + $0x4c8] sm:$0xff]
      %v1623 = vld [vmem:[#allocation2 + $0x4d0] sm:$0xff]
      %v1624 = vld [vmem:[#allocation2 + $0x4d8] sm:$0xff]
      %v1625 = vld [vmem:[#allocation2 + $0x4e0] sm:$0xff]
      %v1626 = vld [vmem:[#allocation2 + $0x4e8] sm:$0xff]
      %v1627 = vld [vmem:[#allocation2 + $0x4f0] sm:$0xff]
      %v1628 = vld [vmem:[#allocation2 + $0x4f8] sm:$0xff]
      %v1629 = vld [vmem:[#allocation2 + $0x500] sm:$0xff]
      %v1630 = vld [vmem:[#allocation2 + $0x508] sm:$0xff]
      %v1631 = vld [vmem:[#allocation2 + $0x510] sm:$0xff]
      %v1632 = vld [vmem:[#allocation2 + $0x518] sm:$0xff]
      %v1633 = vld [vmem:[#allocation2 + $0x520] sm:$0xff]
      %v1634 = vld [vmem:[#allocation2 + $0x528] sm:$0xff]
      %v1635 = vld [vmem:[#allocation2 + $0x530] sm:$0xff]
      %v1636 = vld [vmem:[#allocation2 + $0x538] sm:$0xff]
      %v1637 = vld [vmem:[#allocation2 + $0x540] sm:$0xff]
      %v1638 = vld [vmem:[#allocation2 + $0x548] sm:$0xff]
      %v1639 = vld [vmem:[#allocation2 + $0x550] sm:$0xff]
      %v1640 = vld [vmem:[#allocation2 + $0x558] sm:$0xff]
      %v1641 = vld [vmem:[#allocation2 + $0x560] sm:$0xff]
      %v1642 = vld [vmem:[#allocation2 + $0x568] sm:$0xff]
      %v1643 = vld [vmem:[#allocation2 + $0x570] sm:$0xff]
      %v1644 = vld [vmem:[#allocation2 + $0x578] sm:$0xff]
      %v1645 = vld [vmem:[#allocation2 + $0x580] sm:$0xff]
      %v1646 = vld [vmem:[#allocation2 + $0x588] sm:$0xff]
      %v1647 = vld [vmem:[#allocation2 + $0x590] sm:$0xff]
      %v1648 = vld [vmem:[#allocation2 + $0x598] sm:$0xff]
      %v1649 = vld [vmem:[#allocation2 + $0x5a0] sm:$0xff]
      %v1650 = vld [vmem:[#allocation2 + $0x5a8] sm:$0xff]
      %v1651 = vld [vmem:[#allocation2 + $0x5b0] sm:$0xff]
      %v1652 = vld [vmem:[#allocation2 + $0x5b8] sm:$0xff]
      %v1653 = vld [vmem:[#allocation2 + $0x5c0] sm:$0xff]
      %v1654 = vld [vmem:[#allocation2 + $0x5c8] sm:$0xff]
      %v1655 = vld [vmem:[#allocation2 + $0x5d0] sm:$0xff]
      %v1656 = vld [vmem:[#allocation2 + $0x5d8] sm:$0xff]
      %v1657 = vld [vmem:[#allocation2 + $0x5e0] sm:$0xff]
      %v1658 = vld [vmem:[#allocation2 + $0x5e8] sm:$0xff]
      %v1659 = vld [vmem:[#allocation2 + $0x5f0] sm:$0xff]
      %v1660 = vld [vmem:[#allocation2 + $0x5f8] sm:$0xff]
      %v1661 = vld [vmem:[#allocation2 + $0x600] sm:$0xff]
      %v1662 = vld [vmem:[#allocation2 + $0x608] sm:$0xff]
      %v1663 = vld [vmem:[#allocation2 + $0x610] sm:$0xff]
      %v1664 = vld [vmem:[#allocation2 + $0x618] sm:$0xff]
      %v1665 = vld [vmem:[#allocation2 + $0x620] sm:$0xff]
      %v1666 = vld [vmem:[#allocation2 + $0x628] sm:$0xff]
      %v1667 = vld [vmem:[#allocation2 + $0x630] sm:$0xff]
      %v1668 = vld [vmem:[#allocation2 + $0x638] sm:$0xff]
      %v1669 = vld [vmem:[#allocation2 + $0x640] sm:$0xff]
      %v1670 = vld [vmem:[#allocation2 + $0x648] sm:$0xff]
      %v1671 = vld [vmem:[#allocation2 + $0x650] sm:$0xff]
      %v1672 = vld [vmem:[#allocation2 + $0x658] sm:$0xff]
      %v1673 = vld [vmem:[#allocation2 + $0x660] sm:$0xff]
      %v1674 = vld [vmem:[#allocation2 + $0x668] sm:$0xff]
      %v1675 = vld [vmem:[#allocation2 + $0x670] sm:$0xff]
      %v1676 = vld [vmem:[#allocation2 + $0x678] sm:$0xff]
      %v1677 = vld [vmem:[#allocation2 + $0x680] sm:$0xff]
      %v1678 = vld [vmem:[#allocation2 + $0x688] sm:$0xff]
      %v1679 = vld [vmem:[#allocation2 + $0x690] sm:$0xff]
      %v1680 = vld [vmem:[#allocation2 + $0x698] sm:$0xff]
      %v1681 = vld [vmem:[#allocation2 + $0x6a0] sm:$0xff]
      %v1682 = vld [vmem:[#allocation2 + $0x6a8] sm:$0xff]
      %v1683 = vld [vmem:[#allocation2 + $0x6b0] sm:$0xff]
      %v1684 = vld [vmem:[#allocation2 + $0x6b8] sm:$0xff]
      %v1685 = vld [vmem:[#allocation2 + $0x6c0] sm:$0xff]
      %v1686 = vld [vmem:[#allocation2 + $0x6c8] sm:$0xff]
      %v1687 = vld [vmem:[#allocation2 + $0x6d0] sm:$0xff]
      %v1688 = vld [vmem:[#allocation2 + $0x6d8] sm:$0xff]
      %v1689 = vld [vmem:[#allocation2 + $0x6e0] sm:$0xff]
      %v1690 = vld [vmem:[#allocation2 + $0x6e8] sm:$0xff]
      %v1691 = vld [vmem:[#allocation2 + $0x6f0] sm:$0xff]
      %v1692 = vld [vmem:[#allocation2 + $0x6f8] sm:$0xff]
      %v1693 = vld [vmem:[#allocation2 + $0x700] sm:$0xff]
      %v1694 = vld [vmem:[#allocation2 + $0x708] sm:$0xff]
      %v1695 = vld [vmem:[#allocation2 + $0x710] sm:$0xff]
      %v1696 = vld [vmem:[#allocation2 + $0x718] sm:$0xff]
      %v1697 = vld [vmem:[#allocation2 + $0x720] sm:$0xff]
      %v1698 = vld [vmem:[#allocation2 + $0x728] sm:$0xff]
      %v1699 = vld [vmem:[#allocation2 + $0x730] sm:$0xff]
      %v1700 = vld [vmem:[#allocation2 + $0x738] sm:$0xff]
      %v1701 = vld [vmem:[#allocation2 + $0x740] sm:$0xff]
      %v1702 = vld [vmem:[#allocation2 + $0x748] sm:$0xff]
      %v1703 = vld [vmem:[#allocation2 + $0x750] sm:$0xff]
      %v1704 = vld [vmem:[#allocation2 + $0x758] sm:$0xff]
      %v1705 = vld [vmem:[#allocation2 + $0x760] sm:$0xff]
      %v1706 = vld [vmem:[#allocation2 + $0x768] sm:$0xff]
      %v1707 = vld [vmem:[#allocation2 + $0x770] sm:$0xff]
      %v1708 = vld [vmem:[#allocation2 + $0x778] sm:$0xff]
      %v1709 = vld [vmem:[#allocation2 + $0x780] sm:$0xff]
      %v1710 = vld [vmem:[#allocation2 + $0x788] sm:$0xff]
      %v1711 = vld [vmem:[#allocation2 + $0x790] sm:$0xff]
      %v1712 = vld [vmem:[#allocation2 + $0x798] sm:$0xff]
      %v1713 = vld [vmem:[#allocation2 + $0x7a0] sm:$0xff]
      %v1714 = vld [vmem:[#allocation2 + $0x7a8] sm:$0xff]
      %v1715 = vld [vmem:[#allocation2 + $0x7b0] sm:$0xff]
      %v1716 = vld [vmem:[#allocation2 + $0x7b8] sm:$0xff]
      %v1717 = vld [vmem:[#allocation2 + $0x7c0] sm:$0xff]
      %v1718 = vld [vmem:[#allocation2 + $0x7c8] sm:$0xff]
      %v1719 = vld [vmem:[#allocation2 + $0x7d0] sm:$0xff]
      %v1720 = vld [vmem:[#allocation2 + $0x7d8] sm:$0xff]
      %v1721 = vld [vmem:[#allocation2 + $0x7e0] sm:$0xff]
      %v1722 = vld [vmem:[#allocation2 + $0x7e8] sm:$0xff]
      %v1723 = vld [vmem:[#allocation2 + $0x7f0] sm:$0xff]
      %v1724 = vld [vmem:[#allocation2 + $0x7f8] sm:$0xff]
      %v1725 = vld [vmem:[#allocation2 + $0x800] sm:$0xff]
      %v1726 = vld [vmem:[#allocation2 + $0x808] sm:$0xff]
      %v1727 = vld [vmem:[#allocation2 + $0x810] sm:$0xff]
      %v1728 = vld [vmem:[#allocation2 + $0x818] sm:$0xff]
      %v1729 = vld [vmem:[#allocation2 + $0x820] sm:$0xff]
      %v1730 = vld [vmem:[#allocation2 + $0x828] sm:$0xff]
      %v1731 = vld [vmem:[#allocation2 + $0x830] sm:$0xff]
      %v1732 = vld [vmem:[#allocation2 + $0x838] sm:$0xff]
      %v1733 = vld [vmem:[#allocation2 + $0x840] sm:$0xff]
      %v1734 = vld [vmem:[#allocation2 + $0x848] sm:$0xff]
      %v1735 = vld [vmem:[#allocation2 + $0x850] sm:$0xff]
      %v1736 = vld [vmem:[#allocation2 + $0x858] sm:$0xff]
      %v1737 = vld [vmem:[#allocation2 + $0x860] sm:$0xff]
      %v1738 = vld [vmem:[#allocation2 + $0x868] sm:$0xff]
      %v1739 = vld [vmem:[#allocation2 + $0x870] sm:$0xff]
      %v1740 = vld [vmem:[#allocation2 + $0x878] sm:$0xff]
      %v1741 = vld [vmem:[#allocation2 + $0x880] sm:$0xff]
      %v1742 = vld [vmem:[#allocation2 + $0x888] sm:$0xff]
      %v1743 = vld [vmem:[#allocation2 + $0x890] sm:$0xff]
      %1745 = vset.pattern.permute.xlu0 0
      %1746 = vperm.xlu0 %1745, %v1468
      %v1747 = vpop.permute.xlu0 %1746
      %vm1749 = vcmask 588800
      %v1751 = vsel %vm1749, %v1467, 0
      %1753 = vmatprep.subr.mxu0 %v1635
      %1754 = vmatpush1.msra.mxu0 %v1634
      %1755 = vmatprep.subr.mxu0 %v1624
      %1756 = vmatpush1.msra.mxu0 %v1623
      %1757 = vmatprep.subr.mxu0 %v1613
      %1758 = vmatpush1.msra.mxu0 %v1612
      %1759 = vmatprep.subr.mxu0 %v1602
      %1760 = vmatpush1.msra.mxu0 %v1601
      %1761 = vmatprep.subr.mxu0 %v1591
      %1762 = vmatpush1.msra.mxu0 %v1590
      %1763 = vmatprep.subr.mxu0 %v1580
      %1764 = vmatpush1.msra.mxu0 %v1579
      %1765 = vmatprep.subr.mxu0 %v1569
      %1766 = vmatpush1.msra.mxu0 %v1568
      %1767 = vmatprep.subr.mxu0 %v1558
      %1768 = vmatpush1.msra.mxu0 %v1557
      %1769 = vmatprep.subr.mxu0 %v1547
      %1770 = vmatpush1.msra.mxu0 %v1546
      %1771 = vmatprep.subr.mxu0 %v1536
      %1772 = vmatpush1.msra.mxu0 %v1535
      %1773 = vmatprep.subr.mxu0 %v1525
      %1774 = vmatpush1.msra.mxu0 %v1524
      %1775 = vmatprep.subr.mxu0 %v1514
      %1776 = vmatpush1.msra.mxu0 %v1513
      %1777 = vmatprep.subr.mxu0 %v1503
      %1778 = vmatpush1.msra.mxu0 %v1502
      %1779 = vmatprep.subr.mxu0 %v1492
      %1780 = vmatpush1.msra.mxu0 %v1491
      %1781 = vmatprep.subr.mxu0 %v1481
      %1782 = vmatpush1.msra.mxu0 %v1480
      %1783 = vmatprep.subr.mxu0 %v1470
      %1784 = vmatpush1.msra.mxu0 %v1469
      %1785 = vmatprep.subr.mxu0 0.0
      %1786 = vmatpush2.msra.mxu0 0.0
      %1787 = vmatprep.subr.mxu0 0.0
      %1788 = vmatpush2.msra.mxu0 0.0
      %1789 = vmatprep.subr.mxu0 0.0
      %1790 = vmatpush2.msra.mxu0 0.0
      %1791 = vmatprep.subr.mxu0 0.0
      %1792 = vmatpush2.msra.mxu0 0.0
      %1793 = vmatprep.subr.mxu0 0.0
      %1794 = vmatpush2.msra.mxu0 0.0
      %1795 = vmatprep.subr.mxu0 0.0
      %1796 = vmatpush2.msra.mxu0 0.0
      %1797 = vmatprep.subr.mxu0 0.0
      %1798 = vmatpush2.msra.mxu0 0.0
      %1799 = vmatprep.subr.mxu0 %v1734
      %1800 = vmatpush2.msra.mxu0 %v1733
      %1801 = vmatprep.subr.mxu0 %v1723
      %1802 = vmatpush2.msra.mxu0 %v1722
      %1803 = vmatprep.subr.mxu0 %v1712
      %1804 = vmatpush2.msra.mxu0 %v1711
      %1805 = vmatprep.subr.mxu0 %v1701
      %1806 = vmatpush2.msra.mxu0 %v1700
      %1807 = vmatprep.subr.mxu0 %v1690
      %1808 = vmatpush2.msra.mxu0 %v1689
      %1809 = vmatprep.subr.mxu0 %v1679
      %1810 = vmatpush2.msra.mxu0 %v1678
      %1811 = vmatprep.subr.mxu0 %v1668
      %1812 = vmatpush2.msra.mxu0 %v1667
      %1813 = vmatprep.subr.mxu0 %v1657
      %1814 = vmatpush2.msra.mxu0 %v1656
      %1815 = vmatprep.subr.mxu0 %v1646
      %1816 = vmatpush2.msra.mxu0 %v1645
      %1817 = vmatprep.mubr.f32.mxu0 %v1751
      %1818 = vmatmul.mubr.f32.gmra.mxu0 %v1466
      %v1819 = vpop.f32.mrf.mxu0
      %v1820 = vadd.f32 %v1747, %v1819
      %v1821 = vpop.f32.mrf.mxu0
      %v1822 = vadd.f32 %v1747, %v1821
      %1823 = vdwg.mxu0
      %1824 = vmatprep.subr.mxu0 %v1637
      %1825 = vmatpush1.msra.mxu0 %v1636
      %1826 = vmatprep.subr.mxu0 %v1626
      %1827 = vmatpush1.msra.mxu0 %v1625
      %1828 = vmatprep.subr.mxu0 %v1615
      %1829 = vmatpush1.msra.mxu0 %v1614
      %1830 = vmatprep.subr.mxu0 %v1604
      %1831 = vmatpush1.msra.mxu0 %v1603
      %1832 = vmatprep.subr.mxu0 %v1593
      %1833 = vmatpush1.msra.mxu0 %v1592
      %1834 = vmatprep.subr.mxu0 %v1582
      %1835 = vmatpush1.msra.mxu0 %v1581
      %1836 = vmatprep.subr.mxu0 %v1571
      %1837 = vmatpush1.msra.mxu0 %v1570
      %1838 = vmatprep.subr.mxu0 %v1560
      %1839 = vmatpush1.msra.mxu0 %v1559
      %1840 = vmatprep.subr.mxu0 %v1549
      %1841 = vmatpush1.msra.mxu0 %v1548
      %1842 = vmatprep.subr.mxu0 %v1538
      %1843 = vmatpush1.msra.mxu0 %v1537
      %1844 = vmatprep.subr.mxu0 %v1527
      %1845 = vmatpush1.msra.mxu0 %v1526
      %1846 = vmatprep.subr.mxu0 %v1516
      %1847 = vmatpush1.msra.mxu0 %v1515
      %1848 = vmatprep.subr.mxu0 %v1505
      %1849 = vmatpush1.msra.mxu0 %v1504
      %1850 = vmatprep.subr.mxu0 %v1494
      %1851 = vmatpush1.msra.mxu0 %v1493
      %1852 = vmatprep.subr.mxu0 %v1483
      %1853 = vmatpush1.msra.mxu0 %v1482
      %1854 = vmatprep.subr.mxu0 %v1472
      %1855 = vmatpush1.msra.mxu0 %v1471
      %1856 = vmatprep.subr.mxu0 0.0
      %1857 = vmatpush2.msra.mxu0 0.0
      %1858 = vmatprep.subr.mxu0 0.0
      %1859 = vmatpush2.msra.mxu0 0.0
      %1860 = vmatprep.subr.mxu0 0.0
      %1861 = vmatpush2.msra.mxu0 0.0
      %1862 = vmatprep.subr.mxu0 0.0
      %1863 = vmatpush2.msra.mxu0 0.0
      %1864 = vmatprep.subr.mxu0 0.0
      %1865 = vmatpush2.msra.mxu0 0.0
      %1866 = vmatprep.subr.mxu0 0.0
      %1867 = vmatpush2.msra.mxu0 0.0
      %1868 = vmatprep.subr.mxu0 0.0
      %1869 = vmatpush2.msra.mxu0 0.0
      %1870 = vmatprep.subr.mxu0 %v1736
      %1871 = vmatpush2.msra.mxu0 %v1735
      %1872 = vmatprep.subr.mxu0 %v1725
      %1873 = vmatpush2.msra.mxu0 %v1724
      %1874 = vmatprep.subr.mxu0 %v1714
      %1875 = vmatpush2.msra.mxu0 %v1713
      %1876 = vmatprep.subr.mxu0 %v1703
      %1877 = vmatpush2.msra.mxu0 %v1702
      %1878 = vmatprep.subr.mxu0 %v1692
      %1879 = vmatpush2.msra.mxu0 %v1691
      %1880 = vmatprep.subr.mxu0 %v1681
      %1881 = vmatpush2.msra.mxu0 %v1680
      %1882 = vmatprep.subr.mxu0 %v1670
      %1883 = vmatpush2.msra.mxu0 %v1669
      %1884 = vmatprep.subr.mxu0 %v1659
      %1885 = vmatpush2.msra.mxu0 %v1658
      %1886 = vmatprep.subr.mxu0 %v1648
      %1887 = vmatpush2.msra.mxu0 %v1647
      %1888 = vmatprep.mubr.f32.mxu0 %v1751
      %1889 = vmatmul.mubr.f32.gmra.mxu0 %v1466
      %v1890 = vpop.f32.mrf.mxu0
      %v1891 = vadd.f32 %v1747, %v1890
      %v1892 = vpop.f32.mrf.mxu0
      %v1893 = vadd.f32 %v1747, %v1892
      %1894 = vdwg.mxu0
      %1895 = vmatprep.subr.mxu0 %v1639
      %1896 = vmatpush1.msra.mxu0 %v1638
      %1897 = vmatprep.subr.mxu0 %v1628
      %1898 = vmatpush1.msra.mxu0 %v1627
      %1899 = vmatprep.subr.mxu0 %v1617
      %1900 = vmatpush1.msra.mxu0 %v1616
      %1901 = vmatprep.subr.mxu0 %v1606
      %1902 = vmatpush1.msra.mxu0 %v1605
      %1903 = vmatprep.subr.mxu0 %v1595
      %1904 = vmatpush1.msra.mxu0 %v1594
      %1905 = vmatprep.subr.mxu0 %v1584
      %1906 = vmatpush1.msra.mxu0 %v1583
      %1907 = vmatprep.subr.mxu0 %v1573
      %1908 = vmatpush1.msra.mxu0 %v1572
      %1909 = vmatprep.subr.mxu0 %v1562
      %1910 = vmatpush1.msra.mxu0 %v1561
      %1911 = vmatprep.subr.mxu0 %v1551
      %1912 = vmatpush1.msra.mxu0 %v1550
      %1913 = vmatprep.subr.mxu0 %v1540
      %1914 = vmatpush1.msra.mxu0 %v1539
      %1915 = vmatprep.subr.mxu0 %v1529
      %1916 = vmatpush1.msra.mxu0 %v1528
      %1917 = vmatprep.subr.mxu0 %v1518
      %1918 = vmatpush1.msra.mxu0 %v1517
      %1919 = vmatprep.subr.mxu0 %v1507
      %1920 = vmatpush1.msra.mxu0 %v1506
      %1921 = vmatprep.subr.mxu0 %v1496
      %1922 = vmatpush1.msra.mxu0 %v1495
      %1923 = vmatprep.subr.mxu0 %v1485
      %1924 = vmatpush1.msra.mxu0 %v1484
      %1925 = vmatprep.subr.mxu0 %v1474
      %1926 = vmatpush1.msra.mxu0 %v1473
      %1927 = vmatprep.subr.mxu0 0.0
      %1928 = vmatpush2.msra.mxu0 0.0
      %1929 = vmatprep.subr.mxu0 0.0
      %1930 = vmatpush2.msra.mxu0 0.0
      %1931 = vmatprep.subr.mxu0 0.0
      %1932 = vmatpush2.msra.mxu0 0.0
      %1933 = vmatprep.subr.mxu0 0.0
      %1934 = vmatpush2.msra.mxu0 0.0
      %1935 = vmatprep.subr.mxu0 0.0
      %1936 = vmatpush2.msra.mxu0 0.0
      %1937 = vmatprep.subr.mxu0 0.0
      %1938 = vmatpush2.msra.mxu0 0.0
      %1939 = vmatprep.subr.mxu0 0.0
      %1940 = vmatpush2.msra.mxu0 0.0
      %1941 = vmatprep.subr.mxu0 %v1738
      %1942 = vmatpush2.msra.mxu0 %v1737
      %1943 = vmatprep.subr.mxu0 %v1727
      %1944 = vmatpush2.msra.mxu0 %v1726
      %1945 = vmatprep.subr.mxu0 %v1716
      %1946 = vmatpush2.msra.mxu0 %v1715
      %1947 = vmatprep.subr.mxu0 %v1705
      %1948 = vmatpush2.msra.mxu0 %v1704
      %1949 = vmatprep.subr.mxu0 %v1694
      %1950 = vmatpush2.msra.mxu0 %v1693
      %1951 = vmatprep.subr.mxu0 %v1683
      %1952 = vmatpush2.msra.mxu0 %v1682
      %1953 = vmatprep.subr.mxu0 %v1672
      %1954 = vmatpush2.msra.mxu0 %v1671
      %1955 = vmatprep.subr.mxu0 %v1661
      %1956 = vmatpush2.msra.mxu0 %v1660
      %1957 = vmatprep.subr.mxu0 %v1650
      %1958 = vmatpush2.msra.mxu0 %v1649
      %1959 = vmatprep.mubr.f32.mxu0 %v1751
      %1960 = vmatmul.mubr.f32.gmra.mxu0 %v1466
      %v1961 = vpop.f32.mrf.mxu0
      %v1962 = vadd.f32 %v1747, %v1961
      %v1963 = vpop.f32.mrf.mxu0
      %v1964 = vadd.f32 %v1747, %v1963
      %1965 = vdwg.mxu0
      %1966 = vmatprep.subr.mxu0 %v1641
      %1967 = vmatpush1.msra.mxu0 %v1640
      %1968 = vmatprep.subr.mxu0 %v1630
      %1969 = vmatpush1.msra.mxu0 %v1629
      %1970 = vmatprep.subr.mxu0 %v1619
      %1971 = vmatpush1.msra.mxu0 %v1618
      %1972 = vmatprep.subr.mxu0 %v1608
      %1973 = vmatpush1.msra.mxu0 %v1607
      %1974 = vmatprep.subr.mxu0 %v1597
      %1975 = vmatpush1.msra.mxu0 %v1596
      %1976 = vmatprep.subr.mxu0 %v1586
      %1977 = vmatpush1.msra.mxu0 %v1585
      %1978 = vmatprep.subr.mxu0 %v1575
      %1979 = vmatpush1.msra.mxu0 %v1574
      %1980 = vmatprep.subr.mxu0 %v1564
      %1981 = vmatpush1.msra.mxu0 %v1563
      %1982 = vmatprep.subr.mxu0 %v1553
      %1983 = vmatpush1.msra.mxu0 %v1552
      %1984 = vmatprep.subr.mxu0 %v1542
      %1985 = vmatpush1.msra.mxu0 %v1541
      %1986 = vmatprep.subr.mxu0 %v1531
      %1987 = vmatpush1.msra.mxu0 %v1530
      %1988 = vmatprep.subr.mxu0 %v1520
      %1989 = vmatpush1.msra.mxu0 %v1519
      %1990 = vmatprep.subr.mxu0 %v1509
      %1991 = vmatpush1.msra.mxu0 %v1508
      %1992 = vmatprep.subr.mxu0 %v1498
      %1993 = vmatpush1.msra.mxu0 %v1497
      %1994 = vmatprep.subr.mxu0 %v1487
      %1995 = vmatpush1.msra.mxu0 %v1486
      %1996 = vmatprep.subr.mxu0 %v1476
      %1997 = vmatpush1.msra.mxu0 %v1475
      %1998 = vmatprep.subr.mxu0 0.0
      %1999 = vmatpush2.msra.mxu0 0.0
      %2000 = vmatprep.subr.mxu0 0.0
      %2001 = vmatpush2.msra.mxu0 0.0
      %2002 = vmatprep.subr.mxu0 0.0
      %2003 = vmatpush2.msra.mxu0 0.0
      %2004 = vmatprep.subr.mxu0 0.0
      %2005 = vmatpush2.msra.mxu0 0.0
      %2006 = vmatprep.subr.mxu0 0.0
      %2007 = vmatpush2.msra.mxu0 0.0
      %2008 = vmatprep.subr.mxu0 0.0
      %2009 = vmatpush2.msra.mxu0 0.0
      %2010 = vmatprep.subr.mxu0 0.0
      %2011 = vmatpush2.msra.mxu0 0.0
      %2012 = vmatprep.subr.mxu0 %v1740
      %2013 = vmatpush2.msra.mxu0 %v1739
      %2014 = vmatprep.subr.mxu0 %v1729
      %2015 = vmatpush2.msra.mxu0 %v1728
      %2016 = vmatprep.subr.mxu0 %v1718
      %2017 = vmatpush2.msra.mxu0 %v1717
      %2018 = vmatprep.subr.mxu0 %v1707
      %2019 = vmatpush2.msra.mxu0 %v1706
      %2020 = vmatprep.subr.mxu0 %v1696
      %2021 = vmatpush2.msra.mxu0 %v1695
      %2022 = vmatprep.subr.mxu0 %v1685
      %2023 = vmatpush2.msra.mxu0 %v1684
      %2024 = vmatprep.subr.mxu0 %v1674
      %2025 = vmatpush2.msra.mxu0 %v1673
      %2026 = vmatprep.subr.mxu0 %v1663
      %2027 = vmatpush2.msra.mxu0 %v1662
      %2028 = vmatprep.subr.mxu0 %v1652
      %2029 = vmatpush2.msra.mxu0 %v1651
      %2030 = vmatprep.mubr.f32.mxu0 %v1751
      %2031 = vmatmul.mubr.f32.gmra.mxu0 %v1466
      %v2032 = vpop.f32.mrf.mxu0
      %v2033 = vadd.f32 %v1747, %v2032
      %v2034 = vpop.f32.mrf.mxu0
      %v2035 = vadd.f32 %v1747, %v2034
      %2036 = vdwg.mxu0
      %2037 = vmatprep.subr.mxu0 %v1643
      %2038 = vmatpush1.msra.mxu0 %v1642
      %2039 = vmatprep.subr.mxu0 %v1632
      %2040 = vmatpush1.msra.mxu0 %v1631
      %2041 = vmatprep.subr.mxu0 %v1621
      %2042 = vmatpush1.msra.mxu0 %v1620
      %2043 = vmatprep.subr.mxu0 %v1610
      %2044 = vmatpush1.msra.mxu0 %v1609
      %2045 = vmatprep.subr.mxu0 %v1599
      %2046 = vmatpush1.msra.mxu0 %v1598
      %2047 = vmatprep.subr.mxu0 %v1588
      %2048 = vmatpush1.msra.mxu0 %v1587
      %2049 = vmatprep.subr.mxu0 %v1577
      %2050 = vmatpush1.msra.mxu0 %v1576
      %2051 = vmatprep.subr.mxu0 %v1566
      %2052 = vmatpush1.msra.mxu0 %v1565
      %2053 = vmatprep.subr.mxu0 %v1555
      %2054 = vmatpush1.msra.mxu0 %v1554
      %2055 = vmatprep.subr.mxu0 %v1544
      %2056 = vmatpush1.msra.mxu0 %v1543
      %2057 = vmatprep.subr.mxu0 %v1533
      %2058 = vmatpush1.msra.mxu0 %v1532
      %2059 = vmatprep.subr.mxu0 %v1522
      %2060 = vmatpush1.msra.mxu0 %v1521
      %2061 = vmatprep.subr.mxu0 %v1511
      %2062 = vmatpush1.msra.mxu0 %v1510
      %2063 = vmatprep.subr.mxu0 %v1500
      %2064 = vmatpush1.msra.mxu0 %v1499
      %2065 = vmatprep.subr.mxu0 %v1489
      %2066 = vmatpush1.msra.mxu0 %v1488
      %2067 = vmatprep.subr.mxu0 %v1478
      %2068 = vmatpush1.msra.mxu0 %v1477
      %2069 = vmatprep.subr.mxu0 0.0
      %2070 = vmatpush2.msra.mxu0 0.0
      %2071 = vmatprep.subr.mxu0 0.0
      %2072 = vmatpush2.msra.mxu0 0.0
      %2073 = vmatprep.subr.mxu0 0.0
      %2074 = vmatpush2.msra.mxu0 0.0
      %2075 = vmatprep.subr.mxu0 0.0
      %2076 = vmatpush2.msra.mxu0 0.0
      %2077 = vmatprep.subr.mxu0 0.0
      %2078 = vmatpush2.msra.mxu0 0.0
      %2079 = vmatprep.subr.mxu0 0.0
      %2080 = vmatpush2.msra.mxu0 0.0
      %2081 = vmatprep.subr.mxu0 0.0
      %2082 = vmatpush2.msra.mxu0 0.0
      %2083 = vmatprep.subr.mxu0 %v1742
      %2084 = vmatpush2.msra.mxu0 %v1741
      %2085 = vmatprep.subr.mxu0 %v1731
      %2086 = vmatpush2.msra.mxu0 %v1730
      %2087 = vmatprep.subr.mxu0 %v1720
      %2088 = vmatpush2.msra.mxu0 %v1719
      %2089 = vmatprep.subr.mxu0 %v1709
      %2090 = vmatpush2.msra.mxu0 %v1708
      %2091 = vmatprep.subr.mxu0 %v1698
      %2092 = vmatpush2.msra.mxu0 %v1697
      %2093 = vmatprep.subr.mxu0 %v1687
      %2094 = vmatpush2.msra.mxu0 %v1686
      %2095 = vmatprep.subr.mxu0 %v1676
      %2096 = vmatpush2.msra.mxu0 %v1675
      %2097 = vmatprep.subr.mxu0 %v1665
      %2098 = vmatpush2.msra.mxu0 %v1664
      %2099 = vmatprep.subr.mxu0 %v1654
      %2100 = vmatpush2.msra.mxu0 %v1653
      %2101 = vmatprep.mubr.f32.mxu0 %v1751
      %2102 = vmatmul.mubr.f32.gmra.mxu0 %v1466
      %v2103 = vpop.f32.mrf.mxu0
      %v2104 = vadd.f32 %v1747, %v2103
      %v2105 = vpop.f32.mrf.mxu0
      %v2106 = vadd.f32 %v1747, %v2105
      %2107 = vdwg.mxu0
      %2108 = vmatprep.subr.mxu0 0.0
      %2109 = vmatpush1.msra.mxu0 %v1644
      %2110 = vmatprep.subr.mxu0 0.0
      %2111 = vmatpush1.msra.mxu0 %v1633
      %2112 = vmatprep.subr.mxu0 0.0
      %2113 = vmatpush1.msra.mxu0 %v1622
      %2114 = vmatprep.subr.mxu0 0.0
      %2115 = vmatpush1.msra.mxu0 %v1611
      %2116 = vmatprep.subr.mxu0 0.0
      %2117 = vmatpush1.msra.mxu0 %v1600
      %2118 = vmatprep.subr.mxu0 0.0
      %2119 = vmatpush1.msra.mxu0 %v1589
      %2120 = vmatprep.subr.mxu0 0.0
      %2121 = vmatpush1.msra.mxu0 %v1578
      %2122 = vmatprep.subr.mxu0 0.0
      %2123 = vmatpush1.msra.mxu0 %v1567
      %2124 = vmatprep.subr.mxu0 0.0
      %2125 = vmatpush1.msra.mxu0 %v1556
      %2126 = vmatprep.subr.mxu0 0.0
      %2127 = vmatpush1.msra.mxu0 %v1545
      %2128 = vmatprep.subr.mxu0 0.0
      %2129 = vmatpush1.msra.mxu0 %v1534
      %2130 = vmatprep.subr.mxu0 0.0
      %2131 = vmatpush1.msra.mxu0 %v1523
      %2132 = vmatprep.subr.mxu0 0.0
      %2133 = vmatpush1.msra.mxu0 %v1512
      %2134 = vmatprep.subr.mxu0 0.0
      %2135 = vmatpush1.msra.mxu0 %v1501
      %2136 = vmatprep.subr.mxu0 0.0
      %2137 = vmatpush1.msra.mxu0 %v1490
      %2138 = vmatprep.subr.mxu0 0.0
      %2139 = vmatpush1.msra.mxu0 %v1479
      %2140 = vmatprep.subr.mxu0 0.0
      %2141 = vmatpush2.msra.mxu0 0.0
      %2142 = vmatprep.subr.mxu0 0.0
      %2143 = vmatpush2.msra.mxu0 0.0
      %2144 = vmatprep.subr.mxu0 0.0
      %2145 = vmatpush2.msra.mxu0 0.0
      %2146 = vmatprep.subr.mxu0 0.0
      %2147 = vmatpush2.msra.mxu0 0.0
      %2148 = vmatprep.subr.mxu0 0.0
      %2149 = vmatpush2.msra.mxu0 0.0
      %2150 = vmatprep.subr.mxu0 0.0
      %2151 = vmatpush2.msra.mxu0 0.0
      %2152 = vmatprep.subr.mxu0 0.0
      %2153 = vmatpush2.msra.mxu0 0.0
      %2154 = vmatprep.subr.mxu0 0.0
      %2155 = vmatpush2.msra.mxu0 %v1743
      %2156 = vmatprep.subr.mxu0 0.0
      %2157 = vmatpush2.msra.mxu0 %v1732
      %2158 = vmatprep.subr.mxu0 0.0
      %2159 = vmatpush2.msra.mxu0 %v1721
      %2160 = vmatprep.subr.mxu0 0.0
      %2161 = vmatpush2.msra.mxu0 %v1710
      %2162 = vmatprep.subr.mxu0 0.0
      %2163 = vmatpush2.msra.mxu0 %v1699
      %2164 = vmatprep.subr.mxu0 0.0
      %2165 = vmatpush2.msra.mxu0 %v1688
      %2166 = vmatprep.subr.mxu0 0.0
      %2167 = vmatpush2.msra.mxu0 %v1677
      %2168 = vmatprep.subr.mxu0 0.0
      %2169 = vmatpush2.msra.mxu0 %v1666
      %2170 = vmatprep.subr.mxu0 0.0
      %2171 = vmatpush2.msra.mxu0 %v1655
      %2172 = vmatprep.mubr.f32.mxu0 %v1751
      %2173 = vmatmul.mubr.f32.gmra.mxu0 %v1466
      %v2174 = vpop.f32.mrf.mxu0
      %v2175 = vadd.f32 %v1747, %v2174
      %v2176 = vpop.f32.mrf.mxu0
      %2177 = vdwg.mxu0
      %v2178 = vmax.f32 %v1820, 0.0
      %v2179 = vmax.f32 %v1822, 0.0
      %v2180 = vmax.f32 %v1891, 0.0
      %v2181 = vmax.f32 %v1893, 0.0
      %v2182 = vmax.f32 %v1962, 0.0
      %v2183 = vmax.f32 %v1964, 0.0
      %v2184 = vmax.f32 %v2033, 0.0
      %v2185 = vmax.f32 %v2035, 0.0
      %v2186 = vmax.f32 %v2104, 0.0
      %v2187 = vmax.f32 %v2106, 0.0
      %v2188 = vmax.f32 %v2175, 0.0
      %v2191 = vlaneseq
      %v2192 = vshrl.u32 %v2191, 7
      %v2193 = vsub.s32 0, %v2192
      %v2194 = vrot.slane %v371, %v2193
      %v2195 = vlaneseq
      %v2196 = vshrl.u32 %v2195, 7
      %v2197 = vsub.s32 1, %v2196
      %v2198 = vrot.slane %v371, %v2197
      %v2199 = vlaneseq
      %v2200 = vshrl.u32 %v2199, 7
      %v2201 = vsub.s32 2, %v2200
      %v2202 = vrot.slane %v371, %v2201
      %v2203 = vlaneseq
      %v2204 = vshrl.u32 %v2203, 7
      %v2205 = vsub.s32 3, %v2204
      %v2206 = vrot.slane %v371, %v2205
      %v2207 = vlaneseq
      %v2208 = vshrl.u32 %v2207, 7
      %v2209 = vsub.s32 4, %v2208
      %v2210 = vrot.slane %v371, %v2209
      %v2211 = vlaneseq
      %v2212 = vshrl.u32 %v2211, 7
      %v2213 = vsub.s32 5, %v2212
      %v2214 = vrot.slane %v371, %v2213
      %v2215 = vlaneseq
      %v2216 = vshrl.u32 %v2215, 7
      %v2217 = vsub.s32 6, %v2216
      %v2218 = vrot.slane %v371, %v2217
      %v2219 = vlaneseq
      %v2220 = vshrl.u32 %v2219, 7
      %v2221 = vsub.s32 7, %v2220
      %v2222 = vrot.slane %v371, %v2221
      %v2223 = vlaneseq
      %v2224 = vshrl.u32 %v2223, 7
      %v2225 = vsub.s32 0, %v2224
      %v2226 = vrot.slane %v372, %v2225
      %v2227 = vlaneseq
      %v2228 = vshrl.u32 %v2227, 7
      %v2229 = vsub.s32 1, %v2228
      %v2230 = vrot.slane %v372, %v2229
      %v2231 = vlaneseq
      %v2232 = vshrl.u32 %v2231, 7
      %v2233 = vsub.s32 2, %v2232
      %v2234 = vrot.slane %v372, %v2233
      %v2246 = vmul.f32 %v2178, %v2194
      %v2247 = vmul.f32 %v2179, %v2198
      %v2248 = vmul.f32 %v2180, %v2202
      %v2249 = vmul.f32 %v2181, %v2206
      %v2250 = vmul.f32 %v2182, %v2210
      %v2251 = vmul.f32 %v2183, %v2214
      %v2252 = vmul.f32 %v2184, %v2218
      %v2253 = vmul.f32 %v2185, %v2222
      %v2254 = vmul.f32 %v2186, %v2226
      %v2255 = vmul.f32 %v2187, %v2230
      %v2256 = vmul.f32 %v2188, %v2234
      %2257 = vrot.lane.b32.xlu0 %v2246, 37
      %v2258 = vpop.permute.xlu0 %2257
      %2259 = vrot.lane.b32.xlu0 %v2247, 37
      %v2260 = vpop.permute.xlu0 %2259
      %2261 = vrot.lane.b32.xlu0 %v2248, 37
      %v2262 = vpop.permute.xlu0 %2261
      %2263 = vrot.lane.b32.xlu0 %v2249, 37
      %v2264 = vpop.permute.xlu0 %2263
      %2265 = vrot.lane.b32.xlu0 %v2250, 37
      %v2266 = vpop.permute.xlu0 %2265
      %2267 = vrot.lane.b32.xlu0 %v2251, 37
      %v2268 = vpop.permute.xlu0 %2267
      %2269 = vrot.lane.b32.xlu0 %v2252, 37
      %v2270 = vpop.permute.xlu0 %2269
      %2271 = vrot.lane.b32.xlu0 %v2253, 37
      %v2272 = vpop.permute.xlu0 %2271
      %2273 = vrot.lane.b32.xlu0 %v2254, 37
      %v2274 = vpop.permute.xlu0 %2273
      %2275 = vrot.lane.b32.xlu0 %v2255, 37
      %v2276 = vpop.permute.xlu0 %2275
      %2277 = vrot.lane.b32.xlu0 %v2256, 37
      %v2278 = vpop.permute.xlu0 %2277
      %v2279 = vsel %vm667, %v2276, %v2278
      %v2280 = vsel %vm667, %v2274, %v2276
      %v2281 = vsel %vm667, %v2272, %v2274
      %v2282 = vsel %vm667, %v2270, %v2272
      %v2283 = vsel %vm667, %v2268, %v2270
      %v2284 = vsel %vm667, %v2266, %v2268
      %v2285 = vsel %vm667, %v2264, %v2266
      %v2286 = vsel %vm667, %v2262, %v2264
      %v2287 = vsel %vm667, %v2260, %v2262
      %v2288 = vsel %vm667, %v2258, %v2260
      %v2289 = vsel %vm667, %v2278, %v2258
      %2290 = vst [vmem:[#allocation2] sm:$0xff] %v2289
      %2291 = vst [vmem:[#allocation2 + $0x8] sm:$0xff] %v2288
      %2292 = vst [vmem:[#allocation2 + $0x10] sm:$0xff] %v2287
      %2293 = vst [vmem:[#allocation2 + $0x18] sm:$0xff] %v2286
      %2294 = vst [vmem:[#allocation2 + $0x20] sm:$0xff] %v2285
      %2295 = vst [vmem:[#allocation2 + $0x28] sm:$0xff] %v2284
      %2296 = vst [vmem:[#allocation2 + $0x30] sm:$0xff] %v2283
      %2297 = vst [vmem:[#allocation2 + $0x38] sm:$0xff] %v2282
      %2298 = vst [vmem:[#allocation2 + $0x40] sm:$0xff] %v2281
      %2299 = vst [vmem:[#allocation2 + $0x48] sm:$0xff] %v2280
      %2300 = vst [vmem:[#allocation2 + $0x50] sm:$0xff] %v2279
      %2301 = vrot.lane.b32.xlu0 %v2246, 36
      %v2302 = vpop.permute.xlu0 %2301
      %2303 = vrot.lane.b32.xlu0 %v2247, 36
      %v2304 = vpop.permute.xlu0 %2303
      %2305 = vrot.lane.b32.xlu0 %v2248, 36
      %v2306 = vpop.permute.xlu0 %2305
      %2307 = vrot.lane.b32.xlu0 %v2249, 36
      %v2308 = vpop.permute.xlu0 %2307
      %2309 = vrot.lane.b32.xlu0 %v2250, 36
      %v2310 = vpop.permute.xlu0 %2309
      %2311 = vrot.lane.b32.xlu0 %v2251, 36
      %v2312 = vpop.permute.xlu0 %2311
      %2313 = vrot.lane.b32.xlu0 %v2252, 36
      %v2314 = vpop.permute.xlu0 %2313
      %2315 = vrot.lane.b32.xlu0 %v2253, 36
      %v2316 = vpop.permute.xlu0 %2315
      %2317 = vrot.lane.b32.xlu0 %v2254, 36
      %v2318 = vpop.permute.xlu0 %2317
      %2319 = vrot.lane.b32.xlu0 %v2255, 36
      %v2320 = vpop.permute.xlu0 %2319
      %2321 = vrot.lane.b32.xlu0 %v2256, 36
      %v2322 = vpop.permute.xlu0 %2321
      %v2323 = vsel %vm712, %v2320, %v2322
      %v2324 = vsel %vm712, %v2318, %v2320
      %v2325 = vsel %vm712, %v2316, %v2318
      %v2326 = vsel %vm712, %v2314, %v2316
      %v2327 = vsel %vm712, %v2312, %v2314
      %v2328 = vsel %vm712, %v2310, %v2312
      %v2329 = vsel %vm712, %v2308, %v2310
      %v2330 = vsel %vm712, %v2306, %v2308
      %v2331 = vsel %vm712, %v2304, %v2306
      %v2332 = vsel %vm712, %v2302, %v2304
      %v2333 = vsel %vm712, %v2322, %v2302
      %2334 = vst [vmem:[#allocation2 + $0x58] sm:$0xff] %v2333
      %2335 = vst [vmem:[#allocation2 + $0x60] sm:$0xff] %v2332
      %2336 = vst [vmem:[#allocation2 + $0x68] sm:$0xff] %v2331
      %2337 = vst [vmem:[#allocation2 + $0x70] sm:$0xff] %v2330
      %2338 = vst [vmem:[#allocation2 + $0x78] sm:$0xff] %v2329
      %2339 = vst [vmem:[#allocation2 + $0x80] sm:$0xff] %v2328
      %2340 = vst [vmem:[#allocation2 + $0x88] sm:$0xff] %v2327
      %2341 = vst [vmem:[#allocation2 + $0x90] sm:$0xff] %v2326
      %2342 = vst [vmem:[#allocation2 + $0x98] sm:$0xff] %v2325
      %2343 = vst [vmem:[#allocation2 + $0xa0] sm:$0xff] %v2324
      %2344 = vst [vmem:[#allocation2 + $0xa8] sm:$0xff] %v2323
      %2345 = vrot.lane.b32.xlu0 %v2246, 35
      %v2346 = vpop.permute.xlu0 %2345
      %2347 = vrot.lane.b32.xlu0 %v2247, 35
      %v2348 = vpop.permute.xlu0 %2347
      %2349 = vrot.lane.b32.xlu0 %v2248, 35
      %v2350 = vpop.permute.xlu0 %2349
      %2351 = vrot.lane.b32.xlu0 %v2249, 35
      %v2352 = vpop.permute.xlu0 %2351
      %2353 = vrot.lane.b32.xlu0 %v2250, 35
      %v2354 = vpop.permute.xlu0 %2353
      %2355 = vrot.lane.b32.xlu0 %v2251, 35
      %v2356 = vpop.permute.xlu0 %2355
      %2357 = vrot.lane.b32.xlu0 %v2252, 35
      %v2358 = vpop.permute.xlu0 %2357
      %2359 = vrot.lane.b32.xlu0 %v2253, 35
      %v2360 = vpop.permute.xlu0 %2359
      %2361 = vrot.lane.b32.xlu0 %v2254, 35
      %v2362 = vpop.permute.xlu0 %2361
      %2363 = vrot.lane.b32.xlu0 %v2255, 35
      %v2364 = vpop.permute.xlu0 %2363
      %2365 = vrot.lane.b32.xlu0 %v2256, 35
      %v2366 = vpop.permute.xlu0 %2365
      %v2367 = vsel %vm757, %v2364, %v2366
      %v2368 = vsel %vm757, %v2362, %v2364
      %v2369 = vsel %vm757, %v2360, %v2362
      %v2370 = vsel %vm757, %v2358, %v2360
      %v2371 = vsel %vm757, %v2356, %v2358
      %v2372 = vsel %vm757, %v2354, %v2356
      %v2373 = vsel %vm757, %v2352, %v2354
      %v2374 = vsel %vm757, %v2350, %v2352
      %v2375 = vsel %vm757, %v2348, %v2350
      %v2376 = vsel %vm757, %v2346, %v2348
      %v2377 = vsel %vm757, %v2366, %v2346
      %2378 = vst [vmem:[#allocation2 + $0xb0] sm:$0xff] %v2377
      %2379 = vst [vmem:[#allocation2 + $0xb8] sm:$0xff] %v2376
      %2380 = vst [vmem:[#allocation2 + $0xc0] sm:$0xff] %v2375
      %2381 = vst [vmem:[#allocation2 + $0xc8] sm:$0xff] %v2374
      %2382 = vst [vmem:[#allocation2 + $0xd0] sm:$0xff] %v2373
      %2383 = vst [vmem:[#allocation2 + $0xd8] sm:$0xff] %v2372
      %2384 = vst [vmem:[#allocation2 + $0xe0] sm:$0xff] %v2371
      %2385 = vst [vmem:[#allocation2 + $0xe8] sm:$0xff] %v2370
      %2386 = vst [vmem:[#allocation2 + $0xf0] sm:$0xff] %v2369
      %2387 = vst [vmem:[#allocation2 + $0xf8] sm:$0xff] %v2368
      %2388 = vst [vmem:[#allocation2 + $0x100] sm:$0xff] %v2367
      %2389 = vrot.lane.b32.xlu0 %v2246, 1
      %v2390 = vpop.permute.xlu0 %2389
      %2391 = vrot.lane.b32.xlu0 %v2247, 1
      %v2392 = vpop.permute.xlu0 %2391
      %2393 = vrot.lane.b32.xlu0 %v2248, 1
      %v2394 = vpop.permute.xlu0 %2393
      %2395 = vrot.lane.b32.xlu0 %v2249, 1
      %v2396 = vpop.permute.xlu0 %2395
      %2397 = vrot.lane.b32.xlu0 %v2250, 1
      %v2398 = vpop.permute.xlu0 %2397
      %2399 = vrot.lane.b32.xlu0 %v2251, 1
      %v2400 = vpop.permute.xlu0 %2399
      %2401 = vrot.lane.b32.xlu0 %v2252, 1
      %v2402 = vpop.permute.xlu0 %2401
      %2403 = vrot.lane.b32.xlu0 %v2253, 1
      %v2404 = vpop.permute.xlu0 %2403
      %2405 = vrot.lane.b32.xlu0 %v2254, 1
      %v2406 = vpop.permute.xlu0 %2405
      %2407 = vrot.lane.b32.xlu0 %v2255, 1
      %v2408 = vpop.permute.xlu0 %2407
      %2409 = vrot.lane.b32.xlu0 %v2256, 1
      %v2410 = vpop.permute.xlu0 %2409
      %v2411 = vsel %vm892, %v2408, %v2410
      %v2412 = vsel %vm892, %v2406, %v2408
      %v2413 = vsel %vm892, %v2404, %v2406
      %v2414 = vsel %vm892, %v2402, %v2404
      %v2415 = vsel %vm892, %v2400, %v2402
      %v2416 = vsel %vm892, %v2398, %v2400
      %v2417 = vsel %vm892, %v2396, %v2398
      %v2418 = vsel %vm892, %v2394, %v2396
      %v2419 = vsel %vm892, %v2392, %v2394
      %v2420 = vsel %vm892, %v2390, %v2392
      %v2421 = vsel %vm892, %v2410, %v2390
      %2422 = vst [vmem:[#allocation2 + $0x108] sm:$0xff] %v2421
      %2423 = vst [vmem:[#allocation2 + $0x110] sm:$0xff] %v2420
      %2424 = vst [vmem:[#allocation2 + $0x118] sm:$0xff] %v2419
      %2425 = vst [vmem:[#allocation2 + $0x120] sm:$0xff] %v2418
      %2426 = vst [vmem:[#allocation2 + $0x128] sm:$0xff] %v2417
      %2427 = vst [vmem:[#allocation2 + $0x130] sm:$0xff] %v2416
      %2428 = vst [vmem:[#allocation2 + $0x138] sm:$0xff] %v2415
      %2429 = vst [vmem:[#allocation2 + $0x140] sm:$0xff] %v2414
      %2430 = vst [vmem:[#allocation2 + $0x148] sm:$0xff] %v2413
      %2431 = vst [vmem:[#allocation2 + $0x150] sm:$0xff] %v2412
      %2432 = vst [vmem:[#allocation2 + $0x158] sm:$0xff] %v2411
      %2433 = vst [vmem:[#allocation2 + $0x160] sm:$0xff] %v2246
      %2434 = vst [vmem:[#allocation2 + $0x168] sm:$0xff] %v2247
      %2435 = vst [vmem:[#allocation2 + $0x170] sm:$0xff] %v2248
      %2436 = vst [vmem:[#allocation2 + $0x178] sm:$0xff] %v2249
      %2437 = vst [vmem:[#allocation2 + $0x180] sm:$0xff] %v2250
      %2438 = vst [vmem:[#allocation2 + $0x188] sm:$0xff] %v2251
      %2439 = vst [vmem:[#allocation2 + $0x190] sm:$0xff] %v2252
      %2440 = vst [vmem:[#allocation2 + $0x198] sm:$0xff] %v2253
      %2441 = vst [vmem:[#allocation2 + $0x1a0] sm:$0xff] %v2254
      %2442 = vst [vmem:[#allocation2 + $0x1a8] sm:$0xff] %v2255
      %2443 = vst [vmem:[#allocation2 + $0x1b0] sm:$0xff] %v2256
      %2444 = vrot.lane.b32.xlu0 %v2246, 127
      %v2445 = vpop.permute.xlu0 %2444
      %2446 = vrot.lane.b32.xlu0 %v2247, 127
      %v2447 = vpop.permute.xlu0 %2446
      %2448 = vrot.lane.b32.xlu0 %v2248, 127
      %v2449 = vpop.permute.xlu0 %2448
      %2450 = vrot.lane.b32.xlu0 %v2249, 127
      %v2451 = vpop.permute.xlu0 %2450
      %2452 = vrot.lane.b32.xlu0 %v2250, 127
      %v2453 = vpop.permute.xlu0 %2452
      %2454 = vrot.lane.b32.xlu0 %v2251, 127
      %v2455 = vpop.permute.xlu0 %2454
      %2456 = vrot.lane.b32.xlu0 %v2252, 127
      %v2457 = vpop.permute.xlu0 %2456
      %2458 = vrot.lane.b32.xlu0 %v2253, 127
      %v2459 = vpop.permute.xlu0 %2458
      %2460 = vrot.lane.b32.xlu0 %v2254, 127
      %v2461 = vpop.permute.xlu0 %2460
      %2462 = vrot.lane.b32.xlu0 %v2255, 127
      %v2463 = vpop.permute.xlu0 %2462
      %2464 = vrot.lane.b32.xlu0 %v2256, 127
      %v2465 = vpop.permute.xlu0 %2464
      %v2466 = vsel %vm948, %v2463, %v2465
      %v2467 = vsel %vm948, %v2461, %v2463
      %v2468 = vsel %vm948, %v2459, %v2461
      %v2469 = vsel %vm948, %v2457, %v2459
      %v2470 = vsel %vm948, %v2455, %v2457
      %v2471 = vsel %vm948, %v2453, %v2455
      %v2472 = vsel %vm948, %v2451, %v2453
      %v2473 = vsel %vm948, %v2449, %v2451
      %v2474 = vsel %vm948, %v2447, %v2449
      %v2475 = vsel %vm948, %v2445, %v2447
      %v2476 = vsel %vm948, %v2465, %v2445
      %2477 = vst [vmem:[#allocation2 + $0x1b8] sm:$0xff] %v2475
      %2478 = vst [vmem:[#allocation2 + $0x1c0] sm:$0xff] %v2474
      %2479 = vst [vmem:[#allocation2 + $0x1c8] sm:$0xff] %v2473
      %2480 = vst [vmem:[#allocation2 + $0x1d0] sm:$0xff] %v2472
      %2481 = vst [vmem:[#allocation2 + $0x1d8] sm:$0xff] %v2471
      %2482 = vst [vmem:[#allocation2 + $0x1e0] sm:$0xff] %v2470
      %2483 = vst [vmem:[#allocation2 + $0x1e8] sm:$0xff] %v2469
      %2484 = vst [vmem:[#allocation2 + $0x1f0] sm:$0xff] %v2468
      %2485 = vst [vmem:[#allocation2 + $0x1f8] sm:$0xff] %v2467
      %2486 = vst [vmem:[#allocation2 + $0x200] sm:$0xff] %v2466
      %2487 = vst [vmem:[#allocation2 + $0x208] sm:$0xff] %v2476
      %2488 = vrot.lane.b32.xlu0 %v2246, 93
      %v2489 = vpop.permute.xlu0 %2488
      %2490 = vrot.lane.b32.xlu0 %v2247, 93
      %v2491 = vpop.permute.xlu0 %2490
      %2492 = vrot.lane.b32.xlu0 %v2248, 93
      %v2493 = vpop.permute.xlu0 %2492
      %2494 = vrot.lane.b32.xlu0 %v2249, 93
      %v2495 = vpop.permute.xlu0 %2494
      %2496 = vrot.lane.b32.xlu0 %v2250, 93
      %v2497 = vpop.permute.xlu0 %2496
      %2498 = vrot.lane.b32.xlu0 %v2251, 93
      %v2499 = vpop.permute.xlu0 %2498
      %2500 = vrot.lane.b32.xlu0 %v2252, 93
      %v2501 = vpop.permute.xlu0 %2500
      %2502 = vrot.lane.b32.xlu0 %v2253, 93
      %v2503 = vpop.permute.xlu0 %2502
      %2504 = vrot.lane.b32.xlu0 %v2254, 93
      %v2505 = vpop.permute.xlu0 %2504
      %2506 = vrot.lane.b32.xlu0 %v2255, 93
      %v2507 = vpop.permute.xlu0 %2506
      %2508 = vrot.lane.b32.xlu0 %v2256, 93
      %v2509 = vpop.permute.xlu0 %2508
      %v2510 = vsel %vm1083, %v2507, %v2509
      %v2511 = vsel %vm1083, %v2505, %v2507
      %v2512 = vsel %vm1083, %v2503, %v2505
      %v2513 = vsel %vm1083, %v2501, %v2503
      %v2514 = vsel %vm1083, %v2499, %v2501
      %v2515 = vsel %vm1083, %v2497, %v2499
      %v2516 = vsel %vm1083, %v2495, %v2497
      %v2517 = vsel %vm1083, %v2493, %v2495
      %v2518 = vsel %vm1083, %v2491, %v2493
      %v2519 = vsel %vm1083, %v2489, %v2491
      %v2520 = vsel %vm1083, %v2509, %v2489
      %2521 = vst [vmem:[#allocation2 + $0x210] sm:$0xff] %v2519
      %2522 = vst [vmem:[#allocation2 + $0x218] sm:$0xff] %v2518
      %2523 = vst [vmem:[#allocation2 + $0x220] sm:$0xff] %v2517
      %2524 = vst [vmem:[#allocation2 + $0x228] sm:$0xff] %v2516
      %2525 = vst [vmem:[#allocation2 + $0x230] sm:$0xff] %v2515
      %2526 = vst [vmem:[#allocation2 + $0x238] sm:$0xff] %v2514
      %2527 = vst [vmem:[#allocation2 + $0x240] sm:$0xff] %v2513
      %2528 = vst [vmem:[#allocation2 + $0x248] sm:$0xff] %v2512
      %2529 = vst [vmem:[#allocation2 + $0x250] sm:$0xff] %v2511
      %2530 = vst [vmem:[#allocation2 + $0x258] sm:$0xff] %v2510
      %2531 = vst [vmem:[#allocation2 + $0x260] sm:$0xff] %v2520
      %2532 = vrot.lane.b32.xlu0 %v2246, 92
      %v2533 = vpop.permute.xlu0 %2532
      %2534 = vrot.lane.b32.xlu0 %v2247, 92
      %v2535 = vpop.permute.xlu0 %2534
      %2536 = vrot.lane.b32.xlu0 %v2248, 92
      %v2537 = vpop.permute.xlu0 %2536
      %2538 = vrot.lane.b32.xlu0 %v2249, 92
      %v2539 = vpop.permute.xlu0 %2538
      %2540 = vrot.lane.b32.xlu0 %v2250, 92
      %v2541 = vpop.permute.xlu0 %2540
      %2542 = vrot.lane.b32.xlu0 %v2251, 92
      %v2543 = vpop.permute.xlu0 %2542
      %2544 = vrot.lane.b32.xlu0 %v2252, 92
      %v2545 = vpop.permute.xlu0 %2544
      %2546 = vrot.lane.b32.xlu0 %v2253, 92
      %v2547 = vpop.permute.xlu0 %2546
      %2548 = vrot.lane.b32.xlu0 %v2254, 92
      %v2549 = vpop.permute.xlu0 %2548
      %2550 = vrot.lane.b32.xlu0 %v2255, 92
      %v2551 = vpop.permute.xlu0 %2550
      %2552 = vrot.lane.b32.xlu0 %v2256, 92
      %v2553 = vpop.permute.xlu0 %2552
      %v2554 = vsel %vm1128, %v2551, %v2553
      %v2555 = vsel %vm1128, %v2549, %v2551
      %v2556 = vsel %vm1128, %v2547, %v2549
      %v2557 = vsel %vm1128, %v2545, %v2547
      %v2558 = vsel %vm1128, %v2543, %v2545
      %v2559 = vsel %vm1128, %v2541, %v2543
      %v2560 = vsel %vm1128, %v2539, %v2541
      %v2561 = vsel %vm1128, %v2537, %v2539
      %v2562 = vsel %vm1128, %v2535, %v2537
      %v2563 = vsel %vm1128, %v2533, %v2535
      %v2564 = vsel %vm1128, %v2553, %v2533
      %2565 = vst [vmem:[#allocation2 + $0x268] sm:$0xff] %v2563
      %2566 = vst [vmem:[#allocation2 + $0x270] sm:$0xff] %v2562
      %2567 = vst [vmem:[#allocation2 + $0x278] sm:$0xff] %v2561
      %2568 = vst [vmem:[#allocation2 + $0x280] sm:$0xff] %v2560
      %2569 = vst [vmem:[#allocation2 + $0x288] sm:$0xff] %v2559
      %2570 = vst [vmem:[#allocation2 + $0x290] sm:$0xff] %v2558
      %2571 = vst [vmem:[#allocation2 + $0x298] sm:$0xff] %v2557
      %2572 = vst [vmem:[#allocation2 + $0x2a0] sm:$0xff] %v2556
      %2573 = vst [vmem:[#allocation2 + $0x2a8] sm:$0xff] %v2555
      %2574 = vst [vmem:[#allocation2 + $0x2b0] sm:$0xff] %v2554
      %2575 = vst [vmem:[#allocation2 + $0x2b8] sm:$0xff] %v2564
      %2576 = vrot.lane.b32.xlu0 %v2246, 91
      %v2577 = vpop.permute.xlu0 %2576
      %2578 = vrot.lane.b32.xlu0 %v2247, 91
      %v2579 = vpop.permute.xlu0 %2578
      %2580 = vrot.lane.b32.xlu0 %v2248, 91
      %v2581 = vpop.permute.xlu0 %2580
      %2582 = vrot.lane.b32.xlu0 %v2249, 91
      %v2583 = vpop.permute.xlu0 %2582
      %2584 = vrot.lane.b32.xlu0 %v2250, 91
      %v2585 = vpop.permute.xlu0 %2584
      %2586 = vrot.lane.b32.xlu0 %v2251, 91
      %v2587 = vpop.permute.xlu0 %2586
      %2588 = vrot.lane.b32.xlu0 %v2252, 91
      %v2589 = vpop.permute.xlu0 %2588
      %2590 = vrot.lane.b32.xlu0 %v2253, 91
      %v2591 = vpop.permute.xlu0 %2590
      %2592 = vrot.lane.b32.xlu0 %v2254, 91
      %v2593 = vpop.permute.xlu0 %2592
      %2594 = vrot.lane.b32.xlu0 %v2255, 91
      %v2595 = vpop.permute.xlu0 %2594
      %2596 = vrot.lane.b32.xlu0 %v2256, 91
      %v2597 = vpop.permute.xlu0 %2596
      %v2598 = vsel %vm1173, %v2595, %v2597
      %v2599 = vsel %vm1173, %v2593, %v2595
      %v2600 = vsel %vm1173, %v2591, %v2593
      %v2601 = vsel %vm1173, %v2589, %v2591
      %v2602 = vsel %vm1173, %v2587, %v2589
      %v2603 = vsel %vm1173, %v2585, %v2587
      %v2604 = vsel %vm1173, %v2583, %v2585
      %v2605 = vsel %vm1173, %v2581, %v2583
      %v2606 = vsel %vm1173, %v2579, %v2581
      %v2607 = vsel %vm1173, %v2577, %v2579
      %v2608 = vsel %vm1173, %v2597, %v2577
      %2609 = vst [vmem:[#allocation2 + $0x2c0] sm:$0xff] %v2607
      %2610 = vst [vmem:[#allocation2 + $0x2c8] sm:$0xff] %v2606
      %2611 = vst [vmem:[#allocation2 + $0x2d0] sm:$0xff] %v2605
      %2612 = vst [vmem:[#allocation2 + $0x2d8] sm:$0xff] %v2604
      %2613 = vst [vmem:[#allocation2 + $0x2e0] sm:$0xff] %v2603
      %2614 = vst [vmem:[#allocation2 + $0x2e8] sm:$0xff] %v2602
      %2615 = vst [vmem:[#allocation2 + $0x2f0] sm:$0xff] %v2601
      %2616 = vst [vmem:[#allocation2 + $0x2f8] sm:$0xff] %v2600
      %2617 = vst [vmem:[#allocation2 + $0x300] sm:$0xff] %v2599
      %2618 = vst [vmem:[#allocation2 + $0x308] sm:$0xff] %v2598
      %2619 = vst [vmem:[#allocation2 + $0x310] sm:$0xff] %v2608
      %v2620 = vld [vmem:[%s4] sm:$0xff]
      %v2621 = vld [vmem:[%s5] sm:$0xff]
      %v2622 = vld [vmem:[#allocation2] sm:$0xff]
      %v2623 = vld [vmem:[#allocation2 + $0x8] sm:$0xff]
      %v2624 = vld [vmem:[#allocation2 + $0x10] sm:$0xff]
      %v2625 = vld [vmem:[#allocation2 + $0x18] sm:$0xff]
      %v2626 = vld [vmem:[#allocation2 + $0x20] sm:$0xff]
      %v2627 = vld [vmem:[#allocation2 + $0x28] sm:$0xff]
      %v2628 = vld [vmem:[#allocation2 + $0x30] sm:$0xff]
      %v2629 = vld [vmem:[#allocation2 + $0x38] sm:$0xff]
      %v2630 = vld [vmem:[#allocation2 + $0x40] sm:$0xff]
      %v2631 = vld [vmem:[#allocation2 + $0x48] sm:$0xff]
      %v2632 = vld [vmem:[#allocation2 + $0x50] sm:$0xff]
      %v2633 = vld [vmem:[#allocation2 + $0x58] sm:$0xff]
      %v2634 = vld [vmem:[#allocation2 + $0x60] sm:$0xff]
      %v2635 = vld [vmem:[#allocation2 + $0x68] sm:$0xff]
      %v2636 = vld [vmem:[#allocation2 + $0x70] sm:$0xff]
      %v2637 = vld [vmem:[#allocation2 + $0x78] sm:$0xff]
      %v2638 = vld [vmem:[#allocation2 + $0x80] sm:$0xff]
      %v2639 = vld [vmem:[#allocation2 + $0x88] sm:$0xff]
      %v2640 = vld [vmem:[#allocation2 + $0x90] sm:$0xff]
      %v2641 = vld [vmem:[#allocation2 + $0x98] sm:$0xff]
      %v2642 = vld [vmem:[#allocation2 + $0xa0] sm:$0xff]
      %v2643 = vld [vmem:[#allocation2 + $0xa8] sm:$0xff]
      %v2644 = vld [vmem:[#allocation2 + $0xb0] sm:$0xff]
      %v2645 = vld [vmem:[#allocation2 + $0xb8] sm:$0xff]
      %v2646 = vld [vmem:[#allocation2 + $0xc0] sm:$0xff]
      %v2647 = vld [vmem:[#allocation2 + $0xc8] sm:$0xff]
      %v2648 = vld [vmem:[#allocation2 + $0xd0] sm:$0xff]
      %v2649 = vld [vmem:[#allocation2 + $0xd8] sm:$0xff]
      %v2650 = vld [vmem:[#allocation2 + $0xe0] sm:$0xff]
      %v2651 = vld [vmem:[#allocation2 + $0xe8] sm:$0xff]
      %v2652 = vld [vmem:[#allocation2 + $0xf0] sm:$0xff]
      %v2653 = vld [vmem:[#allocation2 + $0xf8] sm:$0xff]
      %v2654 = vld [vmem:[#allocation2 + $0x100] sm:$0xff]
      %v2655 = vld [vmem:[#allocation2 + $0x108] sm:$0xff]
      %v2656 = vld [vmem:[#allocation2 + $0x110] sm:$0xff]
      %v2657 = vld [vmem:[#allocation2 + $0x118] sm:$0xff]
      %v2658 = vld [vmem:[#allocation2 + $0x120] sm:$0xff]
      %v2659 = vld [vmem:[#allocation2 + $0x128] sm:$0xff]
      %v2660 = vld [vmem:[#allocation2 + $0x130] sm:$0xff]
      %v2661 = vld [vmem:[#allocation2 + $0x138] sm:$0xff]
      %v2662 = vld [vmem:[#allocation2 + $0x140] sm:$0xff]
      %v2663 = vld [vmem:[#allocation2 + $0x148] sm:$0xff]
      %v2664 = vld [vmem:[#allocation2 + $0x150] sm:$0xff]
      %v2665 = vld [vmem:[#allocation2 + $0x158] sm:$0xff]
      %v2666 = vld [vmem:[#allocation2 + $0x160] sm:$0xff]
      %v2667 = vld [vmem:[#allocation2 + $0x168] sm:$0xff]
      %v2668 = vld [vmem:[#allocation2 + $0x170] sm:$0xff]
      %v2669 = vld [vmem:[#allocation2 + $0x178] sm:$0xff]
      %v2670 = vld [vmem:[#allocation2 + $0x180] sm:$0xff]
      %v2671 = vld [vmem:[#allocation2 + $0x188] sm:$0xff]
      %v2672 = vld [vmem:[#allocation2 + $0x190] sm:$0xff]
      %v2673 = vld [vmem:[#allocation2 + $0x198] sm:$0xff]
      %v2674 = vld [vmem:[#allocation2 + $0x1a0] sm:$0xff]
      %v2675 = vld [vmem:[#allocation2 + $0x1a8] sm:$0xff]
      %v2676 = vld [vmem:[#allocation2 + $0x1b0] sm:$0xff]
      %v2677 = vld [vmem:[#allocation2 + $0x1b8] sm:$0xff]
      %v2678 = vld [vmem:[#allocation2 + $0x1c0] sm:$0xff]
      %v2679 = vld [vmem:[#allocation2 + $0x1c8] sm:$0xff]
      %v2680 = vld [vmem:[#allocation2 + $0x1d0] sm:$0xff]
      %v2681 = vld [vmem:[#allocation2 + $0x1d8] sm:$0xff]
      %v2682 = vld [vmem:[#allocation2 + $0x1e0] sm:$0xff]
      %v2683 = vld [vmem:[#allocation2 + $0x1e8] sm:$0xff]
      %v2684 = vld [vmem:[#allocation2 + $0x1f0] sm:$0xff]
      %v2685 = vld [vmem:[#allocation2 + $0x1f8] sm:$0xff]
      %v2686 = vld [vmem:[#allocation2 + $0x200] sm:$0xff]
      %v2687 = vld [vmem:[#allocation2 + $0x208] sm:$0xff]
      %v2688 = vld [vmem:[#allocation2 + $0x210] sm:$0xff]
      %v2689 = vld [vmem:[#allocation2 + $0x218] sm:$0xff]
      %v2690 = vld [vmem:[#allocation2 + $0x220] sm:$0xff]
      %v2691 = vld [vmem:[#allocation2 + $0x228] sm:$0xff]
      %v2692 = vld [vmem:[#allocation2 + $0x230] sm:$0xff]
      %v2693 = vld [vmem:[#allocation2 + $0x238] sm:$0xff]
      %v2694 = vld [vmem:[#allocation2 + $0x240] sm:$0xff]
      %v2695 = vld [vmem:[#allocation2 + $0x248] sm:$0xff]
      %v2696 = vld [vmem:[#allocation2 + $0x250] sm:$0xff]
      %v2697 = vld [vmem:[#allocation2 + $0x258] sm:$0xff]
      %v2698 = vld [vmem:[#allocation2 + $0x260] sm:$0xff]
      %v2699 = vld [vmem:[#allocation2 + $0x268] sm:$0xff]
      %v2700 = vld [vmem:[#allocation2 + $0x270] sm:$0xff]
      %v2701 = vld [vmem:[#allocation2 + $0x278] sm:$0xff]
      %v2702 = vld [vmem:[#allocation2 + $0x280] sm:$0xff]
      %v2703 = vld [vmem:[#allocation2 + $0x288] sm:$0xff]
      %v2704 = vld [vmem:[#allocation2 + $0x290] sm:$0xff]
      %v2705 = vld [vmem:[#allocation2 + $0x298] sm:$0xff]
      %v2706 = vld [vmem:[#allocation2 + $0x2a0] sm:$0xff]
      %v2707 = vld [vmem:[#allocation2 + $0x2a8] sm:$0xff]
      %v2708 = vld [vmem:[#allocation2 + $0x2b0] sm:$0xff]
      %v2709 = vld [vmem:[#allocation2 + $0x2b8] sm:$0xff]
      %v2710 = vld [vmem:[#allocation2 + $0x2c0] sm:$0xff]
      %v2711 = vld [vmem:[#allocation2 + $0x2c8] sm:$0xff]
      %v2712 = vld [vmem:[#allocation2 + $0x2d0] sm:$0xff]
      %v2713 = vld [vmem:[#allocation2 + $0x2d8] sm:$0xff]
      %v2714 = vld [vmem:[#allocation2 + $0x2e0] sm:$0xff]
      %v2715 = vld [vmem:[#allocation2 + $0x2e8] sm:$0xff]
      %v2716 = vld [vmem:[#allocation2 + $0x2f0] sm:$0xff]
      %v2717 = vld [vmem:[#allocation2 + $0x2f8] sm:$0xff]
      %v2718 = vld [vmem:[#allocation2 + $0x300] sm:$0xff]
      %v2719 = vld [vmem:[#allocation2 + $0x308] sm:$0xff]
      %v2720 = vld [vmem:[#allocation2 + $0x310] sm:$0xff]
      %2722 = vset.pattern.permute.xlu0 0
      %2723 = vperm.xlu0 %2722, %v2621
      %v2724 = vpop.permute.xlu0 %2723
      %v2727 = vsel %vm1749, %v2620, 0
      %2729 = vmatprep.subr.mxu0 0.0
      %2730 = vmatpush1.msra.mxu0 0.0
      %2731 = vmatprep.subr.mxu0 0.0
      %2732 = vmatpush1.msra.mxu0 0.0
      %2733 = vmatprep.subr.mxu0 0.0
      %2734 = vmatpush1.msra.mxu0 0.0
      %2735 = vmatprep.subr.mxu0 0.0
      %2736 = vmatpush1.msra.mxu0 0.0
      %2737 = vmatprep.subr.mxu0 0.0
      %2738 = vmatpush1.msra.mxu0 0.0
      %2739 = vmatprep.subr.mxu0 0.0
      %2740 = vmatpush1.msra.mxu0 0.0
      %2741 = vmatprep.subr.mxu0 0.0
      %2742 = vmatpush1.msra.mxu0 0.0
      %2743 = vmatprep.subr.mxu0 %v2711
      %2744 = vmatpush1.msra.mxu0 %v2710
      %2745 = vmatprep.subr.mxu0 %v2700
      %2746 = vmatpush1.msra.mxu0 %v2699
      %2747 = vmatprep.subr.mxu0 %v2689
      %2748 = vmatpush1.msra.mxu0 %v2688
      %2749 = vmatprep.subr.mxu0 %v2678
      %2750 = vmatpush1.msra.mxu0 %v2677
      %2751 = vmatprep.subr.mxu0 %v2667
      %2752 = vmatpush1.msra.mxu0 %v2666
      %2753 = vmatprep.subr.mxu0 %v2656
      %2754 = vmatpush1.msra.mxu0 %v2655
      %2755 = vmatprep.subr.mxu0 %v2645
      %2756 = vmatpush1.msra.mxu0 %v2644
      %2757 = vmatprep.subr.mxu0 %v2634
      %2758 = vmatpush1.msra.mxu0 %v2633
      %2759 = vmatprep.subr.mxu0 %v2623
      %2760 = vmatpush1.msra.mxu0 %v2622
      %2761 = vmatprep.subr.mxu0 0.0
      %2762 = vmatpush2.msra.mxu0 0.0
      %2763 = vmatprep.subr.mxu0 0.0
      %2764 = vmatpush2.msra.mxu0 0.0
      %2765 = vmatprep.subr.mxu0 0.0
      %2766 = vmatpush2.msra.mxu0 0.0
      %2767 = vmatprep.subr.mxu0 0.0
      %2768 = vmatpush2.msra.mxu0 0.0
      %2769 = vmatprep.subr.mxu0 0.0
      %2770 = vmatpush2.msra.mxu0 0.0
      %2771 = vmatprep.subr.mxu0 0.0
      %2772 = vmatpush2.msra.mxu0 0.0
      %2773 = vmatprep.subr.mxu0 0.0
      %2774 = vmatpush2.msra.mxu0 0.0
      %2775 = vmatprep.subr.mxu0 0.0
      %2776 = vmatpush2.msra.mxu0 0.0
      %2777 = vmatprep.subr.mxu0 0.0
      %2778 = vmatpush2.msra.mxu0 0.0
      %2779 = vmatprep.subr.mxu0 0.0
      %2780 = vmatpush2.msra.mxu0 0.0
      %2781 = vmatprep.subr.mxu0 0.0
      %2782 = vmatpush2.msra.mxu0 0.0
      %2783 = vmatprep.subr.mxu0 0.0
      %2784 = vmatpush2.msra.mxu0 0.0
      %2785 = vmatprep.subr.mxu0 0.0
      %2786 = vmatpush2.msra.mxu0 0.0
      %2787 = vmatprep.subr.mxu0 0.0
      %2788 = vmatpush2.msra.mxu0 0.0
      %2789 = vmatprep.subr.mxu0 0.0
      %2790 = vmatpush2.msra.mxu0 0.0
      %2791 = vmatprep.subr.mxu0 0.0
      %2792 = vmatpush2.msra.mxu0 0.0
      %2793 = vmatprep.mubr.f32.mxu0 0.0
      %2794 = vmatmul.mubr.f32.gmra.mxu0 %v2727
      %v2795 = vpop.f32.mrf.mxu0
      %v2796 = vadd.f32 %v2724, %v2795
      %v2797 = vpop.f32.mrf.mxu0
      %v2798 = vadd.f32 %v2724, %v2797
      %2799 = vdwg.mxu0
      %2800 = vmatprep.subr.mxu0 0.0
      %2801 = vmatpush1.msra.mxu0 0.0
      %2802 = vmatprep.subr.mxu0 0.0
      %2803 = vmatpush1.msra.mxu0 0.0
      %2804 = vmatprep.subr.mxu0 0.0
      %2805 = vmatpush1.msra.mxu0 0.0
      %2806 = vmatprep.subr.mxu0 0.0
      %2807 = vmatpush1.msra.mxu0 0.0
      %2808 = vmatprep.subr.mxu0 0.0
      %2809 = vmatpush1.msra.mxu0 0.0
      %2810 = vmatprep.subr.mxu0 0.0
      %2811 = vmatpush1.msra.mxu0 0.0
      %2812 = vmatprep.subr.mxu0 0.0
      %2813 = vmatpush1.msra.mxu0 0.0
      %2814 = vmatprep.subr.mxu0 %v2713
      %2815 = vmatpush1.msra.mxu0 %v2712
      %2816 = vmatprep.subr.mxu0 %v2702
      %2817 = vmatpush1.msra.mxu0 %v2701
      %2818 = vmatprep.subr.mxu0 %v2691
      %2819 = vmatpush1.msra.mxu0 %v2690
      %2820 = vmatprep.subr.mxu0 %v2680
      %2821 = vmatpush1.msra.mxu0 %v2679
      %2822 = vmatprep.subr.mxu0 %v2669
      %2823 = vmatpush1.msra.mxu0 %v2668
      %2824 = vmatprep.subr.mxu0 %v2658
      %2825 = vmatpush1.msra.mxu0 %v2657
      %2826 = vmatprep.subr.mxu0 %v2647
      %2827 = vmatpush1.msra.mxu0 %v2646
      %2828 = vmatprep.subr.mxu0 %v2636
      %2829 = vmatpush1.msra.mxu0 %v2635
      %2830 = vmatprep.subr.mxu0 %v2625
      %2831 = vmatpush1.msra.mxu0 %v2624
      %2832 = vmatprep.subr.mxu0 0.0
      %2833 = vmatpush2.msra.mxu0 0.0
      %2834 = vmatprep.subr.mxu0 0.0
      %2835 = vmatpush2.msra.mxu0 0.0
      %2836 = vmatprep.subr.mxu0 0.0
      %2837 = vmatpush2.msra.mxu0 0.0
      %2838 = vmatprep.subr.mxu0 0.0
      %2839 = vmatpush2.msra.mxu0 0.0
      %2840 = vmatprep.subr.mxu0 0.0
      %2841 = vmatpush2.msra.mxu0 0.0
      %2842 = vmatprep.subr.mxu0 0.0
      %2843 = vmatpush2.msra.mxu0 0.0
      %2844 = vmatprep.subr.mxu0 0.0
      %2845 = vmatpush2.msra.mxu0 0.0
      %2846 = vmatprep.subr.mxu0 0.0
      %2847 = vmatpush2.msra.mxu0 0.0
      %2848 = vmatprep.subr.mxu0 0.0
      %2849 = vmatpush2.msra.mxu0 0.0
      %2850 = vmatprep.subr.mxu0 0.0
      %2851 = vmatpush2.msra.mxu0 0.0
      %2852 = vmatprep.subr.mxu0 0.0
      %2853 = vmatpush2.msra.mxu0 0.0
      %2854 = vmatprep.subr.mxu0 0.0
      %2855 = vmatpush2.msra.mxu0 0.0
      %2856 = vmatprep.subr.mxu0 0.0
      %2857 = vmatpush2.msra.mxu0 0.0
      %2858 = vmatprep.subr.mxu0 0.0
      %2859 = vmatpush2.msra.mxu0 0.0
      %2860 = vmatprep.subr.mxu0 0.0
      %2861 = vmatpush2.msra.mxu0 0.0
      %2862 = vmatprep.subr.mxu0 0.0
      %2863 = vmatpush2.msra.mxu0 0.0
      %2864 = vmatprep.mubr.f32.mxu0 0.0
      %2865 = vmatmul.mubr.f32.gmra.mxu0 %v2727
      %v2866 = vpop.f32.mrf.mxu0
      %v2867 = vadd.f32 %v2724, %v2866
      %v2868 = vpop.f32.mrf.mxu0
      %v2869 = vadd.f32 %v2724, %v2868
      %2870 = vdwg.mxu0
      %2871 = vmatprep.subr.mxu0 0.0
      %2872 = vmatpush1.msra.mxu0 0.0
      %2873 = vmatprep.subr.mxu0 0.0
      %2874 = vmatpush1.msra.mxu0 0.0
      %2875 = vmatprep.subr.mxu0 0.0
      %2876 = vmatpush1.msra.mxu0 0.0
      %2877 = vmatprep.subr.mxu0 0.0
      %2878 = vmatpush1.msra.mxu0 0.0
      %2879 = vmatprep.subr.mxu0 0.0
      %2880 = vmatpush1.msra.mxu0 0.0
      %2881 = vmatprep.subr.mxu0 0.0
      %2882 = vmatpush1.msra.mxu0 0.0
      %2883 = vmatprep.subr.mxu0 0.0
      %2884 = vmatpush1.msra.mxu0 0.0
      %2885 = vmatprep.subr.mxu0 %v2715
      %2886 = vmatpush1.msra.mxu0 %v2714
      %2887 = vmatprep.subr.mxu0 %v2704
      %2888 = vmatpush1.msra.mxu0 %v2703
      %2889 = vmatprep.subr.mxu0 %v2693
      %2890 = vmatpush1.msra.mxu0 %v2692
      %2891 = vmatprep.subr.mxu0 %v2682
      %2892 = vmatpush1.msra.mxu0 %v2681
      %2893 = vmatprep.subr.mxu0 %v2671
      %2894 = vmatpush1.msra.mxu0 %v2670
      %2895 = vmatprep.subr.mxu0 %v2660
      %2896 = vmatpush1.msra.mxu0 %v2659
      %2897 = vmatprep.subr.mxu0 %v2649
      %2898 = vmatpush1.msra.mxu0 %v2648
      %2899 = vmatprep.subr.mxu0 %v2638
      %2900 = vmatpush1.msra.mxu0 %v2637
      %2901 = vmatprep.subr.mxu0 %v2627
      %2902 = vmatpush1.msra.mxu0 %v2626
      %2903 = vmatprep.subr.mxu0 0.0
      %2904 = vmatpush2.msra.mxu0 0.0
      %2905 = vmatprep.subr.mxu0 0.0
      %2906 = vmatpush2.msra.mxu0 0.0
      %2907 = vmatprep.subr.mxu0 0.0
      %2908 = vmatpush2.msra.mxu0 0.0
      %2909 = vmatprep.subr.mxu0 0.0
      %2910 = vmatpush2.msra.mxu0 0.0
      %2911 = vmatprep.subr.mxu0 0.0
      %2912 = vmatpush2.msra.mxu0 0.0
      %2913 = vmatprep.subr.mxu0 0.0
      %2914 = vmatpush2.msra.mxu0 0.0
      %2915 = vmatprep.subr.mxu0 0.0
      %2916 = vmatpush2.msra.mxu0 0.0
      %2917 = vmatprep.subr.mxu0 0.0
      %2918 = vmatpush2.msra.mxu0 0.0
      %2919 = vmatprep.subr.mxu0 0.0
      %2920 = vmatpush2.msra.mxu0 0.0
      %2921 = vmatprep.subr.mxu0 0.0
      %2922 = vmatpush2.msra.mxu0 0.0
      %2923 = vmatprep.subr.mxu0 0.0
      %2924 = vmatpush2.msra.mxu0 0.0
      %2925 = vmatprep.subr.mxu0 0.0
      %2926 = vmatpush2.msra.mxu0 0.0
      %2927 = vmatprep.subr.mxu0 0.0
      %2928 = vmatpush2.msra.mxu0 0.0
      %2929 = vmatprep.subr.mxu0 0.0
      %2930 = vmatpush2.msra.mxu0 0.0
      %2931 = vmatprep.subr.mxu0 0.0
      %2932 = vmatpush2.msra.mxu0 0.0
      %2933 = vmatprep.subr.mxu0 0.0
      %2934 = vmatpush2.msra.mxu0 0.0
      %2935 = vmatprep.mubr.f32.mxu0 0.0
      %2936 = vmatmul.mubr.f32.gmra.mxu0 %v2727
      %v2937 = vpop.f32.mrf.mxu0
      %v2938 = vadd.f32 %v2724, %v2937
      %v2939 = vpop.f32.mrf.mxu0
      %v2940 = vadd.f32 %v2724, %v2939
      %2941 = vdwg.mxu0
      %2942 = vmatprep.subr.mxu0 0.0
      %2943 = vmatpush1.msra.mxu0 0.0
      %2944 = vmatprep.subr.mxu0 0.0
      %2945 = vmatpush1.msra.mxu0 0.0
      %2946 = vmatprep.subr.mxu0 0.0
      %2947 = vmatpush1.msra.mxu0 0.0
      %2948 = vmatprep.subr.mxu0 0.0
      %2949 = vmatpush1.msra.mxu0 0.0
      %2950 = vmatprep.subr.mxu0 0.0
      %2951 = vmatpush1.msra.mxu0 0.0
      %2952 = vmatprep.subr.mxu0 0.0
      %2953 = vmatpush1.msra.mxu0 0.0
      %2954 = vmatprep.subr.mxu0 0.0
      %2955 = vmatpush1.msra.mxu0 0.0
      %2956 = vmatprep.subr.mxu0 %v2717
      %2957 = vmatpush1.msra.mxu0 %v2716
      %2958 = vmatprep.subr.mxu0 %v2706
      %2959 = vmatpush1.msra.mxu0 %v2705
      %2960 = vmatprep.subr.mxu0 %v2695
      %2961 = vmatpush1.msra.mxu0 %v2694
      %2962 = vmatprep.subr.mxu0 %v2684
      %2963 = vmatpush1.msra.mxu0 %v2683
      %2964 = vmatprep.subr.mxu0 %v2673
      %2965 = vmatpush1.msra.mxu0 %v2672
      %2966 = vmatprep.subr.mxu0 %v2662
      %2967 = vmatpush1.msra.mxu0 %v2661
      %2968 = vmatprep.subr.mxu0 %v2651
      %2969 = vmatpush1.msra.mxu0 %v2650
      %2970 = vmatprep.subr.mxu0 %v2640
      %2971 = vmatpush1.msra.mxu0 %v2639
      %2972 = vmatprep.subr.mxu0 %v2629
      %2973 = vmatpush1.msra.mxu0 %v2628
      %2974 = vmatprep.subr.mxu0 0.0
      %2975 = vmatpush2.msra.mxu0 0.0
      %2976 = vmatprep.subr.mxu0 0.0
      %2977 = vmatpush2.msra.mxu0 0.0
      %2978 = vmatprep.subr.mxu0 0.0
      %2979 = vmatpush2.msra.mxu0 0.0
      %2980 = vmatprep.subr.mxu0 0.0
      %2981 = vmatpush2.msra.mxu0 0.0
      %2982 = vmatprep.subr.mxu0 0.0
      %2983 = vmatpush2.msra.mxu0 0.0
      %2984 = vmatprep.subr.mxu0 0.0
      %2985 = vmatpush2.msra.mxu0 0.0
      %2986 = vmatprep.subr.mxu0 0.0
      %2987 = vmatpush2.msra.mxu0 0.0
      %2988 = vmatprep.subr.mxu0 0.0
      %2989 = vmatpush2.msra.mxu0 0.0
      %2990 = vmatprep.subr.mxu0 0.0
      %2991 = vmatpush2.msra.mxu0 0.0
      %2992 = vmatprep.subr.mxu0 0.0
      %2993 = vmatpush2.msra.mxu0 0.0
      %2994 = vmatprep.subr.mxu0 0.0
      %2995 = vmatpush2.msra.mxu0 0.0
      %2996 = vmatprep.subr.mxu0 0.0
      %2997 = vmatpush2.msra.mxu0 0.0
      %2998 = vmatprep.subr.mxu0 0.0
      %2999 = vmatpush2.msra.mxu0 0.0
      %3000 = vmatprep.subr.mxu0 0.0
      %3001 = vmatpush2.msra.mxu0 0.0
      %3002 = vmatprep.subr.mxu0 0.0
      %3003 = vmatpush2.msra.mxu0 0.0
      %3004 = vmatprep.subr.mxu0 0.0
      %3005 = vmatpush2.msra.mxu0 0.0
      %3006 = vmatprep.mubr.f32.mxu0 0.0
      %3007 = vmatmul.mubr.f32.gmra.mxu0 %v2727
      %v3008 = vpop.f32.mrf.mxu0
      %v3009 = vadd.f32 %v2724, %v3008
      %v3010 = vpop.f32.mrf.mxu0
      %v3011 = vadd.f32 %v2724, %v3010
      %3012 = vdwg.mxu0
      %3013 = vmatprep.subr.mxu0 0.0
      %3014 = vmatpush1.msra.mxu0 0.0
      %3015 = vmatprep.subr.mxu0 0.0
      %3016 = vmatpush1.msra.mxu0 0.0
      %3017 = vmatprep.subr.mxu0 0.0
      %3018 = vmatpush1.msra.mxu0 0.0
      %3019 = vmatprep.subr.mxu0 0.0
      %3020 = vmatpush1.msra.mxu0 0.0
      %3021 = vmatprep.subr.mxu0 0.0
      %3022 = vmatpush1.msra.mxu0 0.0
      %3023 = vmatprep.subr.mxu0 0.0
      %3024 = vmatpush1.msra.mxu0 0.0
      %3025 = vmatprep.subr.mxu0 0.0
      %3026 = vmatpush1.msra.mxu0 0.0
      %3027 = vmatprep.subr.mxu0 %v2719
      %3028 = vmatpush1.msra.mxu0 %v2718
      %3029 = vmatprep.subr.mxu0 %v2708
      %3030 = vmatpush1.msra.mxu0 %v2707
      %3031 = vmatprep.subr.mxu0 %v2697
      %3032 = vmatpush1.msra.mxu0 %v2696
      %3033 = vmatprep.subr.mxu0 %v2686
      %3034 = vmatpush1.msra.mxu0 %v2685
      %3035 = vmatprep.subr.mxu0 %v2675
      %3036 = vmatpush1.msra.mxu0 %v2674
      %3037 = vmatprep.subr.mxu0 %v2664
      %3038 = vmatpush1.msra.mxu0 %v2663
      %3039 = vmatprep.subr.mxu0 %v2653
      %3040 = vmatpush1.msra.mxu0 %v2652
      %3041 = vmatprep.subr.mxu0 %v2642
      %3042 = vmatpush1.msra.mxu0 %v2641
      %3043 = vmatprep.subr.mxu0 %v2631
      %3044 = vmatpush1.msra.mxu0 %v2630
      %3045 = vmatprep.subr.mxu0 0.0
      %3046 = vmatpush2.msra.mxu0 0.0
      %3047 = vmatprep.subr.mxu0 0.0
      %3048 = vmatpush2.msra.mxu0 0.0
      %3049 = vmatprep.subr.mxu0 0.0
      %3050 = vmatpush2.msra.mxu0 0.0
      %3051 = vmatprep.subr.mxu0 0.0
      %3052 = vmatpush2.msra.mxu0 0.0
      %3053 = vmatprep.subr.mxu0 0.0
      %3054 = vmatpush2.msra.mxu0 0.0
      %3055 = vmatprep.subr.mxu0 0.0
      %3056 = vmatpush2.msra.mxu0 0.0
      %3057 = vmatprep.subr.mxu0 0.0
      %3058 = vmatpush2.msra.mxu0 0.0
      %3059 = vmatprep.subr.mxu0 0.0
      %3060 = vmatpush2.msra.mxu0 0.0
      %3061 = vmatprep.subr.mxu0 0.0
      %3062 = vmatpush2.msra.mxu0 0.0
      %3063 = vmatprep.subr.mxu0 0.0
      %3064 = vmatpush2.msra.mxu0 0.0
      %3065 = vmatprep.subr.mxu0 0.0
      %3066 = vmatpush2.msra.mxu0 0.0
      %3067 = vmatprep.subr.mxu0 0.0
      %3068 = vmatpush2.msra.mxu0 0.0
      %3069 = vmatprep.subr.mxu0 0.0
      %3070 = vmatpush2.msra.mxu0 0.0
      %3071 = vmatprep.subr.mxu0 0.0
      %3072 = vmatpush2.msra.mxu0 0.0
      %3073 = vmatprep.subr.mxu0 0.0
      %3074 = vmatpush2.msra.mxu0 0.0
      %3075 = vmatprep.subr.mxu0 0.0
      %3076 = vmatpush2.msra.mxu0 0.0
      %3077 = vmatprep.mubr.f32.mxu0 0.0
      %3078 = vmatmul.mubr.f32.gmra.mxu0 %v2727
      %v3079 = vpop.f32.mrf.mxu0
      %v3080 = vadd.f32 %v2724, %v3079
      %v3081 = vpop.f32.mrf.mxu0
      %v3082 = vadd.f32 %v2724, %v3081
      %3083 = vdwg.mxu0
      %3084 = vmatprep.subr.mxu0 0.0
      %3085 = vmatpush1.msra.mxu0 0.0
      %3086 = vmatprep.subr.mxu0 0.0
      %3087 = vmatpush1.msra.mxu0 0.0
      %3088 = vmatprep.subr.mxu0 0.0
      %3089 = vmatpush1.msra.mxu0 0.0
      %3090 = vmatprep.subr.mxu0 0.0
      %3091 = vmatpush1.msra.mxu0 0.0
      %3092 = vmatprep.subr.mxu0 0.0
      %3093 = vmatpush1.msra.mxu0 0.0
      %3094 = vmatprep.subr.mxu0 0.0
      %3095 = vmatpush1.msra.mxu0 0.0
      %3096 = vmatprep.subr.mxu0 0.0
      %3097 = vmatpush1.msra.mxu0 0.0
      %3098 = vmatprep.subr.mxu0 0.0
      %3099 = vmatpush1.msra.mxu0 %v2720
      %3100 = vmatprep.subr.mxu0 0.0
      %3101 = vmatpush1.msra.mxu0 %v2709
      %3102 = vmatprep.subr.mxu0 0.0
      %3103 = vmatpush1.msra.mxu0 %v2698
      %3104 = vmatprep.subr.mxu0 0.0
      %3105 = vmatpush1.msra.mxu0 %v2687
      %3106 = vmatprep.subr.mxu0 0.0
      %3107 = vmatpush1.msra.mxu0 %v2676
      %3108 = vmatprep.subr.mxu0 0.0
      %3109 = vmatpush1.msra.mxu0 %v2665
      %3110 = vmatprep.subr.mxu0 0.0
      %3111 = vmatpush1.msra.mxu0 %v2654
      %3112 = vmatprep.subr.mxu0 0.0
      %3113 = vmatpush1.msra.mxu0 %v2643
      %3114 = vmatprep.subr.mxu0 0.0
      %3115 = vmatpush1.msra.mxu0 %v2632
      %3116 = vmatprep.subr.mxu0 0.0
      %3117 = vmatpush2.msra.mxu0 0.0
      %3118 = vmatprep.subr.mxu0 0.0
      %3119 = vmatpush2.msra.mxu0 0.0
      %3120 = vmatprep.subr.mxu0 0.0
      %3121 = vmatpush2.msra.mxu0 0.0
      %3122 = vmatprep.subr.mxu0 0.0
      %3123 = vmatpush2.msra.mxu0 0.0
      %3124 = vmatprep.subr.mxu0 0.0
      %3125 = vmatpush2.msra.mxu0 0.0
      %3126 = vmatprep.subr.mxu0 0.0
      %3127 = vmatpush2.msra.mxu0 0.0
      %3128 = vmatprep.subr.mxu0 0.0
      %3129 = vmatpush2.msra.mxu0 0.0
      %3130 = vmatprep.subr.mxu0 0.0
      %3131 = vmatpush2.msra.mxu0 0.0
      %3132 = vmatprep.subr.mxu0 0.0
      %3133 = vmatpush2.msra.mxu0 0.0
      %3134 = vmatprep.subr.mxu0 0.0
      %3135 = vmatpush2.msra.mxu0 0.0
      %3136 = vmatprep.subr.mxu0 0.0
      %3137 = vmatpush2.msra.mxu0 0.0
      %3138 = vmatprep.subr.mxu0 0.0
      %3139 = vmatpush2.msra.mxu0 0.0
      %3140 = vmatprep.subr.mxu0 0.0
      %3141 = vmatpush2.msra.mxu0 0.0
      %3142 = vmatprep.subr.mxu0 0.0
      %3143 = vmatpush2.msra.mxu0 0.0
      %3144 = vmatprep.subr.mxu0 0.0
      %3145 = vmatpush2.msra.mxu0 0.0
      %3146 = vmatprep.subr.mxu0 0.0
      %3147 = vmatpush2.msra.mxu0 0.0
      %3148 = vmatprep.mubr.f32.mxu0 0.0
      %3149 = vmatmul.mubr.f32.gmra.mxu0 %v2727
      %v3150 = vpop.f32.mrf.mxu0
      %v3151 = vadd.f32 %v2724, %v3150
      %v3152 = vpop.f32.mrf.mxu0
      %3153 = vdwg.mxu0
      %v3154 = vmax.f32 %v2796, 0.0
      %v3155 = vmax.f32 %v2798, 0.0
      %v3156 = vmax.f32 %v2867, 0.0
      %v3157 = vmax.f32 %v2869, 0.0
      %v3158 = vmax.f32 %v2938, 0.0
      %v3159 = vmax.f32 %v2940, 0.0
      %v3160 = vmax.f32 %v3009, 0.0
      %v3161 = vmax.f32 %v3011, 0.0
      %v3162 = vmax.f32 %v3080, 0.0
      %v3163 = vmax.f32 %v3082, 0.0
      %v3164 = vmax.f32 %v3151, 0.0
      %v3165 = vmul.f32 %v3154, %v2194
      %v3166 = vmul.f32 %v3155, %v2198
      %v3167 = vmul.f32 %v3156, %v2202
      %v3168 = vmul.f32 %v3157, %v2206
      %v3169 = vmul.f32 %v3158, %v2210
      %v3170 = vmul.f32 %v3159, %v2214
      %v3171 = vmul.f32 %v3160, %v2218
      %v3172 = vmul.f32 %v3161, %v2222
      %v3173 = vmul.f32 %v3162, %v2226
      %v3174 = vmul.f32 %v3163, %v2230
      %v3175 = vmul.f32 %v3164, %v2234
      %3176 = vrot.lane.b32.xlu0 %v3165, 37
      %v3177 = vpop.permute.xlu0 %3176
      %3178 = vrot.lane.b32.xlu0 %v3166, 37
      %v3179 = vpop.permute.xlu0 %3178
      %3180 = vrot.lane.b32.xlu0 %v3167, 37
      %v3181 = vpop.permute.xlu0 %3180
      %3182 = vrot.lane.b32.xlu0 %v3168, 37
      %v3183 = vpop.permute.xlu0 %3182
      %3184 = vrot.lane.b32.xlu0 %v3169, 37
      %v3185 = vpop.permute.xlu0 %3184
      %3186 = vrot.lane.b32.xlu0 %v3170, 37
      %v3187 = vpop.permute.xlu0 %3186
      %3188 = vrot.lane.b32.xlu0 %v3171, 37
      %v3189 = vpop.permute.xlu0 %3188
      %3190 = vrot.lane.b32.xlu0 %v3172, 37
      %v3191 = vpop.permute.xlu0 %3190
      %3192 = vrot.lane.b32.xlu0 %v3173, 37
      %v3193 = vpop.permute.xlu0 %3192
      %3194 = vrot.lane.b32.xlu0 %v3174, 37
      %v3195 = vpop.permute.xlu0 %3194
      %3196 = vrot.lane.b32.xlu0 %v3175, 37
      %v3197 = vpop.permute.xlu0 %3196
      %v3198 = vsel %vm667, %v3195, %v3197
      %v3199 = vsel %vm667, %v3193, %v3195
      %v3200 = vsel %vm667, %v3191, %v3193
      %v3201 = vsel %vm667, %v3189, %v3191
      %v3202 = vsel %vm667, %v3187, %v3189
      %v3203 = vsel %vm667, %v3185, %v3187
      %v3204 = vsel %vm667, %v3183, %v3185
      %v3205 = vsel %vm667, %v3181, %v3183
      %v3206 = vsel %vm667, %v3179, %v3181
      %v3207 = vsel %vm667, %v3177, %v3179
      %v3208 = vsel %vm667, %v3197, %v3177
      %3209 = vst [vmem:[#allocation2] sm:$0xff] %v3208
      %3210 = vst [vmem:[#allocation2 + $0x8] sm:$0xff] %v3207
      %3211 = vst [vmem:[#allocation2 + $0x10] sm:$0xff] %v3206
      %3212 = vst [vmem:[#allocation2 + $0x18] sm:$0xff] %v3205
      %3213 = vst [vmem:[#allocation2 + $0x20] sm:$0xff] %v3204
      %3214 = vst [vmem:[#allocation2 + $0x28] sm:$0xff] %v3203
      %3215 = vst [vmem:[#allocation2 + $0x30] sm:$0xff] %v3202
      %3216 = vst [vmem:[#allocation2 + $0x38] sm:$0xff] %v3201
      %3217 = vst [vmem:[#allocation2 + $0x40] sm:$0xff] %v3200
      %3218 = vst [vmem:[#allocation2 + $0x48] sm:$0xff] %v3199
      %3219 = vst [vmem:[#allocation2 + $0x50] sm:$0xff] %v3198
      %3220 = vrot.lane.b32.xlu0 %v3165, 36
      %v3221 = vpop.permute.xlu0 %3220
      %3222 = vrot.lane.b32.xlu0 %v3166, 36
      %v3223 = vpop.permute.xlu0 %3222
      %3224 = vrot.lane.b32.xlu0 %v3167, 36
      %v3225 = vpop.permute.xlu0 %3224
      %3226 = vrot.lane.b32.xlu0 %v3168, 36
      %v3227 = vpop.permute.xlu0 %3226
      %3228 = vrot.lane.b32.xlu0 %v3169, 36
      %v3229 = vpop.permute.xlu0 %3228
      %3230 = vrot.lane.b32.xlu0 %v3170, 36
      %v3231 = vpop.permute.xlu0 %3230
      %3232 = vrot.lane.b32.xlu0 %v3171, 36
      %v3233 = vpop.permute.xlu0 %3232
      %3234 = vrot.lane.b32.xlu0 %v3172, 36
      %v3235 = vpop.permute.xlu0 %3234
      %3236 = vrot.lane.b32.xlu0 %v3173, 36
      %v3237 = vpop.permute.xlu0 %3236
      %3238 = vrot.lane.b32.xlu0 %v3174, 36
      %v3239 = vpop.permute.xlu0 %3238
      %3240 = vrot.lane.b32.xlu0 %v3175, 36
      %v3241 = vpop.permute.xlu0 %3240
      %v3242 = vsel %vm712, %v3239, %v3241
      %v3243 = vsel %vm712, %v3237, %v3239
      %v3244 = vsel %vm712, %v3235, %v3237
      %v3245 = vsel %vm712, %v3233, %v3235
      %v3246 = vsel %vm712, %v3231, %v3233
      %v3247 = vsel %vm712, %v3229, %v3231
      %v3248 = vsel %vm712, %v3227, %v3229
      %v3249 = vsel %vm712, %v3225, %v3227
      %v3250 = vsel %vm712, %v3223, %v3225
      %v3251 = vsel %vm712, %v3221, %v3223
      %v3252 = vsel %vm712, %v3241, %v3221
      %3253 = vst [vmem:[#allocation2 + $0x58] sm:$0xff] %v3252
      %3254 = vst [vmem:[#allocation2 + $0x60] sm:$0xff] %v3251
      %3255 = vst [vmem:[#allocation2 + $0x68] sm:$0xff] %v3250
      %3256 = vst [vmem:[#allocation2 + $0x70] sm:$0xff] %v3249
      %3257 = vst [vmem:[#allocation2 + $0x78] sm:$0xff] %v3248
      %3258 = vst [vmem:[#allocation2 + $0x80] sm:$0xff] %v3247
      %3259 = vst [vmem:[#allocation2 + $0x88] sm:$0xff] %v3246
      %3260 = vst [vmem:[#allocation2 + $0x90] sm:$0xff] %v3245
      %3261 = vst [vmem:[#allocation2 + $0x98] sm:$0xff] %v3244
      %3262 = vst [vmem:[#allocation2 + $0xa0] sm:$0xff] %v3243
      %3263 = vst [vmem:[#allocation2 + $0xa8] sm:$0xff] %v3242
      %3264 = vrot.lane.b32.xlu0 %v3165, 35
      %v3265 = vpop.permute.xlu0 %3264
      %3266 = vrot.lane.b32.xlu0 %v3166, 35
      %v3267 = vpop.permute.xlu0 %3266
      %3268 = vrot.lane.b32.xlu0 %v3167, 35
      %v3269 = vpop.permute.xlu0 %3268
      %3270 = vrot.lane.b32.xlu0 %v3168, 35
      %v3271 = vpop.permute.xlu0 %3270
      %3272 = vrot.lane.b32.xlu0 %v3169, 35
      %v3273 = vpop.permute.xlu0 %3272
      %3274 = vrot.lane.b32.xlu0 %v3170, 35
      %v3275 = vpop.permute.xlu0 %3274
      %3276 = vrot.lane.b32.xlu0 %v3171, 35
      %v3277 = vpop.permute.xlu0 %3276
      %3278 = vrot.lane.b32.xlu0 %v3172, 35
      %v3279 = vpop.permute.xlu0 %3278
      %3280 = vrot.lane.b32.xlu0 %v3173, 35
      %v3281 = vpop.permute.xlu0 %3280
      %3282 = vrot.lane.b32.xlu0 %v3174, 35
      %v3283 = vpop.permute.xlu0 %3282
      %3284 = vrot.lane.b32.xlu0 %v3175, 35
      %v3285 = vpop.permute.xlu0 %3284
      %v3286 = vsel %vm757, %v3283, %v3285
      %v3287 = vsel %vm757, %v3281, %v3283
      %v3288 = vsel %vm757, %v3279, %v3281
      %v3289 = vsel %vm757, %v3277, %v3279
      %v3290 = vsel %vm757, %v3275, %v3277
      %v3291 = vsel %vm757, %v3273, %v3275
      %v3292 = vsel %vm757, %v3271, %v3273
      %v3293 = vsel %vm757, %v3269, %v3271
      %v3294 = vsel %vm757, %v3267, %v3269
      %v3295 = vsel %vm757, %v3265, %v3267
      %v3296 = vsel %vm757, %v3285, %v3265
      %3297 = vst [vmem:[#allocation2 + $0xb0] sm:$0xff] %v3296
      %3298 = vst [vmem:[#allocation2 + $0xb8] sm:$0xff] %v3295
      %3299 = vst [vmem:[#allocation2 + $0xc0] sm:$0xff] %v3294
      %3300 = vst [vmem:[#allocation2 + $0xc8] sm:$0xff] %v3293
      %3301 = vst [vmem:[#allocation2 + $0xd0] sm:$0xff] %v3292
      %3302 = vst [vmem:[#allocation2 + $0xd8] sm:$0xff] %v3291
      %3303 = vst [vmem:[#allocation2 + $0xe0] sm:$0xff] %v3290
      %3304 = vst [vmem:[#allocation2 + $0xe8] sm:$0xff] %v3289
      %3305 = vst [vmem:[#allocation2 + $0xf0] sm:$0xff] %v3288
      %3306 = vst [vmem:[#allocation2 + $0xf8] sm:$0xff] %v3287
      %3307 = vst [vmem:[#allocation2 + $0x100] sm:$0xff] %v3286
      %3308 = vrot.lane.b32.xlu0 %v3165, 1
      %v3309 = vpop.permute.xlu0 %3308
      %3310 = vrot.lane.b32.xlu0 %v3166, 1
      %v3311 = vpop.permute.xlu0 %3310
      %3312 = vrot.lane.b32.xlu0 %v3167, 1
      %v3313 = vpop.permute.xlu0 %3312
      %3314 = vrot.lane.b32.xlu0 %v3168, 1
      %v3315 = vpop.permute.xlu0 %3314
      %3316 = vrot.lane.b32.xlu0 %v3169, 1
      %v3317 = vpop.permute.xlu0 %3316
      %3318 = vrot.lane.b32.xlu0 %v3170, 1
      %v3319 = vpop.permute.xlu0 %3318
      %3320 = vrot.lane.b32.xlu0 %v3171, 1
      %v3321 = vpop.permute.xlu0 %3320
      %3322 = vrot.lane.b32.xlu0 %v3172, 1
      %v3323 = vpop.permute.xlu0 %3322
      %3324 = vrot.lane.b32.xlu0 %v3173, 1
      %v3325 = vpop.permute.xlu0 %3324
      %3326 = vrot.lane.b32.xlu0 %v3174, 1
      %v3327 = vpop.permute.xlu0 %3326
      %3328 = vrot.lane.b32.xlu0 %v3175, 1
      %v3329 = vpop.permute.xlu0 %3328
      %v3330 = vsel %vm892, %v3327, %v3329
      %v3331 = vsel %vm892, %v3325, %v3327
      %v3332 = vsel %vm892, %v3323, %v3325
      %v3333 = vsel %vm892, %v3321, %v3323
      %v3334 = vsel %vm892, %v3319, %v3321
      %v3335 = vsel %vm892, %v3317, %v3319
      %v3336 = vsel %vm892, %v3315, %v3317
      %v3337 = vsel %vm892, %v3313, %v3315
      %v3338 = vsel %vm892, %v3311, %v3313
      %v3339 = vsel %vm892, %v3309, %v3311
      %v3340 = vsel %vm892, %v3329, %v3309
      %3341 = vst [vmem:[#allocation2 + $0x108] sm:$0xff] %v3340
      %3342 = vst [vmem:[#allocation2 + $0x110] sm:$0xff] %v3339
      %3343 = vst [vmem:[#allocation2 + $0x118] sm:$0xff] %v3338
      %3344 = vst [vmem:[#allocation2 + $0x120] sm:$0xff] %v3337
      %3345 = vst [vmem:[#allocation2 + $0x128] sm:$0xff] %v3336
      %3346 = vst [vmem:[#allocation2 + $0x130] sm:$0xff] %v3335
      %3347 = vst [vmem:[#allocation2 + $0x138] sm:$0xff] %v3334
      %3348 = vst [vmem:[#allocation2 + $0x140] sm:$0xff] %v3333
      %3349 = vst [vmem:[#allocation2 + $0x148] sm:$0xff] %v3332
      %3350 = vst [vmem:[#allocation2 + $0x150] sm:$0xff] %v3331
      %3351 = vst [vmem:[#allocation2 + $0x158] sm:$0xff] %v3330
      %3352 = vst [vmem:[#allocation2 + $0x160] sm:$0xff] %v3165
      %3353 = vst [vmem:[#allocation2 + $0x168] sm:$0xff] %v3166
      %3354 = vst [vmem:[#allocation2 + $0x170] sm:$0xff] %v3167
      %3355 = vst [vmem:[#allocation2 + $0x178] sm:$0xff] %v3168
      %3356 = vst [vmem:[#allocation2 + $0x180] sm:$0xff] %v3169
      %3357 = vst [vmem:[#allocation2 + $0x188] sm:$0xff] %v3170
      %3358 = vst [vmem:[#allocation2 + $0x190] sm:$0xff] %v3171
      %3359 = vst [vmem:[#allocation2 + $0x198] sm:$0xff] %v3172
      %3360 = vst [vmem:[#allocation2 + $0x1a0] sm:$0xff] %v3173
      %3361 = vst [vmem:[#allocation2 + $0x1a8] sm:$0xff] %v3174
      %3362 = vst [vmem:[#allocation2 + $0x1b0] sm:$0xff] %v3175
      %3363 = vrot.lane.b32.xlu0 %v3165, 127
      %v3364 = vpop.permute.xlu0 %3363
      %3365 = vrot.lane.b32.xlu0 %v3166, 127
      %v3366 = vpop.permute.xlu0 %3365
      %3367 = vrot.lane.b32.xlu0 %v3167, 127
      %v3368 = vpop.permute.xlu0 %3367
      %3369 = vrot.lane.b32.xlu0 %v3168, 127
      %v3370 = vpop.permute.xlu0 %3369
      %3371 = vrot.lane.b32.xlu0 %v3169, 127
      %v3372 = vpop.permute.xlu0 %3371
      %3373 = vrot.lane.b32.xlu0 %v3170, 127
      %v3374 = vpop.permute.xlu0 %3373
      %3375 = vrot.lane.b32.xlu0 %v3171, 127
      %v3376 = vpop.permute.xlu0 %3375
      %3377 = vrot.lane.b32.xlu0 %v3172, 127
      %v3378 = vpop.permute.xlu0 %3377
      %3379 = vrot.lane.b32.xlu0 %v3173, 127
      %v3380 = vpop.permute.xlu0 %3379
      %3381 = vrot.lane.b32.xlu0 %v3174, 127
      %v3382 = vpop.permute.xlu0 %3381
      %3383 = vrot.lane.b32.xlu0 %v3175, 127
      %v3384 = vpop.permute.xlu0 %3383
      %v3385 = vsel %vm948, %v3382, %v3384
      %v3386 = vsel %vm948, %v3380, %v3382
      %v3387 = vsel %vm948, %v3378, %v3380
      %v3388 = vsel %vm948, %v3376, %v3378
      %v3389 = vsel %vm948, %v3374, %v3376
      %v3390 = vsel %vm948, %v3372, %v3374
      %v3391 = vsel %vm948, %v3370, %v3372
      %v3392 = vsel %vm948, %v3368, %v3370
      %v3393 = vsel %vm948, %v3366, %v3368
      %v3394 = vsel %vm948, %v3364, %v3366
      %v3395 = vsel %vm948, %v3384, %v3364
      %3396 = vst [vmem:[#allocation2 + $0x1b8] sm:$0xff] %v3394
      %3397 = vst [vmem:[#allocation2 + $0x1c0] sm:$0xff] %v3393
      %3398 = vst [vmem:[#allocation2 + $0x1c8] sm:$0xff] %v3392
      %3399 = vst [vmem:[#allocation2 + $0x1d0] sm:$0xff] %v3391
      %3400 = vst [vmem:[#allocation2 + $0x1d8] sm:$0xff] %v3390
      %3401 = vst [vmem:[#allocation2 + $0x1e0] sm:$0xff] %v3389
      %3402 = vst [vmem:[#allocation2 + $0x1e8] sm:$0xff] %v3388
      %3403 = vst [vmem:[#allocation2 + $0x1f0] sm:$0xff] %v3387
      %3404 = vst [vmem:[#allocation2 + $0x1f8] sm:$0xff] %v3386
      %3405 = vst [vmem:[#allocation2 + $0x200] sm:$0xff] %v3385
      %3406 = vst [vmem:[#allocation2 + $0x208] sm:$0xff] %v3395
      %3407 = vrot.lane.b32.xlu0 %v3165, 93
      %v3408 = vpop.permute.xlu0 %3407
      %3409 = vrot.lane.b32.xlu0 %v3166, 93
      %v3410 = vpop.permute.xlu0 %3409
      %3411 = vrot.lane.b32.xlu0 %v3167, 93
      %v3412 = vpop.permute.xlu0 %3411
      %3413 = vrot.lane.b32.xlu0 %v3168, 93
      %v3414 = vpop.permute.xlu0 %3413
      %3415 = vrot.lane.b32.xlu0 %v3169, 93
      %v3416 = vpop.permute.xlu0 %3415
      %3417 = vrot.lane.b32.xlu0 %v3170, 93
      %v3418 = vpop.permute.xlu0 %3417
      %3419 = vrot.lane.b32.xlu0 %v3171, 93
      %v3420 = vpop.permute.xlu0 %3419
      %3421 = vrot.lane.b32.xlu0 %v3172, 93
      %v3422 = vpop.permute.xlu0 %3421
      %3423 = vrot.lane.b32.xlu0 %v3173, 93
      %v3424 = vpop.permute.xlu0 %3423
      %3425 = vrot.lane.b32.xlu0 %v3174, 93
      %v3426 = vpop.permute.xlu0 %3425
      %3427 = vrot.lane.b32.xlu0 %v3175, 93
      %v3428 = vpop.permute.xlu0 %3427
      %v3429 = vsel %vm1083, %v3426, %v3428
      %v3430 = vsel %vm1083, %v3424, %v3426
      %v3431 = vsel %vm1083, %v3422, %v3424
      %v3432 = vsel %vm1083, %v3420, %v3422
      %v3433 = vsel %vm1083, %v3418, %v3420
      %v3434 = vsel %vm1083, %v3416, %v3418
      %v3435 = vsel %vm1083, %v3414, %v3416
      %v3436 = vsel %vm1083, %v3412, %v3414
      %v3437 = vsel %vm1083, %v3410, %v3412
      %v3438 = vsel %vm1083, %v3408, %v3410
      %v3439 = vsel %vm1083, %v3428, %v3408
      %3440 = vst [vmem:[#allocation2 + $0x210] sm:$0xff] %v3438
      %3441 = vst [vmem:[#allocation2 + $0x218] sm:$0xff] %v3437
      %3442 = vst [vmem:[#allocation2 + $0x220] sm:$0xff] %v3436
      %3443 = vst [vmem:[#allocation2 + $0x228] sm:$0xff] %v3435
      %3444 = vst [vmem:[#allocation2 + $0x230] sm:$0xff] %v3434
      %3445 = vst [vmem:[#allocation2 + $0x238] sm:$0xff] %v3433
      %3446 = vst [vmem:[#allocation2 + $0x240] sm:$0xff] %v3432
      %3447 = vst [vmem:[#allocation2 + $0x248] sm:$0xff] %v3431
      %3448 = vst [vmem:[#allocation2 + $0x250] sm:$0xff] %v3430
      %3449 = vst [vmem:[#allocation2 + $0x258] sm:$0xff] %v3429
      %3450 = vst [vmem:[#allocation2 + $0x260] sm:$0xff] %v3439
      %3451 = vrot.lane.b32.xlu0 %v3165, 92
      %v3452 = vpop.permute.xlu0 %3451
      %3453 = vrot.lane.b32.xlu0 %v3166, 92
      %v3454 = vpop.permute.xlu0 %3453
      %3455 = vrot.lane.b32.xlu0 %v3167, 92
      %v3456 = vpop.permute.xlu0 %3455
      %3457 = vrot.lane.b32.xlu0 %v3168, 92
      %v3458 = vpop.permute.xlu0 %3457
      %3459 = vrot.lane.b32.xlu0 %v3169, 92
      %v3460 = vpop.permute.xlu0 %3459
      %3461 = vrot.lane.b32.xlu0 %v3170, 92
      %v3462 = vpop.permute.xlu0 %3461
      %3463 = vrot.lane.b32.xlu0 %v3171, 92
      %v3464 = vpop.permute.xlu0 %3463
      %3465 = vrot.lane.b32.xlu0 %v3172, 92
      %v3466 = vpop.permute.xlu0 %3465
      %3467 = vrot.lane.b32.xlu0 %v3173, 92
      %v3468 = vpop.permute.xlu0 %3467
      %3469 = vrot.lane.b32.xlu0 %v3174, 92
      %v3470 = vpop.permute.xlu0 %3469
      %3471 = vrot.lane.b32.xlu0 %v3175, 92
      %v3472 = vpop.permute.xlu0 %3471
      %v3473 = vsel %vm1128, %v3470, %v3472
      %v3474 = vsel %vm1128, %v3468, %v3470
      %v3475 = vsel %vm1128, %v3466, %v3468
      %v3476 = vsel %vm1128, %v3464, %v3466
      %v3477 = vsel %vm1128, %v3462, %v3464
      %v3478 = vsel %vm1128, %v3460, %v3462
      %v3479 = vsel %vm1128, %v3458, %v3460
      %v3480 = vsel %vm1128, %v3456, %v3458
      %v3481 = vsel %vm1128, %v3454, %v3456
      %v3482 = vsel %vm1128, %v3452, %v3454
      %v3483 = vsel %vm1128, %v3472, %v3452
      %3484 = vst [vmem:[#allocation2 + $0x268] sm:$0xff] %v3482
      %3485 = vst [vmem:[#allocation2 + $0x270] sm:$0xff] %v3481
      %3486 = vst [vmem:[#allocation2 + $0x278] sm:$0xff] %v3480
      %3487 = vst [vmem:[#allocation2 + $0x280] sm:$0xff] %v3479
      %3488 = vst [vmem:[#allocation2 + $0x288] sm:$0xff] %v3478
      %3489 = vst [vmem:[#allocation2 + $0x290] sm:$0xff] %v3477
      %3490 = vst [vmem:[#allocation2 + $0x298] sm:$0xff] %v3476
      %3491 = vst [vmem:[#allocation2 + $0x2a0] sm:$0xff] %v3475
      %3492 = vst [vmem:[#allocation2 + $0x2a8] sm:$0xff] %v3474
      %3493 = vst [vmem:[#allocation2 + $0x2b0] sm:$0xff] %v3473
      %3494 = vst [vmem:[#allocation2 + $0x2b8] sm:$0xff] %v3483
      %3495 = vrot.lane.b32.xlu0 %v3165, 91
      %v3496 = vpop.permute.xlu0 %3495
      %3497 = vrot.lane.b32.xlu0 %v3166, 91
      %v3498 = vpop.permute.xlu0 %3497
      %3499 = vrot.lane.b32.xlu0 %v3167, 91
      %v3500 = vpop.permute.xlu0 %3499
      %3501 = vrot.lane.b32.xlu0 %v3168, 91
      %v3502 = vpop.permute.xlu0 %3501
      %3503 = vrot.lane.b32.xlu0 %v3169, 91
      %v3504 = vpop.permute.xlu0 %3503
      %3505 = vrot.lane.b32.xlu0 %v3170, 91
      %v3506 = vpop.permute.xlu0 %3505
      %3507 = vrot.lane.b32.xlu0 %v3171, 91
      %v3508 = vpop.permute.xlu0 %3507
      %3509 = vrot.lane.b32.xlu0 %v3172, 91
      %v3510 = vpop.permute.xlu0 %3509
      %3511 = vrot.lane.b32.xlu0 %v3173, 91
      %v3512 = vpop.permute.xlu0 %3511
      %3513 = vrot.lane.b32.xlu0 %v3174, 91
      %v3514 = vpop.permute.xlu0 %3513
      %3515 = vrot.lane.b32.xlu0 %v3175, 91
      %v3516 = vpop.permute.xlu0 %3515
      %v3517 = vsel %vm1173, %v3514, %v3516
      %v3518 = vsel %vm1173, %v3512, %v3514
      %v3519 = vsel %vm1173, %v3510, %v3512
      %v3520 = vsel %vm1173, %v3508, %v3510
      %v3521 = vsel %vm1173, %v3506, %v3508
      %v3522 = vsel %vm1173, %v3504, %v3506
      %v3523 = vsel %vm1173, %v3502, %v3504
      %v3524 = vsel %vm1173, %v3500, %v3502
      %v3525 = vsel %vm1173, %v3498, %v3500
      %v3526 = vsel %vm1173, %v3496, %v3498
      %v3527 = vsel %vm1173, %v3516, %v3496
      %3528 = vst [vmem:[#allocation2 + $0x2c0] sm:$0xff] %v3526
      %3529 = vst [vmem:[#allocation2 + $0x2c8] sm:$0xff] %v3525
      %3530 = vst [vmem:[#allocation2 + $0x2d0] sm:$0xff] %v3524
      %3531 = vst [vmem:[#allocation2 + $0x2d8] sm:$0xff] %v3523
      %3532 = vst [vmem:[#allocation2 + $0x2e0] sm:$0xff] %v3522
      %3533 = vst [vmem:[#allocation2 + $0x2e8] sm:$0xff] %v3521
      %3534 = vst [vmem:[#allocation2 + $0x2f0] sm:$0xff] %v3520
      %3535 = vst [vmem:[#allocation2 + $0x2f8] sm:$0xff] %v3519
      %3536 = vst [vmem:[#allocation2 + $0x300] sm:$0xff] %v3518
      %3537 = vst [vmem:[#allocation2 + $0x308] sm:$0xff] %v3517
      %3538 = vst [vmem:[#allocation2 + $0x310] sm:$0xff] %v3527
      %v3539 = vld [vmem:[%s6] sm:$0xff]
      %v3540 = vld [vmem:[%s7] sm:$0xff]
      %v3541 = vld [vmem:[#allocation2] sm:$0xff]
      %v3542 = vld [vmem:[#allocation2 + $0x8] sm:$0xff]
      %v3543 = vld [vmem:[#allocation2 + $0x10] sm:$0xff]
      %v3544 = vld [vmem:[#allocation2 + $0x18] sm:$0xff]
      %v3545 = vld [vmem:[#allocation2 + $0x20] sm:$0xff]
      %v3546 = vld [vmem:[#allocation2 + $0x28] sm:$0xff]
      %v3547 = vld [vmem:[#allocation2 + $0x30] sm:$0xff]
      %v3548 = vld [vmem:[#allocation2 + $0x38] sm:$0xff]
      %v3549 = vld [vmem:[#allocation2 + $0x40] sm:$0xff]
      %v3550 = vld [vmem:[#allocation2 + $0x48] sm:$0xff]
      %v3551 = vld [vmem:[#allocation2 + $0x50] sm:$0xff]
      %v3552 = vld [vmem:[#allocation2 + $0x58] sm:$0xff]
      %v3553 = vld [vmem:[#allocation2 + $0x60] sm:$0xff]
      %v3554 = vld [vmem:[#allocation2 + $0x68] sm:$0xff]
      %v3555 = vld [vmem:[#allocation2 + $0x70] sm:$0xff]
      %v3556 = vld [vmem:[#allocation2 + $0x78] sm:$0xff]
      %v3557 = vld [vmem:[#allocation2 + $0x80] sm:$0xff]
      %v3558 = vld [vmem:[#allocation2 + $0x88] sm:$0xff]
      %v3559 = vld [vmem:[#allocation2 + $0x90] sm:$0xff]
      %v3560 = vld [vmem:[#allocation2 + $0x98] sm:$0xff]
      %v3561 = vld [vmem:[#allocation2 + $0xa0] sm:$0xff]
      %v3562 = vld [vmem:[#allocation2 + $0xa8] sm:$0xff]
      %v3563 = vld [vmem:[#allocation2 + $0xb0] sm:$0xff]
      %v3564 = vld [vmem:[#allocation2 + $0xb8] sm:$0xff]
      %v3565 = vld [vmem:[#allocation2 + $0xc0] sm:$0xff]
      %v3566 = vld [vmem:[#allocation2 + $0xc8] sm:$0xff]
      %v3567 = vld [vmem:[#allocation2 + $0xd0] sm:$0xff]
      %v3568 = vld [vmem:[#allocation2 + $0xd8] sm:$0xff]
      %v3569 = vld [vmem:[#allocation2 + $0xe0] sm:$0xff]
      %v3570 = vld [vmem:[#allocation2 + $0xe8] sm:$0xff]
      %v3571 = vld [vmem:[#allocation2 + $0xf0] sm:$0xff]
      %v3572 = vld [vmem:[#allocation2 + $0xf8] sm:$0xff]
      %v3573 = vld [vmem:[#allocation2 + $0x100] sm:$0xff]
      %v3574 = vld [vmem:[#allocation2 + $0x108] sm:$0xff]
      %v3575 = vld [vmem:[#allocation2 + $0x110] sm:$0xff]
      %v3576 = vld [vmem:[#allocation2 + $0x118] sm:$0xff]
      %v3577 = vld [vmem:[#allocation2 + $0x120] sm:$0xff]
      %v3578 = vld [vmem:[#allocation2 + $0x128] sm:$0xff]
      %v3579 = vld [vmem:[#allocation2 + $0x130] sm:$0xff]
      %v3580 = vld [vmem:[#allocation2 + $0x138] sm:$0xff]
      %v3581 = vld [vmem:[#allocation2 + $0x140] sm:$0xff]
      %v3582 = vld [vmem:[#allocation2 + $0x148] sm:$0xff]
      %v3583 = vld [vmem:[#allocation2 + $0x150] sm:$0xff]
      %v3584 = vld [vmem:[#allocation2 + $0x158] sm:$0xff]
      %v3585 = vld [vmem:[#allocation2 + $0x160] sm:$0xff]
      %v3586 = vld [vmem:[#allocation2 + $0x168] sm:$0xff]
      %v3587 = vld [vmem:[#allocation2 + $0x170] sm:$0xff]
      %v3588 = vld [vmem:[#allocation2 + $0x178] sm:$0xff]
      %v3589 = vld [vmem:[#allocation2 + $0x180] sm:$0xff]
      %v3590 = vld [vmem:[#allocation2 + $0x188] sm:$0xff]
      %v3591 = vld [vmem:[#allocation2 + $0x190] sm:$0xff]
      %v3592 = vld [vmem:[#allocation2 + $0x198] sm:$0xff]
      %v3593 = vld [vmem:[#allocation2 + $0x1a0] sm:$0xff]
      %v3594 = vld [vmem:[#allocation2 + $0x1a8] sm:$0xff]
      %v3595 = vld [vmem:[#allocation2 + $0x1b0] sm:$0xff]
      %v3596 = vld [vmem:[#allocation2 + $0x1b8] sm:$0xff]
      %v3597 = vld [vmem:[#allocation2 + $0x1c0] sm:$0xff]
      %v3598 = vld [vmem:[#allocation2 + $0x1c8] sm:$0xff]
      %v3599 = vld [vmem:[#allocation2 + $0x1d0] sm:$0xff]
      %v3600 = vld [vmem:[#allocation2 + $0x1d8] sm:$0xff]
      %v3601 = vld [vmem:[#allocation2 + $0x1e0] sm:$0xff]
      %v3602 = vld [vmem:[#allocation2 + $0x1e8] sm:$0xff]
      %v3603 = vld [vmem:[#allocation2 + $0x1f0] sm:$0xff]
      %v3604 = vld [vmem:[#allocation2 + $0x1f8] sm:$0xff]
      %v3605 = vld [vmem:[#allocation2 + $0x200] sm:$0xff]
      %v3606 = vld [vmem:[#allocation2 + $0x208] sm:$0xff]
      %v3607 = vld [vmem:[#allocation2 + $0x210] sm:$0xff]
      %v3608 = vld [vmem:[#allocation2 + $0x218] sm:$0xff]
      %v3609 = vld [vmem:[#allocation2 + $0x220] sm:$0xff]
      %v3610 = vld [vmem:[#allocation2 + $0x228] sm:$0xff]
      %v3611 = vld [vmem:[#allocation2 + $0x230] sm:$0xff]
      %v3612 = vld [vmem:[#allocation2 + $0x238] sm:$0xff]
      %v3613 = vld [vmem:[#allocation2 + $0x240] sm:$0xff]
      %v3614 = vld [vmem:[#allocation2 + $0x248] sm:$0xff]
      %v3615 = vld [vmem:[#allocation2 + $0x250] sm:$0xff]
      %v3616 = vld [vmem:[#allocation2 + $0x258] sm:$0xff]
      %v3617 = vld [vmem:[#allocation2 + $0x260] sm:$0xff]
      %v3618 = vld [vmem:[#allocation2 + $0x268] sm:$0xff]
      %v3619 = vld [vmem:[#allocation2 + $0x270] sm:$0xff]
      %v3620 = vld [vmem:[#allocation2 + $0x278] sm:$0xff]
      %v3621 = vld [vmem:[#allocation2 + $0x280] sm:$0xff]
      %v3622 = vld [vmem:[#allocation2 + $0x288] sm:$0xff]
      %v3623 = vld [vmem:[#allocation2 + $0x290] sm:$0xff]
      %v3624 = vld [vmem:[#allocation2 + $0x298] sm:$0xff]
      %v3625 = vld [vmem:[#allocation2 + $0x2a0] sm:$0xff]
      %v3626 = vld [vmem:[#allocation2 + $0x2a8] sm:$0xff]
      %v3627 = vld [vmem:[#allocation2 + $0x2b0] sm:$0xff]
      %v3628 = vld [vmem:[#allocation2 + $0x2b8] sm:$0xff]
      %v3629 = vld [vmem:[#allocation2 + $0x2c0] sm:$0xff]
      %v3630 = vld [vmem:[#allocation2 + $0x2c8] sm:$0xff]
      %v3631 = vld [vmem:[#allocation2 + $0x2d0] sm:$0xff]
      %v3632 = vld [vmem:[#allocation2 + $0x2d8] sm:$0xff]
      %v3633 = vld [vmem:[#allocation2 + $0x2e0] sm:$0xff]
      %v3634 = vld [vmem:[#allocation2 + $0x2e8] sm:$0xff]
      %v3635 = vld [vmem:[#allocation2 + $0x2f0] sm:$0xff]
      %v3636 = vld [vmem:[#allocation2 + $0x2f8] sm:$0xff]
      %v3637 = vld [vmem:[#allocation2 + $0x300] sm:$0xff]
      %v3638 = vld [vmem:[#allocation2 + $0x308] sm:$0xff]
      %v3639 = vld [vmem:[#allocation2 + $0x310] sm:$0xff]
      %3641 = vset.pattern.permute.xlu0 0
      %3642 = vperm.xlu0 %3641, %v3540
      %v3643 = vpop.permute.xlu0 %3642
      %v3646 = vsel %vm1749, %v3539, 0
      %3648 = vmatprep.subr.mxu0 0.0
      %3649 = vmatpush1.msra.mxu0 0.0
      %3650 = vmatprep.subr.mxu0 0.0
      %3651 = vmatpush1.msra.mxu0 0.0
      %3652 = vmatprep.subr.mxu0 0.0
      %3653 = vmatpush1.msra.mxu0 0.0
      %3654 = vmatprep.subr.mxu0 0.0
      %3655 = vmatpush1.msra.mxu0 0.0
      %3656 = vmatprep.subr.mxu0 0.0
      %3657 = vmatpush1.msra.mxu0 0.0
      %3658 = vmatprep.subr.mxu0 0.0
      %3659 = vmatpush1.msra.mxu0 0.0
      %3660 = vmatprep.subr.mxu0 0.0
      %3661 = vmatpush1.msra.mxu0 0.0
      %3662 = vmatprep.subr.mxu0 %v3630
      %3663 = vmatpush1.msra.mxu0 %v3629
      %3664 = vmatprep.subr.mxu0 %v3619
      %3665 = vmatpush1.msra.mxu0 %v3618
      %3666 = vmatprep.subr.mxu0 %v3608
      %3667 = vmatpush1.msra.mxu0 %v3607
      %3668 = vmatprep.subr.mxu0 %v3597
      %3669 = vmatpush1.msra.mxu0 %v3596
      %3670 = vmatprep.subr.mxu0 %v3586
      %3671 = vmatpush1.msra.mxu0 %v3585
      %3672 = vmatprep.subr.mxu0 %v3575
      %3673 = vmatpush1.msra.mxu0 %v3574
      %3674 = vmatprep.subr.mxu0 %v3564
      %3675 = vmatpush1.msra.mxu0 %v3563
      %3676 = vmatprep.subr.mxu0 %v3553
      %3677 = vmatpush1.msra.mxu0 %v3552
      %3678 = vmatprep.subr.mxu0 %v3542
      %3679 = vmatpush1.msra.mxu0 %v3541
      %3680 = vmatprep.subr.mxu0 0.0
      %3681 = vmatpush2.msra.mxu0 0.0
      %3682 = vmatprep.subr.mxu0 0.0
      %3683 = vmatpush2.msra.mxu0 0.0
      %3684 = vmatprep.subr.mxu0 0.0
      %3685 = vmatpush2.msra.mxu0 0.0
      %3686 = vmatprep.subr.mxu0 0.0
      %3687 = vmatpush2.msra.mxu0 0.0
      %3688 = vmatprep.subr.mxu0 0.0
      %3689 = vmatpush2.msra.mxu0 0.0
      %3690 = vmatprep.subr.mxu0 0.0
      %3691 = vmatpush2.msra.mxu0 0.0
      %3692 = vmatprep.subr.mxu0 0.0
      %3693 = vmatpush2.msra.mxu0 0.0
      %3694 = vmatprep.subr.mxu0 0.0
      %3695 = vmatpush2.msra.mxu0 0.0
      %3696 = vmatprep.subr.mxu0 0.0
      %3697 = vmatpush2.msra.mxu0 0.0
      %3698 = vmatprep.subr.mxu0 0.0
      %3699 = vmatpush2.msra.mxu0 0.0
      %3700 = vmatprep.subr.mxu0 0.0
      %3701 = vmatpush2.msra.mxu0 0.0
      %3702 = vmatprep.subr.mxu0 0.0
      %3703 = vmatpush2.msra.mxu0 0.0
      %3704 = vmatprep.subr.mxu0 0.0
      %3705 = vmatpush2.msra.mxu0 0.0
      %3706 = vmatprep.subr.mxu0 0.0
      %3707 = vmatpush2.msra.mxu0 0.0
      %3708 = vmatprep.subr.mxu0 0.0
      %3709 = vmatpush2.msra.mxu0 0.0
      %3710 = vmatprep.subr.mxu0 0.0
      %3711 = vmatpush2.msra.mxu0 0.0
      %3712 = vmatprep.mubr.f32.mxu0 0.0
      %3713 = vmatmul.mubr.f32.gmra.mxu0 %v3646
      %v3714 = vpop.f32.mrf.mxu0
      %v3715 = vadd.f32 %v3643, %v3714
      %v3716 = vpop.f32.mrf.mxu0
      %v3717 = vadd.f32 %v3643, %v3716
      %3718 = vdwg.mxu0
      %3719 = vmatprep.subr.mxu0 0.0
      %3720 = vmatpush1.msra.mxu0 0.0
      %3721 = vmatprep.subr.mxu0 0.0
      %3722 = vmatpush1.msra.mxu0 0.0
      %3723 = vmatprep.subr.mxu0 0.0
      %3724 = vmatpush1.msra.mxu0 0.0
      %3725 = vmatprep.subr.mxu0 0.0
      %3726 = vmatpush1.msra.mxu0 0.0
      %3727 = vmatprep.subr.mxu0 0.0
      %3728 = vmatpush1.msra.mxu0 0.0
      %3729 = vmatprep.subr.mxu0 0.0
      %3730 = vmatpush1.msra.mxu0 0.0
      %3731 = vmatprep.subr.mxu0 0.0
      %3732 = vmatpush1.msra.mxu0 0.0
      %3733 = vmatprep.subr.mxu0 %v3632
      %3734 = vmatpush1.msra.mxu0 %v3631
      %3735 = vmatprep.subr.mxu0 %v3621
      %3736 = vmatpush1.msra.mxu0 %v3620
      %3737 = vmatprep.subr.mxu0 %v3610
      %3738 = vmatpush1.msra.mxu0 %v3609
      %3739 = vmatprep.subr.mxu0 %v3599
      %3740 = vmatpush1.msra.mxu0 %v3598
      %3741 = vmatprep.subr.mxu0 %v3588
      %3742 = vmatpush1.msra.mxu0 %v3587
      %3743 = vmatprep.subr.mxu0 %v3577
      %3744 = vmatpush1.msra.mxu0 %v3576
      %3745 = vmatprep.subr.mxu0 %v3566
      %3746 = vmatpush1.msra.mxu0 %v3565
      %3747 = vmatprep.subr.mxu0 %v3555
      %3748 = vmatpush1.msra.mxu0 %v3554
      %3749 = vmatprep.subr.mxu0 %v3544
      %3750 = vmatpush1.msra.mxu0 %v3543
      %3751 = vmatprep.subr.mxu0 0.0
      %3752 = vmatpush2.msra.mxu0 0.0
      %3753 = vmatprep.subr.mxu0 0.0
      %3754 = vmatpush2.msra.mxu0 0.0
      %3755 = vmatprep.subr.mxu0 0.0
      %3756 = vmatpush2.msra.mxu0 0.0
      %3757 = vmatprep.subr.mxu0 0.0
      %3758 = vmatpush2.msra.mxu0 0.0
      %3759 = vmatprep.subr.mxu0 0.0
      %3760 = vmatpush2.msra.mxu0 0.0
      %3761 = vmatprep.subr.mxu0 0.0
      %3762 = vmatpush2.msra.mxu0 0.0
      %3763 = vmatprep.subr.mxu0 0.0
      %3764 = vmatpush2.msra.mxu0 0.0
      %3765 = vmatprep.subr.mxu0 0.0
      %3766 = vmatpush2.msra.mxu0 0.0
      %3767 = vmatprep.subr.mxu0 0.0
      %3768 = vmatpush2.msra.mxu0 0.0
      %3769 = vmatprep.subr.mxu0 0.0
      %3770 = vmatpush2.msra.mxu0 0.0
      %3771 = vmatprep.subr.mxu0 0.0
      %3772 = vmatpush2.msra.mxu0 0.0
      %3773 = vmatprep.subr.mxu0 0.0
      %3774 = vmatpush2.msra.mxu0 0.0
      %3775 = vmatprep.subr.mxu0 0.0
      %3776 = vmatpush2.msra.mxu0 0.0
      %3777 = vmatprep.subr.mxu0 0.0
      %3778 = vmatpush2.msra.mxu0 0.0
      %3779 = vmatprep.subr.mxu0 0.0
      %3780 = vmatpush2.msra.mxu0 0.0
      %3781 = vmatprep.subr.mxu0 0.0
      %3782 = vmatpush2.msra.mxu0 0.0
      %3783 = vmatprep.mubr.f32.mxu0 0.0
      %3784 = vmatmul.mubr.f32.gmra.mxu0 %v3646
      %v3785 = vpop.f32.mrf.mxu0
      %v3786 = vadd.f32 %v3643, %v3785
      %v3787 = vpop.f32.mrf.mxu0
      %v3788 = vadd.f32 %v3643, %v3787
      %3789 = vdwg.mxu0
      %3790 = vmatprep.subr.mxu0 0.0
      %3791 = vmatpush1.msra.mxu0 0.0
      %3792 = vmatprep.subr.mxu0 0.0
      %3793 = vmatpush1.msra.mxu0 0.0
      %3794 = vmatprep.subr.mxu0 0.0
      %3795 = vmatpush1.msra.mxu0 0.0
      %3796 = vmatprep.subr.mxu0 0.0
      %3797 = vmatpush1.msra.mxu0 0.0
      %3798 = vmatprep.subr.mxu0 0.0
      %3799 = vmatpush1.msra.mxu0 0.0
      %3800 = vmatprep.subr.mxu0 0.0
      %3801 = vmatpush1.msra.mxu0 0.0
      %3802 = vmatprep.subr.mxu0 0.0
      %3803 = vmatpush1.msra.mxu0 0.0
      %3804 = vmatprep.subr.mxu0 %v3634
      %3805 = vmatpush1.msra.mxu0 %v3633
      %3806 = vmatprep.subr.mxu0 %v3623
      %3807 = vmatpush1.msra.mxu0 %v3622
      %3808 = vmatprep.subr.mxu0 %v3612
      %3809 = vmatpush1.msra.mxu0 %v3611
      %3810 = vmatprep.subr.mxu0 %v3601
      %3811 = vmatpush1.msra.mxu0 %v3600
      %3812 = vmatprep.subr.mxu0 %v3590
      %3813 = vmatpush1.msra.mxu0 %v3589
      %3814 = vmatprep.subr.mxu0 %v3579
      %3815 = vmatpush1.msra.mxu0 %v3578
      %3816 = vmatprep.subr.mxu0 %v3568
      %3817 = vmatpush1.msra.mxu0 %v3567
      %3818 = vmatprep.subr.mxu0 %v3557
      %3819 = vmatpush1.msra.mxu0 %v3556
      %3820 = vmatprep.subr.mxu0 %v3546
      %3821 = vmatpush1.msra.mxu0 %v3545
      %3822 = vmatprep.subr.mxu0 0.0
      %3823 = vmatpush2.msra.mxu0 0.0
      %3824 = vmatprep.subr.mxu0 0.0
      %3825 = vmatpush2.msra.mxu0 0.0
      %3826 = vmatprep.subr.mxu0 0.0
      %3827 = vmatpush2.msra.mxu0 0.0
      %3828 = vmatprep.subr.mxu0 0.0
      %3829 = vmatpush2.msra.mxu0 0.0
      %3830 = vmatprep.subr.mxu0 0.0
      %3831 = vmatpush2.msra.mxu0 0.0
      %3832 = vmatprep.subr.mxu0 0.0
      %3833 = vmatpush2.msra.mxu0 0.0
      %3834 = vmatprep.subr.mxu0 0.0
      %3835 = vmatpush2.msra.mxu0 0.0
      %3836 = vmatprep.subr.mxu0 0.0
      %3837 = vmatpush2.msra.mxu0 0.0
      %3838 = vmatprep.subr.mxu0 0.0
      %3839 = vmatpush2.msra.mxu0 0.0
      %3840 = vmatprep.subr.mxu0 0.0
      %3841 = vmatpush2.msra.mxu0 0.0
      %3842 = vmatprep.subr.mxu0 0.0
      %3843 = vmatpush2.msra.mxu0 0.0
      %3844 = vmatprep.subr.mxu0 0.0
      %3845 = vmatpush2.msra.mxu0 0.0
      %3846 = vmatprep.subr.mxu0 0.0
      %3847 = vmatpush2.msra.mxu0 0.0
      %3848 = vmatprep.subr.mxu0 0.0
      %3849 = vmatpush2.msra.mxu0 0.0
      %3850 = vmatprep.subr.mxu0 0.0
      %3851 = vmatpush2.msra.mxu0 0.0
      %3852 = vmatprep.subr.mxu0 0.0
      %3853 = vmatpush2.msra.mxu0 0.0
      %3854 = vmatprep.mubr.f32.mxu0 0.0
      %3855 = vmatmul.mubr.f32.gmra.mxu0 %v3646
      %v3856 = vpop.f32.mrf.mxu0
      %v3857 = vadd.f32 %v3643, %v3856
      %v3858 = vpop.f32.mrf.mxu0
      %v3859 = vadd.f32 %v3643, %v3858
      %3860 = vdwg.mxu0
      %3861 = vmatprep.subr.mxu0 0.0
      %3862 = vmatpush1.msra.mxu0 0.0
      %3863 = vmatprep.subr.mxu0 0.0
      %3864 = vmatpush1.msra.mxu0 0.0
      %3865 = vmatprep.subr.mxu0 0.0
      %3866 = vmatpush1.msra.mxu0 0.0
      %3867 = vmatprep.subr.mxu0 0.0
      %3868 = vmatpush1.msra.mxu0 0.0
      %3869 = vmatprep.subr.mxu0 0.0
      %3870 = vmatpush1.msra.mxu0 0.0
      %3871 = vmatprep.subr.mxu0 0.0
      %3872 = vmatpush1.msra.mxu0 0.0
      %3873 = vmatprep.subr.mxu0 0.0
      %3874 = vmatpush1.msra.mxu0 0.0
      %3875 = vmatprep.subr.mxu0 %v3636
      %3876 = vmatpush1.msra.mxu0 %v3635
      %3877 = vmatprep.subr.mxu0 %v3625
      %3878 = vmatpush1.msra.mxu0 %v3624
      %3879 = vmatprep.subr.mxu0 %v3614
      %3880 = vmatpush1.msra.mxu0 %v3613
      %3881 = vmatprep.subr.mxu0 %v3603
      %3882 = vmatpush1.msra.mxu0 %v3602
      %3883 = vmatprep.subr.mxu0 %v3592
      %3884 = vmatpush1.msra.mxu0 %v3591
      %3885 = vmatprep.subr.mxu0 %v3581
      %3886 = vmatpush1.msra.mxu0 %v3580
      %3887 = vmatprep.subr.mxu0 %v3570
      %3888 = vmatpush1.msra.mxu0 %v3569
      %3889 = vmatprep.subr.mxu0 %v3559
      %3890 = vmatpush1.msra.mxu0 %v3558
      %3891 = vmatprep.subr.mxu0 %v3548
      %3892 = vmatpush1.msra.mxu0 %v3547
      %3893 = vmatprep.subr.mxu0 0.0
      %3894 = vmatpush2.msra.mxu0 0.0
      %3895 = vmatprep.subr.mxu0 0.0
      %3896 = vmatpush2.msra.mxu0 0.0
      %3897 = vmatprep.subr.mxu0 0.0
      %3898 = vmatpush2.msra.mxu0 0.0
      %3899 = vmatprep.subr.mxu0 0.0
      %3900 = vmatpush2.msra.mxu0 0.0
      %3901 = vmatprep.subr.mxu0 0.0
      %3902 = vmatpush2.msra.mxu0 0.0
      %3903 = vmatprep.subr.mxu0 0.0
      %3904 = vmatpush2.msra.mxu0 0.0
      %3905 = vmatprep.subr.mxu0 0.0
      %3906 = vmatpush2.msra.mxu0 0.0
      %3907 = vmatprep.subr.mxu0 0.0
      %3908 = vmatpush2.msra.mxu0 0.0
      %3909 = vmatprep.subr.mxu0 0.0
      %3910 = vmatpush2.msra.mxu0 0.0
      %3911 = vmatprep.subr.mxu0 0.0
      %3912 = vmatpush2.msra.mxu0 0.0
      %3913 = vmatprep.subr.mxu0 0.0
      %3914 = vmatpush2.msra.mxu0 0.0
      %3915 = vmatprep.subr.mxu0 0.0
      %3916 = vmatpush2.msra.mxu0 0.0
      %3917 = vmatprep.subr.mxu0 0.0
      %3918 = vmatpush2.msra.mxu0 0.0
      %3919 = vmatprep.subr.mxu0 0.0
      %3920 = vmatpush2.msra.mxu0 0.0
      %3921 = vmatprep.subr.mxu0 0.0
      %3922 = vmatpush2.msra.mxu0 0.0
      %3923 = vmatprep.subr.mxu0 0.0
      %3924 = vmatpush2.msra.mxu0 0.0
      %3925 = vmatprep.mubr.f32.mxu0 0.0
      %3926 = vmatmul.mubr.f32.gmra.mxu0 %v3646
      %v3927 = vpop.f32.mrf.mxu0
      %v3928 = vadd.f32 %v3643, %v3927
      %v3929 = vpop.f32.mrf.mxu0
      %v3930 = vadd.f32 %v3643, %v3929
      %3931 = vdwg.mxu0
      %3932 = vmatprep.subr.mxu0 0.0
      %3933 = vmatpush1.msra.mxu0 0.0
      %3934 = vmatprep.subr.mxu0 0.0
      %3935 = vmatpush1.msra.mxu0 0.0
      %3936 = vmatprep.subr.mxu0 0.0
      %3937 = vmatpush1.msra.mxu0 0.0
      %3938 = vmatprep.subr.mxu0 0.0
      %3939 = vmatpush1.msra.mxu0 0.0
      %3940 = vmatprep.subr.mxu0 0.0
      %3941 = vmatpush1.msra.mxu0 0.0
      %3942 = vmatprep.subr.mxu0 0.0
      %3943 = vmatpush1.msra.mxu0 0.0
      %3944 = vmatprep.subr.mxu0 0.0
      %3945 = vmatpush1.msra.mxu0 0.0
      %3946 = vmatprep.subr.mxu0 %v3638
      %3947 = vmatpush1.msra.mxu0 %v3637
      %3948 = vmatprep.subr.mxu0 %v3627
      %3949 = vmatpush1.msra.mxu0 %v3626
      %3950 = vmatprep.subr.mxu0 %v3616
      %3951 = vmatpush1.msra.mxu0 %v3615
      %3952 = vmatprep.subr.mxu0 %v3605
      %3953 = vmatpush1.msra.mxu0 %v3604
      %3954 = vmatprep.subr.mxu0 %v3594
      %3955 = vmatpush1.msra.mxu0 %v3593
      %3956 = vmatprep.subr.mxu0 %v3583
      %3957 = vmatpush1.msra.mxu0 %v3582
      %3958 = vmatprep.subr.mxu0 %v3572
      %3959 = vmatpush1.msra.mxu0 %v3571
      %3960 = vmatprep.subr.mxu0 %v3561
      %3961 = vmatpush1.msra.mxu0 %v3560
      %3962 = vmatprep.subr.mxu0 %v3550
      %3963 = vmatpush1.msra.mxu0 %v3549
      %3964 = vmatprep.subr.mxu0 0.0
      %3965 = vmatpush2.msra.mxu0 0.0
      %3966 = vmatprep.subr.mxu0 0.0
      %3967 = vmatpush2.msra.mxu0 0.0
      %3968 = vmatprep.subr.mxu0 0.0
      %3969 = vmatpush2.msra.mxu0 0.0
      %3970 = vmatprep.subr.mxu0 0.0
      %3971 = vmatpush2.msra.mxu0 0.0
      %3972 = vmatprep.subr.mxu0 0.0
      %3973 = vmatpush2.msra.mxu0 0.0
      %3974 = vmatprep.subr.mxu0 0.0
      %3975 = vmatpush2.msra.mxu0 0.0
      %3976 = vmatprep.subr.mxu0 0.0
      %3977 = vmatpush2.msra.mxu0 0.0
      %3978 = vmatprep.subr.mxu0 0.0
      %3979 = vmatpush2.msra.mxu0 0.0
      %3980 = vmatprep.subr.mxu0 0.0
      %3981 = vmatpush2.msra.mxu0 0.0
      %3982 = vmatprep.subr.mxu0 0.0
      %3983 = vmatpush2.msra.mxu0 0.0
      %3984 = vmatprep.subr.mxu0 0.0
      %3985 = vmatpush2.msra.mxu0 0.0
      %3986 = vmatprep.subr.mxu0 0.0
      %3987 = vmatpush2.msra.mxu0 0.0
      %3988 = vmatprep.subr.mxu0 0.0
      %3989 = vmatpush2.msra.mxu0 0.0
      %3990 = vmatprep.subr.mxu0 0.0
      %3991 = vmatpush2.msra.mxu0 0.0
      %3992 = vmatprep.subr.mxu0 0.0
      %3993 = vmatpush2.msra.mxu0 0.0
      %3994 = vmatprep.subr.mxu0 0.0
      %3995 = vmatpush2.msra.mxu0 0.0
      %3996 = vmatprep.mubr.f32.mxu0 0.0
      %3997 = vmatmul.mubr.f32.gmra.mxu0 %v3646
      %v3998 = vpop.f32.mrf.mxu0
      %v3999 = vadd.f32 %v3643, %v3998
      %v4000 = vpop.f32.mrf.mxu0
      %v4001 = vadd.f32 %v3643, %v4000
      %4002 = vdwg.mxu0
      %4003 = vmatprep.subr.mxu0 0.0
      %4004 = vmatpush1.msra.mxu0 0.0
      %4005 = vmatprep.subr.mxu0 0.0
      %4006 = vmatpush1.msra.mxu0 0.0
      %4007 = vmatprep.subr.mxu0 0.0
      %4008 = vmatpush1.msra.mxu0 0.0
      %4009 = vmatprep.subr.mxu0 0.0
      %4010 = vmatpush1.msra.mxu0 0.0
      %4011 = vmatprep.subr.mxu0 0.0
      %4012 = vmatpush1.msra.mxu0 0.0
      %4013 = vmatprep.subr.mxu0 0.0
      %4014 = vmatpush1.msra.mxu0 0.0
      %4015 = vmatprep.subr.mxu0 0.0
      %4016 = vmatpush1.msra.mxu0 0.0
      %4017 = vmatprep.subr.mxu0 0.0
      %4018 = vmatpush1.msra.mxu0 %v3639
      %4019 = vmatprep.subr.mxu0 0.0
      %4020 = vmatpush1.msra.mxu0 %v3628
      %4021 = vmatprep.subr.mxu0 0.0
      %4022 = vmatpush1.msra.mxu0 %v3617
      %4023 = vmatprep.subr.mxu0 0.0
      %4024 = vmatpush1.msra.mxu0 %v3606
      %4025 = vmatprep.subr.mxu0 0.0
      %4026 = vmatpush1.msra.mxu0 %v3595
      %4027 = vmatprep.subr.mxu0 0.0
      %4028 = vmatpush1.msra.mxu0 %v3584
      %4029 = vmatprep.subr.mxu0 0.0
      %4030 = vmatpush1.msra.mxu0 %v3573
      %4031 = vmatprep.subr.mxu0 0.0
      %4032 = vmatpush1.msra.mxu0 %v3562
      %4033 = vmatprep.subr.mxu0 0.0
      %4034 = vmatpush1.msra.mxu0 %v3551
      %4035 = vmatprep.subr.mxu0 0.0
      %4036 = vmatpush2.msra.mxu0 0.0
      %4037 = vmatprep.subr.mxu0 0.0
      %4038 = vmatpush2.msra.mxu0 0.0
      %4039 = vmatprep.subr.mxu0 0.0
      %4040 = vmatpush2.msra.mxu0 0.0
      %4041 = vmatprep.subr.mxu0 0.0
      %4042 = vmatpush2.msra.mxu0 0.0
      %4043 = vmatprep.subr.mxu0 0.0
      %4044 = vmatpush2.msra.mxu0 0.0
      %4045 = vmatprep.subr.mxu0 0.0
      %4046 = vmatpush2.msra.mxu0 0.0
      %4047 = vmatprep.subr.mxu0 0.0
      %4048 = vmatpush2.msra.mxu0 0.0
      %4049 = vmatprep.subr.mxu0 0.0
      %4050 = vmatpush2.msra.mxu0 0.0
      %4051 = vmatprep.subr.mxu0 0.0
      %4052 = vmatpush2.msra.mxu0 0.0
      %4053 = vmatprep.subr.mxu0 0.0
      %4054 = vmatpush2.msra.mxu0 0.0
      %4055 = vmatprep.subr.mxu0 0.0
      %4056 = vmatpush2.msra.mxu0 0.0
      %4057 = vmatprep.subr.mxu0 0.0
      %4058 = vmatpush2.msra.mxu0 0.0
      %4059 = vmatprep.subr.mxu0 0.0
      %4060 = vmatpush2.msra.mxu0 0.0
      %4061 = vmatprep.subr.mxu0 0.0
      %4062 = vmatpush2.msra.mxu0 0.0
      %4063 = vmatprep.subr.mxu0 0.0
      %4064 = vmatpush2.msra.mxu0 0.0
      %4065 = vmatprep.subr.mxu0 0.0
      %4066 = vmatpush2.msra.mxu0 0.0
      %4067 = vmatprep.mubr.f32.mxu0 0.0
      %4068 = vmatmul.mubr.f32.gmra.mxu0 %v3646
      %v4069 = vpop.f32.mrf.mxu0
      %v4070 = vadd.f32 %v3643, %v4069
      %v4071 = vpop.f32.mrf.mxu0
      %4072 = vdwg.mxu0
      %v4073 = vmax.f32 %v3715, 0.0
      %v4074 = vmax.f32 %v3717, 0.0
      %v4075 = vmax.f32 %v3786, 0.0
      %v4076 = vmax.f32 %v3788, 0.0
      %v4077 = vmax.f32 %v3857, 0.0
      %v4078 = vmax.f32 %v3859, 0.0
      %v4079 = vmax.f32 %v3928, 0.0
      %v4080 = vmax.f32 %v3930, 0.0
      %v4081 = vmax.f32 %v3999, 0.0
      %v4082 = vmax.f32 %v4001, 0.0
      %v4083 = vmax.f32 %v4070, 0.0
      %v4084 = vmul.f32 %v4073, %v2194
      %v4085 = vmul.f32 %v4074, %v2198
      %v4086 = vmul.f32 %v4075, %v2202
      %v4087 = vmul.f32 %v4076, %v2206
      %v4088 = vmul.f32 %v4077, %v2210
      %v4089 = vmul.f32 %v4078, %v2214
      %v4090 = vmul.f32 %v4079, %v2218
      %v4091 = vmul.f32 %v4080, %v2222
      %v4092 = vmul.f32 %v4081, %v2226
      %v4093 = vmul.f32 %v4082, %v2230
      %v4094 = vmul.f32 %v4083, %v2234
      %4095 = vrot.lane.b32.xlu0 %v4084, 74
      %v4096 = vpop.permute.xlu0 %4095
      %4097 = vrot.lane.b32.xlu0 %v4085, 74
      %v4098 = vpop.permute.xlu0 %4097
      %4099 = vrot.lane.b32.xlu0 %v4086, 74
      %v4100 = vpop.permute.xlu0 %4099
      %4101 = vrot.lane.b32.xlu0 %v4087, 74
      %v4102 = vpop.permute.xlu0 %4101
      %4103 = vrot.lane.b32.xlu0 %v4088, 74
      %v4104 = vpop.permute.xlu0 %4103
      %4105 = vrot.lane.b32.xlu0 %v4089, 74
      %v4106 = vpop.permute.xlu0 %4105
      %4107 = vrot.lane.b32.xlu0 %v4090, 74
      %v4108 = vpop.permute.xlu0 %4107
      %4109 = vrot.lane.b32.xlu0 %v4091, 74
      %v4110 = vpop.permute.xlu0 %4109
      %4111 = vrot.lane.b32.xlu0 %v4092, 74
      %v4112 = vpop.permute.xlu0 %4111
      %4113 = vrot.lane.b32.xlu0 %v4093, 74
      %v4114 = vpop.permute.xlu0 %4113
      %4115 = vrot.lane.b32.xlu0 %v4094, 74
      %v4116 = vpop.permute.xlu0 %4115
      %v4117 = vsel %vm397, %v4114, %v4116
      %v4118 = vsel %vm397, %v4112, %v4114
      %v4119 = vsel %vm397, %v4110, %v4112
      %v4120 = vsel %vm397, %v4108, %v4110
      %v4121 = vsel %vm397, %v4106, %v4108
      %v4122 = vsel %vm397, %v4104, %v4106
      %v4123 = vsel %vm397, %v4102, %v4104
      %v4124 = vsel %vm397, %v4100, %v4102
      %v4125 = vsel %vm397, %v4098, %v4100
      %v4126 = vsel %vm397, %v4096, %v4098
      %v4127 = vsel %vm397, %v4116, %v4096
      %4128 = vst [vmem:[#allocation2] sm:$0xff] %v4127
      %4129 = vst [vmem:[#allocation2 + $0x8] sm:$0xff] %v4126
      %4130 = vst [vmem:[#allocation2 + $0x10] sm:$0xff] %v4125
      %4131 = vst [vmem:[#allocation2 + $0x18] sm:$0xff] %v4124
      %4132 = vst [vmem:[#allocation2 + $0x20] sm:$0xff] %v4123
      %4133 = vst [vmem:[#allocation2 + $0x28] sm:$0xff] %v4122
      %4134 = vst [vmem:[#allocation2 + $0x30] sm:$0xff] %v4121
      %4135 = vst [vmem:[#allocation2 + $0x38] sm:$0xff] %v4120
      %4136 = vst [vmem:[#allocation2 + $0x40] sm:$0xff] %v4119
      %4137 = vst [vmem:[#allocation2 + $0x48] sm:$0xff] %v4118
      %4138 = vst [vmem:[#allocation2 + $0x50] sm:$0xff] %v4117
      %4139 = vrot.lane.b32.xlu0 %v4084, 73
      %v4140 = vpop.permute.xlu0 %4139
      %4141 = vrot.lane.b32.xlu0 %v4085, 73
      %v4142 = vpop.permute.xlu0 %4141
      %4143 = vrot.lane.b32.xlu0 %v4086, 73
      %v4144 = vpop.permute.xlu0 %4143
      %4145 = vrot.lane.b32.xlu0 %v4087, 73
      %v4146 = vpop.permute.xlu0 %4145
      %4147 = vrot.lane.b32.xlu0 %v4088, 73
      %v4148 = vpop.permute.xlu0 %4147
      %4149 = vrot.lane.b32.xlu0 %v4089, 73
      %v4150 = vpop.permute.xlu0 %4149
      %4151 = vrot.lane.b32.xlu0 %v4090, 73
      %v4152 = vpop.permute.xlu0 %4151
      %4153 = vrot.lane.b32.xlu0 %v4091, 73
      %v4154 = vpop.permute.xlu0 %4153
      %4155 = vrot.lane.b32.xlu0 %v4092, 73
      %v4156 = vpop.permute.xlu0 %4155
      %4157 = vrot.lane.b32.xlu0 %v4093, 73
      %v4158 = vpop.permute.xlu0 %4157
      %4159 = vrot.lane.b32.xlu0 %v4094, 73
      %v4160 = vpop.permute.xlu0 %4159
      %v4161 = vsel %vm442, %v4158, %v4160
      %v4162 = vsel %vm442, %v4156, %v4158
      %v4163 = vsel %vm442, %v4154, %v4156
      %v4164 = vsel %vm442, %v4152, %v4154
      %v4165 = vsel %vm442, %v4150, %v4152
      %v4166 = vsel %vm442, %v4148, %v4150
      %v4167 = vsel %vm442, %v4146, %v4148
      %v4168 = vsel %vm442, %v4144, %v4146
      %v4169 = vsel %vm442, %v4142, %v4144
      %v4170 = vsel %vm442, %v4140, %v4142
      %v4171 = vsel %vm442, %v4160, %v4140
      %4172 = vst [vmem:[#allocation2 + $0x58] sm:$0xff] %v4171
      %4173 = vst [vmem:[#allocation2 + $0x60] sm:$0xff] %v4170
      %4174 = vst [vmem:[#allocation2 + $0x68] sm:$0xff] %v4169
      %4175 = vst [vmem:[#allocation2 + $0x70] sm:$0xff] %v4168
      %4176 = vst [vmem:[#allocation2 + $0x78] sm:$0xff] %v4167
      %4177 = vst [vmem:[#allocation2 + $0x80] sm:$0xff] %v4166
      %4178 = vst [vmem:[#allocation2 + $0x88] sm:$0xff] %v4165
      %4179 = vst [vmem:[#allocation2 + $0x90] sm:$0xff] %v4164
      %4180 = vst [vmem:[#allocation2 + $0x98] sm:$0xff] %v4163
      %4181 = vst [vmem:[#allocation2 + $0xa0] sm:$0xff] %v4162
      %4182 = vst [vmem:[#allocation2 + $0xa8] sm:$0xff] %v4161
      %4183 = vrot.lane.b32.xlu0 %v4084, 72
      %v4184 = vpop.permute.xlu0 %4183
      %4185 = vrot.lane.b32.xlu0 %v4085, 72
      %v4186 = vpop.permute.xlu0 %4185
      %4187 = vrot.lane.b32.xlu0 %v4086, 72
      %v4188 = vpop.permute.xlu0 %4187
      %4189 = vrot.lane.b32.xlu0 %v4087, 72
      %v4190 = vpop.permute.xlu0 %4189
      %4191 = vrot.lane.b32.xlu0 %v4088, 72
      %v4192 = vpop.permute.xlu0 %4191
      %4193 = vrot.lane.b32.xlu0 %v4089, 72
      %v4194 = vpop.permute.xlu0 %4193
      %4195 = vrot.lane.b32.xlu0 %v4090, 72
      %v4196 = vpop.permute.xlu0 %4195
      %4197 = vrot.lane.b32.xlu0 %v4091, 72
      %v4198 = vpop.permute.xlu0 %4197
      %4199 = vrot.lane.b32.xlu0 %v4092, 72
      %v4200 = vpop.permute.xlu0 %4199
      %4201 = vrot.lane.b32.xlu0 %v4093, 72
      %v4202 = vpop.permute.xlu0 %4201
      %4203 = vrot.lane.b32.xlu0 %v4094, 72
      %v4204 = vpop.permute.xlu0 %4203
      %v4205 = vsel %vm487, %v4202, %v4204
      %v4206 = vsel %vm487, %v4200, %v4202
      %v4207 = vsel %vm487, %v4198, %v4200
      %v4208 = vsel %vm487, %v4196, %v4198
      %v4209 = vsel %vm487, %v4194, %v4196
      %v4210 = vsel %vm487, %v4192, %v4194
      %v4211 = vsel %vm487, %v4190, %v4192
      %v4212 = vsel %vm487, %v4188, %v4190
      %v4213 = vsel %vm487, %v4186, %v4188
      %v4214 = vsel %vm487, %v4184, %v4186
      %v4215 = vsel %vm487, %v4204, %v4184
      %4216 = vst [vmem:[#allocation2 + $0xb0] sm:$0xff] %v4215
      %4217 = vst [vmem:[#allocation2 + $0xb8] sm:$0xff] %v4214
      %4218 = vst [vmem:[#allocation2 + $0xc0] sm:$0xff] %v4213
      %4219 = vst [vmem:[#allocation2 + $0xc8] sm:$0xff] %v4212
      %4220 = vst [vmem:[#allocation2 + $0xd0] sm:$0xff] %v4211
      %4221 = vst [vmem:[#allocation2 + $0xd8] sm:$0xff] %v4210
      %4222 = vst [vmem:[#allocation2 + $0xe0] sm:$0xff] %v4209
      %4223 = vst [vmem:[#allocation2 + $0xe8] sm:$0xff] %v4208
      %4224 = vst [vmem:[#allocation2 + $0xf0] sm:$0xff] %v4207
      %4225 = vst [vmem:[#allocation2 + $0xf8] sm:$0xff] %v4206
      %4226 = vst [vmem:[#allocation2 + $0x100] sm:$0xff] %v4205
      %4227 = vrot.lane.b32.xlu0 %v4084, 71
      %v4228 = vpop.permute.xlu0 %4227
      %4229 = vrot.lane.b32.xlu0 %v4085, 71
      %v4230 = vpop.permute.xlu0 %4229
      %4231 = vrot.lane.b32.xlu0 %v4086, 71
      %v4232 = vpop.permute.xlu0 %4231
      %4233 = vrot.lane.b32.xlu0 %v4087, 71
      %v4234 = vpop.permute.xlu0 %4233
      %4235 = vrot.lane.b32.xlu0 %v4088, 71
      %v4236 = vpop.permute.xlu0 %4235
      %4237 = vrot.lane.b32.xlu0 %v4089, 71
      %v4238 = vpop.permute.xlu0 %4237
      %4239 = vrot.lane.b32.xlu0 %v4090, 71
      %v4240 = vpop.permute.xlu0 %4239
      %4241 = vrot.lane.b32.xlu0 %v4091, 71
      %v4242 = vpop.permute.xlu0 %4241
      %4243 = vrot.lane.b32.xlu0 %v4092, 71
      %v4244 = vpop.permute.xlu0 %4243
      %4245 = vrot.lane.b32.xlu0 %v4093, 71
      %v4246 = vpop.permute.xlu0 %4245
      %4247 = vrot.lane.b32.xlu0 %v4094, 71
      %v4248 = vpop.permute.xlu0 %4247
      %v4249 = vsel %vm532, %v4246, %v4248
      %v4250 = vsel %vm532, %v4244, %v4246
      %v4251 = vsel %vm532, %v4242, %v4244
      %v4252 = vsel %vm532, %v4240, %v4242
      %v4253 = vsel %vm532, %v4238, %v4240
      %v4254 = vsel %vm532, %v4236, %v4238
      %v4255 = vsel %vm532, %v4234, %v4236
      %v4256 = vsel %vm532, %v4232, %v4234
      %v4257 = vsel %vm532, %v4230, %v4232
      %v4258 = vsel %vm532, %v4228, %v4230
      %v4259 = vsel %vm532, %v4248, %v4228
      %4260 = vst [vmem:[#allocation2 + $0x108] sm:$0xff] %v4259
      %4261 = vst [vmem:[#allocation2 + $0x110] sm:$0xff] %v4258
      %4262 = vst [vmem:[#allocation2 + $0x118] sm:$0xff] %v4257
      %4263 = vst [vmem:[#allocation2 + $0x120] sm:$0xff] %v4256
      %4264 = vst [vmem:[#allocation2 + $0x128] sm:$0xff] %v4255
      %4265 = vst [vmem:[#allocation2 + $0x130] sm:$0xff] %v4254
      %4266 = vst [vmem:[#allocation2 + $0x138] sm:$0xff] %v4253
      %4267 = vst [vmem:[#allocation2 + $0x140] sm:$0xff] %v4252
      %4268 = vst [vmem:[#allocation2 + $0x148] sm:$0xff] %v4251
      %4269 = vst [vmem:[#allocation2 + $0x150] sm:$0xff] %v4250
      %4270 = vst [vmem:[#allocation2 + $0x158] sm:$0xff] %v4249
      %4271 = vrot.lane.b32.xlu0 %v4084, 70
      %v4272 = vpop.permute.xlu0 %4271
      %4273 = vrot.lane.b32.xlu0 %v4085, 70
      %v4274 = vpop.permute.xlu0 %4273
      %4275 = vrot.lane.b32.xlu0 %v4086, 70
      %v4276 = vpop.permute.xlu0 %4275
      %4277 = vrot.lane.b32.xlu0 %v4087, 70
      %v4278 = vpop.permute.xlu0 %4277
      %4279 = vrot.lane.b32.xlu0 %v4088, 70
      %v4280 = vpop.permute.xlu0 %4279
      %4281 = vrot.lane.b32.xlu0 %v4089, 70
      %v4282 = vpop.permute.xlu0 %4281
      %4283 = vrot.lane.b32.xlu0 %v4090, 70
      %v4284 = vpop.permute.xlu0 %4283
      %4285 = vrot.lane.b32.xlu0 %v4091, 70
      %v4286 = vpop.permute.xlu0 %4285
      %4287 = vrot.lane.b32.xlu0 %v4092, 70
      %v4288 = vpop.permute.xlu0 %4287
      %4289 = vrot.lane.b32.xlu0 %v4093, 70
      %v4290 = vpop.permute.xlu0 %4289
      %4291 = vrot.lane.b32.xlu0 %v4094, 70
      %v4292 = vpop.permute.xlu0 %4291
      %v4293 = vsel %vm577, %v4290, %v4292
      %v4294 = vsel %vm577, %v4288, %v4290
      %v4295 = vsel %vm577, %v4286, %v4288
      %v4296 = vsel %vm577, %v4284, %v4286
      %v4297 = vsel %vm577, %v4282, %v4284
      %v4298 = vsel %vm577, %v4280, %v4282
      %v4299 = vsel %vm577, %v4278, %v4280
      %v4300 = vsel %vm577, %v4276, %v4278
      %v4301 = vsel %vm577, %v4274, %v4276
      %v4302 = vsel %vm577, %v4272, %v4274
      %v4303 = vsel %vm577, %v4292, %v4272
      %4304 = vst [vmem:[#allocation2 + $0x160] sm:$0xff] %v4303
      %4305 = vst [vmem:[#allocation2 + $0x168] sm:$0xff] %v4302
      %4306 = vst [vmem:[#allocation2 + $0x170] sm:$0xff] %v4301
      %4307 = vst [vmem:[#allocation2 + $0x178] sm:$0xff] %v4300
      %4308 = vst [vmem:[#allocation2 + $0x180] sm:$0xff] %v4299
      %4309 = vst [vmem:[#allocation2 + $0x188] sm:$0xff] %v4298
      %4310 = vst [vmem:[#allocation2 + $0x190] sm:$0xff] %v4297
      %4311 = vst [vmem:[#allocation2 + $0x198] sm:$0xff] %v4296
      %4312 = vst [vmem:[#allocation2 + $0x1a0] sm:$0xff] %v4295
      %4313 = vst [vmem:[#allocation2 + $0x1a8] sm:$0xff] %v4294
      %4314 = vst [vmem:[#allocation2 + $0x1b0] sm:$0xff] %v4293
      %4315 = vrot.lane.b32.xlu0 %v4084, 38
      %v4316 = vpop.permute.xlu0 %4315
      %4317 = vrot.lane.b32.xlu0 %v4085, 38
      %v4318 = vpop.permute.xlu0 %4317
      %4319 = vrot.lane.b32.xlu0 %v4086, 38
      %v4320 = vpop.permute.xlu0 %4319
      %4321 = vrot.lane.b32.xlu0 %v4087, 38
      %v4322 = vpop.permute.xlu0 %4321
      %4323 = vrot.lane.b32.xlu0 %v4088, 38
      %v4324 = vpop.permute.xlu0 %4323
      %4325 = vrot.lane.b32.xlu0 %v4089, 38
      %v4326 = vpop.permute.xlu0 %4325
      %4327 = vrot.lane.b32.xlu0 %v4090, 38
      %v4328 = vpop.permute.xlu0 %4327
      %4329 = vrot.lane.b32.xlu0 %v4091, 38
      %v4330 = vpop.permute.xlu0 %4329
      %4331 = vrot.lane.b32.xlu0 %v4092, 38
      %v4332 = vpop.permute.xlu0 %4331
      %4333 = vrot.lane.b32.xlu0 %v4093, 38
      %v4334 = vpop.permute.xlu0 %4333
      %4335 = vrot.lane.b32.xlu0 %v4094, 38
      %v4336 = vpop.permute.xlu0 %4335
      %v4337 = vsel %vm622, %v4334, %v4336
      %v4338 = vsel %vm622, %v4332, %v4334
      %v4339 = vsel %vm622, %v4330, %v4332
      %v4340 = vsel %vm622, %v4328, %v4330
      %v4341 = vsel %vm622, %v4326, %v4328
      %v4342 = vsel %vm622, %v4324, %v4326
      %v4343 = vsel %vm622, %v4322, %v4324
      %v4344 = vsel %vm622, %v4320, %v4322
      %v4345 = vsel %vm622, %v4318, %v4320
      %v4346 = vsel %vm622, %v4316, %v4318
      %v4347 = vsel %vm622, %v4336, %v4316
      %4348 = vst [vmem:[#allocation2 + $0x1b8] sm:$0xff] %v4347
      %4349 = vst [vmem:[#allocation2 + $0x1c0] sm:$0xff] %v4346
      %4350 = vst [vmem:[#allocation2 + $0x1c8] sm:$0xff] %v4345
      %4351 = vst [vmem:[#allocation2 + $0x1d0] sm:$0xff] %v4344
      %4352 = vst [vmem:[#allocation2 + $0x1d8] sm:$0xff] %v4343
      %4353 = vst [vmem:[#allocation2 + $0x1e0] sm:$0xff] %v4342
      %4354 = vst [vmem:[#allocation2 + $0x1e8] sm:$0xff] %v4341
      %4355 = vst [vmem:[#allocation2 + $0x1f0] sm:$0xff] %v4340
      %4356 = vst [vmem:[#allocation2 + $0x1f8] sm:$0xff] %v4339
      %4357 = vst [vmem:[#allocation2 + $0x200] sm:$0xff] %v4338
      %4358 = vst [vmem:[#allocation2 + $0x208] sm:$0xff] %v4337
      %4359 = vrot.lane.b32.xlu0 %v4084, 37
      %v4360 = vpop.permute.xlu0 %4359
      %4361 = vrot.lane.b32.xlu0 %v4085, 37
      %v4362 = vpop.permute.xlu0 %4361
      %4363 = vrot.lane.b32.xlu0 %v4086, 37
      %v4364 = vpop.permute.xlu0 %4363
      %4365 = vrot.lane.b32.xlu0 %v4087, 37
      %v4366 = vpop.permute.xlu0 %4365
      %4367 = vrot.lane.b32.xlu0 %v4088, 37
      %v4368 = vpop.permute.xlu0 %4367
      %4369 = vrot.lane.b32.xlu0 %v4089, 37
      %v4370 = vpop.permute.xlu0 %4369
      %4371 = vrot.lane.b32.xlu0 %v4090, 37
      %v4372 = vpop.permute.xlu0 %4371
      %4373 = vrot.lane.b32.xlu0 %v4091, 37
      %v4374 = vpop.permute.xlu0 %4373
      %4375 = vrot.lane.b32.xlu0 %v4092, 37
      %v4376 = vpop.permute.xlu0 %4375
      %4377 = vrot.lane.b32.xlu0 %v4093, 37
      %v4378 = vpop.permute.xlu0 %4377
      %4379 = vrot.lane.b32.xlu0 %v4094, 37
      %v4380 = vpop.permute.xlu0 %4379
      %v4381 = vsel %vm667, %v4378, %v4380
      %v4382 = vsel %vm667, %v4376, %v4378
      %v4383 = vsel %vm667, %v4374, %v4376
      %v4384 = vsel %vm667, %v4372, %v4374
      %v4385 = vsel %vm667, %v4370, %v4372
      %v4386 = vsel %vm667, %v4368, %v4370
      %v4387 = vsel %vm667, %v4366, %v4368
      %v4388 = vsel %vm667, %v4364, %v4366
      %v4389 = vsel %vm667, %v4362, %v4364
      %v4390 = vsel %vm667, %v4360, %v4362
      %v4391 = vsel %vm667, %v4380, %v4360
      %4392 = vst [vmem:[#allocation2 + $0x210] sm:$0xff] %v4391
      %4393 = vst [vmem:[#allocation2 + $0x218] sm:$0xff] %v4390
      %4394 = vst [vmem:[#allocation2 + $0x220] sm:$0xff] %v4389
      %4395 = vst [vmem:[#allocation2 + $0x228] sm:$0xff] %v4388
      %4396 = vst [vmem:[#allocation2 + $0x230] sm:$0xff] %v4387
      %4397 = vst [vmem:[#allocation2 + $0x238] sm:$0xff] %v4386
      %4398 = vst [vmem:[#allocation2 + $0x240] sm:$0xff] %v4385
      %4399 = vst [vmem:[#allocation2 + $0x248] sm:$0xff] %v4384
      %4400 = vst [vmem:[#allocation2 + $0x250] sm:$0xff] %v4383
      %4401 = vst [vmem:[#allocation2 + $0x258] sm:$0xff] %v4382
      %4402 = vst [vmem:[#allocation2 + $0x260] sm:$0xff] %v4381
      %4403 = vrot.lane.b32.xlu0 %v4084, 36
      %v4404 = vpop.permute.xlu0 %4403
      %4405 = vrot.lane.b32.xlu0 %v4085, 36
      %v4406 = vpop.permute.xlu0 %4405
      %4407 = vrot.lane.b32.xlu0 %v4086, 36
      %v4408 = vpop.permute.xlu0 %4407
      %4409 = vrot.lane.b32.xlu0 %v4087, 36
      %v4410 = vpop.permute.xlu0 %4409
      %4411 = vrot.lane.b32.xlu0 %v4088, 36
      %v4412 = vpop.permute.xlu0 %4411
      %4413 = vrot.lane.b32.xlu0 %v4089, 36
      %v4414 = vpop.permute.xlu0 %4413
      %4415 = vrot.lane.b32.xlu0 %v4090, 36
      %v4416 = vpop.permute.xlu0 %4415
      %4417 = vrot.lane.b32.xlu0 %v4091, 36
      %v4418 = vpop.permute.xlu0 %4417
      %4419 = vrot.lane.b32.xlu0 %v4092, 36
      %v4420 = vpop.permute.xlu0 %4419
      %4421 = vrot.lane.b32.xlu0 %v4093, 36
      %v4422 = vpop.permute.xlu0 %4421
      %4423 = vrot.lane.b32.xlu0 %v4094, 36
      %v4424 = vpop.permute.xlu0 %4423
      %v4425 = vsel %vm712, %v4422, %v4424
      %v4426 = vsel %vm712, %v4420, %v4422
      %v4427 = vsel %vm712, %v4418, %v4420
      %v4428 = vsel %vm712, %v4416, %v4418
      %v4429 = vsel %vm712, %v4414, %v4416
      %v4430 = vsel %vm712, %v4412, %v4414
      %v4431 = vsel %vm712, %v4410, %v4412
      %v4432 = vsel %vm712, %v4408, %v4410
      %v4433 = vsel %vm712, %v4406, %v4408
      %v4434 = vsel %vm712, %v4404, %v4406
      %v4435 = vsel %vm712, %v4424, %v4404
      %4436 = vst [vmem:[#allocation2 + $0x268] sm:$0xff] %v4435
      %4437 = vst [vmem:[#allocation2 + $0x270] sm:$0xff] %v4434
      %4438 = vst [vmem:[#allocation2 + $0x278] sm:$0xff] %v4433
      %4439 = vst [vmem:[#allocation2 + $0x280] sm:$0xff] %v4432
      %4440 = vst [vmem:[#allocation2 + $0x288] sm:$0xff] %v4431
      %4441 = vst [vmem:[#allocation2 + $0x290] sm:$0xff] %v4430
      %4442 = vst [vmem:[#allocation2 + $0x298] sm:$0xff] %v4429
      %4443 = vst [vmem:[#allocation2 + $0x2a0] sm:$0xff] %v4428
      %4444 = vst [vmem:[#allocation2 + $0x2a8] sm:$0xff] %v4427
      %4445 = vst [vmem:[#allocation2 + $0x2b0] sm:$0xff] %v4426
      %4446 = vst [vmem:[#allocation2 + $0x2b8] sm:$0xff] %v4425
      %4447 = vrot.lane.b32.xlu0 %v4084, 35
      %v4448 = vpop.permute.xlu0 %4447
      %4449 = vrot.lane.b32.xlu0 %v4085, 35
      %v4450 = vpop.permute.xlu0 %4449
      %4451 = vrot.lane.b32.xlu0 %v4086, 35
      %v4452 = vpop.permute.xlu0 %4451
      %4453 = vrot.lane.b32.xlu0 %v4087, 35
      %v4454 = vpop.permute.xlu0 %4453
      %4455 = vrot.lane.b32.xlu0 %v4088, 35
      %v4456 = vpop.permute.xlu0 %4455
      %4457 = vrot.lane.b32.xlu0 %v4089, 35
      %v4458 = vpop.permute.xlu0 %4457
      %4459 = vrot.lane.b32.xlu0 %v4090, 35
      %v4460 = vpop.permute.xlu0 %4459
      %4461 = vrot.lane.b32.xlu0 %v4091, 35
      %v4462 = vpop.permute.xlu0 %4461
      %4463 = vrot.lane.b32.xlu0 %v4092, 35
      %v4464 = vpop.permute.xlu0 %4463
      %4465 = vrot.lane.b32.xlu0 %v4093, 35
      %v4466 = vpop.permute.xlu0 %4465
      %4467 = vrot.lane.b32.xlu0 %v4094, 35
      %v4468 = vpop.permute.xlu0 %4467
      %v4469 = vsel %vm757, %v4466, %v4468
      %v4470 = vsel %vm757, %v4464, %v4466
      %v4471 = vsel %vm757, %v4462, %v4464
      %v4472 = vsel %vm757, %v4460, %v4462
      %v4473 = vsel %vm757, %v4458, %v4460
      %v4474 = vsel %vm757, %v4456, %v4458
      %v4475 = vsel %vm757, %v4454, %v4456
      %v4476 = vsel %vm757, %v4452, %v4454
      %v4477 = vsel %vm757, %v4450, %v4452
      %v4478 = vsel %vm757, %v4448, %v4450
      %v4479 = vsel %vm757, %v4468, %v4448
      %4480 = vst [vmem:[#allocation2 + $0x2c0] sm:$0xff] %v4479
      %4481 = vst [vmem:[#allocation2 + $0x2c8] sm:$0xff] %v4478
      %4482 = vst [vmem:[#allocation2 + $0x2d0] sm:$0xff] %v4477
      %4483 = vst [vmem:[#allocation2 + $0x2d8] sm:$0xff] %v4476
      %4484 = vst [vmem:[#allocation2 + $0x2e0] sm:$0xff] %v4475
      %4485 = vst [vmem:[#allocation2 + $0x2e8] sm:$0xff] %v4474
      %4486 = vst [vmem:[#allocation2 + $0x2f0] sm:$0xff] %v4473
      %4487 = vst [vmem:[#allocation2 + $0x2f8] sm:$0xff] %v4472
      %4488 = vst [vmem:[#allocation2 + $0x300] sm:$0xff] %v4471
      %4489 = vst [vmem:[#allocation2 + $0x308] sm:$0xff] %v4470
      %4490 = vst [vmem:[#allocation2 + $0x310] sm:$0xff] %v4469
      %4491 = vrot.lane.b32.xlu0 %v4084, 34
      %v4492 = vpop.permute.xlu0 %4491
      %4493 = vrot.lane.b32.xlu0 %v4085, 34
      %v4494 = vpop.permute.xlu0 %4493
      %4495 = vrot.lane.b32.xlu0 %v4086, 34
      %v4496 = vpop.permute.xlu0 %4495
      %4497 = vrot.lane.b32.xlu0 %v4087, 34
      %v4498 = vpop.permute.xlu0 %4497
      %4499 = vrot.lane.b32.xlu0 %v4088, 34
      %v4500 = vpop.permute.xlu0 %4499
      %4501 = vrot.lane.b32.xlu0 %v4089, 34
      %v4502 = vpop.permute.xlu0 %4501
      %4503 = vrot.lane.b32.xlu0 %v4090, 34
      %v4504 = vpop.permute.xlu0 %4503
      %4505 = vrot.lane.b32.xlu0 %v4091, 34
      %v4506 = vpop.permute.xlu0 %4505
      %4507 = vrot.lane.b32.xlu0 %v4092, 34
      %v4508 = vpop.permute.xlu0 %4507
      %4509 = vrot.lane.b32.xlu0 %v4093, 34
      %v4510 = vpop.permute.xlu0 %4509
      %4511 = vrot.lane.b32.xlu0 %v4094, 34
      %v4512 = vpop.permute.xlu0 %4511
      %v4513 = vsel %vm802, %v4510, %v4512
      %v4514 = vsel %vm802, %v4508, %v4510
      %v4515 = vsel %vm802, %v4506, %v4508
      %v4516 = vsel %vm802, %v4504, %v4506
      %v4517 = vsel %vm802, %v4502, %v4504
      %v4518 = vsel %vm802, %v4500, %v4502
      %v4519 = vsel %vm802, %v4498, %v4500
      %v4520 = vsel %vm802, %v4496, %v4498
      %v4521 = vsel %vm802, %v4494, %v4496
      %v4522 = vsel %vm802, %v4492, %v4494
      %v4523 = vsel %vm802, %v4512, %v4492
      %4524 = vst [vmem:[#allocation2 + $0x318] sm:$0xff] %v4523
      %4525 = vst [vmem:[#allocation2 + $0x320] sm:$0xff] %v4522
      %4526 = vst [vmem:[#allocation2 + $0x328] sm:$0xff] %v4521
      %4527 = vst [vmem:[#allocation2 + $0x330] sm:$0xff] %v4520
      %4528 = vst [vmem:[#allocation2 + $0x338] sm:$0xff] %v4519
      %4529 = vst [vmem:[#allocation2 + $0x340] sm:$0xff] %v4518
      %4530 = vst [vmem:[#allocation2 + $0x348] sm:$0xff] %v4517
      %4531 = vst [vmem:[#allocation2 + $0x350] sm:$0xff] %v4516
      %4532 = vst [vmem:[#allocation2 + $0x358] sm:$0xff] %v4515
      %4533 = vst [vmem:[#allocation2 + $0x360] sm:$0xff] %v4514
      %4534 = vst [vmem:[#allocation2 + $0x368] sm:$0xff] %v4513
      %4535 = vrot.lane.b32.xlu0 %v4084, 2
      %v4536 = vpop.permute.xlu0 %4535
      %4537 = vrot.lane.b32.xlu0 %v4085, 2
      %v4538 = vpop.permute.xlu0 %4537
      %4539 = vrot.lane.b32.xlu0 %v4086, 2
      %v4540 = vpop.permute.xlu0 %4539
      %4541 = vrot.lane.b32.xlu0 %v4087, 2
      %v4542 = vpop.permute.xlu0 %4541
      %4543 = vrot.lane.b32.xlu0 %v4088, 2
      %v4544 = vpop.permute.xlu0 %4543
      %4545 = vrot.lane.b32.xlu0 %v4089, 2
      %v4546 = vpop.permute.xlu0 %4545
      %4547 = vrot.lane.b32.xlu0 %v4090, 2
      %v4548 = vpop.permute.xlu0 %4547
      %4549 = vrot.lane.b32.xlu0 %v4091, 2
      %v4550 = vpop.permute.xlu0 %4549
      %4551 = vrot.lane.b32.xlu0 %v4092, 2
      %v4552 = vpop.permute.xlu0 %4551
      %4553 = vrot.lane.b32.xlu0 %v4093, 2
      %v4554 = vpop.permute.xlu0 %4553
      %4555 = vrot.lane.b32.xlu0 %v4094, 2
      %v4556 = vpop.permute.xlu0 %4555
      %v4557 = vsel %vm847, %v4554, %v4556
      %v4558 = vsel %vm847, %v4552, %v4554
      %v4559 = vsel %vm847, %v4550, %v4552
      %v4560 = vsel %vm847, %v4548, %v4550
      %v4561 = vsel %vm847, %v4546, %v4548
      %v4562 = vsel %vm847, %v4544, %v4546
      %v4563 = vsel %vm847, %v4542, %v4544
      %v4564 = vsel %vm847, %v4540, %v4542
      %v4565 = vsel %vm847, %v4538, %v4540
      %v4566 = vsel %vm847, %v4536, %v4538
      %v4567 = vsel %vm847, %v4556, %v4536
      %4568 = vst [vmem:[#allocation2 + $0x370] sm:$0xff] %v4567
      %4569 = vst [vmem:[#allocation2 + $0x378] sm:$0xff] %v4566
      %4570 = vst [vmem:[#allocation2 + $0x380] sm:$0xff] %v4565
      %4571 = vst [vmem:[#allocation2 + $0x388] sm:$0xff] %v4564
      %4572 = vst [vmem:[#allocation2 + $0x390] sm:$0xff] %v4563
      %4573 = vst [vmem:[#allocation2 + $0x398] sm:$0xff] %v4562
      %4574 = vst [vmem:[#allocation2 + $0x3a0] sm:$0xff] %v4561
      %4575 = vst [vmem:[#allocation2 + $0x3a8] sm:$0xff] %v4560
      %4576 = vst [vmem:[#allocation2 + $0x3b0] sm:$0xff] %v4559
      %4577 = vst [vmem:[#allocation2 + $0x3b8] sm:$0xff] %v4558
      %4578 = vst [vmem:[#allocation2 + $0x3c0] sm:$0xff] %v4557
      %4579 = vrot.lane.b32.xlu0 %v4084, 1
      %v4580 = vpop.permute.xlu0 %4579
      %4581 = vrot.lane.b32.xlu0 %v4085, 1
      %v4582 = vpop.permute.xlu0 %4581
      %4583 = vrot.lane.b32.xlu0 %v4086, 1
      %v4584 = vpop.permute.xlu0 %4583
      %4585 = vrot.lane.b32.xlu0 %v4087, 1
      %v4586 = vpop.permute.xlu0 %4585
      %4587 = vrot.lane.b32.xlu0 %v4088, 1
      %v4588 = vpop.permute.xlu0 %4587
      %4589 = vrot.lane.b32.xlu0 %v4089, 1
      %v4590 = vpop.permute.xlu0 %4589
      %4591 = vrot.lane.b32.xlu0 %v4090, 1
      %v4592 = vpop.permute.xlu0 %4591
      %4593 = vrot.lane.b32.xlu0 %v4091, 1
      %v4594 = vpop.permute.xlu0 %4593
      %4595 = vrot.lane.b32.xlu0 %v4092, 1
      %v4596 = vpop.permute.xlu0 %4595
      %4597 = vrot.lane.b32.xlu0 %v4093, 1
      %v4598 = vpop.permute.xlu0 %4597
      %4599 = vrot.lane.b32.xlu0 %v4094, 1
      %v4600 = vpop.permute.xlu0 %4599
      %v4601 = vsel %vm892, %v4598, %v4600
      %v4602 = vsel %vm892, %v4596, %v4598
      %v4603 = vsel %vm892, %v4594, %v4596
      %v4604 = vsel %vm892, %v4592, %v4594
      %v4605 = vsel %vm892, %v4590, %v4592
      %v4606 = vsel %vm892, %v4588, %v4590
      %v4607 = vsel %vm892, %v4586, %v4588
      %v4608 = vsel %vm892, %v4584, %v4586
      %v4609 = vsel %vm892, %v4582, %v4584
      %v4610 = vsel %vm892, %v4580, %v4582
      %v4611 = vsel %vm892, %v4600, %v4580
      %4612 = vst [vmem:[#allocation2 + $0x3c8] sm:$0xff] %v4611
      %4613 = vst [vmem:[#allocation2 + $0x3d0] sm:$0xff] %v4610
      %4614 = vst [vmem:[#allocation2 + $0x3d8] sm:$0xff] %v4609
      %4615 = vst [vmem:[#allocation2 + $0x3e0] sm:$0xff] %v4608
      %4616 = vst [vmem:[#allocation2 + $0x3e8] sm:$0xff] %v4607
      %4617 = vst [vmem:[#allocation2 + $0x3f0] sm:$0xff] %v4606
      %4618 = vst [vmem:[#allocation2 + $0x3f8] sm:$0xff] %v4605
      %4619 = vst [vmem:[#allocation2 + $0x400] sm:$0xff] %v4604
      %4620 = vst [vmem:[#allocation2 + $0x408] sm:$0xff] %v4603
      %4621 = vst [vmem:[#allocation2 + $0x410] sm:$0xff] %v4602
      %4622 = vst [vmem:[#allocation2 + $0x418] sm:$0xff] %v4601
      %4623 = vst [vmem:[#allocation2 + $0x420] sm:$0xff] %v4084
      %4624 = vst [vmem:[#allocation2 + $0x428] sm:$0xff] %v4085
      %4625 = vst [vmem:[#allocation2 + $0x430] sm:$0xff] %v4086
      %4626 = vst [vmem:[#allocation2 + $0x438] sm:$0xff] %v4087
      %4627 = vst [vmem:[#allocation2 + $0x440] sm:$0xff] %v4088
      %4628 = vst [vmem:[#allocation2 + $0x448] sm:$0xff] %v4089
      %4629 = vst [vmem:[#allocation2 + $0x450] sm:$0xff] %v4090
      %4630 = vst [vmem:[#allocation2 + $0x458] sm:$0xff] %v4091
      %4631 = vst [vmem:[#allocation2 + $0x460] sm:$0xff] %v4092
      %4632 = vst [vmem:[#allocation2 + $0x468] sm:$0xff] %v4093
      %4633 = vst [vmem:[#allocation2 + $0x470] sm:$0xff] %v4094
      %4634 = vrot.lane.b32.xlu0 %v4084, 127
      %v4635 = vpop.permute.xlu0 %4634
      %4636 = vrot.lane.b32.xlu0 %v4085, 127
      %v4637 = vpop.permute.xlu0 %4636
      %4638 = vrot.lane.b32.xlu0 %v4086, 127
      %v4639 = vpop.permute.xlu0 %4638
      %4640 = vrot.lane.b32.xlu0 %v4087, 127
      %v4641 = vpop.permute.xlu0 %4640
      %4642 = vrot.lane.b32.xlu0 %v4088, 127
      %v4643 = vpop.permute.xlu0 %4642
      %4644 = vrot.lane.b32.xlu0 %v4089, 127
      %v4645 = vpop.permute.xlu0 %4644
      %4646 = vrot.lane.b32.xlu0 %v4090, 127
      %v4647 = vpop.permute.xlu0 %4646
      %4648 = vrot.lane.b32.xlu0 %v4091, 127
      %v4649 = vpop.permute.xlu0 %4648
      %4650 = vrot.lane.b32.xlu0 %v4092, 127
      %v4651 = vpop.permute.xlu0 %4650
      %4652 = vrot.lane.b32.xlu0 %v4093, 127
      %v4653 = vpop.permute.xlu0 %4652
      %4654 = vrot.lane.b32.xlu0 %v4094, 127
      %v4655 = vpop.permute.xlu0 %4654
      %v4656 = vsel %vm948, %v4653, %v4655
      %v4657 = vsel %vm948, %v4651, %v4653
      %v4658 = vsel %vm948, %v4649, %v4651
      %v4659 = vsel %vm948, %v4647, %v4649
      %v4660 = vsel %vm948, %v4645, %v4647
      %v4661 = vsel %vm948, %v4643, %v4645
      %v4662 = vsel %vm948, %v4641, %v4643
      %v4663 = vsel %vm948, %v4639, %v4641
      %v4664 = vsel %vm948, %v4637, %v4639
      %v4665 = vsel %vm948, %v4635, %v4637
      %v4666 = vsel %vm948, %v4655, %v4635
      %4667 = vst [vmem:[#allocation2 + $0x478] sm:$0xff] %v4665
      %4668 = vst [vmem:[#allocation2 + $0x480] sm:$0xff] %v4664
      %4669 = vst [vmem:[#allocation2 + $0x488] sm:$0xff] %v4663
      %4670 = vst [vmem:[#allocation2 + $0x490] sm:$0xff] %v4662
      %4671 = vst [vmem:[#allocation2 + $0x498] sm:$0xff] %v4661
      %4672 = vst [vmem:[#allocation2 + $0x4a0] sm:$0xff] %v4660
      %4673 = vst [vmem:[#allocation2 + $0x4a8] sm:$0xff] %v4659
      %4674 = vst [vmem:[#allocation2 + $0x4b0] sm:$0xff] %v4658
      %4675 = vst [vmem:[#allocation2 + $0x4b8] sm:$0xff] %v4657
      %4676 = vst [vmem:[#allocation2 + $0x4c0] sm:$0xff] %v4656
      %4677 = vst [vmem:[#allocation2 + $0x4c8] sm:$0xff] %v4666
      %4678 = vrot.lane.b32.xlu0 %v4084, 126
      %v4679 = vpop.permute.xlu0 %4678
      %4680 = vrot.lane.b32.xlu0 %v4085, 126
      %v4681 = vpop.permute.xlu0 %4680
      %4682 = vrot.lane.b32.xlu0 %v4086, 126
      %v4683 = vpop.permute.xlu0 %4682
      %4684 = vrot.lane.b32.xlu0 %v4087, 126
      %v4685 = vpop.permute.xlu0 %4684
      %4686 = vrot.lane.b32.xlu0 %v4088, 126
      %v4687 = vpop.permute.xlu0 %4686
      %4688 = vrot.lane.b32.xlu0 %v4089, 126
      %v4689 = vpop.permute.xlu0 %4688
      %4690 = vrot.lane.b32.xlu0 %v4090, 126
      %v4691 = vpop.permute.xlu0 %4690
      %4692 = vrot.lane.b32.xlu0 %v4091, 126
      %v4693 = vpop.permute.xlu0 %4692
      %4694 = vrot.lane.b32.xlu0 %v4092, 126
      %v4695 = vpop.permute.xlu0 %4694
      %4696 = vrot.lane.b32.xlu0 %v4093, 126
      %v4697 = vpop.permute.xlu0 %4696
      %4698 = vrot.lane.b32.xlu0 %v4094, 126
      %v4699 = vpop.permute.xlu0 %4698
      %v4700 = vsel %vm993, %v4697, %v4699
      %v4701 = vsel %vm993, %v4695, %v4697
      %v4702 = vsel %vm993, %v4693, %v4695
      %v4703 = vsel %vm993, %v4691, %v4693
      %v4704 = vsel %vm993, %v4689, %v4691
      %v4705 = vsel %vm993, %v4687, %v4689
      %v4706 = vsel %vm993, %v4685, %v4687
      %v4707 = vsel %vm993, %v4683, %v4685
      %v4708 = vsel %vm993, %v4681, %v4683
      %v4709 = vsel %vm993, %v4679, %v4681
      %v4710 = vsel %vm993, %v4699, %v4679
      %4711 = vst [vmem:[#allocation2 + $0x4d0] sm:$0xff] %v4709
      %4712 = vst [vmem:[#allocation2 + $0x4d8] sm:$0xff] %v4708
      %4713 = vst [vmem:[#allocation2 + $0x4e0] sm:$0xff] %v4707
      %4714 = vst [vmem:[#allocation2 + $0x4e8] sm:$0xff] %v4706
      %4715 = vst [vmem:[#allocation2 + $0x4f0] sm:$0xff] %v4705
      %4716 = vst [vmem:[#allocation2 + $0x4f8] sm:$0xff] %v4704
      %4717 = vst [vmem:[#allocation2 + $0x500] sm:$0xff] %v4703
      %4718 = vst [vmem:[#allocation2 + $0x508] sm:$0xff] %v4702
      %4719 = vst [vmem:[#allocation2 + $0x510] sm:$0xff] %v4701
      %4720 = vst [vmem:[#allocation2 + $0x518] sm:$0xff] %v4700
      %4721 = vst [vmem:[#allocation2 + $0x520] sm:$0xff] %v4710
      %4722 = vrot.lane.b32.xlu0 %v4084, 94
      %v4723 = vpop.permute.xlu0 %4722
      %4724 = vrot.lane.b32.xlu0 %v4085, 94
      %v4725 = vpop.permute.xlu0 %4724
      %4726 = vrot.lane.b32.xlu0 %v4086, 94
      %v4727 = vpop.permute.xlu0 %4726
      %4728 = vrot.lane.b32.xlu0 %v4087, 94
      %v4729 = vpop.permute.xlu0 %4728
      %4730 = vrot.lane.b32.xlu0 %v4088, 94
      %v4731 = vpop.permute.xlu0 %4730
      %4732 = vrot.lane.b32.xlu0 %v4089, 94
      %v4733 = vpop.permute.xlu0 %4732
      %4734 = vrot.lane.b32.xlu0 %v4090, 94
      %v4735 = vpop.permute.xlu0 %4734
      %4736 = vrot.lane.b32.xlu0 %v4091, 94
      %v4737 = vpop.permute.xlu0 %4736
      %4738 = vrot.lane.b32.xlu0 %v4092, 94
      %v4739 = vpop.permute.xlu0 %4738
      %4740 = vrot.lane.b32.xlu0 %v4093, 94
      %v4741 = vpop.permute.xlu0 %4740
      %4742 = vrot.lane.b32.xlu0 %v4094, 94
      %v4743 = vpop.permute.xlu0 %4742
      %v4744 = vsel %vm1038, %v4741, %v4743
      %v4745 = vsel %vm1038, %v4739, %v4741
      %v4746 = vsel %vm1038, %v4737, %v4739
      %v4747 = vsel %vm1038, %v4735, %v4737
      %v4748 = vsel %vm1038, %v4733, %v4735
      %v4749 = vsel %vm1038, %v4731, %v4733
      %v4750 = vsel %vm1038, %v4729, %v4731
      %v4751 = vsel %vm1038, %v4727, %v4729
      %v4752 = vsel %vm1038, %v4725, %v4727
      %v4753 = vsel %vm1038, %v4723, %v4725
      %v4754 = vsel %vm1038, %v4743, %v4723
      %4755 = vst [vmem:[#allocation2 + $0x528] sm:$0xff] %v4753
      %4756 = vst [vmem:[#allocation2 + $0x530] sm:$0xff] %v4752
      %4757 = vst [vmem:[#allocation2 + $0x538] sm:$0xff] %v4751
      %4758 = vst [vmem:[#allocation2 + $0x540] sm:$0xff] %v4750
      %4759 = vst [vmem:[#allocation2 + $0x548] sm:$0xff] %v4749
      %4760 = vst [vmem:[#allocation2 + $0x550] sm:$0xff] %v4748
      %4761 = vst [vmem:[#allocation2 + $0x558] sm:$0xff] %v4747
      %4762 = vst [vmem:[#allocation2 + $0x560] sm:$0xff] %v4746
      %4763 = vst [vmem:[#allocation2 + $0x568] sm:$0xff] %v4745
      %4764 = vst [vmem:[#allocation2 + $0x570] sm:$0xff] %v4744
      %4765 = vst [vmem:[#allocation2 + $0x578] sm:$0xff] %v4754
      %4766 = vrot.lane.b32.xlu0 %v4084, 93
      %v4767 = vpop.permute.xlu0 %4766
      %4768 = vrot.lane.b32.xlu0 %v4085, 93
      %v4769 = vpop.permute.xlu0 %4768
      %4770 = vrot.lane.b32.xlu0 %v4086, 93
      %v4771 = vpop.permute.xlu0 %4770
      %4772 = vrot.lane.b32.xlu0 %v4087, 93
      %v4773 = vpop.permute.xlu0 %4772
      %4774 = vrot.lane.b32.xlu0 %v4088, 93
      %v4775 = vpop.permute.xlu0 %4774
      %4776 = vrot.lane.b32.xlu0 %v4089, 93
      %v4777 = vpop.permute.xlu0 %4776
      %4778 = vrot.lane.b32.xlu0 %v4090, 93
      %v4779 = vpop.permute.xlu0 %4778
      %4780 = vrot.lane.b32.xlu0 %v4091, 93
      %v4781 = vpop.permute.xlu0 %4780
      %4782 = vrot.lane.b32.xlu0 %v4092, 93
      %v4783 = vpop.permute.xlu0 %4782
      %4784 = vrot.lane.b32.xlu0 %v4093, 93
      %v4785 = vpop.permute.xlu0 %4784
      %4786 = vrot.lane.b32.xlu0 %v4094, 93
      %v4787 = vpop.permute.xlu0 %4786
      %v4788 = vsel %vm1083, %v4785, %v4787
      %v4789 = vsel %vm1083, %v4783, %v4785
      %v4790 = vsel %vm1083, %v4781, %v4783
      %v4791 = vsel %vm1083, %v4779, %v4781
      %v4792 = vsel %vm1083, %v4777, %v4779
      %v4793 = vsel %vm1083, %v4775, %v4777
      %v4794 = vsel %vm1083, %v4773, %v4775
      %v4795 = vsel %vm1083, %v4771, %v4773
      %v4796 = vsel %vm1083, %v4769, %v4771
      %v4797 = vsel %vm1083, %v4767, %v4769
      %v4798 = vsel %vm1083, %v4787, %v4767
      %4799 = vst [vmem:[#allocation2 + $0x580] sm:$0xff] %v4797
      %4800 = vst [vmem:[#allocation2 + $0x588] sm:$0xff] %v4796
      %4801 = vst [vmem:[#allocation2 + $0x590] sm:$0xff] %v4795
      %4802 = vst [vmem:[#allocation2 + $0x598] sm:$0xff] %v4794
      %4803 = vst [vmem:[#allocation2 + $0x5a0] sm:$0xff] %v4793
      %4804 = vst [vmem:[#allocation2 + $0x5a8] sm:$0xff] %v4792
      %4805 = vst [vmem:[#allocation2 + $0x5b0] sm:$0xff] %v4791
      %4806 = vst [vmem:[#allocation2 + $0x5b8] sm:$0xff] %v4790
      %4807 = vst [vmem:[#allocation2 + $0x5c0] sm:$0xff] %v4789
      %4808 = vst [vmem:[#allocation2 + $0x5c8] sm:$0xff] %v4788
      %4809 = vst [vmem:[#allocation2 + $0x5d0] sm:$0xff] %v4798
      %4810 = vrot.lane.b32.xlu0 %v4084, 92
      %v4811 = vpop.permute.xlu0 %4810
      %4812 = vrot.lane.b32.xlu0 %v4085, 92
      %v4813 = vpop.permute.xlu0 %4812
      %4814 = vrot.lane.b32.xlu0 %v4086, 92
      %v4815 = vpop.permute.xlu0 %4814
      %4816 = vrot.lane.b32.xlu0 %v4087, 92
      %v4817 = vpop.permute.xlu0 %4816
      %4818 = vrot.lane.b32.xlu0 %v4088, 92
      %v4819 = vpop.permute.xlu0 %4818
      %4820 = vrot.lane.b32.xlu0 %v4089, 92
      %v4821 = vpop.permute.xlu0 %4820
      %4822 = vrot.lane.b32.xlu0 %v4090, 92
      %v4823 = vpop.permute.xlu0 %4822
      %4824 = vrot.lane.b32.xlu0 %v4091, 92
      %v4825 = vpop.permute.xlu0 %4824
      %4826 = vrot.lane.b32.xlu0 %v4092, 92
      %v4827 = vpop.permute.xlu0 %4826
      %4828 = vrot.lane.b32.xlu0 %v4093, 92
      %v4829 = vpop.permute.xlu0 %4828
      %4830 = vrot.lane.b32.xlu0 %v4094, 92
      %v4831 = vpop.permute.xlu0 %4830
      %v4832 = vsel %vm1128, %v4829, %v4831
      %v4833 = vsel %vm1128, %v4827, %v4829
      %v4834 = vsel %vm1128, %v4825, %v4827
      %v4835 = vsel %vm1128, %v4823, %v4825
      %v4836 = vsel %vm1128, %v4821, %v4823
      %v4837 = vsel %vm1128, %v4819, %v4821
      %v4838 = vsel %vm1128, %v4817, %v4819
      %v4839 = vsel %vm1128, %v4815, %v4817
      %v4840 = vsel %vm1128, %v4813, %v4815
      %v4841 = vsel %vm1128, %v4811, %v4813
      %v4842 = vsel %vm1128, %v4831, %v4811
      %4843 = vst [vmem:[#allocation2 + $0x5d8] sm:$0xff] %v4841
      %4844 = vst [vmem:[#allocation2 + $0x5e0] sm:$0xff] %v4840
      %4845 = vst [vmem:[#allocation2 + $0x5e8] sm:$0xff] %v4839
      %4846 = vst [vmem:[#allocation2 + $0x5f0] sm:$0xff] %v4838
      %4847 = vst [vmem:[#allocation2 + $0x5f8] sm:$0xff] %v4837
      %4848 = vst [vmem:[#allocation2 + $0x600] sm:$0xff] %v4836
      %4849 = vst [vmem:[#allocation2 + $0x608] sm:$0xff] %v4835
      %4850 = vst [vmem:[#allocation2 + $0x610] sm:$0xff] %v4834
      %4851 = vst [vmem:[#allocation2 + $0x618] sm:$0xff] %v4833
      %4852 = vst [vmem:[#allocation2 + $0x620] sm:$0xff] %v4832
      %4853 = vst [vmem:[#allocation2 + $0x628] sm:$0xff] %v4842
      %4854 = vrot.lane.b32.xlu0 %v4084, 91
      %v4855 = vpop.permute.xlu0 %4854
      %4856 = vrot.lane.b32.xlu0 %v4085, 91
      %v4857 = vpop.permute.xlu0 %4856
      %4858 = vrot.lane.b32.xlu0 %v4086, 91
      %v4859 = vpop.permute.xlu0 %4858
      %4860 = vrot.lane.b32.xlu0 %v4087, 91
      %v4861 = vpop.permute.xlu0 %4860
      %4862 = vrot.lane.b32.xlu0 %v4088, 91
      %v4863 = vpop.permute.xlu0 %4862
      %4864 = vrot.lane.b32.xlu0 %v4089, 91
      %v4865 = vpop.permute.xlu0 %4864
      %4866 = vrot.lane.b32.xlu0 %v4090, 91
      %v4867 = vpop.permute.xlu0 %4866
      %4868 = vrot.lane.b32.xlu0 %v4091, 91
      %v4869 = vpop.permute.xlu0 %4868
      %4870 = vrot.lane.b32.xlu0 %v4092, 91
      %v4871 = vpop.permute.xlu0 %4870
      %4872 = vrot.lane.b32.xlu0 %v4093, 91
      %v4873 = vpop.permute.xlu0 %4872
      %4874 = vrot.lane.b32.xlu0 %v4094, 91
      %v4875 = vpop.permute.xlu0 %4874
      %v4876 = vsel %vm1173, %v4873, %v4875
      %v4877 = vsel %vm1173, %v4871, %v4873
      %v4878 = vsel %vm1173, %v4869, %v4871
      %v4879 = vsel %vm1173, %v4867, %v4869
      %v4880 = vsel %vm1173, %v4865, %v4867
      %v4881 = vsel %vm1173, %v4863, %v4865
      %v4882 = vsel %vm1173, %v4861, %v4863
      %v4883 = vsel %vm1173, %v4859, %v4861
      %v4884 = vsel %vm1173, %v4857, %v4859
      %v4885 = vsel %vm1173, %v4855, %v4857
      %v4886 = vsel %vm1173, %v4875, %v4855
      %4887 = vst [vmem:[#allocation2 + $0x630] sm:$0xff] %v4885
      %4888 = vst [vmem:[#allocation2 + $0x638] sm:$0xff] %v4884
      %4889 = vst [vmem:[#allocation2 + $0x640] sm:$0xff] %v4883
      %4890 = vst [vmem:[#allocation2 + $0x648] sm:$0xff] %v4882
      %4891 = vst [vmem:[#allocation2 + $0x650] sm:$0xff] %v4881
      %4892 = vst [vmem:[#allocation2 + $0x658] sm:$0xff] %v4880
      %4893 = vst [vmem:[#allocation2 + $0x660] sm:$0xff] %v4879
      %4894 = vst [vmem:[#allocation2 + $0x668] sm:$0xff] %v4878
      %4895 = vst [vmem:[#allocation2 + $0x670] sm:$0xff] %v4877
      %4896 = vst [vmem:[#allocation2 + $0x678] sm:$0xff] %v4876
      %4897 = vst [vmem:[#allocation2 + $0x680] sm:$0xff] %v4886
      %4898 = vrot.lane.b32.xlu0 %v4084, 90
      %v4899 = vpop.permute.xlu0 %4898
      %4900 = vrot.lane.b32.xlu0 %v4085, 90
      %v4901 = vpop.permute.xlu0 %4900
      %4902 = vrot.lane.b32.xlu0 %v4086, 90
      %v4903 = vpop.permute.xlu0 %4902
      %4904 = vrot.lane.b32.xlu0 %v4087, 90
      %v4905 = vpop.permute.xlu0 %4904
      %4906 = vrot.lane.b32.xlu0 %v4088, 90
      %v4907 = vpop.permute.xlu0 %4906
      %4908 = vrot.lane.b32.xlu0 %v4089, 90
      %v4909 = vpop.permute.xlu0 %4908
      %4910 = vrot.lane.b32.xlu0 %v4090, 90
      %v4911 = vpop.permute.xlu0 %4910
      %4912 = vrot.lane.b32.xlu0 %v4091, 90
      %v4913 = vpop.permute.xlu0 %4912
      %4914 = vrot.lane.b32.xlu0 %v4092, 90
      %v4915 = vpop.permute.xlu0 %4914
      %4916 = vrot.lane.b32.xlu0 %v4093, 90
      %v4917 = vpop.permute.xlu0 %4916
      %4918 = vrot.lane.b32.xlu0 %v4094, 90
      %v4919 = vpop.permute.xlu0 %4918
      %v4920 = vsel %vm1218, %v4917, %v4919
      %v4921 = vsel %vm1218, %v4915, %v4917
      %v4922 = vsel %vm1218, %v4913, %v4915
      %v4923 = vsel %vm1218, %v4911, %v4913
      %v4924 = vsel %vm1218, %v4909, %v4911
      %v4925 = vsel %vm1218, %v4907, %v4909
      %v4926 = vsel %vm1218, %v4905, %v4907
      %v4927 = vsel %vm1218, %v4903, %v4905
      %v4928 = vsel %vm1218, %v4901, %v4903
      %v4929 = vsel %vm1218, %v4899, %v4901
      %v4930 = vsel %vm1218, %v4919, %v4899
      %4931 = vst [vmem:[#allocation2 + $0x688] sm:$0xff] %v4929
      %4932 = vst [vmem:[#allocation2 + $0x690] sm:$0xff] %v4928
      %4933 = vst [vmem:[#allocation2 + $0x698] sm:$0xff] %v4927
      %4934 = vst [vmem:[#allocation2 + $0x6a0] sm:$0xff] %v4926
      %4935 = vst [vmem:[#allocation2 + $0x6a8] sm:$0xff] %v4925
      %4936 = vst [vmem:[#allocation2 + $0x6b0] sm:$0xff] %v4924
      %4937 = vst [vmem:[#allocation2 + $0x6b8] sm:$0xff] %v4923
      %4938 = vst [vmem:[#allocation2 + $0x6c0] sm:$0xff] %v4922
      %4939 = vst [vmem:[#allocation2 + $0x6c8] sm:$0xff] %v4921
      %4940 = vst [vmem:[#allocation2 + $0x6d0] sm:$0xff] %v4920
      %4941 = vst [vmem:[#allocation2 + $0x6d8] sm:$0xff] %v4930
      %4942 = vrot.lane.b32.xlu0 %v4084, 58
      %v4943 = vpop.permute.xlu0 %4942
      %4944 = vrot.lane.b32.xlu0 %v4085, 58
      %v4945 = vpop.permute.xlu0 %4944
      %4946 = vrot.lane.b32.xlu0 %v4086, 58
      %v4947 = vpop.permute.xlu0 %4946
      %4948 = vrot.lane.b32.xlu0 %v4087, 58
      %v4949 = vpop.permute.xlu0 %4948
      %4950 = vrot.lane.b32.xlu0 %v4088, 58
      %v4951 = vpop.permute.xlu0 %4950
      %4952 = vrot.lane.b32.xlu0 %v4089, 58
      %v4953 = vpop.permute.xlu0 %4952
      %4954 = vrot.lane.b32.xlu0 %v4090, 58
      %v4955 = vpop.permute.xlu0 %4954
      %4956 = vrot.lane.b32.xlu0 %v4091, 58
      %v4957 = vpop.permute.xlu0 %4956
      %4958 = vrot.lane.b32.xlu0 %v4092, 58
      %v4959 = vpop.permute.xlu0 %4958
      %4960 = vrot.lane.b32.xlu0 %v4093, 58
      %v4961 = vpop.permute.xlu0 %4960
      %4962 = vrot.lane.b32.xlu0 %v4094, 58
      %v4963 = vpop.permute.xlu0 %4962
      %v4964 = vsel %vm1263, %v4961, %v4963
      %v4965 = vsel %vm1263, %v4959, %v4961
      %v4966 = vsel %vm1263, %v4957, %v4959
      %v4967 = vsel %vm1263, %v4955, %v4957
      %v4968 = vsel %vm1263, %v4953, %v4955
      %v4969 = vsel %vm1263, %v4951, %v4953
      %v4970 = vsel %vm1263, %v4949, %v4951
      %v4971 = vsel %vm1263, %v4947, %v4949
      %v4972 = vsel %vm1263, %v4945, %v4947
      %v4973 = vsel %vm1263, %v4943, %v4945
      %v4974 = vsel %vm1263, %v4963, %v4943
      %4975 = vst [vmem:[#allocation2 + $0x6e0] sm:$0xff] %v4973
      %4976 = vst [vmem:[#allocation2 + $0x6e8] sm:$0xff] %v4972
      %4977 = vst [vmem:[#allocation2 + $0x6f0] sm:$0xff] %v4971
      %4978 = vst [vmem:[#allocation2 + $0x6f8] sm:$0xff] %v4970
      %4979 = vst [vmem:[#allocation2 + $0x700] sm:$0xff] %v4969
      %4980 = vst [vmem:[#allocation2 + $0x708] sm:$0xff] %v4968
      %4981 = vst [vmem:[#allocation2 + $0x710] sm:$0xff] %v4967
      %4982 = vst [vmem:[#allocation2 + $0x718] sm:$0xff] %v4966
      %4983 = vst [vmem:[#allocation2 + $0x720] sm:$0xff] %v4965
      %4984 = vst [vmem:[#allocation2 + $0x728] sm:$0xff] %v4964
      %4985 = vst [vmem:[#allocation2 + $0x730] sm:$0xff] %v4974
      %4986 = vrot.lane.b32.xlu0 %v4084, 57
      %v4987 = vpop.permute.xlu0 %4986
      %4988 = vrot.lane.b32.xlu0 %v4085, 57
      %v4989 = vpop.permute.xlu0 %4988
      %4990 = vrot.lane.b32.xlu0 %v4086, 57
      %v4991 = vpop.permute.xlu0 %4990
      %4992 = vrot.lane.b32.xlu0 %v4087, 57
      %v4993 = vpop.permute.xlu0 %4992
      %4994 = vrot.lane.b32.xlu0 %v4088, 57
      %v4995 = vpop.permute.xlu0 %4994
      %4996 = vrot.lane.b32.xlu0 %v4089, 57
      %v4997 = vpop.permute.xlu0 %4996
      %4998 = vrot.lane.b32.xlu0 %v4090, 57
      %v4999 = vpop.permute.xlu0 %4998
      %5000 = vrot.lane.b32.xlu0 %v4091, 57
      %v5001 = vpop.permute.xlu0 %5000
      %5002 = vrot.lane.b32.xlu0 %v4092, 57
      %v5003 = vpop.permute.xlu0 %5002
      %5004 = vrot.lane.b32.xlu0 %v4093, 57
      %v5005 = vpop.permute.xlu0 %5004
      %5006 = vrot.lane.b32.xlu0 %v4094, 57
      %v5007 = vpop.permute.xlu0 %5006
      %v5008 = vsel %vm1308, %v5005, %v5007
      %v5009 = vsel %vm1308, %v5003, %v5005
      %v5010 = vsel %vm1308, %v5001, %v5003
      %v5011 = vsel %vm1308, %v4999, %v5001
      %v5012 = vsel %vm1308, %v4997, %v4999
      %v5013 = vsel %vm1308, %v4995, %v4997
      %v5014 = vsel %vm1308, %v4993, %v4995
      %v5015 = vsel %vm1308, %v4991, %v4993
      %v5016 = vsel %vm1308, %v4989, %v4991
      %v5017 = vsel %vm1308, %v4987, %v4989
      %v5018 = vsel %vm1308, %v5007, %v4987
      %5019 = vst [vmem:[#allocation2 + $0x738] sm:$0xff] %v5017
      %5020 = vst [vmem:[#allocation2 + $0x740] sm:$0xff] %v5016
      %5021 = vst [vmem:[#allocation2 + $0x748] sm:$0xff] %v5015
      %5022 = vst [vmem:[#allocation2 + $0x750] sm:$0xff] %v5014
      %5023 = vst [vmem:[#allocation2 + $0x758] sm:$0xff] %v5013
      %5024 = vst [vmem:[#allocation2 + $0x760] sm:$0xff] %v5012
      %5025 = vst [vmem:[#allocation2 + $0x768] sm:$0xff] %v5011
      %5026 = vst [vmem:[#allocation2 + $0x770] sm:$0xff] %v5010
      %5027 = vst [vmem:[#allocation2 + $0x778] sm:$0xff] %v5009
      %5028 = vst [vmem:[#allocation2 + $0x780] sm:$0xff] %v5008
      %5029 = vst [vmem:[#allocation2 + $0x788] sm:$0xff] %v5018
      %5030 = vrot.lane.b32.xlu0 %v4084, 56
      %v5031 = vpop.permute.xlu0 %5030
      %5032 = vrot.lane.b32.xlu0 %v4085, 56
      %v5033 = vpop.permute.xlu0 %5032
      %5034 = vrot.lane.b32.xlu0 %v4086, 56
      %v5035 = vpop.permute.xlu0 %5034
      %5036 = vrot.lane.b32.xlu0 %v4087, 56
      %v5037 = vpop.permute.xlu0 %5036
      %5038 = vrot.lane.b32.xlu0 %v4088, 56
      %v5039 = vpop.permute.xlu0 %5038
      %5040 = vrot.lane.b32.xlu0 %v4089, 56
      %v5041 = vpop.permute.xlu0 %5040
      %5042 = vrot.lane.b32.xlu0 %v4090, 56
      %v5043 = vpop.permute.xlu0 %5042
      %5044 = vrot.lane.b32.xlu0 %v4091, 56
      %v5045 = vpop.permute.xlu0 %5044
      %5046 = vrot.lane.b32.xlu0 %v4092, 56
      %v5047 = vpop.permute.xlu0 %5046
      %5048 = vrot.lane.b32.xlu0 %v4093, 56
      %v5049 = vpop.permute.xlu0 %5048
      %5050 = vrot.lane.b32.xlu0 %v4094, 56
      %v5051 = vpop.permute.xlu0 %5050
      %v5052 = vsel %vm1353, %v5049, %v5051
      %v5053 = vsel %vm1353, %v5047, %v5049
      %v5054 = vsel %vm1353, %v5045, %v5047
      %v5055 = vsel %vm1353, %v5043, %v5045
      %v5056 = vsel %vm1353, %v5041, %v5043
      %v5057 = vsel %vm1353, %v5039, %v5041
      %v5058 = vsel %vm1353, %v5037, %v5039
      %v5059 = vsel %vm1353, %v5035, %v5037
      %v5060 = vsel %vm1353, %v5033, %v5035
      %v5061 = vsel %vm1353, %v5031, %v5033
      %v5062 = vsel %vm1353, %v5051, %v5031
      %5063 = vst [vmem:[#allocation2 + $0x790] sm:$0xff] %v5061
      %5064 = vst [vmem:[#allocation2 + $0x798] sm:$0xff] %v5060
      %5065 = vst [vmem:[#allocation2 + $0x7a0] sm:$0xff] %v5059
      %5066 = vst [vmem:[#allocation2 + $0x7a8] sm:$0xff] %v5058
      %5067 = vst [vmem:[#allocation2 + $0x7b0] sm:$0xff] %v5057
      %5068 = vst [vmem:[#allocation2 + $0x7b8] sm:$0xff] %v5056
      %5069 = vst [vmem:[#allocation2 + $0x7c0] sm:$0xff] %v5055
      %5070 = vst [vmem:[#allocation2 + $0x7c8] sm:$0xff] %v5054
      %5071 = vst [vmem:[#allocation2 + $0x7d0] sm:$0xff] %v5053
      %5072 = vst [vmem:[#allocation2 + $0x7d8] sm:$0xff] %v5052
      %5073 = vst [vmem:[#allocation2 + $0x7e0] sm:$0xff] %v5062
      %5074 = vrot.lane.b32.xlu0 %v4084, 55
      %v5075 = vpop.permute.xlu0 %5074
      %5076 = vrot.lane.b32.xlu0 %v4085, 55
      %v5077 = vpop.permute.xlu0 %5076
      %5078 = vrot.lane.b32.xlu0 %v4086, 55
      %v5079 = vpop.permute.xlu0 %5078
      %5080 = vrot.lane.b32.xlu0 %v4087, 55
      %v5081 = vpop.permute.xlu0 %5080
      %5082 = vrot.lane.b32.xlu0 %v4088, 55
      %v5083 = vpop.permute.xlu0 %5082
      %5084 = vrot.lane.b32.xlu0 %v4089, 55
      %v5085 = vpop.permute.xlu0 %5084
      %5086 = vrot.lane.b32.xlu0 %v4090, 55
      %v5087 = vpop.permute.xlu0 %5086
      %5088 = vrot.lane.b32.xlu0 %v4091, 55
      %v5089 = vpop.permute.xlu0 %5088
      %5090 = vrot.lane.b32.xlu0 %v4092, 55
      %v5091 = vpop.permute.xlu0 %5090
      %5092 = vrot.lane.b32.xlu0 %v4093, 55
      %v5093 = vpop.permute.xlu0 %5092
      %5094 = vrot.lane.b32.xlu0 %v4094, 55
      %v5095 = vpop.permute.xlu0 %5094
      %v5096 = vsel %vm1398, %v5093, %v5095
      %v5097 = vsel %vm1398, %v5091, %v5093
      %v5098 = vsel %vm1398, %v5089, %v5091
      %v5099 = vsel %vm1398, %v5087, %v5089
      %v5100 = vsel %vm1398, %v5085, %v5087
      %v5101 = vsel %vm1398, %v5083, %v5085
      %v5102 = vsel %vm1398, %v5081, %v5083
      %v5103 = vsel %vm1398, %v5079, %v5081
      %v5104 = vsel %vm1398, %v5077, %v5079
      %v5105 = vsel %vm1398, %v5075, %v5077
      %v5106 = vsel %vm1398, %v5095, %v5075
      %5107 = vst [vmem:[#allocation2 + $0x7e8] sm:$0xff] %v5105
      %5108 = vst [vmem:[#allocation2 + $0x7f0] sm:$0xff] %v5104
      %5109 = vst [vmem:[#allocation2 + $0x7f8] sm:$0xff] %v5103
      %5110 = vst [vmem:[#allocation2 + $0x800] sm:$0xff] %v5102
      %5111 = vst [vmem:[#allocation2 + $0x808] sm:$0xff] %v5101
      %5112 = vst [vmem:[#allocation2 + $0x810] sm:$0xff] %v5100
      %5113 = vst [vmem:[#allocation2 + $0x818] sm:$0xff] %v5099
      %5114 = vst [vmem:[#allocation2 + $0x820] sm:$0xff] %v5098
      %5115 = vst [vmem:[#allocation2 + $0x828] sm:$0xff] %v5097
      %5116 = vst [vmem:[#allocation2 + $0x830] sm:$0xff] %v5096
      %5117 = vst [vmem:[#allocation2 + $0x838] sm:$0xff] %v5106
      %5118 = vrot.lane.b32.xlu0 %v4084, 54
      %v5119 = vpop.permute.xlu0 %5118
      %5120 = vrot.lane.b32.xlu0 %v4085, 54
      %v5121 = vpop.permute.xlu0 %5120
      %5122 = vrot.lane.b32.xlu0 %v4086, 54
      %v5123 = vpop.permute.xlu0 %5122
      %5124 = vrot.lane.b32.xlu0 %v4087, 54
      %v5125 = vpop.permute.xlu0 %5124
      %5126 = vrot.lane.b32.xlu0 %v4088, 54
      %v5127 = vpop.permute.xlu0 %5126
      %5128 = vrot.lane.b32.xlu0 %v4089, 54
      %v5129 = vpop.permute.xlu0 %5128
      %5130 = vrot.lane.b32.xlu0 %v4090, 54
      %v5131 = vpop.permute.xlu0 %5130
      %5132 = vrot.lane.b32.xlu0 %v4091, 54
      %v5133 = vpop.permute.xlu0 %5132
      %5134 = vrot.lane.b32.xlu0 %v4092, 54
      %v5135 = vpop.permute.xlu0 %5134
      %5136 = vrot.lane.b32.xlu0 %v4093, 54
      %v5137 = vpop.permute.xlu0 %5136
      %5138 = vrot.lane.b32.xlu0 %v4094, 54
      %v5139 = vpop.permute.xlu0 %5138
      %v5140 = vsel %vm1443, %v5137, %v5139
      %v5141 = vsel %vm1443, %v5135, %v5137
      %v5142 = vsel %vm1443, %v5133, %v5135
      %v5143 = vsel %vm1443, %v5131, %v5133
      %v5144 = vsel %vm1443, %v5129, %v5131
      %v5145 = vsel %vm1443, %v5127, %v5129
      %v5146 = vsel %vm1443, %v5125, %v5127
      %v5147 = vsel %vm1443, %v5123, %v5125
      %v5148 = vsel %vm1443, %v5121, %v5123
      %v5149 = vsel %vm1443, %v5119, %v5121
      %v5150 = vsel %vm1443, %v5139, %v5119
      %5151 = vst [vmem:[#allocation2 + $0x840] sm:$0xff] %v5149
      %5152 = vst [vmem:[#allocation2 + $0x848] sm:$0xff] %v5148
      %5153 = vst [vmem:[#allocation2 + $0x850] sm:$0xff] %v5147
      %5154 = vst [vmem:[#allocation2 + $0x858] sm:$0xff] %v5146
      %5155 = vst [vmem:[#allocation2 + $0x860] sm:$0xff] %v5145
      %5156 = vst [vmem:[#allocation2 + $0x868] sm:$0xff] %v5144
      %5157 = vst [vmem:[#allocation2 + $0x870] sm:$0xff] %v5143
      %5158 = vst [vmem:[#allocation2 + $0x878] sm:$0xff] %v5142
      %5159 = vst [vmem:[#allocation2 + $0x880] sm:$0xff] %v5141
      %5160 = vst [vmem:[#allocation2 + $0x888] sm:$0xff] %v5140
      %5161 = vst [vmem:[#allocation2 + $0x890] sm:$0xff] %v5150
      %v5162 = vld [vmem:[%s8] sm:$0xff]
      %v5163 = vld [vmem:[%s8 + $0x8] sm:$0xff]
      %v5164 = vld [vmem:[%s9] sm:$0xff]
      %v5165 = vld [vmem:[#allocation2] sm:$0xff]
      %v5166 = vld [vmem:[#allocation2 + $0x8] sm:$0xff]
      %v5167 = vld [vmem:[#allocation2 + $0x10] sm:$0xff]
      %v5168 = vld [vmem:[#allocation2 + $0x18] sm:$0xff]
      %v5169 = vld [vmem:[#allocation2 + $0x20] sm:$0xff]
      %v5170 = vld [vmem:[#allocation2 + $0x28] sm:$0xff]
      %v5171 = vld [vmem:[#allocation2 + $0x30] sm:$0xff]
      %v5172 = vld [vmem:[#allocation2 + $0x38] sm:$0xff]
      %v5173 = vld [vmem:[#allocation2 + $0x40] sm:$0xff]
      %v5174 = vld [vmem:[#allocation2 + $0x48] sm:$0xff]
      %v5175 = vld [vmem:[#allocation2 + $0x50] sm:$0xff]
      %v5176 = vld [vmem:[#allocation2 + $0x58] sm:$0xff]
      %v5177 = vld [vmem:[#allocation2 + $0x60] sm:$0xff]
      %v5178 = vld [vmem:[#allocation2 + $0x68] sm:$0xff]
      %v5179 = vld [vmem:[#allocation2 + $0x70] sm:$0xff]
      %v5180 = vld [vmem:[#allocation2 + $0x78] sm:$0xff]
      %v5181 = vld [vmem:[#allocation2 + $0x80] sm:$0xff]
      %v5182 = vld [vmem:[#allocation2 + $0x88] sm:$0xff]
      %v5183 = vld [vmem:[#allocation2 + $0x90] sm:$0xff]
      %v5184 = vld [vmem:[#allocation2 + $0x98] sm:$0xff]
      %v5185 = vld [vmem:[#allocation2 + $0xa0] sm:$0xff]
      %v5186 = vld [vmem:[#allocation2 + $0xa8] sm:$0xff]
      %v5187 = vld [vmem:[#allocation2 + $0xb0] sm:$0xff]
      %v5188 = vld [vmem:[#allocation2 + $0xb8] sm:$0xff]
      %v5189 = vld [vmem:[#allocation2 + $0xc0] sm:$0xff]
      %v5190 = vld [vmem:[#allocation2 + $0xc8] sm:$0xff]
      %v5191 = vld [vmem:[#allocation2 + $0xd0] sm:$0xff]
      %v5192 = vld [vmem:[#allocation2 + $0xd8] sm:$0xff]
      %v5193 = vld [vmem:[#allocation2 + $0xe0] sm:$0xff]
      %v5194 = vld [vmem:[#allocation2 + $0xe8] sm:$0xff]
      %v5195 = vld [vmem:[#allocation2 + $0xf0] sm:$0xff]
      %v5196 = vld [vmem:[#allocation2 + $0xf8] sm:$0xff]
      %v5197 = vld [vmem:[#allocation2 + $0x100] sm:$0xff]
      %v5198 = vld [vmem:[#allocation2 + $0x108] sm:$0xff]
      %v5199 = vld [vmem:[#allocation2 + $0x110] sm:$0xff]
      %v5200 = vld [vmem:[#allocation2 + $0x118] sm:$0xff]
      %v5201 = vld [vmem:[#allocation2 + $0x120] sm:$0xff]
      %v5202 = vld [vmem:[#allocation2 + $0x128] sm:$0xff]
      %v5203 = vld [vmem:[#allocation2 + $0x130] sm:$0xff]
      %v5204 = vld [vmem:[#allocation2 + $0x138] sm:$0xff]
      %v5205 = vld [vmem:[#allocation2 + $0x140] sm:$0xff]
      %v5206 = vld [vmem:[#allocation2 + $0x148] sm:$0xff]
      %v5207 = vld [vmem:[#allocation2 + $0x150] sm:$0xff]
      %v5208 = vld [vmem:[#allocation2 + $0x158] sm:$0xff]
      %v5209 = vld [vmem:[#allocation2 + $0x160] sm:$0xff]
      %v5210 = vld [vmem:[#allocation2 + $0x168] sm:$0xff]
      %v5211 = vld [vmem:[#allocation2 + $0x170] sm:$0xff]
      %v5212 = vld [vmem:[#allocation2 + $0x178] sm:$0xff]
      %v5213 = vld [vmem:[#allocation2 + $0x180] sm:$0xff]
      %v5214 = vld [vmem:[#allocation2 + $0x188] sm:$0xff]
      %v5215 = vld [vmem:[#allocation2 + $0x190] sm:$0xff]
      %v5216 = vld [vmem:[#allocation2 + $0x198] sm:$0xff]
      %v5217 = vld [vmem:[#allocation2 + $0x1a0] sm:$0xff]
      %v5218 = vld [vmem:[#allocation2 + $0x1a8] sm:$0xff]
      %v5219 = vld [vmem:[#allocation2 + $0x1b0] sm:$0xff]
      %v5220 = vld [vmem:[#allocation2 + $0x1b8] sm:$0xff]
      %v5221 = vld [vmem:[#allocation2 + $0x1c0] sm:$0xff]
      %v5222 = vld [vmem:[#allocation2 + $0x1c8] sm:$0xff]
      %v5223 = vld [vmem:[#allocation2 + $0x1d0] sm:$0xff]
      %v5224 = vld [vmem:[#allocation2 + $0x1d8] sm:$0xff]
      %v5225 = vld [vmem:[#allocation2 + $0x1e0] sm:$0xff]
      %v5226 = vld [vmem:[#allocation2 + $0x1e8] sm:$0xff]
      %v5227 = vld [vmem:[#allocation2 + $0x1f0] sm:$0xff]
      %v5228 = vld [vmem:[#allocation2 + $0x1f8] sm:$0xff]
      %v5229 = vld [vmem:[#allocation2 + $0x200] sm:$0xff]
      %v5230 = vld [vmem:[#allocation2 + $0x208] sm:$0xff]
      %v5231 = vld [vmem:[#allocation2 + $0x210] sm:$0xff]
      %v5232 = vld [vmem:[#allocation2 + $0x218] sm:$0xff]
      %v5233 = vld [vmem:[#allocation2 + $0x220] sm:$0xff]
      %v5234 = vld [vmem:[#allocation2 + $0x228] sm:$0xff]
      %v5235 = vld [vmem:[#allocation2 + $0x230] sm:$0xff]
      %v5236 = vld [vmem:[#allocation2 + $0x238] sm:$0xff]
      %v5237 = vld [vmem:[#allocation2 + $0x240] sm:$0xff]
      %v5238 = vld [vmem:[#allocation2 + $0x248] sm:$0xff]
      %v5239 = vld [vmem:[#allocation2 + $0x250] sm:$0xff]
      %v5240 = vld [vmem:[#allocation2 + $0x258] sm:$0xff]
      %v5241 = vld [vmem:[#allocation2 + $0x260] sm:$0xff]
      %v5242 = vld [vmem:[#allocation2 + $0x268] sm:$0xff]
      %v5243 = vld [vmem:[#allocation2 + $0x270] sm:$0xff]
      %v5244 = vld [vmem:[#allocation2 + $0x278] sm:$0xff]
      %v5245 = vld [vmem:[#allocation2 + $0x280] sm:$0xff]
      %v5246 = vld [vmem:[#allocation2 + $0x288] sm:$0xff]
      %v5247 = vld [vmem:[#allocation2 + $0x290] sm:$0xff]
      %v5248 = vld [vmem:[#allocation2 + $0x298] sm:$0xff]
      %v5249 = vld [vmem:[#allocation2 + $0x2a0] sm:$0xff]
      %v5250 = vld [vmem:[#allocation2 + $0x2a8] sm:$0xff]
      %v5251 = vld [vmem:[#allocation2 + $0x2b0] sm:$0xff]
      %v5252 = vld [vmem:[#allocation2 + $0x2b8] sm:$0xff]
      %v5253 = vld [vmem:[#allocation2 + $0x2c0] sm:$0xff]
      %v5254 = vld [vmem:[#allocation2 + $0x2c8] sm:$0xff]
      %v5255 = vld [vmem:[#allocation2 + $0x2d0] sm:$0xff]
      %v5256 = vld [vmem:[#allocation2 + $0x2d8] sm:$0xff]
      %v5257 = vld [vmem:[#allocation2 + $0x2e0] sm:$0xff]
      %v5258 = vld [vmem:[#allocation2 + $0x2e8] sm:$0xff]
      %v5259 = vld [vmem:[#allocation2 + $0x2f0] sm:$0xff]
      %v5260 = vld [vmem:[#allocation2 + $0x2f8] sm:$0xff]
      %v5261 = vld [vmem:[#allocation2 + $0x300] sm:$0xff]
      %v5262 = vld [vmem:[#allocation2 + $0x308] sm:$0xff]
      %v5263 = vld [vmem:[#allocation2 + $0x310] sm:$0xff]
      %v5264 = vld [vmem:[#allocation2 + $0x318] sm:$0xff]
      %v5265 = vld [vmem:[#allocation2 + $0x320] sm:$0xff]
      %v5266 = vld [vmem:[#allocation2 + $0x328] sm:$0xff]
      %v5267 = vld [vmem:[#allocation2 + $0x330] sm:$0xff]
      %v5268 = vld [vmem:[#allocation2 + $0x338] sm:$0xff]
      %v5269 = vld [vmem:[#allocation2 + $0x340] sm:$0xff]
      %v5270 = vld [vmem:[#allocation2 + $0x348] sm:$0xff]
      %v5271 = vld [vmem:[#allocation2 + $0x350] sm:$0xff]
      %v5272 = vld [vmem:[#allocation2 + $0x358] sm:$0xff]
      %v5273 = vld [vmem:[#allocation2 + $0x360] sm:$0xff]
      %v5274 = vld [vmem:[#allocation2 + $0x368] sm:$0xff]
      %v5275 = vld [vmem:[#allocation2 + $0x370] sm:$0xff]
      %v5276 = vld [vmem:[#allocation2 + $0x378] sm:$0xff]
      %v5277 = vld [vmem:[#allocation2 + $0x380] sm:$0xff]
      %v5278 = vld [vmem:[#allocation2 + $0x388] sm:$0xff]
      %v5279 = vld [vmem:[#allocation2 + $0x390] sm:$0xff]
      %v5280 = vld [vmem:[#allocation2 + $0x398] sm:$0xff]
      %v5281 = vld [vmem:[#allocation2 + $0x3a0] sm:$0xff]
      %v5282 = vld [vmem:[#allocation2 + $0x3a8] sm:$0xff]
      %v5283 = vld [vmem:[#allocation2 + $0x3b0] sm:$0xff]
      %v5284 = vld [vmem:[#allocation2 + $0x3b8] sm:$0xff]
      %v5285 = vld [vmem:[#allocation2 + $0x3c0] sm:$0xff]
      %v5286 = vld [vmem:[#allocation2 + $0x3c8] sm:$0xff]
      %v5287 = vld [vmem:[#allocation2 + $0x3d0] sm:$0xff]
      %v5288 = vld [vmem:[#allocation2 + $0x3d8] sm:$0xff]
      %v5289 = vld [vmem:[#allocation2 + $0x3e0] sm:$0xff]
      %v5290 = vld [vmem:[#allocation2 + $0x3e8] sm:$0xff]
      %v5291 = vld [vmem:[#allocation2 + $0x3f0] sm:$0xff]
      %v5292 = vld [vmem:[#allocation2 + $0x3f8] sm:$0xff]
      %v5293 = vld [vmem:[#allocation2 + $0x400] sm:$0xff]
      %v5294 = vld [vmem:[#allocation2 + $0x408] sm:$0xff]
      %v5295 = vld [vmem:[#allocation2 + $0x410] sm:$0xff]
      %v5296 = vld [vmem:[#allocation2 + $0x418] sm:$0xff]
      %v5297 = vld [vmem:[#allocation2 + $0x420] sm:$0xff]
      %v5298 = vld [vmem:[#allocation2 + $0x428] sm:$0xff]
      %v5299 = vld [vmem:[#allocation2 + $0x430] sm:$0xff]
      %v5300 = vld [vmem:[#allocation2 + $0x438] sm:$0xff]
      %v5301 = vld [vmem:[#allocation2 + $0x440] sm:$0xff]
      %v5302 = vld [vmem:[#allocation2 + $0x448] sm:$0xff]
      %v5303 = vld [vmem:[#allocation2 + $0x450] sm:$0xff]
      %v5304 = vld [vmem:[#allocation2 + $0x458] sm:$0xff]
      %v5305 = vld [vmem:[#allocation2 + $0x460] sm:$0xff]
      %v5306 = vld [vmem:[#allocation2 + $0x468] sm:$0xff]
      %v5307 = vld [vmem:[#allocation2 + $0x470] sm:$0xff]
      %v5308 = vld [vmem:[#allocation2 + $0x478] sm:$0xff]
      %v5309 = vld [vmem:[#allocation2 + $0x480] sm:$0xff]
      %v5310 = vld [vmem:[#allocation2 + $0x488] sm:$0xff]
      %v5311 = vld [vmem:[#allocation2 + $0x490] sm:$0xff]
      %v5312 = vld [vmem:[#allocation2 + $0x498] sm:$0xff]
      %v5313 = vld [vmem:[#allocation2 + $0x4a0] sm:$0xff]
      %v5314 = vld [vmem:[#allocation2 + $0x4a8] sm:$0xff]
      %v5315 = vld [vmem:[#allocation2 + $0x4b0] sm:$0xff]
      %v5316 = vld [vmem:[#allocation2 + $0x4b8] sm:$0xff]
      %v5317 = vld [vmem:[#allocation2 + $0x4c0] sm:$0xff]
      %v5318 = vld [vmem:[#allocation2 + $0x4c8] sm:$0xff]
      %v5319 = vld [vmem:[#allocation2 + $0x4d0] sm:$0xff]
      %v5320 = vld [vmem:[#allocation2 + $0x4d8] sm:$0xff]
      %v5321 = vld [vmem:[#allocation2 + $0x4e0] sm:$0xff]
      %v5322 = vld [vmem:[#allocation2 + $0x4e8] sm:$0xff]
      %v5323 = vld [vmem:[#allocation2 + $0x4f0] sm:$0xff]
      %v5324 = vld [vmem:[#allocation2 + $0x4f8] sm:$0xff]
      %v5325 = vld [vmem:[#allocation2 + $0x500] sm:$0xff]
      %v5326 = vld [vmem:[#allocation2 + $0x508] sm:$0xff]
      %v5327 = vld [vmem:[#allocation2 + $0x510] sm:$0xff]
      %v5328 = vld [vmem:[#allocation2 + $0x518] sm:$0xff]
      %v5329 = vld [vmem:[#allocation2 + $0x520] sm:$0xff]
      %v5330 = vld [vmem:[#allocation2 + $0x528] sm:$0xff]
      %v5331 = vld [vmem:[#allocation2 + $0x530] sm:$0xff]
      %v5332 = vld [vmem:[#allocation2 + $0x538] sm:$0xff]
      %v5333 = vld [vmem:[#allocation2 + $0x540] sm:$0xff]
      %v5334 = vld [vmem:[#allocation2 + $0x548] sm:$0xff]
      %v5335 = vld [vmem:[#allocation2 + $0x550] sm:$0xff]
      %v5336 = vld [vmem:[#allocation2 + $0x558] sm:$0xff]
      %v5337 = vld [vmem:[#allocation2 + $0x560] sm:$0xff]
      %v5338 = vld [vmem:[#allocation2 + $0x568] sm:$0xff]
      %v5339 = vld [vmem:[#allocation2 + $0x570] sm:$0xff]
      %v5340 = vld [vmem:[#allocation2 + $0x578] sm:$0xff]
      %v5341 = vld [vmem:[#allocation2 + $0x580] sm:$0xff]
      %v5342 = vld [vmem:[#allocation2 + $0x588] sm:$0xff]
      %v5343 = vld [vmem:[#allocation2 + $0x590] sm:$0xff]
      %v5344 = vld [vmem:[#allocation2 + $0x598] sm:$0xff]
      %v5345 = vld [vmem:[#allocation2 + $0x5a0] sm:$0xff]
      %v5346 = vld [vmem:[#allocation2 + $0x5a8] sm:$0xff]
      %v5347 = vld [vmem:[#allocation2 + $0x5b0] sm:$0xff]
      %v5348 = vld [vmem:[#allocation2 + $0x5b8] sm:$0xff]
      %v5349 = vld [vmem:[#allocation2 + $0x5c0] sm:$0xff]
      %v5350 = vld [vmem:[#allocation2 + $0x5c8] sm:$0xff]
      %v5351 = vld [vmem:[#allocation2 + $0x5d0] sm:$0xff]
      %v5352 = vld [vmem:[#allocation2 + $0x5d8] sm:$0xff]
      %v5353 = vld [vmem:[#allocation2 + $0x5e0] sm:$0xff]
      %v5354 = vld [vmem:[#allocation2 + $0x5e8] sm:$0xff]
      %v5355 = vld [vmem:[#allocation2 + $0x5f0] sm:$0xff]
      %v5356 = vld [vmem:[#allocation2 + $0x5f8] sm:$0xff]
      %v5357 = vld [vmem:[#allocation2 + $0x600] sm:$0xff]
      %v5358 = vld [vmem:[#allocation2 + $0x608] sm:$0xff]
      %v5359 = vld [vmem:[#allocation2 + $0x610] sm:$0xff]
      %v5360 = vld [vmem:[#allocation2 + $0x618] sm:$0xff]
      %v5361 = vld [vmem:[#allocation2 + $0x620] sm:$0xff]
      %v5362 = vld [vmem:[#allocation2 + $0x628] sm:$0xff]
      %v5363 = vld [vmem:[#allocation2 + $0x630] sm:$0xff]
      %v5364 = vld [vmem:[#allocation2 + $0x638] sm:$0xff]
      %v5365 = vld [vmem:[#allocation2 + $0x640] sm:$0xff]
      %v5366 = vld [vmem:[#allocation2 + $0x648] sm:$0xff]
      %v5367 = vld [vmem:[#allocation2 + $0x650] sm:$0xff]
      %v5368 = vld [vmem:[#allocation2 + $0x658] sm:$0xff]
      %v5369 = vld [vmem:[#allocation2 + $0x660] sm:$0xff]
      %v5370 = vld [vmem:[#allocation2 + $0x668] sm:$0xff]
      %v5371 = vld [vmem:[#allocation2 + $0x670] sm:$0xff]
      %v5372 = vld [vmem:[#allocation2 + $0x678] sm:$0xff]
      %v5373 = vld [vmem:[#allocation2 + $0x680] sm:$0xff]
      %v5374 = vld [vmem:[#allocation2 + $0x688] sm:$0xff]
      %v5375 = vld [vmem:[#allocation2 + $0x690] sm:$0xff]
      %v5376 = vld [vmem:[#allocation2 + $0x698] sm:$0xff]
      %v5377 = vld [vmem:[#allocation2 + $0x6a0] sm:$0xff]
      %v5378 = vld [vmem:[#allocation2 + $0x6a8] sm:$0xff]
      %v5379 = vld [vmem:[#allocation2 + $0x6b0] sm:$0xff]
      %v5380 = vld [vmem:[#allocation2 + $0x6b8] sm:$0xff]
      %v5381 = vld [vmem:[#allocation2 + $0x6c0] sm:$0xff]
      %v5382 = vld [vmem:[#allocation2 + $0x6c8] sm:$0xff]
      %v5383 = vld [vmem:[#allocation2 + $0x6d0] sm:$0xff]
      %v5384 = vld [vmem:[#allocation2 + $0x6d8] sm:$0xff]
      %v5385 = vld [vmem:[#allocation2 + $0x6e0] sm:$0xff]
      %v5386 = vld [vmem:[#allocation2 + $0x6e8] sm:$0xff]
      %v5387 = vld [vmem:[#allocation2 + $0x6f0] sm:$0xff]
      %v5388 = vld [vmem:[#allocation2 + $0x6f8] sm:$0xff]
      %v5389 = vld [vmem:[#allocation2 + $0x700] sm:$0xff]
      %v5390 = vld [vmem:[#allocation2 + $0x708] sm:$0xff]
      %v5391 = vld [vmem:[#allocation2 + $0x710] sm:$0xff]
      %v5392 = vld [vmem:[#allocation2 + $0x718] sm:$0xff]
      %v5393 = vld [vmem:[#allocation2 + $0x720] sm:$0xff]
      %v5394 = vld [vmem:[#allocation2 + $0x728] sm:$0xff]
      %v5395 = vld [vmem:[#allocation2 + $0x730] sm:$0xff]
      %v5396 = vld [vmem:[#allocation2 + $0x738] sm:$0xff]
      %v5397 = vld [vmem:[#allocation2 + $0x740] sm:$0xff]
      %v5398 = vld [vmem:[#allocation2 + $0x748] sm:$0xff]
      %v5399 = vld [vmem:[#allocation2 + $0x750] sm:$0xff]
      %v5400 = vld [vmem:[#allocation2 + $0x758] sm:$0xff]
      %v5401 = vld [vmem:[#allocation2 + $0x760] sm:$0xff]
      %v5402 = vld [vmem:[#allocation2 + $0x768] sm:$0xff]
      %v5403 = vld [vmem:[#allocation2 + $0x770] sm:$0xff]
      %v5404 = vld [vmem:[#allocation2 + $0x778] sm:$0xff]
      %v5405 = vld [vmem:[#allocation2 + $0x780] sm:$0xff]
      %v5406 = vld [vmem:[#allocation2 + $0x788] sm:$0xff]
      %v5407 = vld [vmem:[#allocation2 + $0x790] sm:$0xff]
      %v5408 = vld [vmem:[#allocation2 + $0x798] sm:$0xff]
      %v5409 = vld [vmem:[#allocation2 + $0x7a0] sm:$0xff]
      %v5410 = vld [vmem:[#allocation2 + $0x7a8] sm:$0xff]
      %v5411 = vld [vmem:[#allocation2 + $0x7b0] sm:$0xff]
      %v5412 = vld [vmem:[#allocation2 + $0x7b8] sm:$0xff]
      %v5413 = vld [vmem:[#allocation2 + $0x7c0] sm:$0xff]
      %v5414 = vld [vmem:[#allocation2 + $0x7c8] sm:$0xff]
      %v5415 = vld [vmem:[#allocation2 + $0x7d0] sm:$0xff]
      %v5416 = vld [vmem:[#allocation2 + $0x7d8] sm:$0xff]
      %v5417 = vld [vmem:[#allocation2 + $0x7e0] sm:$0xff]
      %v5418 = vld [vmem:[#allocation2 + $0x7e8] sm:$0xff]
      %v5419 = vld [vmem:[#allocation2 + $0x7f0] sm:$0xff]
      %v5420 = vld [vmem:[#allocation2 + $0x7f8] sm:$0xff]
      %v5421 = vld [vmem:[#allocation2 + $0x800] sm:$0xff]
      %v5422 = vld [vmem:[#allocation2 + $0x808] sm:$0xff]
      %v5423 = vld [vmem:[#allocation2 + $0x810] sm:$0xff]
      %v5424 = vld [vmem:[#allocation2 + $0x818] sm:$0xff]
      %v5425 = vld [vmem:[#allocation2 + $0x820] sm:$0xff]
      %v5426 = vld [vmem:[#allocation2 + $0x828] sm:$0xff]
      %v5427 = vld [vmem:[#allocation2 + $0x830] sm:$0xff]
      %v5428 = vld [vmem:[#allocation2 + $0x838] sm:$0xff]
      %v5429 = vld [vmem:[#allocation2 + $0x840] sm:$0xff]
      %v5430 = vld [vmem:[#allocation2 + $0x848] sm:$0xff]
      %v5431 = vld [vmem:[#allocation2 + $0x850] sm:$0xff]
      %v5432 = vld [vmem:[#allocation2 + $0x858] sm:$0xff]
      %v5433 = vld [vmem:[#allocation2 + $0x860] sm:$0xff]
      %v5434 = vld [vmem:[#allocation2 + $0x868] sm:$0xff]
      %v5435 = vld [vmem:[#allocation2 + $0x870] sm:$0xff]
      %v5436 = vld [vmem:[#allocation2 + $0x878] sm:$0xff]
      %v5437 = vld [vmem:[#allocation2 + $0x880] sm:$0xff]
      %v5438 = vld [vmem:[#allocation2 + $0x888] sm:$0xff]
      %v5439 = vld [vmem:[#allocation2 + $0x890] sm:$0xff]
      %5441 = vset.pattern.permute.xlu0 0
      %5442 = vperm.xlu0 %5441, %v5164
      %v5443 = vpop.permute.xlu0 %5442
      %v5446 = vsel %vm1749, %v5163, 0
      %5448 = vmatprep.subr.mxu0 %v5331
      %5449 = vmatpush1.msra.mxu0 %v5330
      %5450 = vmatprep.subr.mxu0 %v5320
      %5451 = vmatpush1.msra.mxu0 %v5319
      %5452 = vmatprep.subr.mxu0 %v5309
      %5453 = vmatpush1.msra.mxu0 %v5308
      %5454 = vmatprep.subr.mxu0 %v5298
      %5455 = vmatpush1.msra.mxu0 %v5297
      %5456 = vmatprep.subr.mxu0 %v5287
      %5457 = vmatpush1.msra.mxu0 %v5286
      %5458 = vmatprep.subr.mxu0 %v5276
      %5459 = vmatpush1.msra.mxu0 %v5275
      %5460 = vmatprep.subr.mxu0 %v5265
      %5461 = vmatpush1.msra.mxu0 %v5264
      %5462 = vmatprep.subr.mxu0 %v5254
      %5463 = vmatpush1.msra.mxu0 %v5253
      %5464 = vmatprep.subr.mxu0 %v5243
      %5465 = vmatpush1.msra.mxu0 %v5242
      %5466 = vmatprep.subr.mxu0 %v5232
      %5467 = vmatpush1.msra.mxu0 %v5231
      %5468 = vmatprep.subr.mxu0 %v5221
      %5469 = vmatpush1.msra.mxu0 %v5220
      %5470 = vmatprep.subr.mxu0 %v5210
      %5471 = vmatpush1.msra.mxu0 %v5209
      %5472 = vmatprep.subr.mxu0 %v5199
      %5473 = vmatpush1.msra.mxu0 %v5198
      %5474 = vmatprep.subr.mxu0 %v5188
      %5475 = vmatpush1.msra.mxu0 %v5187
      %5476 = vmatprep.subr.mxu0 %v5177
      %5477 = vmatpush1.msra.mxu0 %v5176
      %5478 = vmatprep.subr.mxu0 %v5166
      %5479 = vmatpush1.msra.mxu0 %v5165
      %5480 = vmatprep.subr.mxu0 0.0
      %5481 = vmatpush2.msra.mxu0 0.0
      %5482 = vmatprep.subr.mxu0 0.0
      %5483 = vmatpush2.msra.mxu0 0.0
      %5484 = vmatprep.subr.mxu0 0.0
      %5485 = vmatpush2.msra.mxu0 0.0
      %5486 = vmatprep.subr.mxu0 0.0
      %5487 = vmatpush2.msra.mxu0 0.0
      %5488 = vmatprep.subr.mxu0 0.0
      %5489 = vmatpush2.msra.mxu0 0.0
      %5490 = vmatprep.subr.mxu0 0.0
      %5491 = vmatpush2.msra.mxu0 0.0
      %5492 = vmatprep.subr.mxu0 0.0
      %5493 = vmatpush2.msra.mxu0 0.0
      %5494 = vmatprep.subr.mxu0 %v5430
      %5495 = vmatpush2.msra.mxu0 %v5429
      %5496 = vmatprep.subr.mxu0 %v5419
      %5497 = vmatpush2.msra.mxu0 %v5418
      %5498 = vmatprep.subr.mxu0 %v5408
      %5499 = vmatpush2.msra.mxu0 %v5407
      %5500 = vmatprep.subr.mxu0 %v5397
      %5501 = vmatpush2.msra.mxu0 %v5396
      %5502 = vmatprep.subr.mxu0 %v5386
      %5503 = vmatpush2.msra.mxu0 %v5385
      %5504 = vmatprep.subr.mxu0 %v5375
      %5505 = vmatpush2.msra.mxu0 %v5374
      %5506 = vmatprep.subr.mxu0 %v5364
      %5507 = vmatpush2.msra.mxu0 %v5363
      %5508 = vmatprep.subr.mxu0 %v5353
      %5509 = vmatpush2.msra.mxu0 %v5352
      %5510 = vmatprep.subr.mxu0 %v5342
      %5511 = vmatpush2.msra.mxu0 %v5341
      %5512 = vmatprep.mubr.f32.mxu0 %v5446
      %5513 = vmatmul.mubr.f32.gmra.mxu0 %v5162
      %v5514 = vpop.f32.mrf.mxu0
      %v5515 = vadd.f32 %v5443, %v5514
      %v5516 = vpop.f32.mrf.mxu0
      %v5517 = vadd.f32 %v5443, %v5516
      %5518 = vdwg.mxu0
      %5519 = vmatprep.subr.mxu0 %v5333
      %5520 = vmatpush1.msra.mxu0 %v5332
      %5521 = vmatprep.subr.mxu0 %v5322
      %5522 = vmatpush1.msra.mxu0 %v5321
      %5523 = vmatprep.subr.mxu0 %v5311
      %5524 = vmatpush1.msra.mxu0 %v5310
      %5525 = vmatprep.subr.mxu0 %v5300
      %5526 = vmatpush1.msra.mxu0 %v5299
      %5527 = vmatprep.subr.mxu0 %v5289
      %5528 = vmatpush1.msra.mxu0 %v5288
      %5529 = vmatprep.subr.mxu0 %v5278
      %5530 = vmatpush1.msra.mxu0 %v5277
      %5531 = vmatprep.subr.mxu0 %v5267
      %5532 = vmatpush1.msra.mxu0 %v5266
      %5533 = vmatprep.subr.mxu0 %v5256
      %5534 = vmatpush1.msra.mxu0 %v5255
      %5535 = vmatprep.subr.mxu0 %v5245
      %5536 = vmatpush1.msra.mxu0 %v5244
      %5537 = vmatprep.subr.mxu0 %v5234
      %5538 = vmatpush1.msra.mxu0 %v5233
      %5539 = vmatprep.subr.mxu0 %v5223
      %5540 = vmatpush1.msra.mxu0 %v5222
      %5541 = vmatprep.subr.mxu0 %v5212
      %5542 = vmatpush1.msra.mxu0 %v5211
      %5543 = vmatprep.subr.mxu0 %v5201
      %5544 = vmatpush1.msra.mxu0 %v5200
      %5545 = vmatprep.subr.mxu0 %v5190
      %5546 = vmatpush1.msra.mxu0 %v5189
      %5547 = vmatprep.subr.mxu0 %v5179
      %5548 = vmatpush1.msra.mxu0 %v5178
      %5549 = vmatprep.subr.mxu0 %v5168
      %5550 = vmatpush1.msra.mxu0 %v5167
      %5551 = vmatprep.subr.mxu0 0.0
      %5552 = vmatpush2.msra.mxu0 0.0
      %5553 = vmatprep.subr.mxu0 0.0
      %5554 = vmatpush2.msra.mxu0 0.0
      %5555 = vmatprep.subr.mxu0 0.0
      %5556 = vmatpush2.msra.mxu0 0.0
      %5557 = vmatprep.subr.mxu0 0.0
      %5558 = vmatpush2.msra.mxu0 0.0
      %5559 = vmatprep.subr.mxu0 0.0
      %5560 = vmatpush2.msra.mxu0 0.0
      %5561 = vmatprep.subr.mxu0 0.0
      %5562 = vmatpush2.msra.mxu0 0.0
      %5563 = vmatprep.subr.mxu0 0.0
      %5564 = vmatpush2.msra.mxu0 0.0
      %5565 = vmatprep.subr.mxu0 %v5432
      %5566 = vmatpush2.msra.mxu0 %v5431
      %5567 = vmatprep.subr.mxu0 %v5421
      %5568 = vmatpush2.msra.mxu0 %v5420
      %5569 = vmatprep.subr.mxu0 %v5410
      %5570 = vmatpush2.msra.mxu0 %v5409
      %5571 = vmatprep.subr.mxu0 %v5399
      %5572 = vmatpush2.msra.mxu0 %v5398
      %5573 = vmatprep.subr.mxu0 %v5388
      %5574 = vmatpush2.msra.mxu0 %v5387
      %5575 = vmatprep.subr.mxu0 %v5377
      %5576 = vmatpush2.msra.mxu0 %v5376
      %5577 = vmatprep.subr.mxu0 %v5366
      %5578 = vmatpush2.msra.mxu0 %v5365
      %5579 = vmatprep.subr.mxu0 %v5355
      %5580 = vmatpush2.msra.mxu0 %v5354
      %5581 = vmatprep.subr.mxu0 %v5344
      %5582 = vmatpush2.msra.mxu0 %v5343
      %5583 = vmatprep.mubr.f32.mxu0 %v5446
      %5584 = vmatmul.mubr.f32.gmra.mxu0 %v5162
      %v5585 = vpop.f32.mrf.mxu0
      %v5586 = vadd.f32 %v5443, %v5585
      %v5587 = vpop.f32.mrf.mxu0
      %v5588 = vadd.f32 %v5443, %v5587
      %5589 = vdwg.mxu0
      %5590 = vmatprep.subr.mxu0 %v5335
      %5591 = vmatpush1.msra.mxu0 %v5334
      %5592 = vmatprep.subr.mxu0 %v5324
      %5593 = vmatpush1.msra.mxu0 %v5323
      %5594 = vmatprep.subr.mxu0 %v5313
      %5595 = vmatpush1.msra.mxu0 %v5312
      %5596 = vmatprep.subr.mxu0 %v5302
      %5597 = vmatpush1.msra.mxu0 %v5301
      %5598 = vmatprep.subr.mxu0 %v5291
      %5599 = vmatpush1.msra.mxu0 %v5290
      %5600 = vmatprep.subr.mxu0 %v5280
      %5601 = vmatpush1.msra.mxu0 %v5279
      %5602 = vmatprep.subr.mxu0 %v5269
      %5603 = vmatpush1.msra.mxu0 %v5268
      %5604 = vmatprep.subr.mxu0 %v5258
      %5605 = vmatpush1.msra.mxu0 %v5257
      %5606 = vmatprep.subr.mxu0 %v5247
      %5607 = vmatpush1.msra.mxu0 %v5246
      %5608 = vmatprep.subr.mxu0 %v5236
      %5609 = vmatpush1.msra.mxu0 %v5235
      %5610 = vmatprep.subr.mxu0 %v5225
      %5611 = vmatpush1.msra.mxu0 %v5224
      %5612 = vmatprep.subr.mxu0 %v5214
      %5613 = vmatpush1.msra.mxu0 %v5213
      %5614 = vmatprep.subr.mxu0 %v5203
      %5615 = vmatpush1.msra.mxu0 %v5202
      %5616 = vmatprep.subr.mxu0 %v5192
      %5617 = vmatpush1.msra.mxu0 %v5191
      %5618 = vmatprep.subr.mxu0 %v5181
      %5619 = vmatpush1.msra.mxu0 %v5180
      %5620 = vmatprep.subr.mxu0 %v5170
      %5621 = vmatpush1.msra.mxu0 %v5169
      %5622 = vmatprep.subr.mxu0 0.0
      %5623 = vmatpush2.msra.mxu0 0.0
      %5624 = vmatprep.subr.mxu0 0.0
      %5625 = vmatpush2.msra.mxu0 0.0
      %5626 = vmatprep.subr.mxu0 0.0
      %5627 = vmatpush2.msra.mxu0 0.0
      %5628 = vmatprep.subr.mxu0 0.0
      %5629 = vmatpush2.msra.mxu0 0.0
      %5630 = vmatprep.subr.mxu0 0.0
      %5631 = vmatpush2.msra.mxu0 0.0
      %5632 = vmatprep.subr.mxu0 0.0
      %5633 = vmatpush2.msra.mxu0 0.0
      %5634 = vmatprep.subr.mxu0 0.0
      %5635 = vmatpush2.msra.mxu0 0.0
      %5636 = vmatprep.subr.mxu0 %v5434
      %5637 = vmatpush2.msra.mxu0 %v5433
      %5638 = vmatprep.subr.mxu0 %v5423
      %5639 = vmatpush2.msra.mxu0 %v5422
      %5640 = vmatprep.subr.mxu0 %v5412
      %5641 = vmatpush2.msra.mxu0 %v5411
      %5642 = vmatprep.subr.mxu0 %v5401
      %5643 = vmatpush2.msra.mxu0 %v5400
      %5644 = vmatprep.subr.mxu0 %v5390
      %5645 = vmatpush2.msra.mxu0 %v5389
      %5646 = vmatprep.subr.mxu0 %v5379
      %5647 = vmatpush2.msra.mxu0 %v5378
      %5648 = vmatprep.subr.mxu0 %v5368
      %5649 = vmatpush2.msra.mxu0 %v5367
      %5650 = vmatprep.subr.mxu0 %v5357
      %5651 = vmatpush2.msra.mxu0 %v5356
      %5652 = vmatprep.subr.mxu0 %v5346
      %5653 = vmatpush2.msra.mxu0 %v5345
      %5654 = vmatprep.mubr.f32.mxu0 %v5446
      %5655 = vmatmul.mubr.f32.gmra.mxu0 %v5162
      %v5656 = vpop.f32.mrf.mxu0
      %v5657 = vadd.f32 %v5443, %v5656
      %v5658 = vpop.f32.mrf.mxu0
      %v5659 = vadd.f32 %v5443, %v5658
      %5660 = vdwg.mxu0
      %5661 = vmatprep.subr.mxu0 %v5337
      %5662 = vmatpush1.msra.mxu0 %v5336
      %5663 = vmatprep.subr.mxu0 %v5326
      %5664 = vmatpush1.msra.mxu0 %v5325
      %5665 = vmatprep.subr.mxu0 %v5315
      %5666 = vmatpush1.msra.mxu0 %v5314
      %5667 = vmatprep.subr.mxu0 %v5304
      %5668 = vmatpush1.msra.mxu0 %v5303
      %5669 = vmatprep.subr.mxu0 %v5293
      %5670 = vmatpush1.msra.mxu0 %v5292
      %5671 = vmatprep.subr.mxu0 %v5282
      %5672 = vmatpush1.msra.mxu0 %v5281
      %5673 = vmatprep.subr.mxu0 %v5271
      %5674 = vmatpush1.msra.mxu0 %v5270
      %5675 = vmatprep.subr.mxu0 %v5260
      %5676 = vmatpush1.msra.mxu0 %v5259
      %5677 = vmatprep.subr.mxu0 %v5249
      %5678 = vmatpush1.msra.mxu0 %v5248
      %5679 = vmatprep.subr.mxu0 %v5238
      %5680 = vmatpush1.msra.mxu0 %v5237
      %5681 = vmatprep.subr.mxu0 %v5227
      %5682 = vmatpush1.msra.mxu0 %v5226
      %5683 = vmatprep.subr.mxu0 %v5216
      %5684 = vmatpush1.msra.mxu0 %v5215
      %5685 = vmatprep.subr.mxu0 %v5205
      %5686 = vmatpush1.msra.mxu0 %v5204
      %5687 = vmatprep.subr.mxu0 %v5194
      %5688 = vmatpush1.msra.mxu0 %v5193
      %5689 = vmatprep.subr.mxu0 %v5183
      %5690 = vmatpush1.msra.mxu0 %v5182
      %5691 = vmatprep.subr.mxu0 %v5172
      %5692 = vmatpush1.msra.mxu0 %v5171
      %5693 = vmatprep.subr.mxu0 0.0
      %5694 = vmatpush2.msra.mxu0 0.0
      %5695 = vmatprep.subr.mxu0 0.0
      %5696 = vmatpush2.msra.mxu0 0.0
      %5697 = vmatprep.subr.mxu0 0.0
      %5698 = vmatpush2.msra.mxu0 0.0
      %5699 = vmatprep.subr.mxu0 0.0
      %5700 = vmatpush2.msra.mxu0 0.0
      %5701 = vmatprep.subr.mxu0 0.0
      %5702 = vmatpush2.msra.mxu0 0.0
      %5703 = vmatprep.subr.mxu0 0.0
      %5704 = vmatpush2.msra.mxu0 0.0
      %5705 = vmatprep.subr.mxu0 0.0
      %5706 = vmatpush2.msra.mxu0 0.0
      %5707 = vmatprep.subr.mxu0 %v5436
      %5708 = vmatpush2.msra.mxu0 %v5435
      %5709 = vmatprep.subr.mxu0 %v5425
      %5710 = vmatpush2.msra.mxu0 %v5424
      %5711 = vmatprep.subr.mxu0 %v5414
      %5712 = vmatpush2.msra.mxu0 %v5413
      %5713 = vmatprep.subr.mxu0 %v5403
      %5714 = vmatpush2.msra.mxu0 %v5402
      %5715 = vmatprep.subr.mxu0 %v5392
      %5716 = vmatpush2.msra.mxu0 %v5391
      %5717 = vmatprep.subr.mxu0 %v5381
      %5718 = vmatpush2.msra.mxu0 %v5380
      %5719 = vmatprep.subr.mxu0 %v5370
      %5720 = vmatpush2.msra.mxu0 %v5369
      %5721 = vmatprep.subr.mxu0 %v5359
      %5722 = vmatpush2.msra.mxu0 %v5358
      %5723 = vmatprep.subr.mxu0 %v5348
      %5724 = vmatpush2.msra.mxu0 %v5347
      %5725 = vmatprep.mubr.f32.mxu0 %v5446
      %5726 = vmatmul.mubr.f32.gmra.mxu0 %v5162
      %v5727 = vpop.f32.mrf.mxu0
      %v5728 = vadd.f32 %v5443, %v5727
      %v5729 = vpop.f32.mrf.mxu0
      %v5730 = vadd.f32 %v5443, %v5729
      %5731 = vdwg.mxu0
      %5732 = vmatprep.subr.mxu0 %v5339
      %5733 = vmatpush1.msra.mxu0 %v5338
      %5734 = vmatprep.subr.mxu0 %v5328
      %5735 = vmatpush1.msra.mxu0 %v5327
      %5736 = vmatprep.subr.mxu0 %v5317
      %5737 = vmatpush1.msra.mxu0 %v5316
      %5738 = vmatprep.subr.mxu0 %v5306
      %5739 = vmatpush1.msra.mxu0 %v5305
      %5740 = vmatprep.subr.mxu0 %v5295
      %5741 = vmatpush1.msra.mxu0 %v5294
      %5742 = vmatprep.subr.mxu0 %v5284
      %5743 = vmatpush1.msra.mxu0 %v5283
      %5744 = vmatprep.subr.mxu0 %v5273
      %5745 = vmatpush1.msra.mxu0 %v5272
      %5746 = vmatprep.subr.mxu0 %v5262
      %5747 = vmatpush1.msra.mxu0 %v5261
      %5748 = vmatprep.subr.mxu0 %v5251
      %5749 = vmatpush1.msra.mxu0 %v5250
      %5750 = vmatprep.subr.mxu0 %v5240
      %5751 = vmatpush1.msra.mxu0 %v5239
      %5752 = vmatprep.subr.mxu0 %v5229
      %5753 = vmatpush1.msra.mxu0 %v5228
      %5754 = vmatprep.subr.mxu0 %v5218
      %5755 = vmatpush1.msra.mxu0 %v5217
      %5756 = vmatprep.subr.mxu0 %v5207
      %5757 = vmatpush1.msra.mxu0 %v5206
      %5758 = vmatprep.subr.mxu0 %v5196
      %5759 = vmatpush1.msra.mxu0 %v5195
      %5760 = vmatprep.subr.mxu0 %v5185
      %5761 = vmatpush1.msra.mxu0 %v5184
      %5762 = vmatprep.subr.mxu0 %v5174
      %5763 = vmatpush1.msra.mxu0 %v5173
      %5764 = vmatprep.subr.mxu0 0.0
      %5765 = vmatpush2.msra.mxu0 0.0
      %5766 = vmatprep.subr.mxu0 0.0
      %5767 = vmatpush2.msra.mxu0 0.0
      %5768 = vmatprep.subr.mxu0 0.0
      %5769 = vmatpush2.msra.mxu0 0.0
      %5770 = vmatprep.subr.mxu0 0.0
      %5771 = vmatpush2.msra.mxu0 0.0
      %5772 = vmatprep.subr.mxu0 0.0
      %5773 = vmatpush2.msra.mxu0 0.0
      %5774 = vmatprep.subr.mxu0 0.0
      %5775 = vmatpush2.msra.mxu0 0.0
      %5776 = vmatprep.subr.mxu0 0.0
      %5777 = vmatpush2.msra.mxu0 0.0
      %5778 = vmatprep.subr.mxu0 %v5438
      %5779 = vmatpush2.msra.mxu0 %v5437
      %5780 = vmatprep.subr.mxu0 %v5427
      %5781 = vmatpush2.msra.mxu0 %v5426
      %5782 = vmatprep.subr.mxu0 %v5416
      %5783 = vmatpush2.msra.mxu0 %v5415
      %5784 = vmatprep.subr.mxu0 %v5405
      %5785 = vmatpush2.msra.mxu0 %v5404
      %5786 = vmatprep.subr.mxu0 %v5394
      %5787 = vmatpush2.msra.mxu0 %v5393
      %5788 = vmatprep.subr.mxu0 %v5383
      %5789 = vmatpush2.msra.mxu0 %v5382
      %5790 = vmatprep.subr.mxu0 %v5372
      %5791 = vmatpush2.msra.mxu0 %v5371
      %5792 = vmatprep.subr.mxu0 %v5361
      %5793 = vmatpush2.msra.mxu0 %v5360
      %5794 = vmatprep.subr.mxu0 %v5350
      %5795 = vmatpush2.msra.mxu0 %v5349
      %5796 = vmatprep.mubr.f32.mxu0 %v5446
      %5797 = vmatmul.mubr.f32.gmra.mxu0 %v5162
      %v5798 = vpop.f32.mrf.mxu0
      %v5799 = vadd.f32 %v5443, %v5798
      %v5800 = vpop.f32.mrf.mxu0
      %v5801 = vadd.f32 %v5443, %v5800
      %5802 = vdwg.mxu0
      %5803 = vmatprep.subr.mxu0 0.0
      %5804 = vmatpush1.msra.mxu0 %v5340
      %5805 = vmatprep.subr.mxu0 0.0
      %5806 = vmatpush1.msra.mxu0 %v5329
      %5807 = vmatprep.subr.mxu0 0.0
      %5808 = vmatpush1.msra.mxu0 %v5318
      %5809 = vmatprep.subr.mxu0 0.0
      %5810 = vmatpush1.msra.mxu0 %v5307
      %5811 = vmatprep.subr.mxu0 0.0
      %5812 = vmatpush1.msra.mxu0 %v5296
      %5813 = vmatprep.subr.mxu0 0.0
      %5814 = vmatpush1.msra.mxu0 %v5285
      %5815 = vmatprep.subr.mxu0 0.0
      %5816 = vmatpush1.msra.mxu0 %v5274
      %5817 = vmatprep.subr.mxu0 0.0
      %5818 = vmatpush1.msra.mxu0 %v5263
      %5819 = vmatprep.subr.mxu0 0.0
      %5820 = vmatpush1.msra.mxu0 %v5252
      %5821 = vmatprep.subr.mxu0 0.0
      %5822 = vmatpush1.msra.mxu0 %v5241
      %5823 = vmatprep.subr.mxu0 0.0
      %5824 = vmatpush1.msra.mxu0 %v5230
      %5825 = vmatprep.subr.mxu0 0.0
      %5826 = vmatpush1.msra.mxu0 %v5219
      %5827 = vmatprep.subr.mxu0 0.0
      %5828 = vmatpush1.msra.mxu0 %v5208
      %5829 = vmatprep.subr.mxu0 0.0
      %5830 = vmatpush1.msra.mxu0 %v5197
      %5831 = vmatprep.subr.mxu0 0.0
      %5832 = vmatpush1.msra.mxu0 %v5186
      %5833 = vmatprep.subr.mxu0 0.0
      %5834 = vmatpush1.msra.mxu0 %v5175
      %5835 = vmatprep.subr.mxu0 0.0
      %5836 = vmatpush2.msra.mxu0 0.0
      %5837 = vmatprep.subr.mxu0 0.0
      %5838 = vmatpush2.msra.mxu0 0.0
      %5839 = vmatprep.subr.mxu0 0.0
      %5840 = vmatpush2.msra.mxu0 0.0
      %5841 = vmatprep.subr.mxu0 0.0
      %5842 = vmatpush2.msra.mxu0 0.0
      %5843 = vmatprep.subr.mxu0 0.0
      %5844 = vmatpush2.msra.mxu0 0.0
      %5845 = vmatprep.subr.mxu0 0.0
      %5846 = vmatpush2.msra.mxu0 0.0
      %5847 = vmatprep.subr.mxu0 0.0
      %5848 = vmatpush2.msra.mxu0 0.0
      %5849 = vmatprep.subr.mxu0 0.0
      %5850 = vmatpush2.msra.mxu0 %v5439
      %5851 = vmatprep.subr.mxu0 0.0
      %5852 = vmatpush2.msra.mxu0 %v5428
      %5853 = vmatprep.subr.mxu0 0.0
      %5854 = vmatpush2.msra.mxu0 %v5417
      %5855 = vmatprep.subr.mxu0 0.0
      %5856 = vmatpush2.msra.mxu0 %v5406
      %5857 = vmatprep.subr.mxu0 0.0
      %5858 = vmatpush2.msra.mxu0 %v5395
      %5859 = vmatprep.subr.mxu0 0.0
      %5860 = vmatpush2.msra.mxu0 %v5384
      %5861 = vmatprep.subr.mxu0 0.0
      %5862 = vmatpush2.msra.mxu0 %v5373
      %5863 = vmatprep.subr.mxu0 0.0
      %5864 = vmatpush2.msra.mxu0 %v5362
      %5865 = vmatprep.subr.mxu0 0.0
      %5866 = vmatpush2.msra.mxu0 %v5351
      %5867 = vmatprep.mubr.f32.mxu0 %v5446
      %5868 = vmatmul.mubr.f32.gmra.mxu0 %v5162
      %v5869 = vpop.f32.mrf.mxu0
      %v5870 = vadd.f32 %v5443, %v5869
      %v5871 = vpop.f32.mrf.mxu0
      %5872 = vdwg.mxu0
      %v5873 = vadd.f32 %v5515, %v360
      %v5874 = vadd.f32 %v5517, %v361
      %v5875 = vadd.f32 %v5586, %v362
      %v5876 = vadd.f32 %v5588, %v363
      %v5877 = vadd.f32 %v5657, %v364
      %v5878 = vadd.f32 %v5659, %v365
      %v5879 = vadd.f32 %v5728, %v366
      %v5880 = vadd.f32 %v5730, %v367
      %v5881 = vadd.f32 %v5799, %v368
      %v5882 = vadd.f32 %v5801, %v369
      %v5883 = vadd.f32 %v5870, %v370
      %5884 = vst [vmem:[%s359] sm:$0xff] %v5873
      %5885 = vst [vmem:[%s359 + $0x8] sm:$0xff] %v5874
      %5886 = vst [vmem:[%s359 + $0x10] sm:$0xff] %v5875
      %5887 = vst [vmem:[%s359 + $0x18] sm:$0xff] %v5876
      %5888 = vst [vmem:[%s359 + $0x20] sm:$0xff] %v5877
      %5889 = vst [vmem:[%s359 + $0x28] sm:$0xff] %v5878
      %5890 = vst [vmem:[%s359 + $0x30] sm:$0xff] %v5879
      %5891 = vst [vmem:[%s359 + $0x38] sm:$0xff] %v5880
      %5892 = vst [vmem:[%s359 + $0x40] sm:$0xff] %v5881
      %5893 = vst [vmem:[%s359 + $0x48] sm:$0xff] %v5882
      %5894 = vst [vmem:[%s359 + $0x50] sm:$0xff] %v5883
      %p5895 = scmp.lt.s32.totalorder %s21, 1
      %s5896 = scalar_select %p5895, %s21, 1
      %s5897 = smul.addr %s5896, 11
      %s5898 = smul.addr %s5897, 8
      %s5899 = scalar_lea.vmem %s10, %s5898
      // Predicated region
      $region61: #{a_call__.1} parent=59 // pred_check
        %p5900 = pneg %p254
      $region62: #{a_call__.1} parent=59 // pred_check_branch
        %5902 = sbr.rel (%p5900) target = $region64
      $region63: #{a_call__.1} parent=59 // pred_region
        _
      $region64: #{a_call__.1} parent=59 // pred_fallthru
        _
    $region60: #{a_call__.1} parent=5 // pred_fallthru
      _
    %p5903 = scmp.le.s32.totalorder 2, %s16
    // Predicated region
    $region65: #{a_call__.1} parent=5 // pred_check
      %p5904 = pneg %p5903
    $region66: #{a_call__.1} parent=5 // pred_check_branch
      %5906 = sbr.rel (%p5904) target = $region68
    $region67: #{a_call__.1} parent=5 // pred_region
      %s5907 = ssub.s32 %s16, 2
      // Predicated region
      $region69: #{a_call__.1} parent=67 // pred_check
        %p5908 = pneg %p260
      $region70: #{a_call__.1} parent=67 // pred_check_branch
        %5910 = sbr.rel (%p5908) target = $region72
      $region71: #{a_call__.1} parent=67 // pred_region
        %p5911 = scmp.lt.s32.totalorder %s22, 1
        %s5912 = scalar_select %p5911, %s22, 1
        %s5913 = smul.addr %s5912, 11
        %s5914 = smul.addr %s5913, 8
        %s5915 = scalar_lea.vmem %s10, %s5914
      $region72: #{a_call__.1} parent=67 // pred_fallthru
        _
    $region68: #{a_call__.1} parent=5 // pred_fallthru
      _
  $region6: #{a_call__.1} parent=0 // loop_footer
    %s20 = sadd.s32 1, %s16
  $region7: #{a_call__.1} parent=0 // loop_footer_branch
    %15 = sbr.rel target = $region3
  $region8: #{a_call__.1} parent=0 // loop_exit
    _

</llo_original>
